<compile_context>
chip_gen: v7x
topology: tpu7x:2x2x1
jax: 0.10.0
libtpu: 0.0.40
codegen_flags: <defaults>
</compile_context>

<pallas_src>
import jax
import jax.numpy as jnp
from jax.experimental import pallas as pl
from jax.experimental.pallas import tpu as pltpu


LANES = 128
C_OUT_PAD = 16         # conv output channels stored per layer (6->16, 16->16)
K1_PAD = 32            # conv1 per-pool-offset patch width 25 -> 32 (4*32 = 128)
K2_PAD = 160           # conv2 per-pool-offset patch width 150 -> 160 (4*160 = 640)
K_FC1_PAD = 5376       # 5184 -> 42 * 128
FC1_K_CHUNK = 2688     # 2 lane-aligned K chunks for fc1


# ----------------------------------------------------------------------------
# Kernel 1: fused conv (one transposed matmul) + 2x2 max-pool + bias + ReLU.
# ----------------------------------------------------------------------------
def _conv_relu_pool_kernel(p_ref, w_ref, b_ref, o_ref):
    # p_ref: (1, 4G, Npix) bf16 patches; sublane = pool_offset*G + k,
    #        lane = pooled-pixel index (pixels-in-lanes layout).
    # w_ref: (128, 4G) bf16 block-diagonal weight (4 copies of a 32xG block).
    # b_ref: (32, 1) f32 bias.  o_ref: (1, 16, Npix) bf16.
    y = jnp.dot(w_ref[...], p_ref[0],
                preferred_element_type=jnp.float32)            # (128, Npix) f32
    # 2x2/2 max-pool == max over the four 32-row pool-offset sublane groups.
    m = jnp.maximum(jnp.maximum(y[0:32], y[32:64]),
                    jnp.maximum(y[64:96], y[96:128]))          # (32, Npix)
    # max_d(relu(y_d + b)) == relu(max_d(y_d) + b): bias + ReLU after the pool.
    m = jnp.maximum(m + b_ref[...], 0.0)
    o_ref[0] = m[0:C_OUT_PAD].astype(o_ref.dtype)


def conv_relu_pool(patches_t, w_t, bias):
    """patches_t: (B, 4G, Npix) bf16; w_t: (128, 4G) bf16; bias: (32, 1) f32."""
    B, KT, NPIX = patches_t.shape
    return pl.pallas_call(
        _conv_relu_pool_kernel,
        out_shape=jax.ShapeDtypeStruct((B, C_OUT_PAD, NPIX), jnp.bfloat16),
        grid_spec=pltpu.PrefetchScalarGridSpec(
            num_scalar_prefetch=0,
            grid=(B,),
            in_specs=[
                pl.BlockSpec((1, KT, NPIX), lambda b: (b, 0, 0)),
                pl.BlockSpec((LANES, KT), lambda b: (0, 0)),
                pl.BlockSpec((32, 1), lambda b: (0, 0)),
            ],
            out_specs=pl.BlockSpec((1, C_OUT_PAD, NPIX), lambda b: (b, 0, 0)),
        ),
        compiler_params=pltpu.CompilerParams(
            dimension_semantics=("parallel",)),
    )(patches_t, w_t, bias)


# ----------------------------------------------------------------------------
# Kernel 2: fused fc1 -> ReLU -> fc2 -> ReLU -> fc3 (fc1 K streamed in chunks).
# ----------------------------------------------------------------------------
def _fc_fused_kernel(f_ref, w1_ref, b1_ref, w2_ref, b2_ref, w3_ref, b3_ref,
                     o_ref, h1_acc):
    k = pl.program_id(0)

    @pl.when(k == 0)
    def _():
        h1_acc[...] = jnp.zeros_like(h1_acc)

    # bf16 x bf16 MXU path, f32 accumulation; no in-kernel weight upcasts.
    h1_acc[...] += jnp.dot(f_ref[...], w1_ref[...],
                           preferred_element_type=jnp.float32)

    @pl.when(k == pl.num_programs(0) - 1)
    def _():
        h1 = jnp.maximum(h1_acc[...] + b1_ref[...], 0.0).astype(jnp.bfloat16)
        h2 = jnp.dot(h1, w2_ref[...], preferred_element_type=jnp.float32)
        h2 = jnp.maximum(h2 + b2_ref[...], 0.0).astype(jnp.bfloat16)
        h3 = jnp.dot(h2, w3_ref[...], preferred_element_type=jnp.float32)
        o_ref[...] = (h3 + b3_ref[...]).astype(o_ref.dtype)


def fc_fused(f, w1, b1, w2, b2, w3, b3, *, k_chunk):
    B, K1 = f.shape
    assert K1 % k_chunk == 0
    n1 = w1.shape[1]
    n_out = w3.shape[1]
    kt = K1 // k_chunk
    return pl.pallas_call(
        _fc_fused_kernel,
        out_shape=jax.ShapeDtypeStruct((B, n_out), jnp.float32),
        grid_spec=pltpu.PrefetchScalarGridSpec(
            num_scalar_prefetch=0,
            grid=(kt,),
            in_specs=[
                pl.BlockSpec((B, k_chunk), lambda k: (0, k)),
                pl.BlockSpec((k_chunk, n1), lambda k: (k, 0)),
                pl.BlockSpec((1, n1), lambda k: (0, 0)),
                pl.BlockSpec(w2.shape, lambda k: (0, 0)),
                pl.BlockSpec((1, w2.shape[1]), lambda k: (0, 0)),
                pl.BlockSpec(w3.shape, lambda k: (0, 0)),
                pl.BlockSpec((1, n_out), lambda k: (0, 0)),
            ],
            out_specs=pl.BlockSpec((B, n_out), lambda k: (0, 0)),
            scratch_shapes=[pltpu.VMEM((B, n1), jnp.float32)],
        ),
        compiler_params=pltpu.CompilerParams(
            dimension_semantics=("arbitrary",),
            vmem_limit_bytes=32 * 1024 * 1024),
    )(f, w1, b1, w2, b2, w3, b3)


# ----------------------------------------------------------------------------
# XLA glue: transposed, pool-offset-grouped im2col (pure data movement, bf16).
# ----------------------------------------------------------------------------
def _pool_grouped_patches_t(planes, ksize, k_pad):
    """planes: (B, C, H, W) -> (B, 4*k_pad, (Ho/2)*(Wo/2)) bf16.

    sublane = (2a + d) * k_pad + (c*ks*ks + ki*ks + kj)   (zero padded to k_pad)
    lane    = ph * (Wo/2) + pw        with (oh, ow) = (2ph + a, 2pw + d).
    """
    planes = planes.astype(jnp.bfloat16)
    B, C, H, W = planes.shape
    Ho, Wo = H - ksize + 1, W - ksize + 1
    k = C * ksize * ksize
    cols = [planes[:, :, ki:ki + Ho, kj:kj + Wo]
            for ki in range(ksize) for kj in range(ksize)]
    p = jnp.stack(cols, axis=2)                       # (B, C, ks*ks, Ho, Wo)
    p = p.reshape(B, k, Ho // 2, 2, Wo // 2, 2)       # (B, k, ph, a, pw, d)
    p = p.transpose(0, 3, 5, 1, 2, 4)                 # (B, a, d, k, ph, pw)
    p = jnp.pad(p, ((0, 0), (0, 0), (0, 0), (0, k_pad - k), (0, 0), (0, 0)))
    return p.reshape(B, 4 * k_pad, (Ho // 2) * (Wo // 2))


# ----------------------------------------------------------------------------
# Parameter preparation (torch layout -> padded bf16 kernel layout).
# ----------------------------------------------------------------------------
def prepare_params(P):
    def conv_wt(w_oihw, k_pad):
        o, c, kh, kw = w_oihw.shape
        blk = w_oihw.reshape(o, c * kh * kw)          # rows=out_ch, cols=(c,ki,kj)
        blk = jnp.pad(blk, ((0, 32 - o), (0, k_pad - c * kh * kw)))
        # Block-diagonal: one copy per pool offset -> (128, 4*k_pad).
        return jnp.kron(jnp.eye(4, dtype=blk.dtype), blk).astype(jnp.bfloat16)

    def conv_bias(b):
        return jnp.pad(b, (0, 32 - b.shape[0])).astype(jnp.float32)[:, None]

    w1 = jnp.pad(P["fc1_w"].T, ((0, K_FC1_PAD - 5184), (0, 0))).astype(jnp.bfloat16)
    w3 = jnp.pad(P["fc3_w"].T, ((0, 0), (0, LANES - 2))).astype(jnp.bfloat16)
    return {
        "conv1_w": conv_wt(P["conv1_w"], K1_PAD),      # (128, 128) bf16
        "conv1_b": conv_bias(P["conv1_b"]),            # (32, 1)   f32
        "conv2_w": conv_wt(P["conv2_w"], K2_PAD),      # (128, 640) bf16
        "conv2_b": conv_bias(P["conv2_b"]),
        "fc1_w": w1,                                   # (5376, 512) bf16
        "fc1_b": P["fc1_b"][None, :].astype(jnp.float32),
        "fc2_w": P["fc2_w"].T.astype(jnp.bfloat16),    # (512, 128) bf16
        "fc2_b": P["fc2_b"][None, :].astype(jnp.float32),
        "fc3_w": w3,                                   # (128, 128) bf16
        "fc3_b": jnp.pad(P["fc3_b"], (0, LANES - 2))[None, :].astype(jnp.float32),
    }


# ----------------------------------------------------------------------------
# Forward pass (Pallas path).
# ----------------------------------------------------------------------------
def forward(x, KP):
    """x: (B, 1, 84, 84) NCHW float32 -> (B, 2) logits."""
    B = x.shape[0]

    # conv1 (1->6, 5x5) + ReLU + 2x2 pool, one fused kernel per image.
    p1 = _pool_grouped_patches_t(x, 5, K1_PAD)                    # (B, 128, 1600)
    y1 = conv_relu_pool(p1, KP["conv1_w"], KP["conv1_b"])         # (B, 16, 1600)

    # conv2 (6->16, 5x5) + ReLU + 2x2 pool.
    p2 = _pool_grouped_patches_t(y1[:, :6].reshape(B, 6, 40, 40), 5, K2_PAD)
    y2 = conv_relu_pool(p2, KP["conv2_w"], KP["conv2_b"])         # (B, 16, 324)

    # (c, h, w) flatten order == torch.flatten on NCHW, so fc1_w.T is used as is.
    f = y2.reshape(B, 16 * 324)                                   # (B, 5184) bf16
    f = jnp.pad(f, ((0, 0), (0, K_FC1_PAD - 5184)))               # (B, 5376) bf16

    out = fc_fused(f, KP["fc1_w"], KP["fc1_b"], KP["fc2_w"], KP["fc2_b"],
                   KP["fc3_w"], KP["fc3_b"], k_chunk=FC1_K_CHUNK)  # (B, 128)
    return out[:, :2]


# ----------------------------------------------------------------------------
# Pure-JAX reference (mirrors the kernel's bf16 operand rounding).
# ----------------------------------------------------------------------------
def ref_forward(x, P):
    dn = ("NCHW", "OIHW", "NCHW")

    def bf(a):
        return a.astype(jnp.bfloat16).astype(jnp.float32)

    y = jax.lax.conv_general_dilated(bf(x), bf(P["conv1_w"]), (1, 1), "VALID",
                                     dimension_numbers=dn)
    y = jax.nn.relu(y + P["conv1_b"][None, :, None, None])
    y = jax.lax.reduce_window(y, -jnp.inf, jax.lax.max,
                              (1, 1, 2, 2), (1, 1, 2, 2), "VALID")
    y = jax.lax.conv_general_dilated(bf(y), bf(P["conv2_w"]), (1, 1), "VALID",
                                     dimension_numbers=dn)
    y = jax.nn.relu(y + P["conv2_b"][None, :, None, None])
    y = jax.lax.reduce_window(y, -jnp.inf, jax.lax.max,
                              (1, 1, 2, 2), (1, 1, 2, 2), "VALID")
    y = bf(y).reshape(y.shape[0], -1)
    y = bf(jax.nn.relu(y @ bf(P["fc1_w"]).T + P["fc1_b"]))
    y = bf(jax.nn.relu(y @ bf(P["fc2_w"]).T + P["fc2_b"]))
    return y @ bf(P["fc3_w"]).T + P["fc3_b"]


# ----------------------------------------------------------------------------
# Deterministic parameter init (xavier-normal-like weights; small random
# biases are used here -- instead of torch's zero init -- purely to exercise
# the kernels' bias paths in the correctness check).
# ----------------------------------------------------------------------------
def make_params(key):
    ks = jax.random.split(key, 10)

    def xavier(k, shape, fan_in, fan_out):
        std = (2.0 / (fan_in + fan_out)) ** 0.5
        return std * jax.random.normal(k, shape, dtype=jnp.float32)

    def small(k, n):
        return 0.05 * jax.random.normal(k, (n,), dtype=jnp.float32)

    return {
        "conv1_w": xavier(ks[0], (6, 1, 5, 5), 25, 150),
        "conv1_b": small(ks[1], 6),
        "conv2_w": xavier(ks[2], (16, 6, 5, 5), 150, 400),
        "conv2_b": small(ks[3], 16),
        "fc1_w": xavier(ks[4], (512, 5184), 5184, 512),
        "fc1_b": small(ks[5], 512),
        "fc2_w": xavier(ks[6], (128, 512), 512, 128),
        "fc2_b": small(ks[7], 128),
        "fc3_w": xavier(ks[8], (2, 128), 128, 2),
        "fc3_b": small(ks[9], 2),
    }


if __name__ == "__main__":
    key = jax.random.PRNGKey(0)
    k_params, k_x = jax.random.split(key)
    params = make_params(k_params)
    kparams = prepare_params(params)

    # fc1 expects 5184 = 16 * 18 * 18 features -> input spatial size must be 84.
    x = jax.random.normal(k_x, (2, 1, 84, 84), dtype=jnp.float32)

    out = jax.jit(forward)(x, kparams)
    out = jax.block_until_ready(out)
    assert out.shape == (2, 2), out.shape

    ref = jax.jit(ref_forward)(x, params)
    ref = jax.block_until_ready(ref)
    assert jnp.allclose(out, ref, rtol=2e-2, atol=2e-2), (out, ref)

    print("KERNEL_OK")
</pallas_src>

<mosaic_0001>
module attributes {stable_mosaic.version = 11 : i64} {
  func.func @_conv_relu_pool_kernel(%arg0: i32, %arg1: memref<1x128x1600xbf16, #tpu.memory_space<vmem>>, %arg2: memref<128x128xbf16, #tpu.memory_space<vmem>>, %arg3: memref<32x1xf32, #tpu.memory_space<vmem>>, %arg4: memref<1x16x1600xbf16, #tpu.memory_space<vmem>>) attributes {dimension_semantics = [#tpu.dimension_semantics<parallel>], iteration_bounds = array<i64: 2>, scalar_prefetch = 0 : i64, scratch_operands = 0 : i64, tpu.core_type = #tpu.core_type<tc>, window_params = [{transform_indices = @transform_0, window_bounds = array<i64: 1, 128, 1600>}, {pipeline_mode = #tpu.pipeline_mode<synchronous>, transform_indices = @transform_1, window_bounds = array<i64: 128, 128>}, {pipeline_mode = #tpu.pipeline_mode<synchronous>, transform_indices = @transform_2, window_bounds = array<i64: 32, 1>}, {transform_indices = @transform_3, window_bounds = array<i64: 1, 16, 1600>}]} {
    %c0 = arith.constant 0 : index
    %c0_0 = arith.constant 0 : index
    %0 = vector.load %arg2[%c0, %c0_0] : memref<128x128xbf16, #tpu.memory_space<vmem>>, vector<128x128xbf16>
    %c0_1 = arith.constant 0 : index
    %c0_2 = arith.constant 0 : index
    %c0_3 = arith.constant 0 : index
    %1 = vector.load %arg1[%c0_1, %c0_2, %c0_3] : memref<1x128x1600xbf16, #tpu.memory_space<vmem>>, vector<1x128x1600xbf16>
    %2 = vector.shape_cast %1 : vector<1x128x1600xbf16> to vector<128x1600xbf16>
    %cst = arith.constant dense<0.000000e+00> : vector<128x1600xf32>
    %3 = tpu.matmul %0, %2, %cst {dimension_numbers = #tpu.dot_dimension_numbers<[1], [0], [0], [1], [0, 0, 1, 1], [], []>} : vector<128x128xbf16>, vector<128x1600xbf16>, vector<128x1600xf32> -> vector<128x1600xf32>
    %4 = vector.extract_strided_slice %3 {offsets = [0, 0], sizes = [32, 1600], strides = [1, 1]} : vector<128x1600xf32> to vector<32x1600xf32>
    %5 = vector.extract_strided_slice %3 {offsets = [32, 0], sizes = [32, 1600], strides = [1, 1]} : vector<128x1600xf32> to vector<32x1600xf32>
    %6 = arith.maximumf %4, %5 : vector<32x1600xf32>
    %7 = vector.extract_strided_slice %3 {offsets = [64, 0], sizes = [32, 1600], strides = [1, 1]} : vector<128x1600xf32> to vector<32x1600xf32>
    %8 = vector.extract_strided_slice %3 {offsets = [96, 0], sizes = [32, 1600], strides = [1, 1]} : vector<128x1600xf32> to vector<32x1600xf32>
    %9 = arith.maximumf %7, %8 : vector<32x1600xf32>
    %10 = arith.maximumf %6, %9 : vector<32x1600xf32>
    %c0_4 = arith.constant 0 : index
    %c0_5 = arith.constant 0 : index
    %11 = vector.load %arg3[%c0_4, %c0_5] : memref<32x1xf32, #tpu.memory_space<vmem>>, vector<32x1xf32>
    %12 = vector.broadcast %11 : vector<32x1xf32> to vector<32x1600xf32>
    %13 = arith.addf %10, %12 : vector<32x1600xf32>
    %cst_6 = arith.constant 0.000000e+00 : f32
    %14 = vector.broadcast %cst_6 : f32 to vector<32x1600xf32>
    %15 = arith.maximumf %13, %14 : vector<32x1600xf32>
    %16 = vector.extract_strided_slice %15 {offsets = [0, 0], sizes = [16, 1600], strides = [1, 1]} : vector<32x1600xf32> to vector<16x1600xf32>
    %17 = arith.truncf %16 : vector<16x1600xf32> to vector<16x1600xbf16>
    %c0_7 = arith.constant 0 : index
    %c0_8 = arith.constant 0 : index
    %c0_9 = arith.constant 0 : index
    %18 = vector.load %arg4[%c0_7, %c0_8, %c0_9] : memref<1x16x1600xbf16, #tpu.memory_space<vmem>>, vector<1x16x1600xbf16>
    %19 = vector.shape_cast %18 : vector<1x16x1600xbf16> to vector<16x1600xbf16>
    %20 = vector.shape_cast %17 : vector<16x1600xbf16> to vector<1x16x1600xbf16>
    tpu.vector_store %arg4[%c0_7, %c0_8, %c0_9], %20 {strides = array<i32>} : memref<1x16x1600xbf16, #tpu.memory_space<vmem>>, vector<1x16x1600xbf16>,
    return
  }
  func.func @transform_0(%arg0: i32) -> (i32, i32, i32) {
    %c0_i32 = arith.constant 0 : i32
    %c0_i32_0 = arith.constant 0 : i32
    %c0_i32_1 = arith.constant 0 : i32
    return %arg0, %c0_i32, %c0_i32_0 : i32, i32, i32
  }
  func.func @transform_1(%arg0: i32) -> (i32, i32) {
    %c0_i32 = arith.constant 0 : i32
    %c0_i32_0 = arith.constant 0 : i32
    %c0_i32_1 = arith.constant 0 : i32
    return %c0_i32, %c0_i32_0 : i32, i32
  }
  func.func @transform_2(%arg0: i32) -> (i32, i32) {
    %c0_i32 = arith.constant 0 : i32
    %c0_i32_0 = arith.constant 0 : i32
    %c0_i32_1 = arith.constant 0 : i32
    return %c0_i32, %c0_i32_0 : i32, i32
  }
  func.func @transform_3(%arg0: i32) -> (i32, i32, i32) {
    %c0_i32 = arith.constant 0 : i32
    %c0_i32_0 = arith.constant 0 : i32
    %c0_i32_1 = arith.constant 0 : i32
    return %arg0, %c0_i32, %c0_i32_0 : i32, i32, i32
  }
}

module attributes {stable_mosaic.version = 11 : i64} {
  func.func @_conv_relu_pool_kernel(%arg0: i32, %arg1: memref<1x640x324xbf16, #tpu.memory_space<vmem>>, %arg2: memref<128x640xbf16, #tpu.memory_space<vmem>>, %arg3: memref<32x1xf32, #tpu.memory_space<vmem>>, %arg4: memref<1x16x324xbf16, #tpu.memory_space<vmem>>) attributes {dimension_semantics = [#tpu.dimension_semantics<parallel>], iteration_bounds = array<i64: 2>, scalar_prefetch = 0 : i64, scratch_operands = 0 : i64, tpu.core_type = #tpu.core_type<tc>, window_params = [{transform_indices = @transform_0, window_bounds = array<i64: 1, 640, 324>}, {pipeline_mode = #tpu.pipeline_mode<synchronous>, transform_indices = @transform_1, window_bounds = array<i64: 128, 640>}, {pipeline_mode = #tpu.pipeline_mode<synchronous>, transform_indices = @transform_2, window_bounds = array<i64: 32, 1>}, {transform_indices = @transform_3, window_bounds = array<i64: 1, 16, 324>}]} {
    %c0 = arith.constant 0 : index
    %c0_0 = arith.constant 0 : index
    %0 = vector.load %arg2[%c0, %c0_0] : memref<128x640xbf16, #tpu.memory_space<vmem>>, vector<128x640xbf16>
    %c0_1 = arith.constant 0 : index
    %c0_2 = arith.constant 0 : index
    %c0_3 = arith.constant 0 : index
    %1 = vector.load %arg1[%c0_1, %c0_2, %c0_3] : memref<1x640x324xbf16, #tpu.memory_space<vmem>>, vector<1x640x324xbf16>
    %2 = vector.shape_cast %1 : vector<1x640x324xbf16> to vector<640x324xbf16>
    %cst = arith.constant dense<0.000000e+00> : vector<128x324xf32>
    %3 = tpu.matmul %0, %2, %cst {dimension_numbers = #tpu.dot_dimension_numbers<[1], [0], [0], [1], [0, 0, 1, 1], [], []>} : vector<128x640xbf16>, vector<640x324xbf16>, vector<128x324xf32> -> vector<128x324xf32>
    %4 = vector.extract_strided_slice %3 {offsets = [0, 0], sizes = [32, 324], strides = [1, 1]} : vector<128x324xf32> to vector<32x324xf32>
    %5 = vector.extract_strided_slice %3 {offsets = [32, 0], sizes = [32, 324], strides = [1, 1]} : vector<128x324xf32> to vector<32x324xf32>
    %6 = arith.maximumf %4, %5 : vector<32x324xf32>
    %7 = vector.extract_strided_slice %3 {offsets = [64, 0], sizes = [32, 324], strides = [1, 1]} : vector<128x324xf32> to vector<32x324xf32>
    %8 = vector.extract_strided_slice %3 {offsets = [96, 0], sizes = [32, 324], strides = [1, 1]} : vector<128x324xf32> to vector<32x324xf32>
    %9 = arith.maximumf %7, %8 : vector<32x324xf32>
    %10 = arith.maximumf %6, %9 : vector<32x324xf32>
    %c0_4 = arith.constant 0 : index
    %c0_5 = arith.constant 0 : index
    %11 = vector.load %arg3[%c0_4, %c0_5] : memref<32x1xf32, #tpu.memory_space<vmem>>, vector<32x1xf32>
    %12 = vector.broadcast %11 : vector<32x1xf32> to vector<32x324xf32>
    %13 = arith.addf %10, %12 : vector<32x324xf32>
    %cst_6 = arith.constant 0.000000e+00 : f32
    %14 = vector.broadcast %cst_6 : f32 to vector<32x324xf32>
    %15 = arith.maximumf %13, %14 : vector<32x324xf32>
    %16 = vector.extract_strided_slice %15 {offsets = [0, 0], sizes = [16, 324], strides = [1, 1]} : vector<32x324xf32> to vector<16x324xf32>
    %17 = arith.truncf %16 : vector<16x324xf32> to vector<16x324xbf16>
    %c0_7 = arith.constant 0 : index
    %c0_8 = arith.constant 0 : index
    %c0_9 = arith.constant 0 : index
    %18 = vector.load %arg4[%c0_7, %c0_8, %c0_9] : memref<1x16x324xbf16, #tpu.memory_space<vmem>>, vector<1x16x324xbf16>
    %19 = vector.shape_cast %18 : vector<1x16x324xbf16> to vector<16x324xbf16>
    %20 = vector.shape_cast %17 : vector<16x324xbf16> to vector<1x16x324xbf16>
    tpu.vector_store %arg4[%c0_7, %c0_8, %c0_9], %20 {strides = array<i32>} : memref<1x16x324xbf16, #tpu.memory_space<vmem>>, vector<1x16x324xbf16>,
    return
  }
  func.func @transform_0(%arg0: i32) -> (i32, i32, i32) {
    %c0_i32 = arith.constant 0 : i32
    %c0_i32_0 = arith.constant 0 : i32
    %c0_i32_1 = arith.constant 0 : i32
    return %arg0, %c0_i32, %c0_i32_0 : i32, i32, i32
  }
  func.func @transform_1(%arg0: i32) -> (i32, i32) {
    %c0_i32 = arith.constant 0 : i32
    %c0_i32_0 = arith.constant 0 : i32
    %c0_i32_1 = arith.constant 0 : i32
    return %c0_i32, %c0_i32_0 : i32, i32
  }
  func.func @transform_2(%arg0: i32) -> (i32, i32) {
    %c0_i32 = arith.constant 0 : i32
    %c0_i32_0 = arith.constant 0 : i32
    %c0_i32_1 = arith.constant 0 : i32
    return %c0_i32, %c0_i32_0 : i32, i32
  }
  func.func @transform_3(%arg0: i32) -> (i32, i32, i32) {
    %c0_i32 = arith.constant 0 : i32
    %c0_i32_0 = arith.constant 0 : i32
    %c0_i32_1 = arith.constant 0 : i32
    return %arg0, %c0_i32, %c0_i32_0 : i32, i32, i32
  }
}

module attributes {stable_mosaic.version = 11 : i64} {
  func.func @_fc_fused_kernel(%arg0: i32, %arg1: memref<2x2688xbf16, #tpu.memory_space<vmem>>, %arg2: memref<2688x512xbf16, #tpu.memory_space<vmem>>, %arg3: memref<1x512xf32, #tpu.memory_space<vmem>>, %arg4: memref<512x128xbf16, #tpu.memory_space<vmem>>, %arg5: memref<1x128xf32, #tpu.memory_space<vmem>>, %arg6: memref<128x128xbf16, #tpu.memory_space<vmem>>, %arg7: memref<1x128xf32, #tpu.memory_space<vmem>>, %arg8: memref<2x128xf32, #tpu.memory_space<vmem>>, %arg9: memref<2x512xf32, #tpu.memory_space<vmem>>) attributes {dimension_semantics = [#tpu.dimension_semantics<arbitrary>], iteration_bounds = array<i64: 2>, scalar_prefetch = 0 : i64, scratch_operands = 1 : i64, tpu.core_type = #tpu.core_type<tc>, window_params = [{transform_indices = @transform_0, window_bounds = array<i64: 2, 2688>}, {transform_indices = @transform_1, window_bounds = array<i64: 2688, 512>}, {pipeline_mode = #tpu.pipeline_mode<synchronous>, transform_indices = @transform_2, window_bounds = array<i64: 1, 512>}, {pipeline_mode = #tpu.pipeline_mode<synchronous>, transform_indices = @transform_3, window_bounds = array<i64: 512, 128>}, {pipeline_mode = #tpu.pipeline_mode<synchronous>, transform_indices = @transform_4, window_bounds = array<i64: 1, 128>}, {pipeline_mode = #tpu.pipeline_mode<synchronous>, transform_indices = @transform_5, window_bounds = array<i64: 128, 128>}, {pipeline_mode = #tpu.pipeline_mode<synchronous>, transform_indices = @transform_6, window_bounds = array<i64: 1, 128>}, {pipeline_mode = #tpu.pipeline_mode<synchronous>, transform_indices = @transform_7, window_bounds = array<i64: 2, 128>}]} {
    %c0_i32 = arith.constant 0 : i32
    %0 = arith.cmpi eq, %arg0, %c0_i32 : i32
    %1 = arith.extui %0 : i1 to i32
    %c0_i32_0 = arith.constant 0 : i32
    %2 = arith.cmpi ne, %1, %c0_i32_0 : i32
    scf.if %2 {
      %cst_9 = arith.constant 0.000000e+00 : f32
      %12 = vector.broadcast %cst_9 : f32 to vector<2x512xf32>
      %c0_10 = arith.constant 0 : index
      %c0_11 = arith.constant 0 : index
      %13 = vector.load %arg9[%c0_10, %c0_11] : memref<2x512xf32, #tpu.memory_space<vmem>>, vector<2x512xf32>
      tpu.vector_store %arg9[%c0_10, %c0_11], %12 {strides = array<i32>} : memref<2x512xf32, #tpu.memory_space<vmem>>, vector<2x512xf32>,
    } else {
    }
    %c0 = arith.constant 0 : index
    %c0_1 = arith.constant 0 : index
    %3 = vector.load %arg9[%c0, %c0_1] : memref<2x512xf32, #tpu.memory_space<vmem>>, vector<2x512xf32>
    %c0_2 = arith.constant 0 : index
    %c0_3 = arith.constant 0 : index
    %4 = vector.load %arg1[%c0_2, %c0_3] : memref<2x2688xbf16, #tpu.memory_space<vmem>>, vector<2x2688xbf16>
    %c0_4 = arith.constant 0 : index
    %c0_5 = arith.constant 0 : index
    %5 = vector.load %arg2[%c0_4, %c0_5] : memref<2688x512xbf16, #tpu.memory_space<vmem>>, vector<2688x512xbf16>
    %cst = arith.constant dense<0.000000e+00> : vector<2x512xf32>
    %6 = tpu.matmul %4, %5, %cst {dimension_numbers = #tpu.dot_dimension_numbers<[1], [0], [0], [1], [0, 0, 1, 1], [], []>} : vector<2x2688xbf16>, vector<2688x512xbf16>, vector<2x512xf32> -> vector<2x512xf32>
    %7 = arith.addf %3, %6 : vector<2x512xf32>
    %c0_6 = arith.constant 0 : index
    %c0_7 = arith.constant 0 : index
    %8 = vector.load %arg9[%c0_6, %c0_7] : memref<2x512xf32, #tpu.memory_space<vmem>>, vector<2x512xf32>
    tpu.vector_store %arg9[%c0_6, %c0_7], %7 {strides = array<i32>} : memref<2x512xf32, #tpu.memory_space<vmem>>, vector<2x512xf32>,
    %c1_i32 = arith.constant 1 : i32
    %9 = arith.cmpi eq, %arg0, %c1_i32 : i32
    %10 = arith.extui %9 : i1 to i32
    %c0_i32_8 = arith.constant 0 : i32
    %11 = arith.cmpi ne, %10, %c0_i32_8 : i32
    scf.if %11 {
      %c0_9 = arith.constant 0 : index
      %c0_10 = arith.constant 0 : index
      %12 = vector.load %arg9[%c0_9, %c0_10] : memref<2x512xf32, #tpu.memory_space<vmem>>, vector<2x512xf32>
      %c0_11 = arith.constant 0 : index
      %c0_12 = arith.constant 0 : index
      %13 = vector.load %arg3[%c0_11, %c0_12] : memref<1x512xf32, #tpu.memory_space<vmem>>, vector<1x512xf32>
      %14 = vector.broadcast %13 : vector<1x512xf32> to vector<2x512xf32>
      %15 = arith.addf %12, %14 : vector<2x512xf32>
      %cst_13 = arith.constant 0.000000e+00 : f32
      %16 = vector.broadcast %cst_13 : f32 to vector<2x512xf32>
      %17 = arith.maximumf %15, %16 : vector<2x512xf32>
      %18 = arith.truncf %17 : vector<2x512xf32> to vector<2x512xbf16>
      %c0_14 = arith.constant 0 : index
      %c0_15 = arith.constant 0 : index
      %19 = vector.load %arg4[%c0_14, %c0_15] : memref<512x128xbf16, #tpu.memory_space<vmem>>, vector<512x128xbf16>
      %cst_16 = arith.constant dense<0.000000e+00> : vector<2x128xf32>
      %20 = tpu.matmul %18, %19, %cst_16 {dimension_numbers = #tpu.dot_dimension_numbers<[1], [0], [0], [1], [0, 0, 1, 1], [], []>} : vector<2x512xbf16>, vector<512x128xbf16>, vector<2x128xf32> -> vector<2x128xf32>
      %c0_17 = arith.constant 0 : index
      %c0_18 = arith.constant 0 : index
      %21 = vector.load %arg5[%c0_17, %c0_18] : memref<1x128xf32, #tpu.memory_space<vmem>>, vector<1x128xf32>
      %22 = vector.broadcast %21 : vector<1x128xf32> to vector<2x128xf32>
      %23 = arith.addf %20, %22 : vector<2x128xf32>
      %cst_19 = arith.constant 0.000000e+00 : f32
      %24 = vector.broadcast %cst_19 : f32 to vector<2x128xf32>
      %25 = arith.maximumf %23, %24 : vector<2x128xf32>
      %26 = arith.truncf %25 : vector<2x128xf32> to vector<2x128xbf16>
      %c0_20 = arith.constant 0 : index
      %c0_21 = arith.constant 0 : index
      %27 = vector.load %arg6[%c0_20, %c0_21] : memref<128x128xbf16, #tpu.memory_space<vmem>>, vector<128x128xbf16>
      %cst_22 = arith.constant dense<0.000000e+00> : vector<2x128xf32>
      %28 = tpu.matmul %26, %27, %cst_22 {dimension_numbers = #tpu.dot_dimension_numbers<[1], [0], [0], [1], [0, 0, 1, 1], [], []>} : vector<2x128xbf16>, vector<128x128xbf16>, vector<2x128xf32> -> vector<2x128xf32>
      %c0_23 = arith.constant 0 : index
      %c0_24 = arith.constant 0 : index
      %29 = vector.load %arg7[%c0_23, %c0_24] : memref<1x128xf32, #tpu.memory_space<vmem>>, vector<1x128xf32>
      %30 = vector.broadcast %29 : vector<1x128xf32> to vector<2x128xf32>
      %31 = arith.addf %28, %30 : vector<2x128xf32>
      %c0_25 = arith.constant 0 : index
      %c0_26 = arith.constant 0 : index
      %32 = vector.load %arg8[%c0_25, %c0_26] : memref<2x128xf32, #tpu.memory_space<vmem>>, vector<2x128xf32>
      tpu.vector_store %arg8[%c0_25, %c0_26], %31 {strides = array<i32>} : memref<2x128xf32, #tpu.memory_space<vmem>>, vector<2x128xf32>,
    } else {
    }
    return
  }
  func.func @transform_0(%arg0: i32) -> (i32, i32) {
    %c0_i32 = arith.constant 0 : i32
    %c0_i32_0 = arith.constant 0 : i32
    return %c0_i32, %arg0 : i32, i32
  }
  func.func @transform_1(%arg0: i32) -> (i32, i32) {
    %c0_i32 = arith.constant 0 : i32
    %c0_i32_0 = arith.constant 0 : i32
    return %arg0, %c0_i32 : i32, i32
  }
  func.func @transform_2(%arg0: i32) -> (i32, i32) {
    %c0_i32 = arith.constant 0 : i32
    %c0_i32_0 = arith.constant 0 : i32
    %c0_i32_1 = arith.constant 0 : i32
    return %c0_i32, %c0_i32_0 : i32, i32
  }
  func.func @transform_3(%arg0: i32) -> (i32, i32) {
    %c0_i32 = arith.constant 0 : i32
    %c0_i32_0 = arith.constant 0 : i32
    %c0_i32_1 = arith.constant 0 : i32
    return %c0_i32, %c0_i32_0 : i32, i32
  }
  func.func @transform_4(%arg0: i32) -> (i32, i32) {
    %c0_i32 = arith.constant 0 : i32
    %c0_i32_0 = arith.constant 0 : i32
    %c0_i32_1 = arith.constant 0 : i32
    return %c0_i32, %c0_i32_0 : i32, i32
  }
  func.func @transform_5(%arg0: i32) -> (i32, i32) {
    %c0_i32 = arith.constant 0 : i32
    %c0_i32_0 = arith.constant 0 : i32
    %c0_i32_1 = arith.constant 0 : i32
    return %c0_i32, %c0_i32_0 : i32, i32
  }
  func.func @transform_6(%arg0: i32) -> (i32, i32) {
    %c0_i32 = arith.constant 0 : i32
    %c0_i32_0 = arith.constant 0 : i32
    %c0_i32_1 = arith.constant 0 : i32
    return %c0_i32, %c0_i32_0 : i32, i32
  }
  func.func @transform_7(%arg0: i32) -> (i32, i32) {
    %c0_i32 = arith.constant 0 : i32
    %c0_i32_0 = arith.constant 0 : i32
    %c0_i32_1 = arith.constant 0 : i32
    return %c0_i32, %c0_i32_0 : i32, i32
  }
}

</mosaic_0001>

<llo_original>
// kernel: forward.3
$region0: #{forward.3}
  #allocation0 [shape = 'u32[]', space=smem, size = 0x4, offset = 0x4, fixed_abs, tag = 'smem constant byte address 0x4 - core index']
  #allocation1 [shape = 'u32[144,128]{1,0:T(1,128)}', space=vmem, size = 0x12000, scoped, tag = 'internal scratch']
  %s0 = inlined_call_operand.vmem [shape: bf16[2,128,1600], index: 0, kind: input, shape index: {}]
  %s1 = inlined_call_operand.vmem [shape: bf16[128,128], index: 1, kind: input, shape index: {}]
  %s2 = inlined_call_operand.vmem [shape: f32[32,1], index: 2, kind: input, shape index: {}]
  %s3 = inlined_call_operand.vmem [shape: bf16[2,16,1600], index: 3, kind: output, shape index: {}]
  %s4 = sld [smem:[#allocation0]]
  $region45: #{forward.3} parent=0
    _
  %s6 = ssub.s32 1, %s4
  %s7 = scalar_select 0, %s6, %s4
  loop: start=0, step=1, limit=4
  $region2: #{forward.3} parent=0 // loop_pre_header
    _
  $region3: #{forward.3} parent=0 // loop_header
    %s9 = sphi 0, %s13
    %p10 = scmp.ge.s32.totalorder %s9, 4
    %s19 = sphi 0, %s21
    %s22 = sphi 0, %s19
    %s23 = sphi 0, %s22
    %s39 = sphi 0, %s23
    %s43 = sphi 0, %s43
    %s45 = sphi 0, %s43
    %s46 = sphi 0, %s45
    %s60 = sphi 0, %s46
    %s64 = sphi 0, %s64
    %s66 = sphi 0, %s64
    %s67 = sphi 0, %s66
    %s81 = sphi 0, %s67
    %s87 = sphi 0, %s89
    %s90 = sphi 0, %s87
    %s91 = sphi 0, %s90
    %s107 = sphi 0, %s91
  $region4: #{forward.3} parent=0 // loop_header_branch
    %12 = sbr.rel (%p10) target = $region8
  $region5: #{forward.3} parent=0 // loop_body
    %s14 = ssub.s32 %s9, 1
    %s15 = ssub.s32 %s9, 2
    %s16 = sadd.s32 %s9, 1
    %s17 = ssub.s32 %s9, %s16
    %p18 = scmp.eq.s32.totalorder %s17, 0
    %s20 = sadd.s32 %s19, 1
    %s21 = scalar_select %p18, %s19, %s20
    %p24 = pneg %p18
    %p25 = scmp.eq.s32.totalorder %s9, 1
    %p26 = por %p24, %p25
    %p27 = scmp.ne.s32.totalorder %s19, %s22
    %p28 = scmp.eq.s32.totalorder %s9, 0
    %p29 = por %p27, %p28
    %p30 = scmp.ne.s32.totalorder %s19, %s22
    %p31 = scmp.eq.s32.totalorder %s14, 1
    %p32 = por %p30, %p31
    %p33 = scmp.ne.s32.totalorder %s22, %s23
    %p34 = scmp.eq.s32.totalorder %s14, 0
    %p35 = por %p33, %p34
    %p36 = scmp.ne.s32.totalorder %s22, %s23
    %p37 = scmp.eq.s32.totalorder %s15, 1
    %p38 = por %p36, %p37
    %p40 = scmp.ne.s32.totalorder %s23, %s39
    %p41 = scmp.eq.s32.totalorder %s15, 0
    %p42 = por %p40, %p41
    %s44 = sadd.s32 %s43, 1
    %p47 = scmp.eq.s32.totalorder %s9, 1
    %p48 = scmp.ne.s32.totalorder %s43, %s45
    %p49 = scmp.eq.s32.totalorder %s9, 0
    %p50 = por %p48, %p49
    %p51 = scmp.ne.s32.totalorder %s43, %s45
    %p52 = scmp.eq.s32.totalorder %s14, 1
    %p53 = por %p51, %p52
    %p54 = scmp.ne.s32.totalorder %s45, %s46
    %p55 = scmp.eq.s32.totalorder %s14, 0
    %p56 = por %p54, %p55
    %p57 = scmp.ne.s32.totalorder %s45, %s46
    %p58 = scmp.eq.s32.totalorder %s15, 1
    %p59 = por %p57, %p58
    %p61 = scmp.ne.s32.totalorder %s46, %s60
    %p62 = scmp.eq.s32.totalorder %s15, 0
    %p63 = por %p61, %p62
    %s65 = sadd.s32 %s64, 1
    %p68 = scmp.eq.s32.totalorder %s9, 1
    %p69 = scmp.ne.s32.totalorder %s64, %s66
    %p70 = scmp.eq.s32.totalorder %s9, 0
    %p71 = por %p69, %p70
    %p72 = scmp.ne.s32.totalorder %s64, %s66
    %p73 = scmp.eq.s32.totalorder %s14, 1
    %p74 = por %p72, %p73
    %p75 = scmp.ne.s32.totalorder %s66, %s67
    %p76 = scmp.eq.s32.totalorder %s14, 0
    %p77 = por %p75, %p76
    %p78 = scmp.ne.s32.totalorder %s66, %s67
    %p79 = scmp.eq.s32.totalorder %s15, 1
    %p80 = por %p78, %p79
    %p82 = scmp.ne.s32.totalorder %s67, %s81
    %p83 = scmp.eq.s32.totalorder %s15, 0
    %p84 = por %p82, %p83
    %s85 = ssub.s32 %s9, %s16
    %p86 = scmp.eq.s32.totalorder %s85, 0
    %s88 = sadd.s32 %s87, 1
    %s89 = scalar_select %p86, %s87, %s88
    %p92 = pneg %p86
    %p93 = scmp.eq.s32.totalorder %s9, 1
    %p94 = por %p92, %p93
    %p95 = scmp.ne.s32.totalorder %s87, %s90
    %p96 = scmp.eq.s32.totalorder %s9, 0
    %p97 = por %p95, %p96
    %p98 = scmp.ne.s32.totalorder %s87, %s90
    %p99 = scmp.eq.s32.totalorder %s14, 1
    %p100 = por %p98, %p99
    %p101 = scmp.ne.s32.totalorder %s90, %s91
    %p102 = scmp.eq.s32.totalorder %s14, 0
    %p103 = por %p101, %p102
    %p104 = scmp.ne.s32.totalorder %s90, %s91
    %p105 = scmp.eq.s32.totalorder %s15, 1
    %p106 = por %p104, %p105
    %p108 = scmp.ne.s32.totalorder %s91, %s107
    %p109 = scmp.eq.s32.totalorder %s15, 0
    %p110 = por %p108, %p109
    %p111 = scmp.le.s32.totalorder 1, %s9
    %p112 = scmp.lt.s32.totalorder %s9, 3
    %p113 = pnand %p111, %p112
    %p114 = pneg %p113
    // Predicated region
    $region9: #{forward.3} parent=5 // pred_check
      _
    $region10: #{forward.3} parent=5 // pred_check_branch
      %116 = sbr.rel (%p113) target = $region12
    $region11: #{forward.3} parent=5 // pred_region
      %s117 = ssub.s32 %s9, 1
      // Predicated region
      $region13: #{forward.3} parent=11 // pred_check
        %p118 = pneg %p56
      $region14: #{forward.3} parent=11 // pred_check_branch
        %120 = sbr.rel (%p118) target = $region16
      $region15: #{forward.3} parent=11 // pred_region
        _
      $region16: #{forward.3} parent=11 // pred_fallthru
        _
      // Predicated region
      $region17: #{forward.3} parent=11 // pred_check
        %p121 = pneg %p77
      $region18: #{forward.3} parent=11 // pred_check_branch
        %123 = sbr.rel (%p121) target = $region20
      $region19: #{forward.3} parent=11 // pred_region
        _
      $region20: #{forward.3} parent=11 // pred_fallthru
        _
    $region12: #{forward.3} parent=5 // pred_fallthru
      _
    %p124 = scmp.lt.s32.totalorder %s9, 2
    // Predicated region
    $region21: #{forward.3} parent=5 // pred_check
      %p125 = pneg %p124
    $region22: #{forward.3} parent=5 // pred_check_branch
      %127 = sbr.rel (%p125) target = $region24
    $region23: #{forward.3} parent=5 // pred_region
      // Predicated region
      $region25: #{forward.3} parent=23 // pred_check
        %p128 = pneg %p29
      $region26: #{forward.3} parent=23 // pred_check_branch
        %130 = sbr.rel (%p128) target = $region28
      $region27: #{forward.3} parent=23 // pred_region
        %p131 = scmp.lt.s32.totalorder %s9, 1
        %s132 = scalar_select %p131, %s9, 1
        %s133 = smul.addr %s132, 208
        %s134 = smul.addr %s133, 4
        %s135 = scalar_lea.vmem %s0, %s134
      $region28: #{forward.3} parent=23 // pred_fallthru
        _
    $region24: #{forward.3} parent=5 // pred_fallthru
      _
    %p136 = scmp.le.s32.totalorder 1, %s9
    %p137 = scmp.lt.s32.totalorder %s9, 3
    %p138 = pnand %p136, %p137
    %p139 = pneg %p138
    // Predicated region
    $region29: #{forward.3} parent=5 // pred_check
      _
    $region30: #{forward.3} parent=5 // pred_check_branch
      %141 = sbr.rel (%p138) target = $region32
    $region31: #{forward.3} parent=5 // pred_region
      %s142 = ssub.s32 %s9, 1
      %p143 = scmp.lt.s32.totalorder %s14, 1
      %s144 = scalar_select %p143, %s14, 1
      %s145 = smul.addr %s144, 208
      %s146 = smul.addr %s145, 4
      %s147 = scalar_lea.vmem %s0, %s146
      %p148 = pneg %p35
      %p149 = pneg %p32
      %p150 = pneg %p56
      %p151 = pneg %p53
      %p152 = pneg %p77
      %p153 = pneg %p74
      %p154 = pneg %p103
      %p155 = pneg %p100
      %p156 = scmp.lt.s32.totalorder %s14, 1
      %s157 = scalar_select %p156, %s14, 1
      %s158 = smul.addr %s157, 26
      %s159 = smul.addr %s158, 4
      %s160 = scalar_lea.vmem %s3, %s159
      %p161 = scmp.lt.s32.totalorder %s14, 1
      %s162 = scalar_select %p161, %s14, 1
      %s163 = smul.addr %s162, 208
      %s164 = smul.addr %s163, 4
      %s165 = scalar_lea.vmem %s0, %s164
      %p166 = scmp.lt.s32.totalorder %s14, 1
      %s167 = scalar_select %p166, %s14, 1
      %s168 = smul.addr %s167, 26
      %s169 = smul.addr %s168, 4
      %s170 = scalar_lea.vmem %s3, %s169
      %v172 = vld [vmem:[%s1] sm:$0xf]
      %v173 = vld [vmem:[%s1 + $0x4] sm:$0xf]
      %v174 = vld [vmem:[%s1 + $0x8] sm:$0xf]
      %v175 = vld [vmem:[%s1 + $0xc] sm:$0xf]
      %v176 = vld [vmem:[%s1 + $0x10] sm:$0xf]
      %v177 = vld [vmem:[%s1 + $0x14] sm:$0xf]
      %v178 = vld [vmem:[%s1 + $0x18] sm:$0xf]
      %v179 = vld [vmem:[%s1 + $0x1c] sm:$0xf]
      %v180 = vld [vmem:[%s1 + $0x20] sm:$0xf]
      %v181 = vld [vmem:[%s1 + $0x24] sm:$0xf]
      %v182 = vld [vmem:[%s1 + $0x28] sm:$0xf]
      %v183 = vld [vmem:[%s1 + $0x2c] sm:$0xf]
      %v184 = vld [vmem:[%s1 + $0x30] sm:$0xf]
      %v185 = vld [vmem:[%s1 + $0x34] sm:$0xf]
      %v186 = vld [vmem:[%s1 + $0x38] sm:$0xf]
      %v187 = vld [vmem:[%s1 + $0x3c] sm:$0xf]
      %v188 = vld [vmem:[%s165] sm:$0xff]
      %v189 = vld [vmem:[%s165 + $0x8] sm:$0xff]
      %v190 = vld [vmem:[%s165 + $0x10] sm:$0xff]
      %v191 = vld [vmem:[%s165 + $0x18] sm:$0xff]
      %v192 = vld [vmem:[%s165 + $0x20] sm:$0xff]
      %v193 = vld [vmem:[%s165 + $0x28] sm:$0xff]
      %v194 = vld [vmem:[%s165 + $0x30] sm:$0xf]
      %v195 = vld [vmem:[%s165 + $0x34] sm:$0xff]
      %v196 = vld [vmem:[%s165 + $0x3c] sm:$0xff]
      %v197 = vld [vmem:[%s165 + $0x44] sm:$0xff]
      %v198 = vld [vmem:[%s165 + $0x4c] sm:$0xff]
      %v199 = vld [vmem:[%s165 + $0x54] sm:$0xff]
      %v200 = vld [vmem:[%s165 + $0x5c] sm:$0xff]
      %v201 = vld [vmem:[%s165 + $0x64] sm:$0xf]
      %v202 = vld [vmem:[%s165 + $0x68] sm:$0xff]
      %v203 = vld [vmem:[%s165 + $0x70] sm:$0xff]
      %v204 = vld [vmem:[%s165 + $0x78] sm:$0xff]
      %v205 = vld [vmem:[%s165 + $0x80] sm:$0xff]
      %v206 = vld [vmem:[%s165 + $0x88] sm:$0xff]
      %v207 = vld [vmem:[%s165 + $0x90] sm:$0xff]
      %v208 = vld [vmem:[%s165 + $0x98] sm:$0xf]
      %v209 = vld [vmem:[%s165 + $0x9c] sm:$0xff]
      %v210 = vld [vmem:[%s165 + $0xa4] sm:$0xff]
      %v211 = vld [vmem:[%s165 + $0xac] sm:$0xff]
      %v212 = vld [vmem:[%s165 + $0xb4] sm:$0xff]
      %v213 = vld [vmem:[%s165 + $0xbc] sm:$0xff]
      %v214 = vld [vmem:[%s165 + $0xc4] sm:$0xff]
      %v215 = vld [vmem:[%s165 + $0xcc] sm:$0xf]
      %v216 = vld [vmem:[%s165 + $0xd0] sm:$0xff]
      %v217 = vld [vmem:[%s165 + $0xd8] sm:$0xff]
      %v218 = vld [vmem:[%s165 + $0xe0] sm:$0xff]
      %v219 = vld [vmem:[%s165 + $0xe8] sm:$0xff]
      %v220 = vld [vmem:[%s165 + $0xf0] sm:$0xff]
      %v221 = vld [vmem:[%s165 + $0xf8] sm:$0xff]
      %v222 = vld [vmem:[%s165 + $0x100] sm:$0xf]
      %v223 = vld [vmem:[%s165 + $0x104] sm:$0xff]
      %v224 = vld [vmem:[%s165 + $0x10c] sm:$0xff]
      %v225 = vld [vmem:[%s165 + $0x114] sm:$0xff]
      %v226 = vld [vmem:[%s165 + $0x11c] sm:$0xff]
      %v227 = vld [vmem:[%s165 + $0x124] sm:$0xff]
      %v228 = vld [vmem:[%s165 + $0x12c] sm:$0xff]
      %v229 = vld [vmem:[%s165 + $0x134] sm:$0xf]
      %v230 = vld [vmem:[%s165 + $0x138] sm:$0xff]
      %v231 = vld [vmem:[%s165 + $0x140] sm:$0xff]
      %v232 = vld [vmem:[%s165 + $0x148] sm:$0xff]
      %v233 = vld [vmem:[%s165 + $0x150] sm:$0xff]
      %v234 = vld [vmem:[%s165 + $0x158] sm:$0xff]
      %v235 = vld [vmem:[%s165 + $0x160] sm:$0xff]
      %v236 = vld [vmem:[%s165 + $0x168] sm:$0xf]
      %v237 = vld [vmem:[%s165 + $0x16c] sm:$0xff]
      %v238 = vld [vmem:[%s165 + $0x174] sm:$0xff]
      %v239 = vld [vmem:[%s165 + $0x17c] sm:$0xff]
      %v240 = vld [vmem:[%s165 + $0x184] sm:$0xff]
      %v241 = vld [vmem:[%s165 + $0x18c] sm:$0xff]
      %v242 = vld [vmem:[%s165 + $0x194] sm:$0xff]
      %v243 = vld [vmem:[%s165 + $0x19c] sm:$0xf]
      %v244 = vld [vmem:[%s165 + $0x1a0] sm:$0xff]
      %v245 = vld [vmem:[%s165 + $0x1a8] sm:$0xff]
      %v246 = vld [vmem:[%s165 + $0x1b0] sm:$0xff]
      %v247 = vld [vmem:[%s165 + $0x1b8] sm:$0xff]
      %v248 = vld [vmem:[%s165 + $0x1c0] sm:$0xff]
      %v249 = vld [vmem:[%s165 + $0x1c8] sm:$0xff]
      %v250 = vld [vmem:[%s165 + $0x1d0] sm:$0xf]
      %v251 = vld [vmem:[%s165 + $0x1d4] sm:$0xff]
      %v252 = vld [vmem:[%s165 + $0x1dc] sm:$0xff]
      %v253 = vld [vmem:[%s165 + $0x1e4] sm:$0xff]
      %v254 = vld [vmem:[%s165 + $0x1ec] sm:$0xff]
      %v255 = vld [vmem:[%s165 + $0x1f4] sm:$0xff]
      %v256 = vld [vmem:[%s165 + $0x1fc] sm:$0xff]
      %v257 = vld [vmem:[%s165 + $0x204] sm:$0xf]
      %v258 = vld [vmem:[%s165 + $0x208] sm:$0xff]
      %v259 = vld [vmem:[%s165 + $0x210] sm:$0xff]
      %v260 = vld [vmem:[%s165 + $0x218] sm:$0xff]
      %v261 = vld [vmem:[%s165 + $0x220] sm:$0xff]
      %v262 = vld [vmem:[%s165 + $0x228] sm:$0xff]
      %v263 = vld [vmem:[%s165 + $0x230] sm:$0xff]
      %v264 = vld [vmem:[%s165 + $0x238] sm:$0xf]
      %v265 = vld [vmem:[%s165 + $0x23c] sm:$0xff]
      %v266 = vld [vmem:[%s165 + $0x244] sm:$0xff]
      %v267 = vld [vmem:[%s165 + $0x24c] sm:$0xff]
      %v268 = vld [vmem:[%s165 + $0x254] sm:$0xff]
      %v269 = vld [vmem:[%s165 + $0x25c] sm:$0xff]
      %v270 = vld [vmem:[%s165 + $0x264] sm:$0xff]
      %v271 = vld [vmem:[%s165 + $0x26c] sm:$0xf]
      %v272 = vld [vmem:[%s165 + $0x270] sm:$0xff]
      %v273 = vld [vmem:[%s165 + $0x278] sm:$0xff]
      %v274 = vld [vmem:[%s165 + $0x280] sm:$0xff]
      %v275 = vld [vmem:[%s165 + $0x288] sm:$0xff]
      %v276 = vld [vmem:[%s165 + $0x290] sm:$0xff]
      %v277 = vld [vmem:[%s165 + $0x298] sm:$0xff]
      %v278 = vld [vmem:[%s165 + $0x2a0] sm:$0xf]
      %v279 = vld [vmem:[%s165 + $0x2a4] sm:$0xff]
      %v280 = vld [vmem:[%s165 + $0x2ac] sm:$0xff]
      %v281 = vld [vmem:[%s165 + $0x2b4] sm:$0xff]
      %v282 = vld [vmem:[%s165 + $0x2bc] sm:$0xff]
      %v283 = vld [vmem:[%s165 + $0x2c4] sm:$0xff]
      %v284 = vld [vmem:[%s165 + $0x2cc] sm:$0xff]
      %v285 = vld [vmem:[%s165 + $0x2d4] sm:$0xf]
      %v286 = vld [vmem:[%s165 + $0x2d8] sm:$0xff]
      %v287 = vld [vmem:[%s165 + $0x2e0] sm:$0xff]
      %v288 = vld [vmem:[%s165 + $0x2e8] sm:$0xff]
      %v289 = vld [vmem:[%s165 + $0x2f0] sm:$0xff]
      %v290 = vld [vmem:[%s165 + $0x2f8] sm:$0xff]
      %v291 = vld [vmem:[%s165 + $0x300] sm:$0xff]
      %v292 = vld [vmem:[%s165 + $0x308] sm:$0xf]
      %v293 = vld [vmem:[%s165 + $0x30c] sm:$0xff]
      %v294 = vld [vmem:[%s165 + $0x314] sm:$0xff]
      %v295 = vld [vmem:[%s165 + $0x31c] sm:$0xff]
      %v296 = vld [vmem:[%s165 + $0x324] sm:$0xff]
      %v297 = vld [vmem:[%s165 + $0x32c] sm:$0xff]
      %v298 = vld [vmem:[%s165 + $0x334] sm:$0xff]
      %v299 = vld [vmem:[%s165 + $0x33c] sm:$0xf]
      %v316 = vunpack.c.l.b16 %v172
      %v317 = vunpack.c.l.b16 %v173
      %v318 = vunpack.c.l.b16 %v174
      %v319 = vunpack.c.l.b16 %v175
      %v320 = vunpack.c.l.b16 %v176
      %v321 = vunpack.c.l.b16 %v177
      %v322 = vunpack.c.l.b16 %v178
      %v323 = vunpack.c.l.b16 %v179
      %v324 = vunpack.c.l.b16 %v180
      %v325 = vunpack.c.l.b16 %v181
      %v326 = vunpack.c.l.b16 %v182
      %v327 = vunpack.c.l.b16 %v183
      %v328 = vunpack.c.l.b16 %v184
      %v329 = vunpack.c.l.b16 %v185
      %v330 = vunpack.c.l.b16 %v186
      %v331 = vunpack.c.l.b16 %v187
      %v332 = vpack.c.b16 %v317, %v316
      %v333 = vpack.c.b16 %v319, %v318
      %v334 = vpack.c.b16 %v321, %v320
      %v335 = vpack.c.b16 %v323, %v322
      %v336 = vpack.c.b16 %v325, %v324
      %v337 = vpack.c.b16 %v327, %v326
      %v338 = vpack.c.b16 %v329, %v328
      %v339 = vpack.c.b16 %v331, %v330
      %v460 = vunpack.c.l.b16 %v188
      %v461 = vunpack.c.h.b16 %v188
      %v462 = vunpack.c.l.b16 %v189
      %v463 = vunpack.c.h.b16 %v189
      %v464 = vunpack.c.l.b16 %v190
      %v465 = vunpack.c.h.b16 %v190
      %v466 = vunpack.c.l.b16 %v191
      %v467 = vunpack.c.h.b16 %v191
      %v468 = vunpack.c.l.b16 %v192
      %v469 = vunpack.c.h.b16 %v192
      %v470 = vunpack.c.l.b16 %v193
      %v471 = vunpack.c.h.b16 %v193
      %v472 = vunpack.c.l.b16 %v194
      %v473 = vunpack.c.l.b16 %v195
      %v474 = vunpack.c.h.b16 %v195
      %v475 = vunpack.c.l.b16 %v196
      %v476 = vunpack.c.h.b16 %v196
      %v477 = vunpack.c.l.b16 %v197
      %v478 = vunpack.c.h.b16 %v197
      %v479 = vunpack.c.l.b16 %v198
      %v480 = vunpack.c.h.b16 %v198
      %v481 = vunpack.c.l.b16 %v199
      %v482 = vunpack.c.h.b16 %v199
      %v483 = vunpack.c.l.b16 %v200
      %v484 = vunpack.c.h.b16 %v200
      %v485 = vunpack.c.l.b16 %v201
      %v486 = vunpack.c.l.b16 %v202
      %v487 = vunpack.c.h.b16 %v202
      %v488 = vunpack.c.l.b16 %v203
      %v489 = vunpack.c.h.b16 %v203
      %v490 = vunpack.c.l.b16 %v204
      %v491 = vunpack.c.h.b16 %v204
      %v492 = vunpack.c.l.b16 %v205
      %v493 = vunpack.c.h.b16 %v205
      %v494 = vunpack.c.l.b16 %v206
      %v495 = vunpack.c.h.b16 %v206
      %v496 = vunpack.c.l.b16 %v207
      %v497 = vunpack.c.h.b16 %v207
      %v498 = vunpack.c.l.b16 %v208
      %v499 = vunpack.c.l.b16 %v209
      %v500 = vunpack.c.h.b16 %v209
      %v501 = vunpack.c.l.b16 %v210
      %v502 = vunpack.c.h.b16 %v210
      %v503 = vunpack.c.l.b16 %v211
      %v504 = vunpack.c.h.b16 %v211
      %v505 = vunpack.c.l.b16 %v212
      %v506 = vunpack.c.h.b16 %v212
      %v507 = vunpack.c.l.b16 %v213
      %v508 = vunpack.c.h.b16 %v213
      %v509 = vunpack.c.l.b16 %v214
      %v510 = vunpack.c.h.b16 %v214
      %v511 = vunpack.c.l.b16 %v215
      %v512 = vunpack.c.l.b16 %v216
      %v513 = vunpack.c.h.b16 %v216
      %v514 = vunpack.c.l.b16 %v217
      %v515 = vunpack.c.h.b16 %v217
      %v516 = vunpack.c.l.b16 %v218
      %v517 = vunpack.c.h.b16 %v218
      %v518 = vunpack.c.l.b16 %v219
      %v519 = vunpack.c.h.b16 %v219
      %v520 = vunpack.c.l.b16 %v220
      %v521 = vunpack.c.h.b16 %v220
      %v522 = vunpack.c.l.b16 %v221
      %v523 = vunpack.c.h.b16 %v221
      %v524 = vunpack.c.l.b16 %v222
      %v525 = vunpack.c.l.b16 %v223
      %v526 = vunpack.c.h.b16 %v223
      %v527 = vunpack.c.l.b16 %v224
      %v528 = vunpack.c.h.b16 %v224
      %v529 = vunpack.c.l.b16 %v225
      %v530 = vunpack.c.h.b16 %v225
      %v531 = vunpack.c.l.b16 %v226
      %v532 = vunpack.c.h.b16 %v226
      %v533 = vunpack.c.l.b16 %v227
      %v534 = vunpack.c.h.b16 %v227
      %v535 = vunpack.c.l.b16 %v228
      %v536 = vunpack.c.h.b16 %v228
      %v537 = vunpack.c.l.b16 %v229
      %v538 = vunpack.c.l.b16 %v230
      %v539 = vunpack.c.h.b16 %v230
      %v540 = vunpack.c.l.b16 %v231
      %v541 = vunpack.c.h.b16 %v231
      %v542 = vunpack.c.l.b16 %v232
      %v543 = vunpack.c.h.b16 %v232
      %v544 = vunpack.c.l.b16 %v233
      %v545 = vunpack.c.h.b16 %v233
      %v546 = vunpack.c.l.b16 %v234
      %v547 = vunpack.c.h.b16 %v234
      %v548 = vunpack.c.l.b16 %v235
      %v549 = vunpack.c.h.b16 %v235
      %v550 = vunpack.c.l.b16 %v236
      %v551 = vunpack.c.l.b16 %v237
      %v552 = vunpack.c.h.b16 %v237
      %v553 = vunpack.c.l.b16 %v238
      %v554 = vunpack.c.h.b16 %v238
      %v555 = vunpack.c.l.b16 %v239
      %v556 = vunpack.c.h.b16 %v239
      %v557 = vunpack.c.l.b16 %v240
      %v558 = vunpack.c.h.b16 %v240
      %v559 = vunpack.c.l.b16 %v241
      %v560 = vunpack.c.h.b16 %v241
      %v561 = vunpack.c.l.b16 %v242
      %v562 = vunpack.c.h.b16 %v242
      %v563 = vunpack.c.l.b16 %v243
      %v564 = vunpack.c.l.b16 %v244
      %v565 = vunpack.c.h.b16 %v244
      %v566 = vunpack.c.l.b16 %v245
      %v567 = vunpack.c.h.b16 %v245
      %v568 = vunpack.c.l.b16 %v246
      %v569 = vunpack.c.h.b16 %v246
      %v570 = vunpack.c.l.b16 %v247
      %v571 = vunpack.c.h.b16 %v247
      %v572 = vunpack.c.l.b16 %v248
      %v573 = vunpack.c.h.b16 %v248
      %v574 = vunpack.c.l.b16 %v249
      %v575 = vunpack.c.h.b16 %v249
      %v576 = vunpack.c.l.b16 %v250
      %v577 = vunpack.c.l.b16 %v251
      %v578 = vunpack.c.h.b16 %v251
      %v579 = vunpack.c.l.b16 %v252
      %v580 = vunpack.c.h.b16 %v252
      %v581 = vunpack.c.l.b16 %v253
      %v582 = vunpack.c.h.b16 %v253
      %v583 = vunpack.c.l.b16 %v254
      %v584 = vunpack.c.h.b16 %v254
      %v585 = vunpack.c.l.b16 %v255
      %v586 = vunpack.c.h.b16 %v255
      %v587 = vunpack.c.l.b16 %v256
      %v588 = vunpack.c.h.b16 %v256
      %v589 = vunpack.c.l.b16 %v257
      %v590 = vunpack.c.l.b16 %v258
      %v591 = vunpack.c.h.b16 %v258
      %v592 = vunpack.c.l.b16 %v259
      %v593 = vunpack.c.h.b16 %v259
      %v594 = vunpack.c.l.b16 %v260
      %v595 = vunpack.c.h.b16 %v260
      %v596 = vunpack.c.l.b16 %v261
      %v597 = vunpack.c.h.b16 %v261
      %v598 = vunpack.c.l.b16 %v262
      %v599 = vunpack.c.h.b16 %v262
      %v600 = vunpack.c.l.b16 %v263
      %v601 = vunpack.c.h.b16 %v263
      %v602 = vunpack.c.l.b16 %v264
      %v603 = vunpack.c.l.b16 %v265
      %v604 = vunpack.c.h.b16 %v265
      %v605 = vunpack.c.l.b16 %v266
      %v606 = vunpack.c.h.b16 %v266
      %v607 = vunpack.c.l.b16 %v267
      %v608 = vunpack.c.h.b16 %v267
      %v609 = vunpack.c.l.b16 %v268
      %v610 = vunpack.c.h.b16 %v268
      %v611 = vunpack.c.l.b16 %v269
      %v612 = vunpack.c.h.b16 %v269
      %v613 = vunpack.c.l.b16 %v270
      %v614 = vunpack.c.h.b16 %v270
      %v615 = vunpack.c.l.b16 %v271
      %v616 = vunpack.c.l.b16 %v272
      %v617 = vunpack.c.h.b16 %v272
      %v618 = vunpack.c.l.b16 %v273
      %v619 = vunpack.c.h.b16 %v273
      %v620 = vunpack.c.l.b16 %v274
      %v621 = vunpack.c.h.b16 %v274
      %v622 = vunpack.c.l.b16 %v275
      %v623 = vunpack.c.h.b16 %v275
      %v624 = vunpack.c.l.b16 %v276
      %v625 = vunpack.c.h.b16 %v276
      %v626 = vunpack.c.l.b16 %v277
      %v627 = vunpack.c.h.b16 %v277
      %v628 = vunpack.c.l.b16 %v278
      %v629 = vunpack.c.l.b16 %v279
      %v630 = vunpack.c.h.b16 %v279
      %v631 = vunpack.c.l.b16 %v280
      %v632 = vunpack.c.h.b16 %v280
      %v633 = vunpack.c.l.b16 %v281
      %v634 = vunpack.c.h.b16 %v281
      %v635 = vunpack.c.l.b16 %v282
      %v636 = vunpack.c.h.b16 %v282
      %v637 = vunpack.c.l.b16 %v283
      %v638 = vunpack.c.h.b16 %v283
      %v639 = vunpack.c.l.b16 %v284
      %v640 = vunpack.c.h.b16 %v284
      %v641 = vunpack.c.l.b16 %v285
      %v642 = vunpack.c.l.b16 %v286
      %v643 = vunpack.c.h.b16 %v286
      %v644 = vunpack.c.l.b16 %v287
      %v645 = vunpack.c.h.b16 %v287
      %v646 = vunpack.c.l.b16 %v288
      %v647 = vunpack.c.h.b16 %v288
      %v648 = vunpack.c.l.b16 %v289
      %v649 = vunpack.c.h.b16 %v289
      %v650 = vunpack.c.l.b16 %v290
      %v651 = vunpack.c.h.b16 %v290
      %v652 = vunpack.c.l.b16 %v291
      %v653 = vunpack.c.h.b16 %v291
      %v654 = vunpack.c.l.b16 %v292
      %v655 = vunpack.c.l.b16 %v293
      %v656 = vunpack.c.h.b16 %v293
      %v657 = vunpack.c.l.b16 %v294
      %v658 = vunpack.c.h.b16 %v294
      %v659 = vunpack.c.l.b16 %v295
      %v660 = vunpack.c.h.b16 %v295
      %v661 = vunpack.c.l.b16 %v296
      %v662 = vunpack.c.h.b16 %v296
      %v663 = vunpack.c.l.b16 %v297
      %v664 = vunpack.c.h.b16 %v297
      %v665 = vunpack.c.l.b16 %v298
      %v666 = vunpack.c.h.b16 %v298
      %v667 = vunpack.c.l.b16 %v299
      %v668 = vpack.c.b16 %v473, %v460
      %v669 = vpack.c.b16 %v474, %v461
      %v670 = vpack.c.b16 %v475, %v462
      %v671 = vpack.c.b16 %v476, %v463
      %v672 = vpack.c.b16 %v477, %v464
      %v673 = vpack.c.b16 %v478, %v465
      %v674 = vpack.c.b16 %v479, %v466
      %v675 = vpack.c.b16 %v480, %v467
      %v676 = vpack.c.b16 %v481, %v468
      %v677 = vpack.c.b16 %v482, %v469
      %v678 = vpack.c.b16 %v483, %v470
      %v679 = vpack.c.b16 %v484, %v471
      %v680 = vpack.c.b16 %v485, %v472
      %v681 = vpack.c.b16 %v499, %v486
      %v682 = vpack.c.b16 %v500, %v487
      %v683 = vpack.c.b16 %v501, %v488
      %v684 = vpack.c.b16 %v502, %v489
      %v685 = vpack.c.b16 %v503, %v490
      %v686 = vpack.c.b16 %v504, %v491
      %v687 = vpack.c.b16 %v505, %v492
      %v688 = vpack.c.b16 %v506, %v493
      %v689 = vpack.c.b16 %v507, %v494
      %v690 = vpack.c.b16 %v508, %v495
      %v691 = vpack.c.b16 %v509, %v496
      %v692 = vpack.c.b16 %v510, %v497
      %v693 = vpack.c.b16 %v511, %v498
      %v694 = vpack.c.b16 %v525, %v512
      %v695 = vpack.c.b16 %v526, %v513
      %v696 = vpack.c.b16 %v527, %v514
      %v697 = vpack.c.b16 %v528, %v515
      %v698 = vpack.c.b16 %v529, %v516
      %v699 = vpack.c.b16 %v530, %v517
      %v700 = vpack.c.b16 %v531, %v518
      %v701 = vpack.c.b16 %v532, %v519
      %v702 = vpack.c.b16 %v533, %v520
      %v703 = vpack.c.b16 %v534, %v521
      %v704 = vpack.c.b16 %v535, %v522
      %v705 = vpack.c.b16 %v536, %v523
      %v706 = vpack.c.b16 %v537, %v524
      %v707 = vpack.c.b16 %v551, %v538
      %v708 = vpack.c.b16 %v552, %v539
      %v709 = vpack.c.b16 %v553, %v540
      %v710 = vpack.c.b16 %v554, %v541
      %v711 = vpack.c.b16 %v555, %v542
      %v712 = vpack.c.b16 %v556, %v543
      %v713 = vpack.c.b16 %v557, %v544
      %v714 = vpack.c.b16 %v558, %v545
      %v715 = vpack.c.b16 %v559, %v546
      %v716 = vpack.c.b16 %v560, %v547
      %v717 = vpack.c.b16 %v561, %v548
      %v718 = vpack.c.b16 %v562, %v549
      %v719 = vpack.c.b16 %v563, %v550
      %v720 = vpack.c.b16 %v577, %v564
      %v721 = vpack.c.b16 %v578, %v565
      %v722 = vpack.c.b16 %v579, %v566
      %v723 = vpack.c.b16 %v580, %v567
      %v724 = vpack.c.b16 %v581, %v568
      %v725 = vpack.c.b16 %v582, %v569
      %v726 = vpack.c.b16 %v583, %v570
      %v727 = vpack.c.b16 %v584, %v571
      %v728 = vpack.c.b16 %v585, %v572
      %v729 = vpack.c.b16 %v586, %v573
      %v730 = vpack.c.b16 %v587, %v574
      %v731 = vpack.c.b16 %v588, %v575
      %v732 = vpack.c.b16 %v589, %v576
      %v733 = vpack.c.b16 %v603, %v590
      %v734 = vpack.c.b16 %v604, %v591
      %v735 = vpack.c.b16 %v605, %v592
      %v736 = vpack.c.b16 %v606, %v593
      %v737 = vpack.c.b16 %v607, %v594
      %v738 = vpack.c.b16 %v608, %v595
      %v739 = vpack.c.b16 %v609, %v596
      %v740 = vpack.c.b16 %v610, %v597
      %v741 = vpack.c.b16 %v611, %v598
      %v742 = vpack.c.b16 %v612, %v599
      %v743 = vpack.c.b16 %v613, %v600
      %v744 = vpack.c.b16 %v614, %v601
      %v745 = vpack.c.b16 %v615, %v602
      %v746 = vpack.c.b16 %v629, %v616
      %v747 = vpack.c.b16 %v630, %v617
      %v748 = vpack.c.b16 %v631, %v618
      %v749 = vpack.c.b16 %v632, %v619
      %v750 = vpack.c.b16 %v633, %v620
      %v751 = vpack.c.b16 %v634, %v621
      %v752 = vpack.c.b16 %v635, %v622
      %v753 = vpack.c.b16 %v636, %v623
      %v754 = vpack.c.b16 %v637, %v624
      %v755 = vpack.c.b16 %v638, %v625
      %v756 = vpack.c.b16 %v639, %v626
      %v757 = vpack.c.b16 %v640, %v627
      %v758 = vpack.c.b16 %v641, %v628
      %v759 = vpack.c.b16 %v655, %v642
      %v760 = vpack.c.b16 %v656, %v643
      %v761 = vpack.c.b16 %v657, %v644
      %v762 = vpack.c.b16 %v658, %v645
      %v763 = vpack.c.b16 %v659, %v646
      %v764 = vpack.c.b16 %v660, %v647
      %v765 = vpack.c.b16 %v661, %v648
      %v766 = vpack.c.b16 %v662, %v649
      %v767 = vpack.c.b16 %v663, %v650
      %v768 = vpack.c.b16 %v664, %v651
      %v769 = vpack.c.b16 %v665, %v652
      %v770 = vpack.c.b16 %v666, %v653
      %v771 = vpack.c.b16 %v667, %v654
      %876 = vmatprep.subr.bf16.mxu0 %v669
      %877 = vmatpush1.bf16.msra.mxu0 %v668
      %878 = vmatprep.subr.bf16.mxu0 %v682
      %879 = vmatpush1.bf16.msra.mxu0 %v681
      %880 = vmatprep.subr.bf16.mxu0 %v695
      %881 = vmatpush1.bf16.msra.mxu0 %v694
      %882 = vmatprep.subr.bf16.mxu0 %v708
      %883 = vmatpush1.bf16.msra.mxu0 %v707
      %884 = vmatprep.subr.bf16.mxu0 %v721
      %885 = vmatpush1.bf16.msra.mxu0 %v720
      %886 = vmatprep.subr.bf16.mxu0 %v734
      %887 = vmatpush1.bf16.msra.mxu0 %v733
      %888 = vmatprep.subr.bf16.mxu0 %v747
      %889 = vmatpush1.bf16.msra.mxu0 %v746
      %890 = vmatprep.subr.bf16.mxu0 %v760
      %891 = vmatpush1.bf16.msra.mxu0 %v759
      %892 = vmatprep.subr.bf16.mxu0 0
      %893 = vmatpush1.bf16.msra.mxu0 0
      %894 = vmatprep.subr.bf16.mxu0 0
      %895 = vmatpush1.bf16.msra.mxu0 0
      %896 = vmatprep.subr.bf16.mxu0 0
      %897 = vmatpush1.bf16.msra.mxu0 0
      %898 = vmatprep.subr.bf16.mxu0 0
      %899 = vmatpush1.bf16.msra.mxu0 0
      %900 = vmatprep.subr.bf16.mxu0 0
      %901 = vmatpush1.bf16.msra.mxu0 0
      %902 = vmatprep.subr.bf16.mxu0 0
      %903 = vmatpush1.bf16.msra.mxu0 0
      %904 = vmatprep.subr.bf16.mxu0 0
      %905 = vmatpush1.bf16.msra.mxu0 0
      %906 = vmatprep.subr.bf16.mxu0 0
      %907 = vmatpush1.bf16.msra.mxu0 0
      %908 = vmatprep.mubr.bf16.mxu0 0
      %909 = vmatmul.mubr.bf16.gmra.mrb[0].mxu0 %v332
      %v910 = vpop.f32.mrb[0].mxu0
      %v911 = vadd.f32 0.0, %v910
      %v912 = vpop.f32.mrb[0].mxu0
      %v913 = vadd.f32 0.0, %v912
      %v914 = vpop.f32.mrb[0].mxu0
      %v915 = vadd.f32 0.0, %v914
      %v916 = vpop.f32.mrb[0].mxu0
      %v917 = vadd.f32 0.0, %v916
      %918 = vmatprep.mubr.bf16.mxu0 0
      %919 = vmatmul.mubr.bf16.gmra.mrb[0].mxu0 %v333
      %v920 = vpop.f32.mrb[0].mxu0
      %v921 = vpop.f32.mrb[0].mxu0
      %v922 = vpop.f32.mrb[0].mxu0
      %v923 = vpop.f32.mrb[0].mxu0
      %924 = vmatprep.mubr.bf16.mxu0 0
      %925 = vmatmul.mubr.bf16.gmra.mrb[0].mxu0 %v334
      %v926 = vpop.f32.mrb[0].mxu0
      %v927 = vadd.f32 0.0, %v926
      %v928 = vpop.f32.mrb[0].mxu0
      %v929 = vadd.f32 0.0, %v928
      %v930 = vpop.f32.mrb[0].mxu0
      %v931 = vadd.f32 0.0, %v930
      %v932 = vpop.f32.mrb[0].mxu0
      %v933 = vadd.f32 0.0, %v932
      %934 = vmatprep.mubr.bf16.mxu0 0
      %935 = vmatmul.mubr.bf16.gmra.mrb[0].mxu0 %v335
      %v936 = vpop.f32.mrb[0].mxu0
      %v937 = vpop.f32.mrb[0].mxu0
      %v938 = vpop.f32.mrb[0].mxu0
      %v939 = vpop.f32.mrb[0].mxu0
      %940 = vmatprep.mubr.bf16.mxu0 0
      %941 = vmatmul.mubr.bf16.gmra.mrb[0].mxu0 %v336
      %v942 = vpop.f32.mrb[0].mxu0
      %v943 = vadd.f32 0.0, %v942
      %v944 = vpop.f32.mrb[0].mxu0
      %v945 = vadd.f32 0.0, %v944
      %v946 = vpop.f32.mrb[0].mxu0
      %v947 = vadd.f32 0.0, %v946
      %v948 = vpop.f32.mrb[0].mxu0
      %v949 = vadd.f32 0.0, %v948
      %950 = vmatprep.mubr.bf16.mxu0 0
      %951 = vmatmul.mubr.bf16.gmra.mrb[0].mxu0 %v337
      %v952 = vpop.f32.mrb[0].mxu0
      %v953 = vpop.f32.mrb[0].mxu0
      %v954 = vpop.f32.mrb[0].mxu0
      %v955 = vpop.f32.mrb[0].mxu0
      %956 = vmatprep.mubr.bf16.mxu0 0
      %957 = vmatmul.mubr.bf16.gmra.mrb[0].mxu0 %v338
      %v958 = vpop.f32.mrb[0].mxu0
      %v959 = vadd.f32 0.0, %v958
      %v960 = vpop.f32.mrb[0].mxu0
      %v961 = vadd.f32 0.0, %v960
      %v962 = vpop.f32.mrb[0].mxu0
      %v963 = vadd.f32 0.0, %v962
      %v964 = vpop.f32.mrb[0].mxu0
      %v965 = vadd.f32 0.0, %v964
      %966 = vmatprep.mubr.bf16.mxu0 0
      %967 = vmatmul.mubr.bf16.gmra.mrb[0].mxu0 %v339
      %v968 = vpop.f32.mrb[0].mxu0
      %v969 = vpop.f32.mrb[0].mxu0
      %v970 = vpop.f32.mrb[0].mxu0
      %v971 = vpop.f32.mrb[0].mxu0
      %972 = vdwg.mxu0
      %973 = vmatprep.subr.bf16.mxu0 %v671
      %974 = vmatpush1.bf16.msra.mxu0 %v670
      %975 = vmatprep.subr.bf16.mxu0 %v684
      %976 = vmatpush1.bf16.msra.mxu0 %v683
      %977 = vmatprep.subr.bf16.mxu0 %v697
      %978 = vmatpush1.bf16.msra.mxu0 %v696
      %979 = vmatprep.subr.bf16.mxu0 %v710
      %980 = vmatpush1.bf16.msra.mxu0 %v709
      %981 = vmatprep.subr.bf16.mxu0 %v723
      %982 = vmatpush1.bf16.msra.mxu0 %v722
      %983 = vmatprep.subr.bf16.mxu0 %v736
      %984 = vmatpush1.bf16.msra.mxu0 %v735
      %985 = vmatprep.subr.bf16.mxu0 %v749
      %986 = vmatpush1.bf16.msra.mxu0 %v748
      %987 = vmatprep.subr.bf16.mxu0 %v762
      %988 = vmatpush1.bf16.msra.mxu0 %v761
      %989 = vmatprep.subr.bf16.mxu0 0
      %990 = vmatpush1.bf16.msra.mxu0 0
      %991 = vmatprep.subr.bf16.mxu0 0
      %992 = vmatpush1.bf16.msra.mxu0 0
      %993 = vmatprep.subr.bf16.mxu0 0
      %994 = vmatpush1.bf16.msra.mxu0 0
      %995 = vmatprep.subr.bf16.mxu0 0
      %996 = vmatpush1.bf16.msra.mxu0 0
      %997 = vmatprep.subr.bf16.mxu0 0
      %998 = vmatpush1.bf16.msra.mxu0 0
      %999 = vmatprep.subr.bf16.mxu0 0
      %1000 = vmatpush1.bf16.msra.mxu0 0
      %1001 = vmatprep.subr.bf16.mxu0 0
      %1002 = vmatpush1.bf16.msra.mxu0 0
      %1003 = vmatprep.subr.bf16.mxu0 0
      %1004 = vmatpush1.bf16.msra.mxu0 0
      %1005 = vmatprep.mubr.bf16.mxu0 0
      %1006 = vmatmul.mubr.bf16.gmra.mrb[0].mxu0 %v332
      %v1007 = vpop.f32.mrb[0].mxu0
      %v1008 = vadd.f32 0.0, %v1007
      %v1009 = vpop.f32.mrb[0].mxu0
      %v1010 = vadd.f32 0.0, %v1009
      %v1011 = vpop.f32.mrb[0].mxu0
      %v1012 = vadd.f32 0.0, %v1011
      %v1013 = vpop.f32.mrb[0].mxu0
      %v1014 = vadd.f32 0.0, %v1013
      %1015 = vmatprep.mubr.bf16.mxu0 0
      %1016 = vmatmul.mubr.bf16.gmra.mrb[0].mxu0 %v333
      %v1017 = vpop.f32.mrb[0].mxu0
      %v1018 = vpop.f32.mrb[0].mxu0
      %v1019 = vpop.f32.mrb[0].mxu0
      %v1020 = vpop.f32.mrb[0].mxu0
      %1021 = vmatprep.mubr.bf16.mxu0 0
      %1022 = vmatmul.mubr.bf16.gmra.mrb[0].mxu0 %v334
      %v1023 = vpop.f32.mrb[0].mxu0
      %v1024 = vadd.f32 0.0, %v1023
      %v1025 = vpop.f32.mrb[0].mxu0
      %v1026 = vadd.f32 0.0, %v1025
      %v1027 = vpop.f32.mrb[0].mxu0
      %v1028 = vadd.f32 0.0, %v1027
      %v1029 = vpop.f32.mrb[0].mxu0
      %v1030 = vadd.f32 0.0, %v1029
      %1031 = vmatprep.mubr.bf16.mxu0 0
      %1032 = vmatmul.mubr.bf16.gmra.mrb[0].mxu0 %v335
      %v1033 = vpop.f32.mrb[0].mxu0
      %v1034 = vpop.f32.mrb[0].mxu0
      %v1035 = vpop.f32.mrb[0].mxu0
      %v1036 = vpop.f32.mrb[0].mxu0
      %1037 = vmatprep.mubr.bf16.mxu0 0
      %1038 = vmatmul.mubr.bf16.gmra.mrb[0].mxu0 %v336
      %v1039 = vpop.f32.mrb[0].mxu0
      %v1040 = vadd.f32 0.0, %v1039
      %v1041 = vpop.f32.mrb[0].mxu0
      %v1042 = vadd.f32 0.0, %v1041
      %v1043 = vpop.f32.mrb[0].mxu0
      %v1044 = vadd.f32 0.0, %v1043
      %v1045 = vpop.f32.mrb[0].mxu0
      %v1046 = vadd.f32 0.0, %v1045
      %1047 = vmatprep.mubr.bf16.mxu0 0
      %1048 = vmatmul.mubr.bf16.gmra.mrb[0].mxu0 %v337
      %v1049 = vpop.f32.mrb[0].mxu0
      %v1050 = vpop.f32.mrb[0].mxu0
      %v1051 = vpop.f32.mrb[0].mxu0
      %v1052 = vpop.f32.mrb[0].mxu0
      %1053 = vmatprep.mubr.bf16.mxu0 0
      %1054 = vmatmul.mubr.bf16.gmra.mrb[0].mxu0 %v338
      %v1055 = vpop.f32.mrb[0].mxu0
      %v1056 = vadd.f32 0.0, %v1055
      %v1057 = vpop.f32.mrb[0].mxu0
      %v1058 = vadd.f32 0.0, %v1057
      %v1059 = vpop.f32.mrb[0].mxu0
      %v1060 = vadd.f32 0.0, %v1059
      %v1061 = vpop.f32.mrb[0].mxu0
      %v1062 = vadd.f32 0.0, %v1061
      %1063 = vmatprep.mubr.bf16.mxu0 0
      %1064 = vmatmul.mubr.bf16.gmra.mrb[0].mxu0 %v339
      %v1065 = vpop.f32.mrb[0].mxu0
      %v1066 = vpop.f32.mrb[0].mxu0
      %v1067 = vpop.f32.mrb[0].mxu0
      %v1068 = vpop.f32.mrb[0].mxu0
      %1069 = vdwg.mxu0
      %1070 = vmatprep.subr.bf16.mxu0 %v673
      %1071 = vmatpush1.bf16.msra.mxu0 %v672
      %1072 = vmatprep.subr.bf16.mxu0 %v686
      %1073 = vmatpush1.bf16.msra.mxu0 %v685
      %1074 = vmatprep.subr.bf16.mxu0 %v699
      %1075 = vmatpush1.bf16.msra.mxu0 %v698
      %1076 = vmatprep.subr.bf16.mxu0 %v712
      %1077 = vmatpush1.bf16.msra.mxu0 %v711
      %1078 = vmatprep.subr.bf16.mxu0 %v725
      %1079 = vmatpush1.bf16.msra.mxu0 %v724
      %1080 = vmatprep.subr.bf16.mxu0 %v738
      %1081 = vmatpush1.bf16.msra.mxu0 %v737
      %1082 = vmatprep.subr.bf16.mxu0 %v751
      %1083 = vmatpush1.bf16.msra.mxu0 %v750
      %1084 = vmatprep.subr.bf16.mxu0 %v764
      %1085 = vmatpush1.bf16.msra.mxu0 %v763
      %1086 = vmatprep.subr.bf16.mxu0 0
      %1087 = vmatpush1.bf16.msra.mxu0 0
      %1088 = vmatprep.subr.bf16.mxu0 0
      %1089 = vmatpush1.bf16.msra.mxu0 0
      %1090 = vmatprep.subr.bf16.mxu0 0
      %1091 = vmatpush1.bf16.msra.mxu0 0
      %1092 = vmatprep.subr.bf16.mxu0 0
      %1093 = vmatpush1.bf16.msra.mxu0 0
      %1094 = vmatprep.subr.bf16.mxu0 0
      %1095 = vmatpush1.bf16.msra.mxu0 0
      %1096 = vmatprep.subr.bf16.mxu0 0
      %1097 = vmatpush1.bf16.msra.mxu0 0
      %1098 = vmatprep.subr.bf16.mxu0 0
      %1099 = vmatpush1.bf16.msra.mxu0 0
      %1100 = vmatprep.subr.bf16.mxu0 0
      %1101 = vmatpush1.bf16.msra.mxu0 0
      %1102 = vmatprep.mubr.bf16.mxu0 0
      %1103 = vmatmul.mubr.bf16.gmra.mrb[0].mxu0 %v332
      %v1104 = vpop.f32.mrb[0].mxu0
      %v1105 = vadd.f32 0.0, %v1104
      %v1106 = vpop.f32.mrb[0].mxu0
      %v1107 = vadd.f32 0.0, %v1106
      %v1108 = vpop.f32.mrb[0].mxu0
      %v1109 = vadd.f32 0.0, %v1108
      %v1110 = vpop.f32.mrb[0].mxu0
      %v1111 = vadd.f32 0.0, %v1110
      %1112 = vmatprep.mubr.bf16.mxu0 0
      %1113 = vmatmul.mubr.bf16.gmra.mrb[0].mxu0 %v333
      %v1114 = vpop.f32.mrb[0].mxu0
      %v1115 = vpop.f32.mrb[0].mxu0
      %v1116 = vpop.f32.mrb[0].mxu0
      %v1117 = vpop.f32.mrb[0].mxu0
      %1118 = vmatprep.mubr.bf16.mxu0 0
      %1119 = vmatmul.mubr.bf16.gmra.mrb[0].mxu0 %v334
      %v1120 = vpop.f32.mrb[0].mxu0
      %v1121 = vadd.f32 0.0, %v1120
      %v1122 = vpop.f32.mrb[0].mxu0
      %v1123 = vadd.f32 0.0, %v1122
      %v1124 = vpop.f32.mrb[0].mxu0
      %v1125 = vadd.f32 0.0, %v1124
      %v1126 = vpop.f32.mrb[0].mxu0
      %v1127 = vadd.f32 0.0, %v1126
      %1128 = vmatprep.mubr.bf16.mxu0 0
      %1129 = vmatmul.mubr.bf16.gmra.mrb[0].mxu0 %v335
      %v1130 = vpop.f32.mrb[0].mxu0
      %v1131 = vpop.f32.mrb[0].mxu0
      %v1132 = vpop.f32.mrb[0].mxu0
      %v1133 = vpop.f32.mrb[0].mxu0
      %1134 = vmatprep.mubr.bf16.mxu0 0
      %1135 = vmatmul.mubr.bf16.gmra.mrb[0].mxu0 %v336
      %v1136 = vpop.f32.mrb[0].mxu0
      %v1137 = vadd.f32 0.0, %v1136
      %v1138 = vpop.f32.mrb[0].mxu0
      %v1139 = vadd.f32 0.0, %v1138
      %v1140 = vpop.f32.mrb[0].mxu0
      %v1141 = vadd.f32 0.0, %v1140
      %v1142 = vpop.f32.mrb[0].mxu0
      %v1143 = vadd.f32 0.0, %v1142
      %1144 = vmatprep.mubr.bf16.mxu0 0
      %1145 = vmatmul.mubr.bf16.gmra.mrb[0].mxu0 %v337
      %v1146 = vpop.f32.mrb[0].mxu0
      %v1147 = vpop.f32.mrb[0].mxu0
      %v1148 = vpop.f32.mrb[0].mxu0
      %v1149 = vpop.f32.mrb[0].mxu0
      %1150 = vmatprep.mubr.bf16.mxu0 0
      %1151 = vmatmul.mubr.bf16.gmra.mrb[0].mxu0 %v338
      %v1152 = vpop.f32.mrb[0].mxu0
      %v1153 = vadd.f32 0.0, %v1152
      %v1154 = vpop.f32.mrb[0].mxu0
      %v1155 = vadd.f32 0.0, %v1154
      %v1156 = vpop.f32.mrb[0].mxu0
      %v1157 = vadd.f32 0.0, %v1156
      %v1158 = vpop.f32.mrb[0].mxu0
      %v1159 = vadd.f32 0.0, %v1158
      %1160 = vmatprep.mubr.bf16.mxu0 0
      %1161 = vmatmul.mubr.bf16.gmra.mrb[0].mxu0 %v339
      %v1162 = vpop.f32.mrb[0].mxu0
      %v1163 = vpop.f32.mrb[0].mxu0
      %v1164 = vpop.f32.mrb[0].mxu0
      %v1165 = vpop.f32.mrb[0].mxu0
      %1166 = vdwg.mxu0
      %1167 = vmatprep.subr.bf16.mxu0 %v675
      %1168 = vmatpush1.bf16.msra.mxu0 %v674
      %1169 = vmatprep.subr.bf16.mxu0 %v688
      %1170 = vmatpush1.bf16.msra.mxu0 %v687
      %1171 = vmatprep.subr.bf16.mxu0 %v701
      %1172 = vmatpush1.bf16.msra.mxu0 %v700
      %1173 = vmatprep.subr.bf16.mxu0 %v714
      %1174 = vmatpush1.bf16.msra.mxu0 %v713
      %1175 = vmatprep.subr.bf16.mxu0 %v727
      %1176 = vmatpush1.bf16.msra.mxu0 %v726
      %1177 = vmatprep.subr.bf16.mxu0 %v740
      %1178 = vmatpush1.bf16.msra.mxu0 %v739
      %1179 = vmatprep.subr.bf16.mxu0 %v753
      %1180 = vmatpush1.bf16.msra.mxu0 %v752
      %1181 = vmatprep.subr.bf16.mxu0 %v766
      %1182 = vmatpush1.bf16.msra.mxu0 %v765
      %1183 = vmatprep.subr.bf16.mxu0 0
      %1184 = vmatpush1.bf16.msra.mxu0 0
      %1185 = vmatprep.subr.bf16.mxu0 0
      %1186 = vmatpush1.bf16.msra.mxu0 0
      %1187 = vmatprep.subr.bf16.mxu0 0
      %1188 = vmatpush1.bf16.msra.mxu0 0
      %1189 = vmatprep.subr.bf16.mxu0 0
      %1190 = vmatpush1.bf16.msra.mxu0 0
      %1191 = vmatprep.subr.bf16.mxu0 0
      %1192 = vmatpush1.bf16.msra.mxu0 0
      %1193 = vmatprep.subr.bf16.mxu0 0
      %1194 = vmatpush1.bf16.msra.mxu0 0
      %1195 = vmatprep.subr.bf16.mxu0 0
      %1196 = vmatpush1.bf16.msra.mxu0 0
      %1197 = vmatprep.subr.bf16.mxu0 0
      %1198 = vmatpush1.bf16.msra.mxu0 0
      %1199 = vmatprep.mubr.bf16.mxu0 0
      %1200 = vmatmul.mubr.bf16.gmra.mrb[0].mxu0 %v332
      %v1201 = vpop.f32.mrb[0].mxu0
      %v1202 = vadd.f32 0.0, %v1201
      %v1203 = vpop.f32.mrb[0].mxu0
      %v1204 = vadd.f32 0.0, %v1203
      %v1205 = vpop.f32.mrb[0].mxu0
      %v1206 = vadd.f32 0.0, %v1205
      %v1207 = vpop.f32.mrb[0].mxu0
      %v1208 = vadd.f32 0.0, %v1207
      %1209 = vmatprep.mubr.bf16.mxu0 0
      %1210 = vmatmul.mubr.bf16.gmra.mrb[0].mxu0 %v333
      %v1211 = vpop.f32.mrb[0].mxu0
      %v1212 = vpop.f32.mrb[0].mxu0
      %v1213 = vpop.f32.mrb[0].mxu0
      %v1214 = vpop.f32.mrb[0].mxu0
      %1215 = vmatprep.mubr.bf16.mxu0 0
      %1216 = vmatmul.mubr.bf16.gmra.mrb[0].mxu0 %v334
      %v1217 = vpop.f32.mrb[0].mxu0
      %v1218 = vadd.f32 0.0, %v1217
      %v1219 = vpop.f32.mrb[0].mxu0
      %v1220 = vadd.f32 0.0, %v1219
      %v1221 = vpop.f32.mrb[0].mxu0
      %v1222 = vadd.f32 0.0, %v1221
      %v1223 = vpop.f32.mrb[0].mxu0
      %v1224 = vadd.f32 0.0, %v1223
      %1225 = vmatprep.mubr.bf16.mxu0 0
      %1226 = vmatmul.mubr.bf16.gmra.mrb[0].mxu0 %v335
      %v1227 = vpop.f32.mrb[0].mxu0
      %v1228 = vpop.f32.mrb[0].mxu0
      %v1229 = vpop.f32.mrb[0].mxu0
      %v1230 = vpop.f32.mrb[0].mxu0
      %1231 = vmatprep.mubr.bf16.mxu0 0
      %1232 = vmatmul.mubr.bf16.gmra.mrb[0].mxu0 %v336
      %v1233 = vpop.f32.mrb[0].mxu0
      %v1234 = vadd.f32 0.0, %v1233
      %v1235 = vpop.f32.mrb[0].mxu0
      %v1236 = vadd.f32 0.0, %v1235
      %v1237 = vpop.f32.mrb[0].mxu0
      %v1238 = vadd.f32 0.0, %v1237
      %v1239 = vpop.f32.mrb[0].mxu0
      %v1240 = vadd.f32 0.0, %v1239
      %1241 = vmatprep.mubr.bf16.mxu0 0
      %1242 = vmatmul.mubr.bf16.gmra.mrb[0].mxu0 %v337
      %v1243 = vpop.f32.mrb[0].mxu0
      %v1244 = vpop.f32.mrb[0].mxu0
      %v1245 = vpop.f32.mrb[0].mxu0
      %v1246 = vpop.f32.mrb[0].mxu0
      %1247 = vmatprep.mubr.bf16.mxu0 0
      %1248 = vmatmul.mubr.bf16.gmra.mrb[0].mxu0 %v338
      %v1249 = vpop.f32.mrb[0].mxu0
      %v1250 = vadd.f32 0.0, %v1249
      %v1251 = vpop.f32.mrb[0].mxu0
      %v1252 = vadd.f32 0.0, %v1251
      %v1253 = vpop.f32.mrb[0].mxu0
      %v1254 = vadd.f32 0.0, %v1253
      %v1255 = vpop.f32.mrb[0].mxu0
      %v1256 = vadd.f32 0.0, %v1255
      %1257 = vmatprep.mubr.bf16.mxu0 0
      %1258 = vmatmul.mubr.bf16.gmra.mrb[0].mxu0 %v339
      %v1259 = vpop.f32.mrb[0].mxu0
      %v1260 = vpop.f32.mrb[0].mxu0
      %v1261 = vpop.f32.mrb[0].mxu0
      %v1262 = vpop.f32.mrb[0].mxu0
      %1263 = vdwg.mxu0
      %1264 = vmatprep.subr.bf16.mxu0 %v677
      %1265 = vmatpush1.bf16.msra.mxu0 %v676
      %1266 = vmatprep.subr.bf16.mxu0 %v690
      %1267 = vmatpush1.bf16.msra.mxu0 %v689
      %1268 = vmatprep.subr.bf16.mxu0 %v703
      %1269 = vmatpush1.bf16.msra.mxu0 %v702
      %1270 = vmatprep.subr.bf16.mxu0 %v716
      %1271 = vmatpush1.bf16.msra.mxu0 %v715
      %1272 = vmatprep.subr.bf16.mxu0 %v729
      %1273 = vmatpush1.bf16.msra.mxu0 %v728
      %1274 = vmatprep.subr.bf16.mxu0 %v742
      %1275 = vmatpush1.bf16.msra.mxu0 %v741
      %1276 = vmatprep.subr.bf16.mxu0 %v755
      %1277 = vmatpush1.bf16.msra.mxu0 %v754
      %1278 = vmatprep.subr.bf16.mxu0 %v768
      %1279 = vmatpush1.bf16.msra.mxu0 %v767
      %1280 = vmatprep.subr.bf16.mxu0 0
      %1281 = vmatpush1.bf16.msra.mxu0 0
      %1282 = vmatprep.subr.bf16.mxu0 0
      %1283 = vmatpush1.bf16.msra.mxu0 0
      %1284 = vmatprep.subr.bf16.mxu0 0
      %1285 = vmatpush1.bf16.msra.mxu0 0
      %1286 = vmatprep.subr.bf16.mxu0 0
      %1287 = vmatpush1.bf16.msra.mxu0 0
      %1288 = vmatprep.subr.bf16.mxu0 0
      %1289 = vmatpush1.bf16.msra.mxu0 0
      %1290 = vmatprep.subr.bf16.mxu0 0
      %1291 = vmatpush1.bf16.msra.mxu0 0
      %1292 = vmatprep.subr.bf16.mxu0 0
      %1293 = vmatpush1.bf16.msra.mxu0 0
      %1294 = vmatprep.subr.bf16.mxu0 0
      %1295 = vmatpush1.bf16.msra.mxu0 0
      %1296 = vmatprep.mubr.bf16.mxu0 0
      %1297 = vmatmul.mubr.bf16.gmra.mrb[0].mxu0 %v332
      %v1298 = vpop.f32.mrb[0].mxu0
      %v1299 = vadd.f32 0.0, %v1298
      %v1300 = vpop.f32.mrb[0].mxu0
      %v1301 = vadd.f32 0.0, %v1300
      %v1302 = vpop.f32.mrb[0].mxu0
      %v1303 = vadd.f32 0.0, %v1302
      %v1304 = vpop.f32.mrb[0].mxu0
      %v1305 = vadd.f32 0.0, %v1304
      %1306 = vmatprep.mubr.bf16.mxu0 0
      %1307 = vmatmul.mubr.bf16.gmra.mrb[0].mxu0 %v333
      %v1308 = vpop.f32.mrb[0].mxu0
      %v1309 = vpop.f32.mrb[0].mxu0
      %v1310 = vpop.f32.mrb[0].mxu0
      %v1311 = vpop.f32.mrb[0].mxu0
      %1312 = vmatprep.mubr.bf16.mxu0 0
      %1313 = vmatmul.mubr.bf16.gmra.mrb[0].mxu0 %v334
      %v1314 = vpop.f32.mrb[0].mxu0
      %v1315 = vadd.f32 0.0, %v1314
      %v1316 = vpop.f32.mrb[0].mxu0
      %v1317 = vadd.f32 0.0, %v1316
      %v1318 = vpop.f32.mrb[0].mxu0
      %v1319 = vadd.f32 0.0, %v1318
      %v1320 = vpop.f32.mrb[0].mxu0
      %v1321 = vadd.f32 0.0, %v1320
      %1322 = vmatprep.mubr.bf16.mxu0 0
      %1323 = vmatmul.mubr.bf16.gmra.mrb[0].mxu0 %v335
      %v1324 = vpop.f32.mrb[0].mxu0
      %v1325 = vpop.f32.mrb[0].mxu0
      %v1326 = vpop.f32.mrb[0].mxu0
      %v1327 = vpop.f32.mrb[0].mxu0
      %1328 = vmatprep.mubr.bf16.mxu0 0
      %1329 = vmatmul.mubr.bf16.gmra.mrb[0].mxu0 %v336
      %v1330 = vpop.f32.mrb[0].mxu0
      %v1331 = vadd.f32 0.0, %v1330
      %v1332 = vpop.f32.mrb[0].mxu0
      %v1333 = vadd.f32 0.0, %v1332
      %v1334 = vpop.f32.mrb[0].mxu0
      %v1335 = vadd.f32 0.0, %v1334
      %v1336 = vpop.f32.mrb[0].mxu0
      %v1337 = vadd.f32 0.0, %v1336
      %1338 = vmatprep.mubr.bf16.mxu0 0
      %1339 = vmatmul.mubr.bf16.gmra.mrb[0].mxu0 %v337
      %v1340 = vpop.f32.mrb[0].mxu0
      %v1341 = vpop.f32.mrb[0].mxu0
      %v1342 = vpop.f32.mrb[0].mxu0
      %v1343 = vpop.f32.mrb[0].mxu0
      %1344 = vmatprep.mubr.bf16.mxu0 0
      %1345 = vmatmul.mubr.bf16.gmra.mrb[0].mxu0 %v338
      %v1346 = vpop.f32.mrb[0].mxu0
      %v1347 = vadd.f32 0.0, %v1346
      %v1348 = vpop.f32.mrb[0].mxu0
      %v1349 = vadd.f32 0.0, %v1348
      %v1350 = vpop.f32.mrb[0].mxu0
      %v1351 = vadd.f32 0.0, %v1350
      %v1352 = vpop.f32.mrb[0].mxu0
      %v1353 = vadd.f32 0.0, %v1352
      %1354 = vmatprep.mubr.bf16.mxu0 0
      %1355 = vmatmul.mubr.bf16.gmra.mrb[0].mxu0 %v339
      %v1356 = vpop.f32.mrb[0].mxu0
      %v1357 = vpop.f32.mrb[0].mxu0
      %v1358 = vpop.f32.mrb[0].mxu0
      %v1359 = vpop.f32.mrb[0].mxu0
      %1360 = vdwg.mxu0
      %1361 = vmatprep.subr.bf16.mxu0 %v679
      %1362 = vmatpush1.bf16.msra.mxu0 %v678
      %1363 = vmatprep.subr.bf16.mxu0 %v692
      %1364 = vmatpush1.bf16.msra.mxu0 %v691
      %1365 = vmatprep.subr.bf16.mxu0 %v705
      %1366 = vmatpush1.bf16.msra.mxu0 %v704
      %1367 = vmatprep.subr.bf16.mxu0 %v718
      %1368 = vmatpush1.bf16.msra.mxu0 %v717
      %1369 = vmatprep.subr.bf16.mxu0 %v731
      %1370 = vmatpush1.bf16.msra.mxu0 %v730
      %1371 = vmatprep.subr.bf16.mxu0 %v744
      %1372 = vmatpush1.bf16.msra.mxu0 %v743
      %1373 = vmatprep.subr.bf16.mxu0 %v757
      %1374 = vmatpush1.bf16.msra.mxu0 %v756
      %1375 = vmatprep.subr.bf16.mxu0 %v770
      %1376 = vmatpush1.bf16.msra.mxu0 %v769
      %1377 = vmatprep.subr.bf16.mxu0 0
      %1378 = vmatpush1.bf16.msra.mxu0 0
      %1379 = vmatprep.subr.bf16.mxu0 0
      %1380 = vmatpush1.bf16.msra.mxu0 0
      %1381 = vmatprep.subr.bf16.mxu0 0
      %1382 = vmatpush1.bf16.msra.mxu0 0
      %1383 = vmatprep.subr.bf16.mxu0 0
      %1384 = vmatpush1.bf16.msra.mxu0 0
      %1385 = vmatprep.subr.bf16.mxu0 0
      %1386 = vmatpush1.bf16.msra.mxu0 0
      %1387 = vmatprep.subr.bf16.mxu0 0
      %1388 = vmatpush1.bf16.msra.mxu0 0
      %1389 = vmatprep.subr.bf16.mxu0 0
      %1390 = vmatpush1.bf16.msra.mxu0 0
      %1391 = vmatprep.subr.bf16.mxu0 0
      %1392 = vmatpush1.bf16.msra.mxu0 0
      %1393 = vmatprep.mubr.bf16.mxu0 0
      %1394 = vmatmul.mubr.bf16.gmra.mrb[0].mxu0 %v332
      %v1395 = vpop.f32.mrb[0].mxu0
      %v1396 = vadd.f32 0.0, %v1395
      %v1397 = vpop.f32.mrb[0].mxu0
      %v1398 = vadd.f32 0.0, %v1397
      %v1399 = vpop.f32.mrb[0].mxu0
      %v1400 = vadd.f32 0.0, %v1399
      %v1401 = vpop.f32.mrb[0].mxu0
      %v1402 = vadd.f32 0.0, %v1401
      %1403 = vmatprep.mubr.bf16.mxu0 0
      %1404 = vmatmul.mubr.bf16.gmra.mrb[0].mxu0 %v333
      %v1405 = vpop.f32.mrb[0].mxu0
      %v1406 = vpop.f32.mrb[0].mxu0
      %v1407 = vpop.f32.mrb[0].mxu0
      %v1408 = vpop.f32.mrb[0].mxu0
      %1409 = vmatprep.mubr.bf16.mxu0 0
      %1410 = vmatmul.mubr.bf16.gmra.mrb[0].mxu0 %v334
      %v1411 = vpop.f32.mrb[0].mxu0
      %v1412 = vadd.f32 0.0, %v1411
      %v1413 = vpop.f32.mrb[0].mxu0
      %v1414 = vadd.f32 0.0, %v1413
      %v1415 = vpop.f32.mrb[0].mxu0
      %v1416 = vadd.f32 0.0, %v1415
      %v1417 = vpop.f32.mrb[0].mxu0
      %v1418 = vadd.f32 0.0, %v1417
      %1419 = vmatprep.mubr.bf16.mxu0 0
      %1420 = vmatmul.mubr.bf16.gmra.mrb[0].mxu0 %v335
      %v1421 = vpop.f32.mrb[0].mxu0
      %v1422 = vpop.f32.mrb[0].mxu0
      %v1423 = vpop.f32.mrb[0].mxu0
      %v1424 = vpop.f32.mrb[0].mxu0
      %1425 = vmatprep.mubr.bf16.mxu0 0
      %1426 = vmatmul.mubr.bf16.gmra.mrb[0].mxu0 %v336
      %v1427 = vpop.f32.mrb[0].mxu0
      %v1428 = vadd.f32 0.0, %v1427
      %v1429 = vpop.f32.mrb[0].mxu0
      %v1430 = vadd.f32 0.0, %v1429
      %v1431 = vpop.f32.mrb[0].mxu0
      %v1432 = vadd.f32 0.0, %v1431
      %v1433 = vpop.f32.mrb[0].mxu0
      %v1434 = vadd.f32 0.0, %v1433
      %1435 = vmatprep.mubr.bf16.mxu0 0
      %1436 = vmatmul.mubr.bf16.gmra.mrb[0].mxu0 %v337
      %v1437 = vpop.f32.mrb[0].mxu0
      %v1438 = vpop.f32.mrb[0].mxu0
      %v1439 = vpop.f32.mrb[0].mxu0
      %v1440 = vpop.f32.mrb[0].mxu0
      %1441 = vmatprep.mubr.bf16.mxu0 0
      %1442 = vmatmul.mubr.bf16.gmra.mrb[0].mxu0 %v338
      %v1443 = vpop.f32.mrb[0].mxu0
      %v1444 = vadd.f32 0.0, %v1443
      %v1445 = vpop.f32.mrb[0].mxu0
      %v1446 = vadd.f32 0.0, %v1445
      %v1447 = vpop.f32.mrb[0].mxu0
      %v1448 = vadd.f32 0.0, %v1447
      %v1449 = vpop.f32.mrb[0].mxu0
      %v1450 = vadd.f32 0.0, %v1449
      %1451 = vmatprep.mubr.bf16.mxu0 0
      %1452 = vmatmul.mubr.bf16.gmra.mrb[0].mxu0 %v339
      %v1453 = vpop.f32.mrb[0].mxu0
      %v1454 = vpop.f32.mrb[0].mxu0
      %v1455 = vpop.f32.mrb[0].mxu0
      %v1456 = vpop.f32.mrb[0].mxu0
      %1457 = vdwg.mxu0
      %1458 = vmatprep.subr.bf16.mxu0 0
      %1459 = vmatpush1.bf16.msra.mxu0 %v680
      %1460 = vmatprep.subr.bf16.mxu0 0
      %1461 = vmatpush1.bf16.msra.mxu0 %v693
      %1462 = vmatprep.subr.bf16.mxu0 0
      %1463 = vmatpush1.bf16.msra.mxu0 %v706
      %1464 = vmatprep.subr.bf16.mxu0 0
      %1465 = vmatpush1.bf16.msra.mxu0 %v719
      %1466 = vmatprep.subr.bf16.mxu0 0
      %1467 = vmatpush1.bf16.msra.mxu0 %v732
      %1468 = vmatprep.subr.bf16.mxu0 0
      %1469 = vmatpush1.bf16.msra.mxu0 %v745
      %1470 = vmatprep.subr.bf16.mxu0 0
      %1471 = vmatpush1.bf16.msra.mxu0 %v758
      %1472 = vmatprep.subr.bf16.mxu0 0
      %1473 = vmatpush1.bf16.msra.mxu0 %v771
      %1474 = vmatprep.subr.bf16.mxu0 0
      %1475 = vmatpush1.bf16.msra.mxu0 0
      %1476 = vmatprep.subr.bf16.mxu0 0
      %1477 = vmatpush1.bf16.msra.mxu0 0
      %1478 = vmatprep.subr.bf16.mxu0 0
      %1479 = vmatpush1.bf16.msra.mxu0 0
      %1480 = vmatprep.subr.bf16.mxu0 0
      %1481 = vmatpush1.bf16.msra.mxu0 0
      %1482 = vmatprep.subr.bf16.mxu0 0
      %1483 = vmatpush1.bf16.msra.mxu0 0
      %1484 = vmatprep.subr.bf16.mxu0 0
      %1485 = vmatpush1.bf16.msra.mxu0 0
      %1486 = vmatprep.subr.bf16.mxu0 0
      %1487 = vmatpush1.bf16.msra.mxu0 0
      %1488 = vmatprep.subr.bf16.mxu0 0
      %1489 = vmatpush1.bf16.msra.mxu0 0
      %1490 = vmatprep.mubr.bf16.mxu0 0
      %1491 = vmatmul.mubr.bf16.gmra.mrb[0].mxu0 %v332
      %v1492 = vpop.f32.mrb[0].mxu0
      %v1493 = vadd.f32 0.0, %v1492
      %v1494 = vpop.f32.mrb[0].mxu0
      %v1495 = vpop.f32.mrb[0].mxu0
      %v1496 = vadd.f32 0.0, %v1495
      %v1497 = vpop.f32.mrb[0].mxu0
      %1498 = vmatprep.mubr.bf16.mxu0 0
      %1499 = vmatmul.mubr.bf16.gmra.mrb[0].mxu0 %v333
      %v1500 = vpop.f32.mrb[0].mxu0
      %v1501 = vpop.f32.mrb[0].mxu0
      %v1502 = vpop.f32.mrb[0].mxu0
      %v1503 = vpop.f32.mrb[0].mxu0
      %1504 = vmatprep.mubr.bf16.mxu0 0
      %1505 = vmatmul.mubr.bf16.gmra.mrb[0].mxu0 %v334
      %v1506 = vpop.f32.mrb[0].mxu0
      %v1507 = vadd.f32 0.0, %v1506
      %v1508 = vpop.f32.mrb[0].mxu0
      %v1509 = vpop.f32.mrb[0].mxu0
      %v1510 = vadd.f32 0.0, %v1509
      %v1511 = vpop.f32.mrb[0].mxu0
      %1512 = vmatprep.mubr.bf16.mxu0 0
      %1513 = vmatmul.mubr.bf16.gmra.mrb[0].mxu0 %v335
      %v1514 = vpop.f32.mrb[0].mxu0
      %v1515 = vpop.f32.mrb[0].mxu0
      %v1516 = vpop.f32.mrb[0].mxu0
      %v1517 = vpop.f32.mrb[0].mxu0
      %1518 = vmatprep.mubr.bf16.mxu0 0
      %1519 = vmatmul.mubr.bf16.gmra.mrb[0].mxu0 %v336
      %v1520 = vpop.f32.mrb[0].mxu0
      %v1521 = vadd.f32 0.0, %v1520
      %v1522 = vpop.f32.mrb[0].mxu0
      %v1523 = vpop.f32.mrb[0].mxu0
      %v1524 = vadd.f32 0.0, %v1523
      %v1525 = vpop.f32.mrb[0].mxu0
      %1526 = vmatprep.mubr.bf16.mxu0 0
      %1527 = vmatmul.mubr.bf16.gmra.mrb[0].mxu0 %v337
      %v1528 = vpop.f32.mrb[0].mxu0
      %v1529 = vpop.f32.mrb[0].mxu0
      %v1530 = vpop.f32.mrb[0].mxu0
      %v1531 = vpop.f32.mrb[0].mxu0
      %1532 = vmatprep.mubr.bf16.mxu0 0
      %1533 = vmatmul.mubr.bf16.gmra.mrb[0].mxu0 %v338
      %v1534 = vpop.f32.mrb[0].mxu0
      %v1535 = vadd.f32 0.0, %v1534
      %v1536 = vpop.f32.mrb[0].mxu0
      %v1537 = vpop.f32.mrb[0].mxu0
      %v1538 = vadd.f32 0.0, %v1537
      %v1539 = vpop.f32.mrb[0].mxu0
      %1540 = vmatprep.mubr.bf16.mxu0 0
      %1541 = vmatmul.mubr.bf16.gmra.mrb[0].mxu0 %v339
      %v1542 = vpop.f32.mrb[0].mxu0
      %v1543 = vpop.f32.mrb[0].mxu0
      %v1544 = vpop.f32.mrb[0].mxu0
      %v1545 = vpop.f32.mrb[0].mxu0
      %1546 = vdwg.mxu0
      %v1547 = vmax.f32 %v911, %v927
      %v1548 = vmax.f32 %v913, %v929
      %v1549 = vmax.f32 %v1008, %v1024
      %v1550 = vmax.f32 %v1010, %v1026
      %v1551 = vmax.f32 %v1105, %v1121
      %v1552 = vmax.f32 %v1107, %v1123
      %v1553 = vmax.f32 %v1202, %v1218
      %v1554 = vmax.f32 %v1204, %v1220
      %v1555 = vmax.f32 %v1299, %v1315
      %v1556 = vmax.f32 %v1301, %v1317
      %v1557 = vmax.f32 %v1396, %v1412
      %v1558 = vmax.f32 %v1398, %v1414
      %v1559 = vmax.f32 %v1493, %v1507
      %v1560 = vmax.f32 %v915, %v931
      %v1561 = vmax.f32 %v917, %v933
      %v1562 = vmax.f32 %v1012, %v1028
      %v1563 = vmax.f32 %v1014, %v1030
      %v1564 = vmax.f32 %v1109, %v1125
      %v1565 = vmax.f32 %v1111, %v1127
      %v1566 = vmax.f32 %v1206, %v1222
      %v1567 = vmax.f32 %v1208, %v1224
      %v1568 = vmax.f32 %v1303, %v1319
      %v1569 = vmax.f32 %v1305, %v1321
      %v1570 = vmax.f32 %v1400, %v1416
      %v1571 = vmax.f32 %v1402, %v1418
      %v1572 = vmax.f32 %v1496, %v1510
      %v1573 = vmax.f32 %v943, %v959
      %v1574 = vmax.f32 %v945, %v961
      %v1575 = vmax.f32 %v1040, %v1056
      %v1576 = vmax.f32 %v1042, %v1058
      %v1577 = vmax.f32 %v1137, %v1153
      %v1578 = vmax.f32 %v1139, %v1155
      %v1579 = vmax.f32 %v1234, %v1250
      %v1580 = vmax.f32 %v1236, %v1252
      %v1581 = vmax.f32 %v1331, %v1347
      %v1582 = vmax.f32 %v1333, %v1349
      %v1583 = vmax.f32 %v1428, %v1444
      %v1584 = vmax.f32 %v1430, %v1446
      %v1585 = vmax.f32 %v1521, %v1535
      %v1586 = vmax.f32 %v947, %v963
      %v1587 = vmax.f32 %v949, %v965
      %v1588 = vmax.f32 %v1044, %v1060
      %v1589 = vmax.f32 %v1046, %v1062
      %v1590 = vmax.f32 %v1141, %v1157
      %v1591 = vmax.f32 %v1143, %v1159
      %v1592 = vmax.f32 %v1238, %v1254
      %v1593 = vmax.f32 %v1240, %v1256
      %v1594 = vmax.f32 %v1335, %v1351
      %v1595 = vmax.f32 %v1337, %v1353
      %v1596 = vmax.f32 %v1432, %v1448
      %v1597 = vmax.f32 %v1434, %v1450
      %v1598 = vmax.f32 %v1524, %v1538
      %v1599 = vmax.f32 %v1547, %v1573
      %v1600 = vmax.f32 %v1548, %v1574
      %v1601 = vmax.f32 %v1549, %v1575
      %v1602 = vmax.f32 %v1550, %v1576
      %v1603 = vmax.f32 %v1551, %v1577
      %v1604 = vmax.f32 %v1552, %v1578
      %v1605 = vmax.f32 %v1553, %v1579
      %v1606 = vmax.f32 %v1554, %v1580
      %v1607 = vmax.f32 %v1555, %v1581
      %v1608 = vmax.f32 %v1556, %v1582
      %v1609 = vmax.f32 %v1557, %v1583
      %v1610 = vmax.f32 %v1558, %v1584
      %v1611 = vmax.f32 %v1559, %v1585
      %v1612 = vmax.f32 %v1560, %v1586
      %v1613 = vmax.f32 %v1561, %v1587
      %v1614 = vmax.f32 %v1562, %v1588
      %v1615 = vmax.f32 %v1563, %v1589
      %v1616 = vmax.f32 %v1564, %v1590
      %v1617 = vmax.f32 %v1565, %v1591
      %v1618 = vmax.f32 %v1566, %v1592
      %v1619 = vmax.f32 %v1567, %v1593
      %v1620 = vmax.f32 %v1568, %v1594
      %v1621 = vmax.f32 %v1569, %v1595
      %v1622 = vmax.f32 %v1570, %v1596
      %v1623 = vmax.f32 %v1571, %v1597
      %v1624 = vmax.f32 %v1572, %v1598
      %v1625 = vld [vmem:[%s2] sm:$0xff]
      %v1626 = vld [vmem:[%s2 + $0x8] sm:$0xff]
      %1628 = vset.pattern.permute.xlu0 0
      %1629 = vperm.xlu0 %1628, %v1625
      %v1630 = vpop.permute.xlu0 %1629
      %1633 = vset.pattern.permute.xlu0 0
      %1634 = vperm.xlu0 %1633, %v1626
      %v1635 = vpop.permute.xlu0 %1634
      %v1637 = vadd.f32 %v1599, %v1630
      %v1638 = vadd.f32 %v1600, %v1630
      %v1639 = vadd.f32 %v1601, %v1630
      %v1640 = vadd.f32 %v1602, %v1630
      %v1641 = vadd.f32 %v1603, %v1630
      %v1642 = vadd.f32 %v1604, %v1630
      %v1643 = vadd.f32 %v1605, %v1630
      %v1644 = vadd.f32 %v1606, %v1630
      %v1645 = vadd.f32 %v1607, %v1630
      %v1646 = vadd.f32 %v1608, %v1630
      %v1647 = vadd.f32 %v1609, %v1630
      %v1648 = vadd.f32 %v1610, %v1630
      %v1649 = vadd.f32 %v1611, %v1630
      %v1650 = vadd.f32 %v1612, %v1635
      %v1651 = vadd.f32 %v1613, %v1635
      %v1652 = vadd.f32 %v1614, %v1635
      %v1653 = vadd.f32 %v1615, %v1635
      %v1654 = vadd.f32 %v1616, %v1635
      %v1655 = vadd.f32 %v1617, %v1635
      %v1656 = vadd.f32 %v1618, %v1635
      %v1657 = vadd.f32 %v1619, %v1635
      %v1658 = vadd.f32 %v1620, %v1635
      %v1659 = vadd.f32 %v1621, %v1635
      %v1660 = vadd.f32 %v1622, %v1635
      %v1661 = vadd.f32 %v1623, %v1635
      %v1662 = vadd.f32 %v1624, %v1635
      %v1663 = vmax.f32 %v1637, 0.0
      %v1664 = vmax.f32 %v1638, 0.0
      %v1665 = vmax.f32 %v1639, 0.0
      %v1666 = vmax.f32 %v1640, 0.0
      %v1667 = vmax.f32 %v1641, 0.0
      %v1668 = vmax.f32 %v1642, 0.0
      %v1669 = vmax.f32 %v1643, 0.0
      %v1670 = vmax.f32 %v1644, 0.0
      %v1671 = vmax.f32 %v1645, 0.0
      %v1672 = vmax.f32 %v1646, 0.0
      %v1673 = vmax.f32 %v1647, 0.0
      %v1674 = vmax.f32 %v1648, 0.0
      %v1675 = vmax.f32 %v1649, 0.0
      %v1676 = vmax.f32 %v1650, 0.0
      %v1677 = vmax.f32 %v1651, 0.0
      %v1678 = vmax.f32 %v1652, 0.0
      %v1679 = vmax.f32 %v1653, 0.0
      %v1680 = vmax.f32 %v1654, 0.0
      %v1681 = vmax.f32 %v1655, 0.0
      %v1682 = vmax.f32 %v1656, 0.0
      %v1683 = vmax.f32 %v1657, 0.0
      %v1684 = vmax.f32 %v1658, 0.0
      %v1685 = vmax.f32 %v1659, 0.0
      %v1686 = vmax.f32 %v1660, 0.0
      %v1687 = vmax.f32 %v1661, 0.0
      %v1688 = vmax.f32 %v1662, 0.0
      %v1689 = vpack.c.bf16 %v1676, %v1663
      %v1690 = vpack.c.bf16 %v1677, %v1664
      %v1691 = vpack.c.bf16 %v1678, %v1665
      %v1692 = vpack.c.bf16 %v1679, %v1666
      %v1693 = vpack.c.bf16 %v1680, %v1667
      %v1694 = vpack.c.bf16 %v1681, %v1668
      %v1695 = vpack.c.bf16 %v1682, %v1669
      %v1696 = vpack.c.bf16 %v1683, %v1670
      %v1697 = vpack.c.bf16 %v1684, %v1671
      %v1698 = vpack.c.bf16 %v1685, %v1672
      %v1699 = vpack.c.bf16 %v1686, %v1673
      %v1700 = vpack.c.bf16 %v1687, %v1674
      %v1701 = vpack.c.bf16 %v1688, %v1675
      %v1715 = vunpack.c.l.b16 %v1689
      %v1716 = vunpack.c.l.b16 %v1690
      %v1717 = vunpack.c.l.b16 %v1691
      %v1718 = vunpack.c.l.b16 %v1692
      %v1719 = vunpack.c.l.b16 %v1693
      %v1720 = vunpack.c.l.b16 %v1694
      %v1721 = vunpack.c.l.b16 %v1695
      %v1722 = vunpack.c.l.b16 %v1696
      %v1723 = vunpack.c.l.b16 %v1697
      %v1724 = vunpack.c.l.b16 %v1698
      %v1725 = vunpack.c.l.b16 %v1699
      %v1726 = vunpack.c.l.b16 %v1700
      %v1727 = vunpack.c.l.b16 %v1701
      %v1728 = vunpack.c.h.b16 %v1689
      %v1729 = vunpack.c.h.b16 %v1690
      %v1730 = vunpack.c.h.b16 %v1691
      %v1731 = vunpack.c.h.b16 %v1692
      %v1732 = vunpack.c.h.b16 %v1693
      %v1733 = vunpack.c.h.b16 %v1694
      %v1734 = vunpack.c.h.b16 %v1695
      %v1735 = vunpack.c.h.b16 %v1696
      %v1736 = vunpack.c.h.b16 %v1697
      %v1737 = vunpack.c.h.b16 %v1698
      %v1738 = vunpack.c.h.b16 %v1699
      %v1739 = vunpack.c.h.b16 %v1700
      %v1740 = vunpack.c.h.b16 %v1701
      %v1741 = vpack.c.b16 %v1716, %v1715
      %v1742 = vpack.c.b16 %v1718, %v1717
      %v1743 = vpack.c.b16 %v1720, %v1719
      %v1744 = vpack.c.b16 %v1722, %v1721
      %v1745 = vpack.c.b16 %v1724, %v1723
      %v1746 = vpack.c.b16 %v1726, %v1725
      %v1747 = vpack.c.b16 %v1727, %v1727
      %v1748 = vpack.c.b16 %v1729, %v1728
      %v1749 = vpack.c.b16 %v1731, %v1730
      %v1750 = vpack.c.b16 %v1733, %v1732
      %v1751 = vpack.c.b16 %v1735, %v1734
      %v1752 = vpack.c.b16 %v1737, %v1736
      %v1753 = vpack.c.b16 %v1739, %v1738
      %v1754 = vpack.c.b16 %v1740, %v1740
      %1769 = vst [vmem:[%s170] sm:$0xff] %v1741
      %1770 = vst [vmem:[%s170 + $0x8] sm:$0xff] %v1742
      %1771 = vst [vmem:[%s170 + $0x10] sm:$0xff] %v1743
      %1772 = vst [vmem:[%s170 + $0x18] sm:$0xff] %v1744
      %1773 = vst [vmem:[%s170 + $0x20] sm:$0xff] %v1745
      %1774 = vst [vmem:[%s170 + $0x28] sm:$0xff] %v1746
      %vm1775 = vcmask 519168
      %1776 = vst.msk [vmem:[%s170 + $0x30] sm:$0xf] %vm1775, %v1747
      %1777 = vst [vmem:[%s170 + $0x34] sm:$0xff] %v1748
      %1778 = vst [vmem:[%s170 + $0x3c] sm:$0xff] %v1749
      %1779 = vst [vmem:[%s170 + $0x44] sm:$0xff] %v1750
      %1780 = vst [vmem:[%s170 + $0x4c] sm:$0xff] %v1751
      %1781 = vst [vmem:[%s170 + $0x54] sm:$0xff] %v1752
      %1782 = vst [vmem:[%s170 + $0x5c] sm:$0xff] %v1753
      %1783 = vst.msk [vmem:[%s170 + $0x64] sm:$0xf] %vm1775, %v1754
      %p1784 = scmp.lt.s32.totalorder %s14, 1
      %s1785 = scalar_select %p1784, %s14, 1
      %s1786 = smul.addr %s1785, 26
      %s1787 = smul.addr %s1786, 4
      %s1788 = scalar_lea.vmem %s3, %s1787
      // Predicated region
      $region33: #{forward.3} parent=31 // pred_check
        %p1789 = pneg %p100
      $region34: #{forward.3} parent=31 // pred_check_branch
        %1791 = sbr.rel (%p1789) target = $region36
      $region35: #{forward.3} parent=31 // pred_region
        _
      $region36: #{forward.3} parent=31 // pred_fallthru
        _
    $region32: #{forward.3} parent=5 // pred_fallthru
      _
    %p1792 = scmp.le.s32.totalorder 2, %s9
    // Predicated region
    $region37: #{forward.3} parent=5 // pred_check
      %p1793 = pneg %p1792
    $region38: #{forward.3} parent=5 // pred_check_branch
      %1795 = sbr.rel (%p1793) target = $region40
    $region39: #{forward.3} parent=5 // pred_region
      %s1796 = ssub.s32 %s9, 2
      // Predicated region
      $region41: #{forward.3} parent=39 // pred_check
        %p1797 = pneg %p106
      $region42: #{forward.3} parent=39 // pred_check_branch
        %1799 = sbr.rel (%p1797) target = $region44
      $region43: #{forward.3} parent=39 // pred_region
        %p1800 = scmp.lt.s32.totalorder %s15, 1
        %s1801 = scalar_select %p1800, %s15, 1
        %s1802 = smul.addr %s1801, 26
        %s1803 = smul.addr %s1802, 4
        %s1804 = scalar_lea.vmem %s3, %s1803
      $region44: #{forward.3} parent=39 // pred_fallthru
        _
    $region40: #{forward.3} parent=5 // pred_fallthru
      _
  $region6: #{forward.3} parent=0 // loop_footer
    %s13 = sadd.s32 1, %s9
  $region7: #{forward.3} parent=0 // loop_footer_branch
    %8 = sbr.rel target = $region3
  $region8: #{forward.3} parent=0 // loop_exit
    _

// kernel: forward.4
$region0: #{forward.4}
  #allocation0 [shape = 'u32[]', space=smem, size = 0x4, offset = 0x4, fixed_abs, tag = 'smem constant byte address 0x4 - core index']
  #allocation1 [shape = 'u32[144,128]{1,0:T(1,128)}', space=vmem, size = 0x12000, scoped, tag = 'internal scratch']
  %s0 = inlined_call_operand.vmem [shape: bf16[2,640,324], index: 0, kind: input, shape index: {}]
  %s1 = inlined_call_operand.vmem [shape: bf16[128,640], index: 1, kind: input, shape index: {}]
  %s2 = inlined_call_operand.vmem [shape: f32[32,1], index: 2, kind: input, shape index: {}]
  %s3 = inlined_call_operand.vmem [shape: bf16[2,16,324], index: 3, kind: output, shape index: {}]
  %s4 = sld [smem:[#allocation0]]
  $region45: #{forward.4} parent=0
    _
  %s6 = ssub.s32 1, %s4
  %s7 = scalar_select 0, %s6, %s4
  loop: start=0, step=1, limit=4
  $region2: #{forward.4} parent=0 // loop_pre_header
    _
  $region3: #{forward.4} parent=0 // loop_header
    %s9 = sphi 0, %s13
    %p10 = scmp.ge.s32.totalorder %s9, 4
    %s19 = sphi 0, %s21
    %s22 = sphi 0, %s19
    %s23 = sphi 0, %s22
    %s39 = sphi 0, %s23
    %s43 = sphi 0, %s43
    %s45 = sphi 0, %s43
    %s46 = sphi 0, %s45
    %s60 = sphi 0, %s46
    %s64 = sphi 0, %s64
    %s66 = sphi 0, %s64
    %s67 = sphi 0, %s66
    %s81 = sphi 0, %s67
    %s87 = sphi 0, %s89
    %s90 = sphi 0, %s87
    %s91 = sphi 0, %s90
    %s107 = sphi 0, %s91
  $region4: #{forward.4} parent=0 // loop_header_branch
    %12 = sbr.rel (%p10) target = $region8
  $region5: #{forward.4} parent=0 // loop_body
    %s14 = ssub.s32 %s9, 1
    %s15 = ssub.s32 %s9, 2
    %s16 = sadd.s32 %s9, 1
    %s17 = ssub.s32 %s9, %s16
    %p18 = scmp.eq.s32.totalorder %s17, 0
    %s20 = sadd.s32 %s19, 1
    %s21 = scalar_select %p18, %s19, %s20
    %p24 = pneg %p18
    %p25 = scmp.eq.s32.totalorder %s9, 1
    %p26 = por %p24, %p25
    %p27 = scmp.ne.s32.totalorder %s19, %s22
    %p28 = scmp.eq.s32.totalorder %s9, 0
    %p29 = por %p27, %p28
    %p30 = scmp.ne.s32.totalorder %s19, %s22
    %p31 = scmp.eq.s32.totalorder %s14, 1
    %p32 = por %p30, %p31
    %p33 = scmp.ne.s32.totalorder %s22, %s23
    %p34 = scmp.eq.s32.totalorder %s14, 0
    %p35 = por %p33, %p34
    %p36 = scmp.ne.s32.totalorder %s22, %s23
    %p37 = scmp.eq.s32.totalorder %s15, 1
    %p38 = por %p36, %p37
    %p40 = scmp.ne.s32.totalorder %s23, %s39
    %p41 = scmp.eq.s32.totalorder %s15, 0
    %p42 = por %p40, %p41
    %s44 = sadd.s32 %s43, 1
    %p47 = scmp.eq.s32.totalorder %s9, 1
    %p48 = scmp.ne.s32.totalorder %s43, %s45
    %p49 = scmp.eq.s32.totalorder %s9, 0
    %p50 = por %p48, %p49
    %p51 = scmp.ne.s32.totalorder %s43, %s45
    %p52 = scmp.eq.s32.totalorder %s14, 1
    %p53 = por %p51, %p52
    %p54 = scmp.ne.s32.totalorder %s45, %s46
    %p55 = scmp.eq.s32.totalorder %s14, 0
    %p56 = por %p54, %p55
    %p57 = scmp.ne.s32.totalorder %s45, %s46
    %p58 = scmp.eq.s32.totalorder %s15, 1
    %p59 = por %p57, %p58
    %p61 = scmp.ne.s32.totalorder %s46, %s60
    %p62 = scmp.eq.s32.totalorder %s15, 0
    %p63 = por %p61, %p62
    %s65 = sadd.s32 %s64, 1
    %p68 = scmp.eq.s32.totalorder %s9, 1
    %p69 = scmp.ne.s32.totalorder %s64, %s66
    %p70 = scmp.eq.s32.totalorder %s9, 0
    %p71 = por %p69, %p70
    %p72 = scmp.ne.s32.totalorder %s64, %s66
    %p73 = scmp.eq.s32.totalorder %s14, 1
    %p74 = por %p72, %p73
    %p75 = scmp.ne.s32.totalorder %s66, %s67
    %p76 = scmp.eq.s32.totalorder %s14, 0
    %p77 = por %p75, %p76
    %p78 = scmp.ne.s32.totalorder %s66, %s67
    %p79 = scmp.eq.s32.totalorder %s15, 1
    %p80 = por %p78, %p79
    %p82 = scmp.ne.s32.totalorder %s67, %s81
    %p83 = scmp.eq.s32.totalorder %s15, 0
    %p84 = por %p82, %p83
    %s85 = ssub.s32 %s9, %s16
    %p86 = scmp.eq.s32.totalorder %s85, 0
    %s88 = sadd.s32 %s87, 1
    %s89 = scalar_select %p86, %s87, %s88
    %p92 = pneg %p86
    %p93 = scmp.eq.s32.totalorder %s9, 1
    %p94 = por %p92, %p93
    %p95 = scmp.ne.s32.totalorder %s87, %s90
    %p96 = scmp.eq.s32.totalorder %s9, 0
    %p97 = por %p95, %p96
    %p98 = scmp.ne.s32.totalorder %s87, %s90
    %p99 = scmp.eq.s32.totalorder %s14, 1
    %p100 = por %p98, %p99
    %p101 = scmp.ne.s32.totalorder %s90, %s91
    %p102 = scmp.eq.s32.totalorder %s14, 0
    %p103 = por %p101, %p102
    %p104 = scmp.ne.s32.totalorder %s90, %s91
    %p105 = scmp.eq.s32.totalorder %s15, 1
    %p106 = por %p104, %p105
    %p108 = scmp.ne.s32.totalorder %s91, %s107
    %p109 = scmp.eq.s32.totalorder %s15, 0
    %p110 = por %p108, %p109
    %p111 = scmp.le.s32.totalorder 1, %s9
    %p112 = scmp.lt.s32.totalorder %s9, 3
    %p113 = pnand %p111, %p112
    %p114 = pneg %p113
    // Predicated region
    $region9: #{forward.4} parent=5 // pred_check
      _
    $region10: #{forward.4} parent=5 // pred_check_branch
      %116 = sbr.rel (%p113) target = $region12
    $region11: #{forward.4} parent=5 // pred_region
      %s117 = ssub.s32 %s9, 1
      // Predicated region
      $region13: #{forward.4} parent=11 // pred_check
        %p118 = pneg %p56
      $region14: #{forward.4} parent=11 // pred_check_branch
        %120 = sbr.rel (%p118) target = $region16
      $region15: #{forward.4} parent=11 // pred_region
        _
      $region16: #{forward.4} parent=11 // pred_fallthru
        _
      // Predicated region
      $region17: #{forward.4} parent=11 // pred_check
        %p121 = pneg %p77
      $region18: #{forward.4} parent=11 // pred_check_branch
        %123 = sbr.rel (%p121) target = $region20
      $region19: #{forward.4} parent=11 // pred_region
        _
      $region20: #{forward.4} parent=11 // pred_fallthru
        _
    $region12: #{forward.4} parent=5 // pred_fallthru
      _
    %p124 = scmp.lt.s32.totalorder %s9, 2
    // Predicated region
    $region21: #{forward.4} parent=5 // pred_check
      %p125 = pneg %p124
    $region22: #{forward.4} parent=5 // pred_check_branch
      %127 = sbr.rel (%p125) target = $region24
    $region23: #{forward.4} parent=5 // pred_region
      // Predicated region
      $region25: #{forward.4} parent=23 // pred_check
        %p128 = pneg %p29
      $region26: #{forward.4} parent=23 // pred_check_branch
        %130 = sbr.rel (%p128) target = $region28
      $region27: #{forward.4} parent=23 // pred_region
        %p131 = scmp.lt.s32.totalorder %s9, 1
        %s132 = scalar_select %p131, %s9, 1
        %s133 = smul.addr %s132, 240
        %s134 = smul.addr %s133, 4
        %s135 = scalar_lea.vmem %s0, %s134
      $region28: #{forward.4} parent=23 // pred_fallthru
        _
    $region24: #{forward.4} parent=5 // pred_fallthru
      _
    %p136 = scmp.le.s32.totalorder 1, %s9
    %p137 = scmp.lt.s32.totalorder %s9, 3
    %p138 = pnand %p136, %p137
    %p139 = pneg %p138
    // Predicated region
    $region29: #{forward.4} parent=5 // pred_check
      _
    $region30: #{forward.4} parent=5 // pred_check_branch
      %141 = sbr.rel (%p138) target = $region32
    $region31: #{forward.4} parent=5 // pred_region
      %s142 = ssub.s32 %s9, 1
      %p143 = scmp.lt.s32.totalorder %s14, 1
      %s144 = scalar_select %p143, %s14, 1
      %s145 = smul.addr %s144, 240
      %s146 = smul.addr %s145, 4
      %s147 = scalar_lea.vmem %s0, %s146
      %p148 = pneg %p35
      %p149 = pneg %p32
      %p150 = pneg %p56
      %p151 = pneg %p53
      %p152 = pneg %p77
      %p153 = pneg %p74
      %p154 = pneg %p103
      %p155 = pneg %p100
      %p156 = scmp.lt.s32.totalorder %s14, 1
      %s157 = scalar_select %p156, %s14, 1
      %s158 = smul.addr %s157, 6
      %s159 = smul.addr %s158, 4
      %s160 = scalar_lea.vmem %s3, %s159
      %p161 = scmp.lt.s32.totalorder %s14, 1
      %s162 = scalar_select %p161, %s14, 1
      %s163 = smul.addr %s162, 240
      %s164 = smul.addr %s163, 4
      %s165 = scalar_lea.vmem %s0, %s164
      %p166 = scmp.lt.s32.totalorder %s14, 1
      %s167 = scalar_select %p166, %s14, 1
      %s168 = smul.addr %s167, 6
      %s169 = smul.addr %s168, 4
      %s170 = scalar_lea.vmem %s3, %s169
      %v172 = vld [vmem:[%s1] sm:$0xff]
      %v173 = vld [vmem:[%s1 + $0x8] sm:$0xff]
      %v174 = vld [vmem:[%s1 + $0x10] sm:$0xf]
      %v175 = vld [vmem:[%s1 + $0x14] sm:$0xff]
      %v176 = vld [vmem:[%s1 + $0x1c] sm:$0xff]
      %v177 = vld [vmem:[%s1 + $0x24] sm:$0xf]
      %v178 = vld [vmem:[%s1 + $0x28] sm:$0xff]
      %v179 = vld [vmem:[%s1 + $0x30] sm:$0xff]
      %v180 = vld [vmem:[%s1 + $0x38] sm:$0xf]
      %v181 = vld [vmem:[%s1 + $0x3c] sm:$0xff]
      %v182 = vld [vmem:[%s1 + $0x44] sm:$0xff]
      %v183 = vld [vmem:[%s1 + $0x4c] sm:$0xf]
      %v184 = vld [vmem:[%s1 + $0x50] sm:$0xff]
      %v185 = vld [vmem:[%s1 + $0x58] sm:$0xff]
      %v186 = vld [vmem:[%s1 + $0x60] sm:$0xf]
      %v187 = vld [vmem:[%s1 + $0x64] sm:$0xff]
      %v188 = vld [vmem:[%s1 + $0x6c] sm:$0xff]
      %v189 = vld [vmem:[%s1 + $0x74] sm:$0xf]
      %v190 = vld [vmem:[%s1 + $0x78] sm:$0xff]
      %v191 = vld [vmem:[%s1 + $0x80] sm:$0xff]
      %v192 = vld [vmem:[%s1 + $0x88] sm:$0xf]
      %v193 = vld [vmem:[%s1 + $0x8c] sm:$0xff]
      %v194 = vld [vmem:[%s1 + $0x94] sm:$0xff]
      %v195 = vld [vmem:[%s1 + $0x9c] sm:$0xf]
      %v196 = vld [vmem:[%s1 + $0xa0] sm:$0xff]
      %v197 = vld [vmem:[%s1 + $0xa8] sm:$0xff]
      %v198 = vld [vmem:[%s1 + $0xb0] sm:$0xf]
      %v199 = vld [vmem:[%s1 + $0xb4] sm:$0xff]
      %v200 = vld [vmem:[%s1 + $0xbc] sm:$0xff]
      %v201 = vld [vmem:[%s1 + $0xc4] sm:$0xf]
      %v202 = vld [vmem:[%s1 + $0xc8] sm:$0xff]
      %v203 = vld [vmem:[%s1 + $0xd0] sm:$0xff]
      %v204 = vld [vmem:[%s1 + $0xd8] sm:$0xf]
      %v205 = vld [vmem:[%s1 + $0xdc] sm:$0xff]
      %v206 = vld [vmem:[%s1 + $0xe4] sm:$0xff]
      %v207 = vld [vmem:[%s1 + $0xec] sm:$0xf]
      %v208 = vld [vmem:[%s1 + $0xf0] sm:$0xff]
      %v209 = vld [vmem:[%s1 + $0xf8] sm:$0xff]
      %v210 = vld [vmem:[%s1 + $0x100] sm:$0xf]
      %v211 = vld [vmem:[%s1 + $0x104] sm:$0xff]
      %v212 = vld [vmem:[%s1 + $0x10c] sm:$0xff]
      %v213 = vld [vmem:[%s1 + $0x114] sm:$0xf]
      %v214 = vld [vmem:[%s1 + $0x118] sm:$0xff]
      %v215 = vld [vmem:[%s1 + $0x120] sm:$0xff]
      %v216 = vld [vmem:[%s1 + $0x128] sm:$0xf]
      %v217 = vld [vmem:[%s1 + $0x12c] sm:$0xff]
      %v218 = vld [vmem:[%s1 + $0x134] sm:$0xff]
      %v219 = vld [vmem:[%s1 + $0x13c] sm:$0xf]
      %v220 = vld [vmem:[%s165] sm:$0xff]
      %v221 = vld [vmem:[%s165 + $0x8] sm:$0xf]
      %v222 = vld [vmem:[%s165 + $0xc] sm:$0xff]
      %v223 = vld [vmem:[%s165 + $0x14] sm:$0xf]
      %v224 = vld [vmem:[%s165 + $0x18] sm:$0xff]
      %v225 = vld [vmem:[%s165 + $0x20] sm:$0xf]
      %v226 = vld [vmem:[%s165 + $0x24] sm:$0xff]
      %v227 = vld [vmem:[%s165 + $0x2c] sm:$0xf]
      %v228 = vld [vmem:[%s165 + $0x30] sm:$0xff]
      %v229 = vld [vmem:[%s165 + $0x38] sm:$0xf]
      %v230 = vld [vmem:[%s165 + $0x3c] sm:$0xff]
      %v231 = vld [vmem:[%s165 + $0x44] sm:$0xf]
      %v232 = vld [vmem:[%s165 + $0x48] sm:$0xff]
      %v233 = vld [vmem:[%s165 + $0x50] sm:$0xf]
      %v234 = vld [vmem:[%s165 + $0x54] sm:$0xff]
      %v235 = vld [vmem:[%s165 + $0x5c] sm:$0xf]
      %v236 = vld [vmem:[%s165 + $0x60] sm:$0xff]
      %v237 = vld [vmem:[%s165 + $0x68] sm:$0xf]
      %v238 = vld [vmem:[%s165 + $0x6c] sm:$0xff]
      %v239 = vld [vmem:[%s165 + $0x74] sm:$0xf]
      %v240 = vld [vmem:[%s165 + $0x78] sm:$0xff]
      %v241 = vld [vmem:[%s165 + $0x80] sm:$0xf]
      %v242 = vld [vmem:[%s165 + $0x84] sm:$0xff]
      %v243 = vld [vmem:[%s165 + $0x8c] sm:$0xf]
      %v244 = vld [vmem:[%s165 + $0x90] sm:$0xff]
      %v245 = vld [vmem:[%s165 + $0x98] sm:$0xf]
      %v246 = vld [vmem:[%s165 + $0x9c] sm:$0xff]
      %v247 = vld [vmem:[%s165 + $0xa4] sm:$0xf]
      %v248 = vld [vmem:[%s165 + $0xa8] sm:$0xff]
      %v249 = vld [vmem:[%s165 + $0xb0] sm:$0xf]
      %v250 = vld [vmem:[%s165 + $0xb4] sm:$0xff]
      %v251 = vld [vmem:[%s165 + $0xbc] sm:$0xf]
      %v252 = vld [vmem:[%s165 + $0xc0] sm:$0xff]
      %v253 = vld [vmem:[%s165 + $0xc8] sm:$0xf]
      %v254 = vld [vmem:[%s165 + $0xcc] sm:$0xff]
      %v255 = vld [vmem:[%s165 + $0xd4] sm:$0xf]
      %v256 = vld [vmem:[%s165 + $0xd8] sm:$0xff]
      %v257 = vld [vmem:[%s165 + $0xe0] sm:$0xf]
      %v258 = vld [vmem:[%s165 + $0xe4] sm:$0xff]
      %v259 = vld [vmem:[%s165 + $0xec] sm:$0xf]
      %v260 = vld [vmem:[%s165 + $0xf0] sm:$0xff]
      %v261 = vld [vmem:[%s165 + $0xf8] sm:$0xf]
      %v262 = vld [vmem:[%s165 + $0xfc] sm:$0xff]
      %v263 = vld [vmem:[%s165 + $0x104] sm:$0xf]
      %v264 = vld [vmem:[%s165 + $0x108] sm:$0xff]
      %v265 = vld [vmem:[%s165 + $0x110] sm:$0xf]
      %v266 = vld [vmem:[%s165 + $0x114] sm:$0xff]
      %v267 = vld [vmem:[%s165 + $0x11c] sm:$0xf]
      %v268 = vld [vmem:[%s165 + $0x120] sm:$0xff]
      %v269 = vld [vmem:[%s165 + $0x128] sm:$0xf]
      %v270 = vld [vmem:[%s165 + $0x12c] sm:$0xff]
      %v271 = vld [vmem:[%s165 + $0x134] sm:$0xf]
      %v272 = vld [vmem:[%s165 + $0x138] sm:$0xff]
      %v273 = vld [vmem:[%s165 + $0x140] sm:$0xf]
      %v274 = vld [vmem:[%s165 + $0x144] sm:$0xff]
      %v275 = vld [vmem:[%s165 + $0x14c] sm:$0xf]
      %v276 = vld [vmem:[%s165 + $0x150] sm:$0xff]
      %v277 = vld [vmem:[%s165 + $0x158] sm:$0xf]
      %v278 = vld [vmem:[%s165 + $0x15c] sm:$0xff]
      %v279 = vld [vmem:[%s165 + $0x164] sm:$0xf]
      %v280 = vld [vmem:[%s165 + $0x168] sm:$0xff]
      %v281 = vld [vmem:[%s165 + $0x170] sm:$0xf]
      %v282 = vld [vmem:[%s165 + $0x174] sm:$0xff]
      %v283 = vld [vmem:[%s165 + $0x17c] sm:$0xf]
      %v284 = vld [vmem:[%s165 + $0x180] sm:$0xff]
      %v285 = vld [vmem:[%s165 + $0x188] sm:$0xf]
      %v286 = vld [vmem:[%s165 + $0x18c] sm:$0xff]
      %v287 = vld [vmem:[%s165 + $0x194] sm:$0xf]
      %v288 = vld [vmem:[%s165 + $0x198] sm:$0xff]
      %v289 = vld [vmem:[%s165 + $0x1a0] sm:$0xf]
      %v290 = vld [vmem:[%s165 + $0x1a4] sm:$0xff]
      %v291 = vld [vmem:[%s165 + $0x1ac] sm:$0xf]
      %v292 = vld [vmem:[%s165 + $0x1b0] sm:$0xff]
      %v293 = vld [vmem:[%s165 + $0x1b8] sm:$0xf]
      %v294 = vld [vmem:[%s165 + $0x1bc] sm:$0xff]
      %v295 = vld [vmem:[%s165 + $0x1c4] sm:$0xf]
      %v296 = vld [vmem:[%s165 + $0x1c8] sm:$0xff]
      %v297 = vld [vmem:[%s165 + $0x1d0] sm:$0xf]
      %v298 = vld [vmem:[%s165 + $0x1d4] sm:$0xff]
      %v299 = vld [vmem:[%s165 + $0x1dc] sm:$0xf]
      %v300 = vld [vmem:[%s165 + $0x1e0] sm:$0xff]
      %v301 = vld [vmem:[%s165 + $0x1e8] sm:$0xf]
      %v302 = vld [vmem:[%s165 + $0x1ec] sm:$0xff]
      %v303 = vld [vmem:[%s165 + $0x1f4] sm:$0xf]
      %v304 = vld [vmem:[%s165 + $0x1f8] sm:$0xff]
      %v305 = vld [vmem:[%s165 + $0x200] sm:$0xf]
      %v306 = vld [vmem:[%s165 + $0x204] sm:$0xff]
      %v307 = vld [vmem:[%s165 + $0x20c] sm:$0xf]
      %v308 = vld [vmem:[%s165 + $0x210] sm:$0xff]
      %v309 = vld [vmem:[%s165 + $0x218] sm:$0xf]
      %v310 = vld [vmem:[%s165 + $0x21c] sm:$0xff]
      %v311 = vld [vmem:[%s165 + $0x224] sm:$0xf]
      %v312 = vld [vmem:[%s165 + $0x228] sm:$0xff]
      %v313 = vld [vmem:[%s165 + $0x230] sm:$0xf]
      %v314 = vld [vmem:[%s165 + $0x234] sm:$0xff]
      %v315 = vld [vmem:[%s165 + $0x23c] sm:$0xf]
      %v316 = vld [vmem:[%s165 + $0x240] sm:$0xff]
      %v317 = vld [vmem:[%s165 + $0x248] sm:$0xf]
      %v318 = vld [vmem:[%s165 + $0x24c] sm:$0xff]
      %v319 = vld [vmem:[%s165 + $0x254] sm:$0xf]
      %v320 = vld [vmem:[%s165 + $0x258] sm:$0xff]
      %v321 = vld [vmem:[%s165 + $0x260] sm:$0xf]
      %v322 = vld [vmem:[%s165 + $0x264] sm:$0xff]
      %v323 = vld [vmem:[%s165 + $0x26c] sm:$0xf]
      %v324 = vld [vmem:[%s165 + $0x270] sm:$0xff]
      %v325 = vld [vmem:[%s165 + $0x278] sm:$0xf]
      %v326 = vld [vmem:[%s165 + $0x27c] sm:$0xff]
      %v327 = vld [vmem:[%s165 + $0x284] sm:$0xf]
      %v328 = vld [vmem:[%s165 + $0x288] sm:$0xff]
      %v329 = vld [vmem:[%s165 + $0x290] sm:$0xf]
      %v330 = vld [vmem:[%s165 + $0x294] sm:$0xff]
      %v331 = vld [vmem:[%s165 + $0x29c] sm:$0xf]
      %v332 = vld [vmem:[%s165 + $0x2a0] sm:$0xff]
      %v333 = vld [vmem:[%s165 + $0x2a8] sm:$0xf]
      %v334 = vld [vmem:[%s165 + $0x2ac] sm:$0xff]
      %v335 = vld [vmem:[%s165 + $0x2b4] sm:$0xf]
      %v336 = vld [vmem:[%s165 + $0x2b8] sm:$0xff]
      %v337 = vld [vmem:[%s165 + $0x2c0] sm:$0xf]
      %v338 = vld [vmem:[%s165 + $0x2c4] sm:$0xff]
      %v339 = vld [vmem:[%s165 + $0x2cc] sm:$0xf]
      %v340 = vld [vmem:[%s165 + $0x2d0] sm:$0xff]
      %v341 = vld [vmem:[%s165 + $0x2d8] sm:$0xf]
      %v342 = vld [vmem:[%s165 + $0x2dc] sm:$0xff]
      %v343 = vld [vmem:[%s165 + $0x2e4] sm:$0xf]
      %v344 = vld [vmem:[%s165 + $0x2e8] sm:$0xff]
      %v345 = vld [vmem:[%s165 + $0x2f0] sm:$0xf]
      %v346 = vld [vmem:[%s165 + $0x2f4] sm:$0xff]
      %v347 = vld [vmem:[%s165 + $0x2fc] sm:$0xf]
      %v348 = vld [vmem:[%s165 + $0x300] sm:$0xff]
      %v349 = vld [vmem:[%s165 + $0x308] sm:$0xf]
      %v350 = vld [vmem:[%s165 + $0x30c] sm:$0xff]
      %v351 = vld [vmem:[%s165 + $0x314] sm:$0xf]
      %v352 = vld [vmem:[%s165 + $0x318] sm:$0xff]
      %v353 = vld [vmem:[%s165 + $0x320] sm:$0xf]
      %v354 = vld [vmem:[%s165 + $0x324] sm:$0xff]
      %v355 = vld [vmem:[%s165 + $0x32c] sm:$0xf]
      %v356 = vld [vmem:[%s165 + $0x330] sm:$0xff]
      %v357 = vld [vmem:[%s165 + $0x338] sm:$0xf]
      %v358 = vld [vmem:[%s165 + $0x33c] sm:$0xff]
      %v359 = vld [vmem:[%s165 + $0x344] sm:$0xf]
      %v360 = vld [vmem:[%s165 + $0x348] sm:$0xff]
      %v361 = vld [vmem:[%s165 + $0x350] sm:$0xf]
      %v362 = vld [vmem:[%s165 + $0x354] sm:$0xff]
      %v363 = vld [vmem:[%s165 + $0x35c] sm:$0xf]
      %v364 = vld [vmem:[%s165 + $0x360] sm:$0xff]
      %v365 = vld [vmem:[%s165 + $0x368] sm:$0xf]
      %v366 = vld [vmem:[%s165 + $0x36c] sm:$0xff]
      %v367 = vld [vmem:[%s165 + $0x374] sm:$0xf]
      %v368 = vld [vmem:[%s165 + $0x378] sm:$0xff]
      %v369 = vld [vmem:[%s165 + $0x380] sm:$0xf]
      %v370 = vld [vmem:[%s165 + $0x384] sm:$0xff]
      %v371 = vld [vmem:[%s165 + $0x38c] sm:$0xf]
      %v372 = vld [vmem:[%s165 + $0x390] sm:$0xff]
      %v373 = vld [vmem:[%s165 + $0x398] sm:$0xf]
      %v374 = vld [vmem:[%s165 + $0x39c] sm:$0xff]
      %v375 = vld [vmem:[%s165 + $0x3a4] sm:$0xf]
      %v376 = vld [vmem:[%s165 + $0x3a8] sm:$0xff]
      %v377 = vld [vmem:[%s165 + $0x3b0] sm:$0xf]
      %v378 = vld [vmem:[%s165 + $0x3b4] sm:$0xff]
      %v379 = vld [vmem:[%s165 + $0x3bc] sm:$0xf]
      %v428 = vunpack.c.l.b16 %v172
      %v429 = vunpack.c.h.b16 %v172
      %v430 = vunpack.c.l.b16 %v173
      %v431 = vunpack.c.h.b16 %v173
      %v432 = vunpack.c.l.b16 %v174
      %v433 = vunpack.c.l.b16 %v175
      %v434 = vunpack.c.h.b16 %v175
      %v435 = vunpack.c.l.b16 %v176
      %v436 = vunpack.c.h.b16 %v176
      %v437 = vunpack.c.l.b16 %v177
      %v438 = vunpack.c.l.b16 %v178
      %v439 = vunpack.c.h.b16 %v178
      %v440 = vunpack.c.l.b16 %v179
      %v441 = vunpack.c.h.b16 %v179
      %v442 = vunpack.c.l.b16 %v180
      %v443 = vunpack.c.l.b16 %v181
      %v444 = vunpack.c.h.b16 %v181
      %v445 = vunpack.c.l.b16 %v182
      %v446 = vunpack.c.h.b16 %v182
      %v447 = vunpack.c.l.b16 %v183
      %v448 = vunpack.c.l.b16 %v184
      %v449 = vunpack.c.h.b16 %v184
      %v450 = vunpack.c.l.b16 %v185
      %v451 = vunpack.c.h.b16 %v185
      %v452 = vunpack.c.l.b16 %v186
      %v453 = vunpack.c.l.b16 %v187
      %v454 = vunpack.c.h.b16 %v187
      %v455 = vunpack.c.l.b16 %v188
      %v456 = vunpack.c.h.b16 %v188
      %v457 = vunpack.c.l.b16 %v189
      %v458 = vunpack.c.l.b16 %v190
      %v459 = vunpack.c.h.b16 %v190
      %v460 = vunpack.c.l.b16 %v191
      %v461 = vunpack.c.h.b16 %v191
      %v462 = vunpack.c.l.b16 %v192
      %v463 = vunpack.c.l.b16 %v193
      %v464 = vunpack.c.h.b16 %v193
      %v465 = vunpack.c.l.b16 %v194
      %v466 = vunpack.c.h.b16 %v194
      %v467 = vunpack.c.l.b16 %v195
      %v468 = vunpack.c.l.b16 %v196
      %v469 = vunpack.c.h.b16 %v196
      %v470 = vunpack.c.l.b16 %v197
      %v471 = vunpack.c.h.b16 %v197
      %v472 = vunpack.c.l.b16 %v198
      %v473 = vunpack.c.l.b16 %v199
      %v474 = vunpack.c.h.b16 %v199
      %v475 = vunpack.c.l.b16 %v200
      %v476 = vunpack.c.h.b16 %v200
      %v477 = vunpack.c.l.b16 %v201
      %v478 = vunpack.c.l.b16 %v202
      %v479 = vunpack.c.h.b16 %v202
      %v480 = vunpack.c.l.b16 %v203
      %v481 = vunpack.c.h.b16 %v203
      %v482 = vunpack.c.l.b16 %v204
      %v483 = vunpack.c.l.b16 %v205
      %v484 = vunpack.c.h.b16 %v205
      %v485 = vunpack.c.l.b16 %v206
      %v486 = vunpack.c.h.b16 %v206
      %v487 = vunpack.c.l.b16 %v207
      %v488 = vunpack.c.l.b16 %v208
      %v489 = vunpack.c.h.b16 %v208
      %v490 = vunpack.c.l.b16 %v209
      %v491 = vunpack.c.h.b16 %v209
      %v492 = vunpack.c.l.b16 %v210
      %v493 = vunpack.c.l.b16 %v211
      %v494 = vunpack.c.h.b16 %v211
      %v495 = vunpack.c.l.b16 %v212
      %v496 = vunpack.c.h.b16 %v212
      %v497 = vunpack.c.l.b16 %v213
      %v498 = vunpack.c.l.b16 %v214
      %v499 = vunpack.c.h.b16 %v214
      %v500 = vunpack.c.l.b16 %v215
      %v501 = vunpack.c.h.b16 %v215
      %v502 = vunpack.c.l.b16 %v216
      %v503 = vunpack.c.l.b16 %v217
      %v504 = vunpack.c.h.b16 %v217
      %v505 = vunpack.c.l.b16 %v218
      %v506 = vunpack.c.h.b16 %v218
      %v507 = vunpack.c.l.b16 %v219
      %v508 = vpack.c.b16 %v433, %v428
      %v509 = vpack.c.b16 %v434, %v429
      %v510 = vpack.c.b16 %v435, %v430
      %v511 = vpack.c.b16 %v436, %v431
      %v512 = vpack.c.b16 %v437, %v432
      %v513 = vpack.c.b16 %v443, %v438
      %v514 = vpack.c.b16 %v444, %v439
      %v515 = vpack.c.b16 %v445, %v440
      %v516 = vpack.c.b16 %v446, %v441
      %v517 = vpack.c.b16 %v447, %v442
      %v518 = vpack.c.b16 %v453, %v448
      %v519 = vpack.c.b16 %v454, %v449
      %v520 = vpack.c.b16 %v455, %v450
      %v521 = vpack.c.b16 %v456, %v451
      %v522 = vpack.c.b16 %v457, %v452
      %v523 = vpack.c.b16 %v463, %v458
      %v524 = vpack.c.b16 %v464, %v459
      %v525 = vpack.c.b16 %v465, %v460
      %v526 = vpack.c.b16 %v466, %v461
      %v527 = vpack.c.b16 %v467, %v462
      %v528 = vpack.c.b16 %v473, %v468
      %v529 = vpack.c.b16 %v474, %v469
      %v530 = vpack.c.b16 %v475, %v470
      %v531 = vpack.c.b16 %v476, %v471
      %v532 = vpack.c.b16 %v477, %v472
      %v533 = vpack.c.b16 %v483, %v478
      %v534 = vpack.c.b16 %v484, %v479
      %v535 = vpack.c.b16 %v485, %v480
      %v536 = vpack.c.b16 %v486, %v481
      %v537 = vpack.c.b16 %v487, %v482
      %v538 = vpack.c.b16 %v493, %v488
      %v539 = vpack.c.b16 %v494, %v489
      %v540 = vpack.c.b16 %v495, %v490
      %v541 = vpack.c.b16 %v496, %v491
      %v542 = vpack.c.b16 %v497, %v492
      %v543 = vpack.c.b16 %v503, %v498
      %v544 = vpack.c.b16 %v504, %v499
      %v545 = vpack.c.b16 %v505, %v500
      %v546 = vpack.c.b16 %v506, %v501
      %v547 = vpack.c.b16 %v507, %v502
      %v748 = vunpack.c.l.b16 %v220
      %v749 = vunpack.c.h.b16 %v220
      %v750 = vunpack.c.l.b16 %v221
      %v751 = vunpack.c.l.b16 %v222
      %v752 = vunpack.c.h.b16 %v222
      %v753 = vunpack.c.l.b16 %v223
      %v754 = vunpack.c.l.b16 %v224
      %v755 = vunpack.c.h.b16 %v224
      %v756 = vunpack.c.l.b16 %v225
      %v757 = vunpack.c.l.b16 %v226
      %v758 = vunpack.c.h.b16 %v226
      %v759 = vunpack.c.l.b16 %v227
      %v760 = vunpack.c.l.b16 %v228
      %v761 = vunpack.c.h.b16 %v228
      %v762 = vunpack.c.l.b16 %v229
      %v763 = vunpack.c.l.b16 %v230
      %v764 = vunpack.c.h.b16 %v230
      %v765 = vunpack.c.l.b16 %v231
      %v766 = vunpack.c.l.b16 %v232
      %v767 = vunpack.c.h.b16 %v232
      %v768 = vunpack.c.l.b16 %v233
      %v769 = vunpack.c.l.b16 %v234
      %v770 = vunpack.c.h.b16 %v234
      %v771 = vunpack.c.l.b16 %v235
      %v772 = vunpack.c.l.b16 %v236
      %v773 = vunpack.c.h.b16 %v236
      %v774 = vunpack.c.l.b16 %v237
      %v775 = vunpack.c.l.b16 %v238
      %v776 = vunpack.c.h.b16 %v238
      %v777 = vunpack.c.l.b16 %v239
      %v778 = vunpack.c.l.b16 %v240
      %v779 = vunpack.c.h.b16 %v240
      %v780 = vunpack.c.l.b16 %v241
      %v781 = vunpack.c.l.b16 %v242
      %v782 = vunpack.c.h.b16 %v242
      %v783 = vunpack.c.l.b16 %v243
      %v784 = vunpack.c.l.b16 %v244
      %v785 = vunpack.c.h.b16 %v244
      %v786 = vunpack.c.l.b16 %v245
      %v787 = vunpack.c.l.b16 %v246
      %v788 = vunpack.c.h.b16 %v246
      %v789 = vunpack.c.l.b16 %v247
      %v790 = vunpack.c.l.b16 %v248
      %v791 = vunpack.c.h.b16 %v248
      %v792 = vunpack.c.l.b16 %v249
      %v793 = vunpack.c.l.b16 %v250
      %v794 = vunpack.c.h.b16 %v250
      %v795 = vunpack.c.l.b16 %v251
      %v796 = vunpack.c.l.b16 %v252
      %v797 = vunpack.c.h.b16 %v252
      %v798 = vunpack.c.l.b16 %v253
      %v799 = vunpack.c.l.b16 %v254
      %v800 = vunpack.c.h.b16 %v254
      %v801 = vunpack.c.l.b16 %v255
      %v802 = vunpack.c.l.b16 %v256
      %v803 = vunpack.c.h.b16 %v256
      %v804 = vunpack.c.l.b16 %v257
      %v805 = vunpack.c.l.b16 %v258
      %v806 = vunpack.c.h.b16 %v258
      %v807 = vunpack.c.l.b16 %v259
      %v808 = vunpack.c.l.b16 %v260
      %v809 = vunpack.c.h.b16 %v260
      %v810 = vunpack.c.l.b16 %v261
      %v811 = vunpack.c.l.b16 %v262
      %v812 = vunpack.c.h.b16 %v262
      %v813 = vunpack.c.l.b16 %v263
      %v814 = vunpack.c.l.b16 %v264
      %v815 = vunpack.c.h.b16 %v264
      %v816 = vunpack.c.l.b16 %v265
      %v817 = vunpack.c.l.b16 %v266
      %v818 = vunpack.c.h.b16 %v266
      %v819 = vunpack.c.l.b16 %v267
      %v820 = vunpack.c.l.b16 %v268
      %v821 = vunpack.c.h.b16 %v268
      %v822 = vunpack.c.l.b16 %v269
      %v823 = vunpack.c.l.b16 %v270
      %v824 = vunpack.c.h.b16 %v270
      %v825 = vunpack.c.l.b16 %v271
      %v826 = vunpack.c.l.b16 %v272
      %v827 = vunpack.c.h.b16 %v272
      %v828 = vunpack.c.l.b16 %v273
      %v829 = vunpack.c.l.b16 %v274
      %v830 = vunpack.c.h.b16 %v274
      %v831 = vunpack.c.l.b16 %v275
      %v832 = vunpack.c.l.b16 %v276
      %v833 = vunpack.c.h.b16 %v276
      %v834 = vunpack.c.l.b16 %v277
      %v835 = vunpack.c.l.b16 %v278
      %v836 = vunpack.c.h.b16 %v278
      %v837 = vunpack.c.l.b16 %v279
      %v838 = vunpack.c.l.b16 %v280
      %v839 = vunpack.c.h.b16 %v280
      %v840 = vunpack.c.l.b16 %v281
      %v841 = vunpack.c.l.b16 %v282
      %v842 = vunpack.c.h.b16 %v282
      %v843 = vunpack.c.l.b16 %v283
      %v844 = vunpack.c.l.b16 %v284
      %v845 = vunpack.c.h.b16 %v284
      %v846 = vunpack.c.l.b16 %v285
      %v847 = vunpack.c.l.b16 %v286
      %v848 = vunpack.c.h.b16 %v286
      %v849 = vunpack.c.l.b16 %v287
      %v850 = vunpack.c.l.b16 %v288
      %v851 = vunpack.c.h.b16 %v288
      %v852 = vunpack.c.l.b16 %v289
      %v853 = vunpack.c.l.b16 %v290
      %v854 = vunpack.c.h.b16 %v290
      %v855 = vunpack.c.l.b16 %v291
      %v856 = vunpack.c.l.b16 %v292
      %v857 = vunpack.c.h.b16 %v292
      %v858 = vunpack.c.l.b16 %v293
      %v859 = vunpack.c.l.b16 %v294
      %v860 = vunpack.c.h.b16 %v294
      %v861 = vunpack.c.l.b16 %v295
      %v862 = vunpack.c.l.b16 %v296
      %v863 = vunpack.c.h.b16 %v296
      %v864 = vunpack.c.l.b16 %v297
      %v865 = vunpack.c.l.b16 %v298
      %v866 = vunpack.c.h.b16 %v298
      %v867 = vunpack.c.l.b16 %v299
      %v868 = vunpack.c.l.b16 %v300
      %v869 = vunpack.c.h.b16 %v300
      %v870 = vunpack.c.l.b16 %v301
      %v871 = vunpack.c.l.b16 %v302
      %v872 = vunpack.c.h.b16 %v302
      %v873 = vunpack.c.l.b16 %v303
      %v874 = vunpack.c.l.b16 %v304
      %v875 = vunpack.c.h.b16 %v304
      %v876 = vunpack.c.l.b16 %v305
      %v877 = vunpack.c.l.b16 %v306
      %v878 = vunpack.c.h.b16 %v306
      %v879 = vunpack.c.l.b16 %v307
      %v880 = vunpack.c.l.b16 %v308
      %v881 = vunpack.c.h.b16 %v308
      %v882 = vunpack.c.l.b16 %v309
      %v883 = vunpack.c.l.b16 %v310
      %v884 = vunpack.c.h.b16 %v310
      %v885 = vunpack.c.l.b16 %v311
      %v886 = vunpack.c.l.b16 %v312
      %v887 = vunpack.c.h.b16 %v312
      %v888 = vunpack.c.l.b16 %v313
      %v889 = vunpack.c.l.b16 %v314
      %v890 = vunpack.c.h.b16 %v314
      %v891 = vunpack.c.l.b16 %v315
      %v892 = vunpack.c.l.b16 %v316
      %v893 = vunpack.c.h.b16 %v316
      %v894 = vunpack.c.l.b16 %v317
      %v895 = vunpack.c.l.b16 %v318
      %v896 = vunpack.c.h.b16 %v318
      %v897 = vunpack.c.l.b16 %v319
      %v898 = vunpack.c.l.b16 %v320
      %v899 = vunpack.c.h.b16 %v320
      %v900 = vunpack.c.l.b16 %v321
      %v901 = vunpack.c.l.b16 %v322
      %v902 = vunpack.c.h.b16 %v322
      %v903 = vunpack.c.l.b16 %v323
      %v904 = vunpack.c.l.b16 %v324
      %v905 = vunpack.c.h.b16 %v324
      %v906 = vunpack.c.l.b16 %v325
      %v907 = vunpack.c.l.b16 %v326
      %v908 = vunpack.c.h.b16 %v326
      %v909 = vunpack.c.l.b16 %v327
      %v910 = vunpack.c.l.b16 %v328
      %v911 = vunpack.c.h.b16 %v328
      %v912 = vunpack.c.l.b16 %v329
      %v913 = vunpack.c.l.b16 %v330
      %v914 = vunpack.c.h.b16 %v330
      %v915 = vunpack.c.l.b16 %v331
      %v916 = vunpack.c.l.b16 %v332
      %v917 = vunpack.c.h.b16 %v332
      %v918 = vunpack.c.l.b16 %v333
      %v919 = vunpack.c.l.b16 %v334
      %v920 = vunpack.c.h.b16 %v334
      %v921 = vunpack.c.l.b16 %v335
      %v922 = vunpack.c.l.b16 %v336
      %v923 = vunpack.c.h.b16 %v336
      %v924 = vunpack.c.l.b16 %v337
      %v925 = vunpack.c.l.b16 %v338
      %v926 = vunpack.c.h.b16 %v338
      %v927 = vunpack.c.l.b16 %v339
      %v928 = vunpack.c.l.b16 %v340
      %v929 = vunpack.c.h.b16 %v340
      %v930 = vunpack.c.l.b16 %v341
      %v931 = vunpack.c.l.b16 %v342
      %v932 = vunpack.c.h.b16 %v342
      %v933 = vunpack.c.l.b16 %v343
      %v934 = vunpack.c.l.b16 %v344
      %v935 = vunpack.c.h.b16 %v344
      %v936 = vunpack.c.l.b16 %v345
      %v937 = vunpack.c.l.b16 %v346
      %v938 = vunpack.c.h.b16 %v346
      %v939 = vunpack.c.l.b16 %v347
      %v940 = vunpack.c.l.b16 %v348
      %v941 = vunpack.c.h.b16 %v348
      %v942 = vunpack.c.l.b16 %v349
      %v943 = vunpack.c.l.b16 %v350
      %v944 = vunpack.c.h.b16 %v350
      %v945 = vunpack.c.l.b16 %v351
      %v946 = vunpack.c.l.b16 %v352
      %v947 = vunpack.c.h.b16 %v352
      %v948 = vunpack.c.l.b16 %v353
      %v949 = vunpack.c.l.b16 %v354
      %v950 = vunpack.c.h.b16 %v354
      %v951 = vunpack.c.l.b16 %v355
      %v952 = vunpack.c.l.b16 %v356
      %v953 = vunpack.c.h.b16 %v356
      %v954 = vunpack.c.l.b16 %v357
      %v955 = vunpack.c.l.b16 %v358
      %v956 = vunpack.c.h.b16 %v358
      %v957 = vunpack.c.l.b16 %v359
      %v958 = vunpack.c.l.b16 %v360
      %v959 = vunpack.c.h.b16 %v360
      %v960 = vunpack.c.l.b16 %v361
      %v961 = vunpack.c.l.b16 %v362
      %v962 = vunpack.c.h.b16 %v362
      %v963 = vunpack.c.l.b16 %v363
      %v964 = vunpack.c.l.b16 %v364
      %v965 = vunpack.c.h.b16 %v364
      %v966 = vunpack.c.l.b16 %v365
      %v967 = vunpack.c.l.b16 %v366
      %v968 = vunpack.c.h.b16 %v366
      %v969 = vunpack.c.l.b16 %v367
      %v970 = vunpack.c.l.b16 %v368
      %v971 = vunpack.c.h.b16 %v368
      %v972 = vunpack.c.l.b16 %v369
      %v973 = vunpack.c.l.b16 %v370
      %v974 = vunpack.c.h.b16 %v370
      %v975 = vunpack.c.l.b16 %v371
      %v976 = vunpack.c.l.b16 %v372
      %v977 = vunpack.c.h.b16 %v372
      %v978 = vunpack.c.l.b16 %v373
      %v979 = vunpack.c.l.b16 %v374
      %v980 = vunpack.c.h.b16 %v374
      %v981 = vunpack.c.l.b16 %v375
      %v982 = vunpack.c.l.b16 %v376
      %v983 = vunpack.c.h.b16 %v376
      %v984 = vunpack.c.l.b16 %v377
      %v985 = vunpack.c.l.b16 %v378
      %v986 = vunpack.c.h.b16 %v378
      %v987 = vunpack.c.l.b16 %v379
      %v988 = vpack.c.b16 %v751, %v748
      %v989 = vpack.c.b16 %v752, %v749
      %v990 = vpack.c.b16 %v753, %v750
      %v991 = vpack.c.b16 %v757, %v754
      %v992 = vpack.c.b16 %v758, %v755
      %v993 = vpack.c.b16 %v759, %v756
      %v994 = vpack.c.b16 %v763, %v760
      %v995 = vpack.c.b16 %v764, %v761
      %v996 = vpack.c.b16 %v765, %v762
      %v997 = vpack.c.b16 %v769, %v766
      %v998 = vpack.c.b16 %v770, %v767
      %v999 = vpack.c.b16 %v771, %v768
      %v1000 = vpack.c.b16 %v775, %v772
      %v1001 = vpack.c.b16 %v776, %v773
      %v1002 = vpack.c.b16 %v777, %v774
      %v1003 = vpack.c.b16 %v781, %v778
      %v1004 = vpack.c.b16 %v782, %v779
      %v1005 = vpack.c.b16 %v783, %v780
      %v1006 = vpack.c.b16 %v787, %v784
      %v1007 = vpack.c.b16 %v788, %v785
      %v1008 = vpack.c.b16 %v789, %v786
      %v1009 = vpack.c.b16 %v793, %v790
      %v1010 = vpack.c.b16 %v794, %v791
      %v1011 = vpack.c.b16 %v795, %v792
      %v1012 = vpack.c.b16 %v799, %v796
      %v1013 = vpack.c.b16 %v800, %v797
      %v1014 = vpack.c.b16 %v801, %v798
      %v1015 = vpack.c.b16 %v805, %v802
      %v1016 = vpack.c.b16 %v806, %v803
      %v1017 = vpack.c.b16 %v807, %v804
      %v1018 = vpack.c.b16 %v811, %v808
      %v1019 = vpack.c.b16 %v812, %v809
      %v1020 = vpack.c.b16 %v813, %v810
      %v1021 = vpack.c.b16 %v817, %v814
      %v1022 = vpack.c.b16 %v818, %v815
      %v1023 = vpack.c.b16 %v819, %v816
      %v1024 = vpack.c.b16 %v823, %v820
      %v1025 = vpack.c.b16 %v824, %v821
      %v1026 = vpack.c.b16 %v825, %v822
      %v1027 = vpack.c.b16 %v829, %v826
      %v1028 = vpack.c.b16 %v830, %v827
      %v1029 = vpack.c.b16 %v831, %v828
      %v1030 = vpack.c.b16 %v835, %v832
      %v1031 = vpack.c.b16 %v836, %v833
      %v1032 = vpack.c.b16 %v837, %v834
      %v1033 = vpack.c.b16 %v841, %v838
      %v1034 = vpack.c.b16 %v842, %v839
      %v1035 = vpack.c.b16 %v843, %v840
      %v1036 = vpack.c.b16 %v847, %v844
      %v1037 = vpack.c.b16 %v848, %v845
      %v1038 = vpack.c.b16 %v849, %v846
      %v1039 = vpack.c.b16 %v853, %v850
      %v1040 = vpack.c.b16 %v854, %v851
      %v1041 = vpack.c.b16 %v855, %v852
      %v1042 = vpack.c.b16 %v859, %v856
      %v1043 = vpack.c.b16 %v860, %v857
      %v1044 = vpack.c.b16 %v861, %v858
      %v1045 = vpack.c.b16 %v865, %v862
      %v1046 = vpack.c.b16 %v866, %v863
      %v1047 = vpack.c.b16 %v867, %v864
      %v1048 = vpack.c.b16 %v871, %v868
      %v1049 = vpack.c.b16 %v872, %v869
      %v1050 = vpack.c.b16 %v873, %v870
      %v1051 = vpack.c.b16 %v877, %v874
      %v1052 = vpack.c.b16 %v878, %v875
      %v1053 = vpack.c.b16 %v879, %v876
      %v1054 = vpack.c.b16 %v883, %v880
      %v1055 = vpack.c.b16 %v884, %v881
      %v1056 = vpack.c.b16 %v885, %v882
      %v1057 = vpack.c.b16 %v889, %v886
      %v1058 = vpack.c.b16 %v890, %v887
      %v1059 = vpack.c.b16 %v891, %v888
      %v1060 = vpack.c.b16 %v895, %v892
      %v1061 = vpack.c.b16 %v896, %v893
      %v1062 = vpack.c.b16 %v897, %v894
      %v1063 = vpack.c.b16 %v901, %v898
      %v1064 = vpack.c.b16 %v902, %v899
      %v1065 = vpack.c.b16 %v903, %v900
      %v1066 = vpack.c.b16 %v907, %v904
      %v1067 = vpack.c.b16 %v908, %v905
      %v1068 = vpack.c.b16 %v909, %v906
      %v1069 = vpack.c.b16 %v913, %v910
      %v1070 = vpack.c.b16 %v914, %v911
      %v1071 = vpack.c.b16 %v915, %v912
      %v1072 = vpack.c.b16 %v919, %v916
      %v1073 = vpack.c.b16 %v920, %v917
      %v1074 = vpack.c.b16 %v921, %v918
      %v1075 = vpack.c.b16 %v925, %v922
      %v1076 = vpack.c.b16 %v926, %v923
      %v1077 = vpack.c.b16 %v927, %v924
      %v1078 = vpack.c.b16 %v931, %v928
      %v1079 = vpack.c.b16 %v932, %v929
      %v1080 = vpack.c.b16 %v933, %v930
      %v1081 = vpack.c.b16 %v937, %v934
      %v1082 = vpack.c.b16 %v938, %v935
      %v1083 = vpack.c.b16 %v939, %v936
      %v1084 = vpack.c.b16 %v943, %v940
      %v1085 = vpack.c.b16 %v944, %v941
      %v1086 = vpack.c.b16 %v945, %v942
      %v1087 = vpack.c.b16 %v949, %v946
      %v1088 = vpack.c.b16 %v950, %v947
      %v1089 = vpack.c.b16 %v951, %v948
      %v1090 = vpack.c.b16 %v955, %v952
      %v1091 = vpack.c.b16 %v956, %v953
      %v1092 = vpack.c.b16 %v957, %v954
      %v1093 = vpack.c.b16 %v961, %v958
      %v1094 = vpack.c.b16 %v962, %v959
      %v1095 = vpack.c.b16 %v963, %v960
      %v1096 = vpack.c.b16 %v967, %v964
      %v1097 = vpack.c.b16 %v968, %v965
      %v1098 = vpack.c.b16 %v969, %v966
      %v1099 = vpack.c.b16 %v973, %v970
      %v1100 = vpack.c.b16 %v974, %v971
      %v1101 = vpack.c.b16 %v975, %v972
      %v1102 = vpack.c.b16 %v979, %v976
      %v1103 = vpack.c.b16 %v980, %v977
      %v1104 = vpack.c.b16 %v981, %v978
      %v1105 = vpack.c.b16 %v985, %v982
      %v1106 = vpack.c.b16 %v986, %v983
      %v1107 = vpack.c.b16 %v987, %v984
      %1228 = vmatprep.subr.bf16.mxu0 %v989
      %1229 = vmatpush1.bf16.msra.mxu0 %v988
      %1230 = vmatprep.subr.bf16.mxu0 %v992
      %1231 = vmatpush1.bf16.msra.mxu0 %v991
      %1232 = vmatprep.subr.bf16.mxu0 %v995
      %1233 = vmatpush1.bf16.msra.mxu0 %v994
      %1234 = vmatprep.subr.bf16.mxu0 %v998
      %1235 = vmatpush1.bf16.msra.mxu0 %v997
      %1236 = vmatprep.subr.bf16.mxu0 %v1001
      %1237 = vmatpush1.bf16.msra.mxu0 %v1000
      %1238 = vmatprep.subr.bf16.mxu0 %v1004
      %1239 = vmatpush1.bf16.msra.mxu0 %v1003
      %1240 = vmatprep.subr.bf16.mxu0 %v1007
      %1241 = vmatpush1.bf16.msra.mxu0 %v1006
      %1242 = vmatprep.subr.bf16.mxu0 %v1010
      %1243 = vmatpush1.bf16.msra.mxu0 %v1009
      %1244 = vmatprep.subr.bf16.mxu0 %v1013
      %1245 = vmatpush1.bf16.msra.mxu0 %v1012
      %1246 = vmatprep.subr.bf16.mxu0 %v1016
      %1247 = vmatpush1.bf16.msra.mxu0 %v1015
      %1248 = vmatprep.subr.bf16.mxu0 %v1019
      %1249 = vmatpush1.bf16.msra.mxu0 %v1018
      %1250 = vmatprep.subr.bf16.mxu0 %v1022
      %1251 = vmatpush1.bf16.msra.mxu0 %v1021
      %1252 = vmatprep.subr.bf16.mxu0 %v1025
      %1253 = vmatpush1.bf16.msra.mxu0 %v1024
      %1254 = vmatprep.subr.bf16.mxu0 %v1028
      %1255 = vmatpush1.bf16.msra.mxu0 %v1027
      %1256 = vmatprep.subr.bf16.mxu0 %v1031
      %1257 = vmatpush1.bf16.msra.mxu0 %v1030
      %1258 = vmatprep.subr.bf16.mxu0 %v1034
      %1259 = vmatpush1.bf16.msra.mxu0 %v1033
      %1260 = vmatprep.mubr.bf16.mxu0 %v509
      %1261 = vmatmul.mubr.bf16.gmra.mrb[0].mxu0 %v508
      %v1262 = vpop.f32.mrb[0].mxu0
      %v1263 = vadd.f32 0.0, %v1262
      %v1264 = vpop.f32.mrb[0].mxu0
      %v1265 = vadd.f32 0.0, %v1264
      %v1266 = vpop.f32.mrb[0].mxu0
      %v1267 = vadd.f32 0.0, %v1266
      %v1268 = vpop.f32.mrb[0].mxu0
      %v1269 = vadd.f32 0.0, %v1268
      %1270 = vmatprep.mubr.bf16.mxu0 %v514
      %1271 = vmatmul.mubr.bf16.gmra.mrb[0].mxu0 %v513
      %v1272 = vpop.f32.mrb[0].mxu0
      %v1273 = vpop.f32.mrb[0].mxu0
      %v1274 = vpop.f32.mrb[0].mxu0
      %v1275 = vpop.f32.mrb[0].mxu0
      %1276 = vmatprep.mubr.bf16.mxu0 %v519
      %1277 = vmatmul.mubr.bf16.gmra.mrb[0].mxu0 %v518
      %v1278 = vpop.f32.mrb[0].mxu0
      %v1279 = vadd.f32 0.0, %v1278
      %v1280 = vpop.f32.mrb[0].mxu0
      %v1281 = vadd.f32 0.0, %v1280
      %v1282 = vpop.f32.mrb[0].mxu0
      %v1283 = vadd.f32 0.0, %v1282
      %v1284 = vpop.f32.mrb[0].mxu0
      %v1285 = vadd.f32 0.0, %v1284
      %1286 = vmatprep.mubr.bf16.mxu0 %v524
      %1287 = vmatmul.mubr.bf16.gmra.mrb[0].mxu0 %v523
      %v1288 = vpop.f32.mrb[0].mxu0
      %v1289 = vpop.f32.mrb[0].mxu0
      %v1290 = vpop.f32.mrb[0].mxu0
      %v1291 = vpop.f32.mrb[0].mxu0
      %1292 = vmatprep.mubr.bf16.mxu0 %v529
      %1293 = vmatmul.mubr.bf16.gmra.mrb[0].mxu0 %v528
      %v1294 = vpop.f32.mrb[0].mxu0
      %v1295 = vadd.f32 0.0, %v1294
      %v1296 = vpop.f32.mrb[0].mxu0
      %v1297 = vadd.f32 0.0, %v1296
      %v1298 = vpop.f32.mrb[0].mxu0
      %v1299 = vadd.f32 0.0, %v1298
      %v1300 = vpop.f32.mrb[0].mxu0
      %v1301 = vadd.f32 0.0, %v1300
      %1302 = vmatprep.mubr.bf16.mxu0 %v534
      %1303 = vmatmul.mubr.bf16.gmra.mrb[0].mxu0 %v533
      %v1304 = vpop.f32.mrb[0].mxu0
      %v1305 = vpop.f32.mrb[0].mxu0
      %v1306 = vpop.f32.mrb[0].mxu0
      %v1307 = vpop.f32.mrb[0].mxu0
      %1308 = vmatprep.mubr.bf16.mxu0 %v539
      %1309 = vmatmul.mubr.bf16.gmra.mrb[0].mxu0 %v538
      %v1310 = vpop.f32.mrb[0].mxu0
      %v1311 = vadd.f32 0.0, %v1310
      %v1312 = vpop.f32.mrb[0].mxu0
      %v1313 = vadd.f32 0.0, %v1312
      %v1314 = vpop.f32.mrb[0].mxu0
      %v1315 = vadd.f32 0.0, %v1314
      %v1316 = vpop.f32.mrb[0].mxu0
      %v1317 = vadd.f32 0.0, %v1316
      %1318 = vmatprep.mubr.bf16.mxu0 %v544
      %1319 = vmatmul.mubr.bf16.gmra.mrb[0].mxu0 %v543
      %v1320 = vpop.f32.mrb[0].mxu0
      %v1321 = vpop.f32.mrb[0].mxu0
      %v1322 = vpop.f32.mrb[0].mxu0
      %v1323 = vpop.f32.mrb[0].mxu0
      %1324 = vdwg.mxu0
      %1325 = vmatprep.subr.bf16.mxu0 %v1037
      %1326 = vmatpush1.bf16.msra.mxu0 %v1036
      %1327 = vmatprep.subr.bf16.mxu0 %v1040
      %1328 = vmatpush1.bf16.msra.mxu0 %v1039
      %1329 = vmatprep.subr.bf16.mxu0 %v1043
      %1330 = vmatpush1.bf16.msra.mxu0 %v1042
      %1331 = vmatprep.subr.bf16.mxu0 %v1046
      %1332 = vmatpush1.bf16.msra.mxu0 %v1045
      %1333 = vmatprep.subr.bf16.mxu0 %v1049
      %1334 = vmatpush1.bf16.msra.mxu0 %v1048
      %1335 = vmatprep.subr.bf16.mxu0 %v1052
      %1336 = vmatpush1.bf16.msra.mxu0 %v1051
      %1337 = vmatprep.subr.bf16.mxu0 %v1055
      %1338 = vmatpush1.bf16.msra.mxu0 %v1054
      %1339 = vmatprep.subr.bf16.mxu0 %v1058
      %1340 = vmatpush1.bf16.msra.mxu0 %v1057
      %1341 = vmatprep.subr.bf16.mxu0 %v1061
      %1342 = vmatpush1.bf16.msra.mxu0 %v1060
      %1343 = vmatprep.subr.bf16.mxu0 %v1064
      %1344 = vmatpush1.bf16.msra.mxu0 %v1063
      %1345 = vmatprep.subr.bf16.mxu0 %v1067
      %1346 = vmatpush1.bf16.msra.mxu0 %v1066
      %1347 = vmatprep.subr.bf16.mxu0 %v1070
      %1348 = vmatpush1.bf16.msra.mxu0 %v1069
      %1349 = vmatprep.subr.bf16.mxu0 %v1073
      %1350 = vmatpush1.bf16.msra.mxu0 %v1072
      %1351 = vmatprep.subr.bf16.mxu0 %v1076
      %1352 = vmatpush1.bf16.msra.mxu0 %v1075
      %1353 = vmatprep.subr.bf16.mxu0 %v1079
      %1354 = vmatpush1.bf16.msra.mxu0 %v1078
      %1355 = vmatprep.subr.bf16.mxu0 %v1082
      %1356 = vmatpush1.bf16.msra.mxu0 %v1081
      %1357 = vmatprep.mubr.bf16.mxu0 %v511
      %1358 = vmatmul.mubr.bf16.gmra.mrb[0].mxu0 %v510
      %v1359 = vpop.f32.mrb[0].mxu0
      %v1360 = vadd.f32 %v1263, %v1359
      %v1361 = vpop.f32.mrb[0].mxu0
      %v1362 = vadd.f32 %v1265, %v1361
      %v1363 = vpop.f32.mrb[0].mxu0
      %v1364 = vadd.f32 %v1267, %v1363
      %v1365 = vpop.f32.mrb[0].mxu0
      %v1366 = vadd.f32 %v1269, %v1365
      %1367 = vmatprep.mubr.bf16.mxu0 %v516
      %1368 = vmatmul.mubr.bf16.gmra.mrb[0].mxu0 %v515
      %v1369 = vpop.f32.mrb[0].mxu0
      %v1370 = vpop.f32.mrb[0].mxu0
      %v1371 = vpop.f32.mrb[0].mxu0
      %v1372 = vpop.f32.mrb[0].mxu0
      %1373 = vmatprep.mubr.bf16.mxu0 %v521
      %1374 = vmatmul.mubr.bf16.gmra.mrb[0].mxu0 %v520
      %v1375 = vpop.f32.mrb[0].mxu0
      %v1376 = vadd.f32 %v1279, %v1375
      %v1377 = vpop.f32.mrb[0].mxu0
      %v1378 = vadd.f32 %v1281, %v1377
      %v1379 = vpop.f32.mrb[0].mxu0
      %v1380 = vadd.f32 %v1283, %v1379
      %v1381 = vpop.f32.mrb[0].mxu0
      %v1382 = vadd.f32 %v1285, %v1381
      %1383 = vmatprep.mubr.bf16.mxu0 %v526
      %1384 = vmatmul.mubr.bf16.gmra.mrb[0].mxu0 %v525
      %v1385 = vpop.f32.mrb[0].mxu0
      %v1386 = vpop.f32.mrb[0].mxu0
      %v1387 = vpop.f32.mrb[0].mxu0
      %v1388 = vpop.f32.mrb[0].mxu0
      %1389 = vmatprep.mubr.bf16.mxu0 %v531
      %1390 = vmatmul.mubr.bf16.gmra.mrb[0].mxu0 %v530
      %v1391 = vpop.f32.mrb[0].mxu0
      %v1392 = vadd.f32 %v1295, %v1391
      %v1393 = vpop.f32.mrb[0].mxu0
      %v1394 = vadd.f32 %v1297, %v1393
      %v1395 = vpop.f32.mrb[0].mxu0
      %v1396 = vadd.f32 %v1299, %v1395
      %v1397 = vpop.f32.mrb[0].mxu0
      %v1398 = vadd.f32 %v1301, %v1397
      %1399 = vmatprep.mubr.bf16.mxu0 %v536
      %1400 = vmatmul.mubr.bf16.gmra.mrb[0].mxu0 %v535
      %v1401 = vpop.f32.mrb[0].mxu0
      %v1402 = vpop.f32.mrb[0].mxu0
      %v1403 = vpop.f32.mrb[0].mxu0
      %v1404 = vpop.f32.mrb[0].mxu0
      %1405 = vmatprep.mubr.bf16.mxu0 %v541
      %1406 = vmatmul.mubr.bf16.gmra.mrb[0].mxu0 %v540
      %v1407 = vpop.f32.mrb[0].mxu0
      %v1408 = vadd.f32 %v1311, %v1407
      %v1409 = vpop.f32.mrb[0].mxu0
      %v1410 = vadd.f32 %v1313, %v1409
      %v1411 = vpop.f32.mrb[0].mxu0
      %v1412 = vadd.f32 %v1315, %v1411
      %v1413 = vpop.f32.mrb[0].mxu0
      %v1414 = vadd.f32 %v1317, %v1413
      %1415 = vmatprep.mubr.bf16.mxu0 %v546
      %1416 = vmatmul.mubr.bf16.gmra.mrb[0].mxu0 %v545
      %v1417 = vpop.f32.mrb[0].mxu0
      %v1418 = vpop.f32.mrb[0].mxu0
      %v1419 = vpop.f32.mrb[0].mxu0
      %v1420 = vpop.f32.mrb[0].mxu0
      %1421 = vdwg.mxu0
      %1422 = vmatprep.subr.bf16.mxu0 %v1085
      %1423 = vmatpush1.bf16.msra.mxu0 %v1084
      %1424 = vmatprep.subr.bf16.mxu0 %v1088
      %1425 = vmatpush1.bf16.msra.mxu0 %v1087
      %1426 = vmatprep.subr.bf16.mxu0 %v1091
      %1427 = vmatpush1.bf16.msra.mxu0 %v1090
      %1428 = vmatprep.subr.bf16.mxu0 %v1094
      %1429 = vmatpush1.bf16.msra.mxu0 %v1093
      %1430 = vmatprep.subr.bf16.mxu0 %v1097
      %1431 = vmatpush1.bf16.msra.mxu0 %v1096
      %1432 = vmatprep.subr.bf16.mxu0 %v1100
      %1433 = vmatpush1.bf16.msra.mxu0 %v1099
      %1434 = vmatprep.subr.bf16.mxu0 %v1103
      %1435 = vmatpush1.bf16.msra.mxu0 %v1102
      %1436 = vmatprep.subr.bf16.mxu0 %v1106
      %1437 = vmatpush1.bf16.msra.mxu0 %v1105
      %1438 = vmatprep.subr.bf16.mxu0 0
      %1439 = vmatpush1.bf16.msra.mxu0 0
      %1440 = vmatprep.subr.bf16.mxu0 0
      %1441 = vmatpush1.bf16.msra.mxu0 0
      %1442 = vmatprep.subr.bf16.mxu0 0
      %1443 = vmatpush1.bf16.msra.mxu0 0
      %1444 = vmatprep.subr.bf16.mxu0 0
      %1445 = vmatpush1.bf16.msra.mxu0 0
      %1446 = vmatprep.subr.bf16.mxu0 0
      %1447 = vmatpush1.bf16.msra.mxu0 0
      %1448 = vmatprep.subr.bf16.mxu0 0
      %1449 = vmatpush1.bf16.msra.mxu0 0
      %1450 = vmatprep.subr.bf16.mxu0 0
      %1451 = vmatpush1.bf16.msra.mxu0 0
      %1452 = vmatprep.subr.bf16.mxu0 0
      %1453 = vmatpush1.bf16.msra.mxu0 0
      %1454 = vmatprep.mubr.bf16.mxu0 0
      %1455 = vmatmul.mubr.bf16.gmra.mrb[0].mxu0 %v512
      %v1456 = vpop.f32.mrb[0].mxu0
      %v1457 = vadd.f32 %v1360, %v1456
      %v1458 = vpop.f32.mrb[0].mxu0
      %v1459 = vadd.f32 %v1362, %v1458
      %v1460 = vpop.f32.mrb[0].mxu0
      %v1461 = vadd.f32 %v1364, %v1460
      %v1462 = vpop.f32.mrb[0].mxu0
      %v1463 = vadd.f32 %v1366, %v1462
      %1464 = vmatprep.mubr.bf16.mxu0 0
      %1465 = vmatmul.mubr.bf16.gmra.mrb[0].mxu0 %v517
      %v1466 = vpop.f32.mrb[0].mxu0
      %v1467 = vpop.f32.mrb[0].mxu0
      %v1468 = vpop.f32.mrb[0].mxu0
      %v1469 = vpop.f32.mrb[0].mxu0
      %1470 = vmatprep.mubr.bf16.mxu0 0
      %1471 = vmatmul.mubr.bf16.gmra.mrb[0].mxu0 %v522
      %v1472 = vpop.f32.mrb[0].mxu0
      %v1473 = vadd.f32 %v1376, %v1472
      %v1474 = vpop.f32.mrb[0].mxu0
      %v1475 = vadd.f32 %v1378, %v1474
      %v1476 = vpop.f32.mrb[0].mxu0
      %v1477 = vadd.f32 %v1380, %v1476
      %v1478 = vpop.f32.mrb[0].mxu0
      %v1479 = vadd.f32 %v1382, %v1478
      %1480 = vmatprep.mubr.bf16.mxu0 0
      %1481 = vmatmul.mubr.bf16.gmra.mrb[0].mxu0 %v527
      %v1482 = vpop.f32.mrb[0].mxu0
      %v1483 = vpop.f32.mrb[0].mxu0
      %v1484 = vpop.f32.mrb[0].mxu0
      %v1485 = vpop.f32.mrb[0].mxu0
      %1486 = vmatprep.mubr.bf16.mxu0 0
      %1487 = vmatmul.mubr.bf16.gmra.mrb[0].mxu0 %v532
      %v1488 = vpop.f32.mrb[0].mxu0
      %v1489 = vadd.f32 %v1392, %v1488
      %v1490 = vpop.f32.mrb[0].mxu0
      %v1491 = vadd.f32 %v1394, %v1490
      %v1492 = vpop.f32.mrb[0].mxu0
      %v1493 = vadd.f32 %v1396, %v1492
      %v1494 = vpop.f32.mrb[0].mxu0
      %v1495 = vadd.f32 %v1398, %v1494
      %1496 = vmatprep.mubr.bf16.mxu0 0
      %1497 = vmatmul.mubr.bf16.gmra.mrb[0].mxu0 %v537
      %v1498 = vpop.f32.mrb[0].mxu0
      %v1499 = vpop.f32.mrb[0].mxu0
      %v1500 = vpop.f32.mrb[0].mxu0
      %v1501 = vpop.f32.mrb[0].mxu0
      %1502 = vmatprep.mubr.bf16.mxu0 0
      %1503 = vmatmul.mubr.bf16.gmra.mrb[0].mxu0 %v542
      %v1504 = vpop.f32.mrb[0].mxu0
      %v1505 = vadd.f32 %v1408, %v1504
      %v1506 = vpop.f32.mrb[0].mxu0
      %v1507 = vadd.f32 %v1410, %v1506
      %v1508 = vpop.f32.mrb[0].mxu0
      %v1509 = vadd.f32 %v1412, %v1508
      %v1510 = vpop.f32.mrb[0].mxu0
      %v1511 = vadd.f32 %v1414, %v1510
      %1512 = vmatprep.mubr.bf16.mxu0 0
      %1513 = vmatmul.mubr.bf16.gmra.mrb[0].mxu0 %v547
      %v1514 = vpop.f32.mrb[0].mxu0
      %v1515 = vpop.f32.mrb[0].mxu0
      %v1516 = vpop.f32.mrb[0].mxu0
      %v1517 = vpop.f32.mrb[0].mxu0
      %1518 = vdwg.mxu0
      %1519 = vmatprep.subr.bf16.mxu0 0
      %1520 = vmatpush1.bf16.msra.mxu0 %v990
      %1521 = vmatprep.subr.bf16.mxu0 0
      %1522 = vmatpush1.bf16.msra.mxu0 %v993
      %1523 = vmatprep.subr.bf16.mxu0 0
      %1524 = vmatpush1.bf16.msra.mxu0 %v996
      %1525 = vmatprep.subr.bf16.mxu0 0
      %1526 = vmatpush1.bf16.msra.mxu0 %v999
      %1527 = vmatprep.subr.bf16.mxu0 0
      %1528 = vmatpush1.bf16.msra.mxu0 %v1002
      %1529 = vmatprep.subr.bf16.mxu0 0
      %1530 = vmatpush1.bf16.msra.mxu0 %v1005
      %1531 = vmatprep.subr.bf16.mxu0 0
      %1532 = vmatpush1.bf16.msra.mxu0 %v1008
      %1533 = vmatprep.subr.bf16.mxu0 0
      %1534 = vmatpush1.bf16.msra.mxu0 %v1011
      %1535 = vmatprep.subr.bf16.mxu0 0
      %1536 = vmatpush1.bf16.msra.mxu0 %v1014
      %1537 = vmatprep.subr.bf16.mxu0 0
      %1538 = vmatpush1.bf16.msra.mxu0 %v1017
      %1539 = vmatprep.subr.bf16.mxu0 0
      %1540 = vmatpush1.bf16.msra.mxu0 %v1020
      %1541 = vmatprep.subr.bf16.mxu0 0
      %1542 = vmatpush1.bf16.msra.mxu0 %v1023
      %1543 = vmatprep.subr.bf16.mxu0 0
      %1544 = vmatpush1.bf16.msra.mxu0 %v1026
      %1545 = vmatprep.subr.bf16.mxu0 0
      %1546 = vmatpush1.bf16.msra.mxu0 %v1029
      %1547 = vmatprep.subr.bf16.mxu0 0
      %1548 = vmatpush1.bf16.msra.mxu0 %v1032
      %1549 = vmatprep.subr.bf16.mxu0 0
      %1550 = vmatpush1.bf16.msra.mxu0 %v1035
      %1551 = vmatprep.mubr.bf16.mxu0 %v509
      %1552 = vmatmul.mubr.bf16.gmra.mrb[0].mxu0 %v508
      %v1553 = vpop.f32.mrb[0].mxu0
      %v1554 = vadd.f32 0.0, %v1553
      %v1555 = vpop.f32.mrb[0].mxu0
      %v1556 = vpop.f32.mrb[0].mxu0
      %v1557 = vadd.f32 0.0, %v1556
      %v1558 = vpop.f32.mrb[0].mxu0
      %1559 = vmatprep.mubr.bf16.mxu0 %v514
      %1560 = vmatmul.mubr.bf16.gmra.mrb[0].mxu0 %v513
      %v1561 = vpop.f32.mrb[0].mxu0
      %v1562 = vpop.f32.mrb[0].mxu0
      %v1563 = vpop.f32.mrb[0].mxu0
      %v1564 = vpop.f32.mrb[0].mxu0
      %1565 = vmatprep.mubr.bf16.mxu0 %v519
      %1566 = vmatmul.mubr.bf16.gmra.mrb[0].mxu0 %v518
      %v1567 = vpop.f32.mrb[0].mxu0
      %v1568 = vadd.f32 0.0, %v1567
      %v1569 = vpop.f32.mrb[0].mxu0
      %v1570 = vpop.f32.mrb[0].mxu0
      %v1571 = vadd.f32 0.0, %v1570
      %v1572 = vpop.f32.mrb[0].mxu0
      %1573 = vmatprep.mubr.bf16.mxu0 %v524
      %1574 = vmatmul.mubr.bf16.gmra.mrb[0].mxu0 %v523
      %v1575 = vpop.f32.mrb[0].mxu0
      %v1576 = vpop.f32.mrb[0].mxu0
      %v1577 = vpop.f32.mrb[0].mxu0
      %v1578 = vpop.f32.mrb[0].mxu0
      %1579 = vmatprep.mubr.bf16.mxu0 %v529
      %1580 = vmatmul.mubr.bf16.gmra.mrb[0].mxu0 %v528
      %v1581 = vpop.f32.mrb[0].mxu0
      %v1582 = vadd.f32 0.0, %v1581
      %v1583 = vpop.f32.mrb[0].mxu0
      %v1584 = vpop.f32.mrb[0].mxu0
      %v1585 = vadd.f32 0.0, %v1584
      %v1586 = vpop.f32.mrb[0].mxu0
      %1587 = vmatprep.mubr.bf16.mxu0 %v534
      %1588 = vmatmul.mubr.bf16.gmra.mrb[0].mxu0 %v533
      %v1589 = vpop.f32.mrb[0].mxu0
      %v1590 = vpop.f32.mrb[0].mxu0
      %v1591 = vpop.f32.mrb[0].mxu0
      %v1592 = vpop.f32.mrb[0].mxu0
      %1593 = vmatprep.mubr.bf16.mxu0 %v539
      %1594 = vmatmul.mubr.bf16.gmra.mrb[0].mxu0 %v538
      %v1595 = vpop.f32.mrb[0].mxu0
      %v1596 = vadd.f32 0.0, %v1595
      %v1597 = vpop.f32.mrb[0].mxu0
      %v1598 = vpop.f32.mrb[0].mxu0
      %v1599 = vadd.f32 0.0, %v1598
      %v1600 = vpop.f32.mrb[0].mxu0
      %1601 = vmatprep.mubr.bf16.mxu0 %v544
      %1602 = vmatmul.mubr.bf16.gmra.mrb[0].mxu0 %v543
      %v1603 = vpop.f32.mrb[0].mxu0
      %v1604 = vpop.f32.mrb[0].mxu0
      %v1605 = vpop.f32.mrb[0].mxu0
      %v1606 = vpop.f32.mrb[0].mxu0
      %1607 = vdwg.mxu0
      %1608 = vmatprep.subr.bf16.mxu0 0
      %1609 = vmatpush1.bf16.msra.mxu0 %v1038
      %1610 = vmatprep.subr.bf16.mxu0 0
      %1611 = vmatpush1.bf16.msra.mxu0 %v1041
      %1612 = vmatprep.subr.bf16.mxu0 0
      %1613 = vmatpush1.bf16.msra.mxu0 %v1044
      %1614 = vmatprep.subr.bf16.mxu0 0
      %1615 = vmatpush1.bf16.msra.mxu0 %v1047
      %1616 = vmatprep.subr.bf16.mxu0 0
      %1617 = vmatpush1.bf16.msra.mxu0 %v1050
      %1618 = vmatprep.subr.bf16.mxu0 0
      %1619 = vmatpush1.bf16.msra.mxu0 %v1053
      %1620 = vmatprep.subr.bf16.mxu0 0
      %1621 = vmatpush1.bf16.msra.mxu0 %v1056
      %1622 = vmatprep.subr.bf16.mxu0 0
      %1623 = vmatpush1.bf16.msra.mxu0 %v1059
      %1624 = vmatprep.subr.bf16.mxu0 0
      %1625 = vmatpush1.bf16.msra.mxu0 %v1062
      %1626 = vmatprep.subr.bf16.mxu0 0
      %1627 = vmatpush1.bf16.msra.mxu0 %v1065
      %1628 = vmatprep.subr.bf16.mxu0 0
      %1629 = vmatpush1.bf16.msra.mxu0 %v1068
      %1630 = vmatprep.subr.bf16.mxu0 0
      %1631 = vmatpush1.bf16.msra.mxu0 %v1071
      %1632 = vmatprep.subr.bf16.mxu0 0
      %1633 = vmatpush1.bf16.msra.mxu0 %v1074
      %1634 = vmatprep.subr.bf16.mxu0 0
      %1635 = vmatpush1.bf16.msra.mxu0 %v1077
      %1636 = vmatprep.subr.bf16.mxu0 0
      %1637 = vmatpush1.bf16.msra.mxu0 %v1080
      %1638 = vmatprep.subr.bf16.mxu0 0
      %1639 = vmatpush1.bf16.msra.mxu0 %v1083
      %1640 = vmatprep.mubr.bf16.mxu0 %v511
      %1641 = vmatmul.mubr.bf16.gmra.mrb[0].mxu0 %v510
      %v1642 = vpop.f32.mrb[0].mxu0
      %v1643 = vadd.f32 %v1554, %v1642
      %v1644 = vpop.f32.mrb[0].mxu0
      %v1645 = vpop.f32.mrb[0].mxu0
      %v1646 = vadd.f32 %v1557, %v1645
      %v1647 = vpop.f32.mrb[0].mxu0
      %1648 = vmatprep.mubr.bf16.mxu0 %v516
      %1649 = vmatmul.mubr.bf16.gmra.mrb[0].mxu0 %v515
      %v1650 = vpop.f32.mrb[0].mxu0
      %v1651 = vpop.f32.mrb[0].mxu0
      %v1652 = vpop.f32.mrb[0].mxu0
      %v1653 = vpop.f32.mrb[0].mxu0
      %1654 = vmatprep.mubr.bf16.mxu0 %v521
      %1655 = vmatmul.mubr.bf16.gmra.mrb[0].mxu0 %v520
      %v1656 = vpop.f32.mrb[0].mxu0
      %v1657 = vadd.f32 %v1568, %v1656
      %v1658 = vpop.f32.mrb[0].mxu0
      %v1659 = vpop.f32.mrb[0].mxu0
      %v1660 = vadd.f32 %v1571, %v1659
      %v1661 = vpop.f32.mrb[0].mxu0
      %1662 = vmatprep.mubr.bf16.mxu0 %v526
      %1663 = vmatmul.mubr.bf16.gmra.mrb[0].mxu0 %v525
      %v1664 = vpop.f32.mrb[0].mxu0
      %v1665 = vpop.f32.mrb[0].mxu0
      %v1666 = vpop.f32.mrb[0].mxu0
      %v1667 = vpop.f32.mrb[0].mxu0
      %1668 = vmatprep.mubr.bf16.mxu0 %v531
      %1669 = vmatmul.mubr.bf16.gmra.mrb[0].mxu0 %v530
      %v1670 = vpop.f32.mrb[0].mxu0
      %v1671 = vadd.f32 %v1582, %v1670
      %v1672 = vpop.f32.mrb[0].mxu0
      %v1673 = vpop.f32.mrb[0].mxu0
      %v1674 = vadd.f32 %v1585, %v1673
      %v1675 = vpop.f32.mrb[0].mxu0
      %1676 = vmatprep.mubr.bf16.mxu0 %v536
      %1677 = vmatmul.mubr.bf16.gmra.mrb[0].mxu0 %v535
      %v1678 = vpop.f32.mrb[0].mxu0
      %v1679 = vpop.f32.mrb[0].mxu0
      %v1680 = vpop.f32.mrb[0].mxu0
      %v1681 = vpop.f32.mrb[0].mxu0
      %1682 = vmatprep.mubr.bf16.mxu0 %v541
      %1683 = vmatmul.mubr.bf16.gmra.mrb[0].mxu0 %v540
      %v1684 = vpop.f32.mrb[0].mxu0
      %v1685 = vadd.f32 %v1596, %v1684
      %v1686 = vpop.f32.mrb[0].mxu0
      %v1687 = vpop.f32.mrb[0].mxu0
      %v1688 = vadd.f32 %v1599, %v1687
      %v1689 = vpop.f32.mrb[0].mxu0
      %1690 = vmatprep.mubr.bf16.mxu0 %v546
      %1691 = vmatmul.mubr.bf16.gmra.mrb[0].mxu0 %v545
      %v1692 = vpop.f32.mrb[0].mxu0
      %v1693 = vpop.f32.mrb[0].mxu0
      %v1694 = vpop.f32.mrb[0].mxu0
      %v1695 = vpop.f32.mrb[0].mxu0
      %1696 = vdwg.mxu0
      %1697 = vmatprep.subr.bf16.mxu0 0
      %1698 = vmatpush1.bf16.msra.mxu0 %v1086
      %1699 = vmatprep.subr.bf16.mxu0 0
      %1700 = vmatpush1.bf16.msra.mxu0 %v1089
      %1701 = vmatprep.subr.bf16.mxu0 0
      %1702 = vmatpush1.bf16.msra.mxu0 %v1092
      %1703 = vmatprep.subr.bf16.mxu0 0
      %1704 = vmatpush1.bf16.msra.mxu0 %v1095
      %1705 = vmatprep.subr.bf16.mxu0 0
      %1706 = vmatpush1.bf16.msra.mxu0 %v1098
      %1707 = vmatprep.subr.bf16.mxu0 0
      %1708 = vmatpush1.bf16.msra.mxu0 %v1101
      %1709 = vmatprep.subr.bf16.mxu0 0
      %1710 = vmatpush1.bf16.msra.mxu0 %v1104
      %1711 = vmatprep.subr.bf16.mxu0 0
      %1712 = vmatpush1.bf16.msra.mxu0 %v1107
      %1713 = vmatprep.subr.bf16.mxu0 0
      %1714 = vmatpush1.bf16.msra.mxu0 0
      %1715 = vmatprep.subr.bf16.mxu0 0
      %1716 = vmatpush1.bf16.msra.mxu0 0
      %1717 = vmatprep.subr.bf16.mxu0 0
      %1718 = vmatpush1.bf16.msra.mxu0 0
      %1719 = vmatprep.subr.bf16.mxu0 0
      %1720 = vmatpush1.bf16.msra.mxu0 0
      %1721 = vmatprep.subr.bf16.mxu0 0
      %1722 = vmatpush1.bf16.msra.mxu0 0
      %1723 = vmatprep.subr.bf16.mxu0 0
      %1724 = vmatpush1.bf16.msra.mxu0 0
      %1725 = vmatprep.subr.bf16.mxu0 0
      %1726 = vmatpush1.bf16.msra.mxu0 0
      %1727 = vmatprep.subr.bf16.mxu0 0
      %1728 = vmatpush1.bf16.msra.mxu0 0
      %1729 = vmatprep.mubr.bf16.mxu0 0
      %1730 = vmatmul.mubr.bf16.gmra.mrb[0].mxu0 %v512
      %v1731 = vpop.f32.mrb[0].mxu0
      %v1732 = vadd.f32 %v1643, %v1731
      %v1733 = vpop.f32.mrb[0].mxu0
      %v1734 = vpop.f32.mrb[0].mxu0
      %v1735 = vadd.f32 %v1646, %v1734
      %v1736 = vpop.f32.mrb[0].mxu0
      %1737 = vmatprep.mubr.bf16.mxu0 0
      %1738 = vmatmul.mubr.bf16.gmra.mrb[0].mxu0 %v517
      %v1739 = vpop.f32.mrb[0].mxu0
      %v1740 = vpop.f32.mrb[0].mxu0
      %v1741 = vpop.f32.mrb[0].mxu0
      %v1742 = vpop.f32.mrb[0].mxu0
      %1743 = vmatprep.mubr.bf16.mxu0 0
      %1744 = vmatmul.mubr.bf16.gmra.mrb[0].mxu0 %v522
      %v1745 = vpop.f32.mrb[0].mxu0
      %v1746 = vadd.f32 %v1657, %v1745
      %v1747 = vpop.f32.mrb[0].mxu0
      %v1748 = vpop.f32.mrb[0].mxu0
      %v1749 = vadd.f32 %v1660, %v1748
      %v1750 = vpop.f32.mrb[0].mxu0
      %1751 = vmatprep.mubr.bf16.mxu0 0
      %1752 = vmatmul.mubr.bf16.gmra.mrb[0].mxu0 %v527
      %v1753 = vpop.f32.mrb[0].mxu0
      %v1754 = vpop.f32.mrb[0].mxu0
      %v1755 = vpop.f32.mrb[0].mxu0
      %v1756 = vpop.f32.mrb[0].mxu0
      %1757 = vmatprep.mubr.bf16.mxu0 0
      %1758 = vmatmul.mubr.bf16.gmra.mrb[0].mxu0 %v532
      %v1759 = vpop.f32.mrb[0].mxu0
      %v1760 = vadd.f32 %v1671, %v1759
      %v1761 = vpop.f32.mrb[0].mxu0
      %v1762 = vpop.f32.mrb[0].mxu0
      %v1763 = vadd.f32 %v1674, %v1762
      %v1764 = vpop.f32.mrb[0].mxu0
      %1765 = vmatprep.mubr.bf16.mxu0 0
      %1766 = vmatmul.mubr.bf16.gmra.mrb[0].mxu0 %v537
      %v1767 = vpop.f32.mrb[0].mxu0
      %v1768 = vpop.f32.mrb[0].mxu0
      %v1769 = vpop.f32.mrb[0].mxu0
      %v1770 = vpop.f32.mrb[0].mxu0
      %1771 = vmatprep.mubr.bf16.mxu0 0
      %1772 = vmatmul.mubr.bf16.gmra.mrb[0].mxu0 %v542
      %v1773 = vpop.f32.mrb[0].mxu0
      %v1774 = vadd.f32 %v1685, %v1773
      %v1775 = vpop.f32.mrb[0].mxu0
      %v1776 = vpop.f32.mrb[0].mxu0
      %v1777 = vadd.f32 %v1688, %v1776
      %v1778 = vpop.f32.mrb[0].mxu0
      %1779 = vmatprep.mubr.bf16.mxu0 0
      %1780 = vmatmul.mubr.bf16.gmra.mrb[0].mxu0 %v547
      %v1781 = vpop.f32.mrb[0].mxu0
      %v1782 = vpop.f32.mrb[0].mxu0
      %v1783 = vpop.f32.mrb[0].mxu0
      %v1784 = vpop.f32.mrb[0].mxu0
      %1785 = vdwg.mxu0
      %v1786 = vmax.f32 %v1457, %v1473
      %v1787 = vmax.f32 %v1459, %v1475
      %v1788 = vmax.f32 %v1732, %v1746
      %v1789 = vmax.f32 %v1461, %v1477
      %v1790 = vmax.f32 %v1463, %v1479
      %v1791 = vmax.f32 %v1735, %v1749
      %v1792 = vmax.f32 %v1489, %v1505
      %v1793 = vmax.f32 %v1491, %v1507
      %v1794 = vmax.f32 %v1760, %v1774
      %v1795 = vmax.f32 %v1493, %v1509
      %v1796 = vmax.f32 %v1495, %v1511
      %v1797 = vmax.f32 %v1763, %v1777
      %v1798 = vmax.f32 %v1786, %v1792
      %v1799 = vmax.f32 %v1787, %v1793
      %v1800 = vmax.f32 %v1788, %v1794
      %v1801 = vmax.f32 %v1789, %v1795
      %v1802 = vmax.f32 %v1790, %v1796
      %v1803 = vmax.f32 %v1791, %v1797
      %v1804 = vld [vmem:[%s2] sm:$0xff]
      %v1805 = vld [vmem:[%s2 + $0x8] sm:$0xff]
      %1807 = vset.pattern.permute.xlu0 0
      %1808 = vperm.xlu0 %1807, %v1804
      %v1809 = vpop.permute.xlu0 %1808
      %1812 = vset.pattern.permute.xlu0 0
      %1813 = vperm.xlu0 %1812, %v1805
      %v1814 = vpop.permute.xlu0 %1813
      %v1816 = vadd.f32 %v1798, %v1809
      %v1817 = vadd.f32 %v1799, %v1809
      %v1818 = vadd.f32 %v1800, %v1809
      %v1819 = vadd.f32 %v1801, %v1814
      %v1820 = vadd.f32 %v1802, %v1814
      %v1821 = vadd.f32 %v1803, %v1814
      %v1822 = vmax.f32 %v1816, 0.0
      %v1823 = vmax.f32 %v1817, 0.0
      %v1824 = vmax.f32 %v1818, 0.0
      %v1825 = vmax.f32 %v1819, 0.0
      %v1826 = vmax.f32 %v1820, 0.0
      %v1827 = vmax.f32 %v1821, 0.0
      %v1828 = vpack.c.bf16 %v1825, %v1822
      %v1829 = vpack.c.bf16 %v1826, %v1823
      %v1830 = vpack.c.bf16 %v1827, %v1824
      %v1834 = vunpack.c.l.b16 %v1828
      %v1835 = vunpack.c.l.b16 %v1829
      %v1836 = vunpack.c.l.b16 %v1830
      %v1837 = vunpack.c.h.b16 %v1828
      %v1838 = vunpack.c.h.b16 %v1829
      %v1839 = vunpack.c.h.b16 %v1830
      %v1840 = vpack.c.b16 %v1835, %v1834
      %v1841 = vpack.c.b16 %v1836, %v1836
      %v1842 = vpack.c.b16 %v1838, %v1837
      %v1843 = vpack.c.b16 %v1839, %v1839
      %1848 = vst [vmem:[%s170] sm:$0xff] %v1840
      %vm1849 = vcmask 551936
      %1850 = vst.msk [vmem:[%s170 + $0x8] sm:$0xf] %vm1849, %v1841
      %1851 = vst [vmem:[%s170 + $0xc] sm:$0xff] %v1842
      %1852 = vst.msk [vmem:[%s170 + $0x14] sm:$0xf] %vm1849, %v1843
      %p1853 = scmp.lt.s32.totalorder %s14, 1
      %s1854 = scalar_select %p1853, %s14, 1
      %s1855 = smul.addr %s1854, 6
      %s1856 = smul.addr %s1855, 4
      %s1857 = scalar_lea.vmem %s3, %s1856
      // Predicated region
      $region33: #{forward.4} parent=31 // pred_check
        %p1858 = pneg %p100
      $region34: #{forward.4} parent=31 // pred_check_branch
        %1860 = sbr.rel (%p1858) target = $region36
      $region35: #{forward.4} parent=31 // pred_region
        _
      $region36: #{forward.4} parent=31 // pred_fallthru
        _
    $region32: #{forward.4} parent=5 // pred_fallthru
      _
    %p1861 = scmp.le.s32.totalorder 2, %s9
    // Predicated region
    $region37: #{forward.4} parent=5 // pred_check
      %p1862 = pneg %p1861
    $region38: #{forward.4} parent=5 // pred_check_branch
      %1864 = sbr.rel (%p1862) target = $region40
    $region39: #{forward.4} parent=5 // pred_region
      %s1865 = ssub.s32 %s9, 2
      // Predicated region
      $region41: #{forward.4} parent=39 // pred_check
        %p1866 = pneg %p106
      $region42: #{forward.4} parent=39 // pred_check_branch
        %1868 = sbr.rel (%p1866) target = $region44
      $region43: #{forward.4} parent=39 // pred_region
        %p1869 = scmp.lt.s32.totalorder %s15, 1
        %s1870 = scalar_select %p1869, %s15, 1
        %s1871 = smul.addr %s1870, 6
        %s1872 = smul.addr %s1871, 4
        %s1873 = scalar_lea.vmem %s3, %s1872
      $region44: #{forward.4} parent=39 // pred_fallthru
        _
    $region40: #{forward.4} parent=5 // pred_fallthru
      _
  $region6: #{forward.4} parent=0 // loop_footer
    %s13 = sadd.s32 1, %s9
  $region7: #{forward.4} parent=0 // loop_footer_branch
    %8 = sbr.rel target = $region3
  $region8: #{forward.4} parent=0 // loop_exit
    _

// kernel: forward.5
$region0: #{forward.5}
  #allocation0 [shape = 'u32[]', space=smem, size = 0x4, offset = 0x4, fixed_abs, tag = 'smem constant byte address 0x4 - core index']
  #allocation1 [shape = 'u32[144,128]{1,0:T(1,128)}', space=vmem, size = 0x12000, scoped, tag = 'internal scratch']
  #allocation2 [shape = 'f32[2,512]{1,0:T(2,128)}', space=vmem, size = 0x1000, scoped, tag = 'scratch operand']
  %s0 = inlined_call_operand.vmem [shape: bf16[2,5376], index: 0, kind: input, shape index: {}]
  %s1 = inlined_call_operand.vmem [shape: bf16[5376,512], index: 1, kind: input, shape index: {}]
  %s2 = inlined_call_operand.vmem [shape: f32[1,512], index: 2, kind: input, shape index: {}]
  %s3 = inlined_call_operand.vmem [shape: bf16[512,128], index: 3, kind: input, shape index: {}]
  %s4 = inlined_call_operand.vmem [shape: f32[1,128], index: 4, kind: input, shape index: {}]
  %s5 = inlined_call_operand.vmem [shape: bf16[128,128], index: 5, kind: input, shape index: {}]
  %s6 = inlined_call_operand.vmem [shape: f32[1,128], index: 6, kind: input, shape index: {}]
  %s7 = inlined_call_operand.hbm [shape: f32[2,128], index: 7, kind: output, shape index: {}]
  %s8 = sld [smem:[#allocation0]]
  $region69: #{forward.5} parent=0
    _
  %s10 = ssub.s32 1, %s8
  %s11 = scalar_select 0, %s10, %s8
  $region1: #{forward.5} parent=0
    #allocation3 [shape = 'u8[1024]{0}', space=vmem, size = 0x400, scoped, tag = 'output window, operand 0, single buffered']
    #allocation4 [shape = 's32[2]{0}', space=sflag, size = 0x8, scoped, tag = 'scoped memory for forward.5']
    %12 = vsyncpa [#allocation4], 0
    loop: start=0, step=1, limit=4
    $region2: #{forward.5} parent=1 // loop_pre_header
      _
    $region3: #{forward.5} parent=1 // loop_header
      %s14 = sphi 0, %s18
      %p15 = scmp.ge.s32.totalorder %s14, 4
      %s24 = sphi 0, %s26
      %s27 = sphi 0, %s24
      %s28 = sphi 0, %s27
      %s44 = sphi 0, %s28
      %s50 = sphi 0, %s52
      %s53 = sphi 0, %s50
      %s54 = sphi 0, %s53
      %s70 = sphi 0, %s54
      %s74 = sphi 0, %s74
      %s76 = sphi 0, %s74
      %s77 = sphi 0, %s76
      %s91 = sphi 0, %s77
      %s95 = sphi 0, %s95
      %s97 = sphi 0, %s95
      %s98 = sphi 0, %s97
      %s112 = sphi 0, %s98
      %s116 = sphi 0, %s116
      %s118 = sphi 0, %s116
      %s119 = sphi 0, %s118
      %s133 = sphi 0, %s119
      %s137 = sphi 0, %s137
      %s139 = sphi 0, %s137
      %s140 = sphi 0, %s139
      %s154 = sphi 0, %s140
      %s158 = sphi 0, %s158
      %s160 = sphi 0, %s158
      %s161 = sphi 0, %s160
      %s175 = sphi 0, %s161
      %s179 = sphi 0, %s179
      %s181 = sphi 0, %s179
      %s182 = sphi 0, %s181
      %s196 = sphi 0, %s182
    $region4: #{forward.5} parent=1 // loop_header_branch
      %17 = sbr.rel (%p15) target = $region8
    $region5: #{forward.5} parent=1 // loop_body
      %s19 = ssub.s32 %s14, 1
      %s20 = ssub.s32 %s14, 2
      %s21 = sadd.s32 %s14, 1
      %s22 = ssub.s32 %s14, %s21
      %p23 = scmp.eq.s32.totalorder %s22, 0
      %s25 = sadd.s32 %s24, 1
      %s26 = scalar_select %p23, %s24, %s25
      %p29 = pneg %p23
      %p30 = scmp.eq.s32.totalorder %s14, 1
      %p31 = por %p29, %p30
      %p32 = scmp.ne.s32.totalorder %s24, %s27
      %p33 = scmp.eq.s32.totalorder %s14, 0
      %p34 = por %p32, %p33
      %p35 = scmp.ne.s32.totalorder %s24, %s27
      %p36 = scmp.eq.s32.totalorder %s19, 1
      %p37 = por %p35, %p36
      %p38 = scmp.ne.s32.totalorder %s27, %s28
      %p39 = scmp.eq.s32.totalorder %s19, 0
      %p40 = por %p38, %p39
      %p41 = scmp.ne.s32.totalorder %s27, %s28
      %p42 = scmp.eq.s32.totalorder %s20, 1
      %p43 = por %p41, %p42
      %p45 = scmp.ne.s32.totalorder %s28, %s44
      %p46 = scmp.eq.s32.totalorder %s20, 0
      %p47 = por %p45, %p46
      %s48 = ssub.s32 %s14, %s21
      %p49 = scmp.eq.s32.totalorder %s48, 0
      %s51 = sadd.s32 %s50, 1
      %s52 = scalar_select %p49, %s50, %s51
      %p55 = pneg %p49
      %p56 = scmp.eq.s32.totalorder %s14, 1
      %p57 = por %p55, %p56
      %p58 = scmp.ne.s32.totalorder %s50, %s53
      %p59 = scmp.eq.s32.totalorder %s14, 0
      %p60 = por %p58, %p59
      %p61 = scmp.ne.s32.totalorder %s50, %s53
      %p62 = scmp.eq.s32.totalorder %s19, 1
      %p63 = por %p61, %p62
      %p64 = scmp.ne.s32.totalorder %s53, %s54
      %p65 = scmp.eq.s32.totalorder %s19, 0
      %p66 = por %p64, %p65
      %p67 = scmp.ne.s32.totalorder %s53, %s54
      %p68 = scmp.eq.s32.totalorder %s20, 1
      %p69 = por %p67, %p68
      %p71 = scmp.ne.s32.totalorder %s54, %s70
      %p72 = scmp.eq.s32.totalorder %s20, 0
      %p73 = por %p71, %p72
      %s75 = sadd.s32 %s74, 1
      %p78 = scmp.eq.s32.totalorder %s14, 1
      %p79 = scmp.ne.s32.totalorder %s74, %s76
      %p80 = scmp.eq.s32.totalorder %s14, 0
      %p81 = por %p79, %p80
      %p82 = scmp.ne.s32.totalorder %s74, %s76
      %p83 = scmp.eq.s32.totalorder %s19, 1
      %p84 = por %p82, %p83
      %p85 = scmp.ne.s32.totalorder %s76, %s77
      %p86 = scmp.eq.s32.totalorder %s19, 0
      %p87 = por %p85, %p86
      %p88 = scmp.ne.s32.totalorder %s76, %s77
      %p89 = scmp.eq.s32.totalorder %s20, 1
      %p90 = por %p88, %p89
      %p92 = scmp.ne.s32.totalorder %s77, %s91
      %p93 = scmp.eq.s32.totalorder %s20, 0
      %p94 = por %p92, %p93
      %s96 = sadd.s32 %s95, 1
      %p99 = scmp.eq.s32.totalorder %s14, 1
      %p100 = scmp.ne.s32.totalorder %s95, %s97
      %p101 = scmp.eq.s32.totalorder %s14, 0
      %p102 = por %p100, %p101
      %p103 = scmp.ne.s32.totalorder %s95, %s97
      %p104 = scmp.eq.s32.totalorder %s19, 1
      %p105 = por %p103, %p104
      %p106 = scmp.ne.s32.totalorder %s97, %s98
      %p107 = scmp.eq.s32.totalorder %s19, 0
      %p108 = por %p106, %p107
      %p109 = scmp.ne.s32.totalorder %s97, %s98
      %p110 = scmp.eq.s32.totalorder %s20, 1
      %p111 = por %p109, %p110
      %p113 = scmp.ne.s32.totalorder %s98, %s112
      %p114 = scmp.eq.s32.totalorder %s20, 0
      %p115 = por %p113, %p114
      %s117 = sadd.s32 %s116, 1
      %p120 = scmp.eq.s32.totalorder %s14, 1
      %p121 = scmp.ne.s32.totalorder %s116, %s118
      %p122 = scmp.eq.s32.totalorder %s14, 0
      %p123 = por %p121, %p122
      %p124 = scmp.ne.s32.totalorder %s116, %s118
      %p125 = scmp.eq.s32.totalorder %s19, 1
      %p126 = por %p124, %p125
      %p127 = scmp.ne.s32.totalorder %s118, %s119
      %p128 = scmp.eq.s32.totalorder %s19, 0
      %p129 = por %p127, %p128
      %p130 = scmp.ne.s32.totalorder %s118, %s119
      %p131 = scmp.eq.s32.totalorder %s20, 1
      %p132 = por %p130, %p131
      %p134 = scmp.ne.s32.totalorder %s119, %s133
      %p135 = scmp.eq.s32.totalorder %s20, 0
      %p136 = por %p134, %p135
      %s138 = sadd.s32 %s137, 1
      %p141 = scmp.eq.s32.totalorder %s14, 1
      %p142 = scmp.ne.s32.totalorder %s137, %s139
      %p143 = scmp.eq.s32.totalorder %s14, 0
      %p144 = por %p142, %p143
      %p145 = scmp.ne.s32.totalorder %s137, %s139
      %p146 = scmp.eq.s32.totalorder %s19, 1
      %p147 = por %p145, %p146
      %p148 = scmp.ne.s32.totalorder %s139, %s140
      %p149 = scmp.eq.s32.totalorder %s19, 0
      %p150 = por %p148, %p149
      %p151 = scmp.ne.s32.totalorder %s139, %s140
      %p152 = scmp.eq.s32.totalorder %s20, 1
      %p153 = por %p151, %p152
      %p155 = scmp.ne.s32.totalorder %s140, %s154
      %p156 = scmp.eq.s32.totalorder %s20, 0
      %p157 = por %p155, %p156
      %s159 = sadd.s32 %s158, 1
      %p162 = scmp.eq.s32.totalorder %s14, 1
      %p163 = scmp.ne.s32.totalorder %s158, %s160
      %p164 = scmp.eq.s32.totalorder %s14, 0
      %p165 = por %p163, %p164
      %p166 = scmp.ne.s32.totalorder %s158, %s160
      %p167 = scmp.eq.s32.totalorder %s19, 1
      %p168 = por %p166, %p167
      %p169 = scmp.ne.s32.totalorder %s160, %s161
      %p170 = scmp.eq.s32.totalorder %s19, 0
      %p171 = por %p169, %p170
      %p172 = scmp.ne.s32.totalorder %s160, %s161
      %p173 = scmp.eq.s32.totalorder %s20, 1
      %p174 = por %p172, %p173
      %p176 = scmp.ne.s32.totalorder %s161, %s175
      %p177 = scmp.eq.s32.totalorder %s20, 0
      %p178 = por %p176, %p177
      %s180 = sadd.s32 %s179, 1
      %p183 = scmp.eq.s32.totalorder %s14, 1
      %p184 = scmp.ne.s32.totalorder %s179, %s181
      %p185 = scmp.eq.s32.totalorder %s14, 0
      %p186 = por %p184, %p185
      %p187 = scmp.ne.s32.totalorder %s179, %s181
      %p188 = scmp.eq.s32.totalorder %s19, 1
      %p189 = por %p187, %p188
      %p190 = scmp.ne.s32.totalorder %s181, %s182
      %p191 = scmp.eq.s32.totalorder %s19, 0
      %p192 = por %p190, %p191
      %p193 = scmp.ne.s32.totalorder %s181, %s182
      %p194 = scmp.eq.s32.totalorder %s20, 1
      %p195 = por %p193, %p194
      %p197 = scmp.ne.s32.totalorder %s182, %s196
      %p198 = scmp.eq.s32.totalorder %s20, 0
      %p199 = por %p197, %p198
      %p200 = scmp.le.s32.totalorder 1, %s14
      %p201 = scmp.lt.s32.totalorder %s14, 3
      %p202 = pnand %p200, %p201
      %p203 = pneg %p202
      // Predicated region
      $region9: #{forward.5} parent=5 // pred_check
        _
      $region10: #{forward.5} parent=5 // pred_check_branch
        %205 = sbr.rel (%p202) target = $region12
      $region11: #{forward.5} parent=5 // pred_region
        %s206 = ssub.s32 %s14, 1
        // Predicated region
        $region13: #{forward.5} parent=11 // pred_check
          %p207 = pneg %p87
        $region14: #{forward.5} parent=11 // pred_check_branch
          %209 = sbr.rel (%p207) target = $region16
        $region15: #{forward.5} parent=11 // pred_region
          _
        $region16: #{forward.5} parent=11 // pred_fallthru
          _
        // Predicated region
        $region17: #{forward.5} parent=11 // pred_check
          %p210 = pneg %p108
        $region18: #{forward.5} parent=11 // pred_check_branch
          %212 = sbr.rel (%p210) target = $region20
        $region19: #{forward.5} parent=11 // pred_region
          _
        $region20: #{forward.5} parent=11 // pred_fallthru
          _
        // Predicated region
        $region21: #{forward.5} parent=11 // pred_check
          %p213 = pneg %p129
        $region22: #{forward.5} parent=11 // pred_check_branch
          %215 = sbr.rel (%p213) target = $region24
        $region23: #{forward.5} parent=11 // pred_region
          _
        $region24: #{forward.5} parent=11 // pred_fallthru
          _
        // Predicated region
        $region25: #{forward.5} parent=11 // pred_check
          %p216 = pneg %p150
        $region26: #{forward.5} parent=11 // pred_check_branch
          %218 = sbr.rel (%p216) target = $region28
        $region27: #{forward.5} parent=11 // pred_region
          _
        $region28: #{forward.5} parent=11 // pred_fallthru
          _
        // Predicated region
        $region29: #{forward.5} parent=11 // pred_check
          %p219 = pneg %p171
        $region30: #{forward.5} parent=11 // pred_check_branch
          %221 = sbr.rel (%p219) target = $region32
        $region31: #{forward.5} parent=11 // pred_region
          _
        $region32: #{forward.5} parent=11 // pred_fallthru
          _
      $region12: #{forward.5} parent=5 // pred_fallthru
        _
      %p222 = scmp.lt.s32.totalorder %s14, 2
      // Predicated region
      $region33: #{forward.5} parent=5 // pred_check
        %p223 = pneg %p222
      $region34: #{forward.5} parent=5 // pred_check_branch
        %225 = sbr.rel (%p223) target = $region36
      $region35: #{forward.5} parent=5 // pred_region
        // Predicated region
        $region37: #{forward.5} parent=35 // pred_check
          %p226 = pneg %p34
        $region38: #{forward.5} parent=35 // pred_check_branch
          %228 = sbr.rel (%p226) target = $region40
        $region39: #{forward.5} parent=35 // pred_region
          %s229 = smul.u32 21, %s14
          %p230 = scmp.lt.s32.totalorder %s229, 41
          %s231 = scalar_select %p230, %s229, 41
          %s232 = scalar_lea.vmem %s0, %s231
          %s233 = smul.u32 21, %s14
        $region40: #{forward.5} parent=35 // pred_fallthru
          _
        // Predicated region
        $region41: #{forward.5} parent=35 // pred_check
          %p234 = pneg %p60
        $region42: #{forward.5} parent=35 // pred_check_branch
          %236 = sbr.rel (%p234) target = $region44
        $region43: #{forward.5} parent=35 // pred_region
          %s237 = smul.u32 336, %s14
          %p238 = scmp.lt.s32.totalorder %s237, 671
          %s239 = scalar_select %p238, %s237, 671
          %s240 = smul.addr %s239, 4
          %s241 = smul.addr %s240, 4
          %s242 = scalar_lea.vmem %s1, %s241
          %s243 = smul.u32 336, %s14
        $region44: #{forward.5} parent=35 // pred_fallthru
          _
      $region36: #{forward.5} parent=5 // pred_fallthru
        _
      %p244 = scmp.le.s32.totalorder 1, %s14
      %p245 = scmp.lt.s32.totalorder %s14, 3
      %p246 = pnand %p244, %p245
      %p247 = pneg %p246
      // Predicated region
      $region45: #{forward.5} parent=5 // pred_check
        _
      $region46: #{forward.5} parent=5 // pred_check_branch
        %249 = sbr.rel (%p246) target = $region48
      $region47: #{forward.5} parent=5 // pred_region
        %s250 = ssub.s32 %s14, 1
        %s251 = smul.u32 21, %s19
        %p252 = scmp.lt.s32.totalorder %s251, 41
        %s253 = scalar_select %p252, %s251, 41
        %s254 = scalar_lea.vmem %s0, %s253
        %p255 = pneg %p40
        %p256 = pneg %p37
        %s257 = smul.u32 336, %s19
        %p258 = scmp.lt.s32.totalorder %s257, 671
        %s259 = scalar_select %p258, %s257, 671
        %s260 = smul.addr %s259, 4
        %s261 = smul.addr %s260, 4
        %s262 = scalar_lea.vmem %s1, %s261
        %p263 = pneg %p66
        %p264 = pneg %p63
        %p265 = pneg %p87
        %p266 = pneg %p84
        %p267 = pneg %p108
        %p268 = pneg %p105
        %p269 = pneg %p129
        %p270 = pneg %p126
        %p271 = pneg %p150
        %p272 = pneg %p147
        %p273 = pneg %p171
        %p274 = pneg %p168
        %p275 = pneg %p192
        %p276 = pneg %p189
        %s277 = smul.u32 21, %s19
        %p278 = scmp.lt.s32.totalorder %s277, 41
        %s279 = scalar_select %p278, %s277, 41
        %s280 = scalar_lea.vmem %s0, %s279
        %s281 = smul.u32 21, %s19
        %s282 = smul.u32 336, %s19
        %p283 = scmp.lt.s32.totalorder %s282, 671
        %s284 = scalar_select %p283, %s282, 671
        %s285 = smul.addr %s284, 4
        %s286 = smul.addr %s285, 4
        %s287 = scalar_lea.vmem %s1, %s286
        %s288 = smul.u32 336, %s19
        %p290 = scmp.eq.s32.totalorder %s19, 0
        // Predicated region
        $region49: #{forward.5} parent=47 // pred_check
          %p291 = pneg %p290
        $region50: #{forward.5} parent=47 // pred_check_branch
          %293 = sbr.rel (%p291) target = $region52
        $region51: #{forward.5} parent=47 // pred_region
          %294 = vst [vmem:[#allocation2] sm:$0xff] 0.0
        $region52: #{forward.5} parent=47 // pred_fallthru
          _
        %v295 = vld [vmem:[#allocation2] sm:$0xff]
        %v296 = vld [vmem:[%s280] sm:$0xff]
        %v297 = vld [vmem:[%s280 + $0x8] sm:$0xff]
        %v298 = vld [vmem:[%s280 + $0x10] sm:$0x1f]
        %v299 = vld [vmem:[%s287] sm:$0xff]
        %v300 = vld [vmem:[%s287 + $0x8] sm:$0xff]
        %v301 = vld [vmem:[%s287 + $0x10] sm:$0xff]
        %v302 = vld [vmem:[%s287 + $0x18] sm:$0xff]
        %v303 = vld [vmem:[%s287 + $0x20] sm:$0xff]
        %v304 = vld [vmem:[%s287 + $0x28] sm:$0xff]
        %v305 = vld [vmem:[%s287 + $0x30] sm:$0xff]
        %v306 = vld [vmem:[%s287 + $0x38] sm:$0xff]
        %v307 = vld [vmem:[%s287 + $0x40] sm:$0xff]
        %v308 = vld [vmem:[%s287 + $0x48] sm:$0xff]
        %v309 = vld [vmem:[%s287 + $0x50] sm:$0xff]
        %v310 = vld [vmem:[%s287 + $0x58] sm:$0xff]
        %v311 = vld [vmem:[%s287 + $0x60] sm:$0xff]
        %v312 = vld [vmem:[%s287 + $0x68] sm:$0xff]
        %v313 = vld [vmem:[%s287 + $0x70] sm:$0xff]
        %v314 = vld [vmem:[%s287 + $0x78] sm:$0xff]
        %v315 = vld [vmem:[%s287 + $0x80] sm:$0xff]
        %v316 = vld [vmem:[%s287 + $0x88] sm:$0xff]
        %v317 = vld [vmem:[%s287 + $0x90] sm:$0xff]
        %v318 = vld [vmem:[%s287 + $0x98] sm:$0xff]
        %v319 = vld [vmem:[%s287 + $0xa0] sm:$0xff]
        %v320 = vld [vmem:[%s287 + $0xa8] sm:$0xff]
        %v321 = vld [vmem:[%s287 + $0xb0] sm:$0xff]
        %v322 = vld [vmem:[%s287 + $0xb8] sm:$0xff]
        %v323 = vld [vmem:[%s287 + $0xc0] sm:$0xff]
        %v324 = vld [vmem:[%s287 + $0xc8] sm:$0xff]
        %v325 = vld [vmem:[%s287 + $0xd0] sm:$0xff]
        %v326 = vld [vmem:[%s287 + $0xd8] sm:$0xff]
        %v327 = vld [vmem:[%s287 + $0xe0] sm:$0xff]
        %v328 = vld [vmem:[%s287 + $0xe8] sm:$0xff]
        %v329 = vld [vmem:[%s287 + $0xf0] sm:$0xff]
        %v330 = vld [vmem:[%s287 + $0xf8] sm:$0xff]
        %v331 = vld [vmem:[%s287 + $0x100] sm:$0xff]
        %v332 = vld [vmem:[%s287 + $0x108] sm:$0xff]
        %v333 = vld [vmem:[%s287 + $0x110] sm:$0xff]
        %v334 = vld [vmem:[%s287 + $0x118] sm:$0xff]
        %v335 = vld [vmem:[%s287 + $0x120] sm:$0xff]
        %v336 = vld [vmem:[%s287 + $0x128] sm:$0xff]
        %v337 = vld [vmem:[%s287 + $0x130] sm:$0xff]
        %v338 = vld [vmem:[%s287 + $0x138] sm:$0xff]
        %v339 = vld [vmem:[%s287 + $0x140] sm:$0xff]
        %v340 = vld [vmem:[%s287 + $0x148] sm:$0xff]
        %v341 = vld [vmem:[%s287 + $0x150] sm:$0xff]
        %v342 = vld [vmem:[%s287 + $0x158] sm:$0xff]
        %v343 = vld [vmem:[%s287 + $0x160] sm:$0xff]
        %v344 = vld [vmem:[%s287 + $0x168] sm:$0xff]
        %v345 = vld [vmem:[%s287 + $0x170] sm:$0xff]
        %v346 = vld [vmem:[%s287 + $0x178] sm:$0xff]
        %v347 = vld [vmem:[%s287 + $0x180] sm:$0xff]
        %v348 = vld [vmem:[%s287 + $0x188] sm:$0xff]
        %v349 = vld [vmem:[%s287 + $0x190] sm:$0xff]
        %v350 = vld [vmem:[%s287 + $0x198] sm:$0xff]
        %v351 = vld [vmem:[%s287 + $0x1a0] sm:$0xff]
        %v352 = vld [vmem:[%s287 + $0x1a8] sm:$0xff]
        %v353 = vld [vmem:[%s287 + $0x1b0] sm:$0xff]
        %v354 = vld [vmem:[%s287 + $0x1b8] sm:$0xff]
        %v355 = vld [vmem:[%s287 + $0x1c0] sm:$0xff]
        %v356 = vld [vmem:[%s287 + $0x1c8] sm:$0xff]
        %v357 = vld [vmem:[%s287 + $0x1d0] sm:$0xff]
        %v358 = vld [vmem:[%s287 + $0x1d8] sm:$0xff]
        %v359 = vld [vmem:[%s287 + $0x1e0] sm:$0xff]
        %v360 = vld [vmem:[%s287 + $0x1e8] sm:$0xff]
        %v361 = vld [vmem:[%s287 + $0x1f0] sm:$0xff]
        %v362 = vld [vmem:[%s287 + $0x1f8] sm:$0xff]
        %v363 = vld [vmem:[%s287 + $0x200] sm:$0xff]
        %v364 = vld [vmem:[%s287 + $0x208] sm:$0xff]
        %v365 = vld [vmem:[%s287 + $0x210] sm:$0xff]
        %v366 = vld [vmem:[%s287 + $0x218] sm:$0xff]
        %v367 = vld [vmem:[%s287 + $0x220] sm:$0xff]
        %v368 = vld [vmem:[%s287 + $0x228] sm:$0xff]
        %v369 = vld [vmem:[%s287 + $0x230] sm:$0xff]
        %v370 = vld [vmem:[%s287 + $0x238] sm:$0xff]
        %v371 = vld [vmem:[%s287 + $0x240] sm:$0xff]
        %v372 = vld [vmem:[%s287 + $0x248] sm:$0xff]
        %v373 = vld [vmem:[%s287 + $0x250] sm:$0xff]
        %v374 = vld [vmem:[%s287 + $0x258] sm:$0xff]
        %v375 = vld [vmem:[%s287 + $0x260] sm:$0xff]
        %v376 = vld [vmem:[%s287 + $0x268] sm:$0xff]
        %v377 = vld [vmem:[%s287 + $0x270] sm:$0xff]
        %v378 = vld [vmem:[%s287 + $0x278] sm:$0xff]
        %v379 = vld [vmem:[%s287 + $0x280] sm:$0xff]
        %v380 = vld [vmem:[%s287 + $0x288] sm:$0xff]
        %v381 = vld [vmem:[%s287 + $0x290] sm:$0xff]
        %v382 = vld [vmem:[%s287 + $0x298] sm:$0xff]
        %v383 = vld [vmem:[%s287 + $0x2a0] sm:$0xff]
        %v384 = vld [vmem:[%s287 + $0x2a8] sm:$0xff]
        %v385 = vld [vmem:[%s287 + $0x2b0] sm:$0xff]
        %v386 = vld [vmem:[%s287 + $0x2b8] sm:$0xff]
        %v387 = vld [vmem:[%s287 + $0x2c0] sm:$0xff]
        %v388 = vld [vmem:[%s287 + $0x2c8] sm:$0xff]
        %v389 = vld [vmem:[%s287 + $0x2d0] sm:$0xff]
        %v390 = vld [vmem:[%s287 + $0x2d8] sm:$0xff]
        %v391 = vld [vmem:[%s287 + $0x2e0] sm:$0xff]
        %v392 = vld [vmem:[%s287 + $0x2e8] sm:$0xff]
        %v393 = vld [vmem:[%s287 + $0x2f0] sm:$0xff]
        %v394 = vld [vmem:[%s287 + $0x2f8] sm:$0xff]
        %v395 = vld [vmem:[%s287 + $0x300] sm:$0xff]
        %v396 = vld [vmem:[%s287 + $0x308] sm:$0xff]
        %v397 = vld [vmem:[%s287 + $0x310] sm:$0xff]
        %v398 = vld [vmem:[%s287 + $0x318] sm:$0xff]
        %v399 = vld [vmem:[%s287 + $0x320] sm:$0xff]
        %v400 = vld [vmem:[%s287 + $0x328] sm:$0xff]
        %v401 = vld [vmem:[%s287 + $0x330] sm:$0xff]
        %v402 = vld [vmem:[%s287 + $0x338] sm:$0xff]
        %v403 = vld [vmem:[%s287 + $0x340] sm:$0xff]
        %v404 = vld [vmem:[%s287 + $0x348] sm:$0xff]
        %v405 = vld [vmem:[%s287 + $0x350] sm:$0xff]
        %v406 = vld [vmem:[%s287 + $0x358] sm:$0xff]
        %v407 = vld [vmem:[%s287 + $0x360] sm:$0xff]
        %v408 = vld [vmem:[%s287 + $0x368] sm:$0xff]
        %v409 = vld [vmem:[%s287 + $0x370] sm:$0xff]
        %v410 = vld [vmem:[%s287 + $0x378] sm:$0xff]
        %v411 = vld [vmem:[%s287 + $0x380] sm:$0xff]
        %v412 = vld [vmem:[%s287 + $0x388] sm:$0xff]
        %v413 = vld [vmem:[%s287 + $0x390] sm:$0xff]
        %v414 = vld [vmem:[%s287 + $0x398] sm:$0xff]
        %v415 = vld [vmem:[%s287 + $0x3a0] sm:$0xff]
        %v416 = vld [vmem:[%s287 + $0x3a8] sm:$0xff]
        %v417 = vld [vmem:[%s287 + $0x3b0] sm:$0xff]
        %v418 = vld [vmem:[%s287 + $0x3b8] sm:$0xff]
        %v419 = vld [vmem:[%s287 + $0x3c0] sm:$0xff]
        %v420 = vld [vmem:[%s287 + $0x3c8] sm:$0xff]
        %v421 = vld [vmem:[%s287 + $0x3d0] sm:$0xff]
        %v422 = vld [vmem:[%s287 + $0x3d8] sm:$0xff]
        %v423 = vld [vmem:[%s287 + $0x3e0] sm:$0xff]
        %v424 = vld [vmem:[%s287 + $0x3e8] sm:$0xff]
        %v425 = vld [vmem:[%s287 + $0x3f0] sm:$0xff]
        %v426 = vld [vmem:[%s287 + $0x3f8] sm:$0xff]
        %v427 = vld [vmem:[%s287 + $0x400] sm:$0xff]
        %v428 = vld [vmem:[%s287 + $0x408] sm:$0xff]
        %v429 = vld [vmem:[%s287 + $0x410] sm:$0xff]
        %v430 = vld [vmem:[%s287 + $0x418] sm:$0xff]
        %v431 = vld [vmem:[%s287 + $0x420] sm:$0xff]
        %v432 = vld [vmem:[%s287 + $0x428] sm:$0xff]
        %v433 = vld [vmem:[%s287 + $0x430] sm:$0xff]
        %v434 = vld [vmem:[%s287 + $0x438] sm:$0xff]
        %v435 = vld [vmem:[%s287 + $0x440] sm:$0xff]
        %v436 = vld [vmem:[%s287 + $0x448] sm:$0xff]
        %v437 = vld [vmem:[%s287 + $0x450] sm:$0xff]
        %v438 = vld [vmem:[%s287 + $0x458] sm:$0xff]
        %v439 = vld [vmem:[%s287 + $0x460] sm:$0xff]
        %v440 = vld [vmem:[%s287 + $0x468] sm:$0xff]
        %v441 = vld [vmem:[%s287 + $0x470] sm:$0xff]
        %v442 = vld [vmem:[%s287 + $0x478] sm:$0xff]
        %v443 = vld [vmem:[%s287 + $0x480] sm:$0xff]
        %v444 = vld [vmem:[%s287 + $0x488] sm:$0xff]
        %v445 = vld [vmem:[%s287 + $0x490] sm:$0xff]
        %v446 = vld [vmem:[%s287 + $0x498] sm:$0xff]
        %v447 = vld [vmem:[%s287 + $0x4a0] sm:$0xff]
        %v448 = vld [vmem:[%s287 + $0x4a8] sm:$0xff]
        %v449 = vld [vmem:[%s287 + $0x4b0] sm:$0xff]
        %v450 = vld [vmem:[%s287 + $0x4b8] sm:$0xff]
        %v451 = vld [vmem:[%s287 + $0x4c0] sm:$0xff]
        %v452 = vld [vmem:[%s287 + $0x4c8] sm:$0xff]
        %v453 = vld [vmem:[%s287 + $0x4d0] sm:$0xff]
        %v454 = vld [vmem:[%s287 + $0x4d8] sm:$0xff]
        %v455 = vld [vmem:[%s287 + $0x4e0] sm:$0xff]
        %v456 = vld [vmem:[%s287 + $0x4e8] sm:$0xff]
        %v457 = vld [vmem:[%s287 + $0x4f0] sm:$0xff]
        %v458 = vld [vmem:[%s287 + $0x4f8] sm:$0xff]
        %v459 = vld [vmem:[%s287 + $0x500] sm:$0xff]
        %v460 = vld [vmem:[%s287 + $0x508] sm:$0xff]
        %v461 = vld [vmem:[%s287 + $0x510] sm:$0xff]
        %v462 = vld [vmem:[%s287 + $0x518] sm:$0xff]
        %v463 = vld [vmem:[%s287 + $0x520] sm:$0xff]
        %v464 = vld [vmem:[%s287 + $0x528] sm:$0xff]
        %v465 = vld [vmem:[%s287 + $0x530] sm:$0xff]
        %v466 = vld [vmem:[%s287 + $0x538] sm:$0xff]
        %v467 = vld [vmem:[%s287 + $0x540] sm:$0xff]
        %v468 = vld [vmem:[%s287 + $0x548] sm:$0xff]
        %v469 = vld [vmem:[%s287 + $0x550] sm:$0xff]
        %v470 = vld [vmem:[%s287 + $0x558] sm:$0xff]
        %v471 = vld [vmem:[%s287 + $0x560] sm:$0xff]
        %v472 = vld [vmem:[%s287 + $0x568] sm:$0xff]
        %v473 = vld [vmem:[%s287 + $0x570] sm:$0xff]
        %v474 = vld [vmem:[%s287 + $0x578] sm:$0xff]
        %v475 = vld [vmem:[%s287 + $0x580] sm:$0xff]
        %v476 = vld [vmem:[%s287 + $0x588] sm:$0xff]
        %v477 = vld [vmem:[%s287 + $0x590] sm:$0xff]
        %v478 = vld [vmem:[%s287 + $0x598] sm:$0xff]
        %v479 = vld [vmem:[%s287 + $0x5a0] sm:$0xff]
        %v480 = vld [vmem:[%s287 + $0x5a8] sm:$0xff]
        %v481 = vld [vmem:[%s287 + $0x5b0] sm:$0xff]
        %v482 = vld [vmem:[%s287 + $0x5b8] sm:$0xff]
        %v483 = vld [vmem:[%s287 + $0x5c0] sm:$0xff]
        %v484 = vld [vmem:[%s287 + $0x5c8] sm:$0xff]
        %v485 = vld [vmem:[%s287 + $0x5d0] sm:$0xff]
        %v486 = vld [vmem:[%s287 + $0x5d8] sm:$0xff]
        %v487 = vld [vmem:[%s287 + $0x5e0] sm:$0xff]
        %v488 = vld [vmem:[%s287 + $0x5e8] sm:$0xff]
        %v489 = vld [vmem:[%s287 + $0x5f0] sm:$0xff]
        %v490 = vld [vmem:[%s287 + $0x5f8] sm:$0xff]
        %v491 = vld [vmem:[%s287 + $0x600] sm:$0xff]
        %v492 = vld [vmem:[%s287 + $0x608] sm:$0xff]
        %v493 = vld [vmem:[%s287 + $0x610] sm:$0xff]
        %v494 = vld [vmem:[%s287 + $0x618] sm:$0xff]
        %v495 = vld [vmem:[%s287 + $0x620] sm:$0xff]
        %v496 = vld [vmem:[%s287 + $0x628] sm:$0xff]
        %v497 = vld [vmem:[%s287 + $0x630] sm:$0xff]
        %v498 = vld [vmem:[%s287 + $0x638] sm:$0xff]
        %v499 = vld [vmem:[%s287 + $0x640] sm:$0xff]
        %v500 = vld [vmem:[%s287 + $0x648] sm:$0xff]
        %v501 = vld [vmem:[%s287 + $0x650] sm:$0xff]
        %v502 = vld [vmem:[%s287 + $0x658] sm:$0xff]
        %v503 = vld [vmem:[%s287 + $0x660] sm:$0xff]
        %v504 = vld [vmem:[%s287 + $0x668] sm:$0xff]
        %v505 = vld [vmem:[%s287 + $0x670] sm:$0xff]
        %v506 = vld [vmem:[%s287 + $0x678] sm:$0xff]
        %v507 = vld [vmem:[%s287 + $0x680] sm:$0xff]
        %v508 = vld [vmem:[%s287 + $0x688] sm:$0xff]
        %v509 = vld [vmem:[%s287 + $0x690] sm:$0xff]
        %v510 = vld [vmem:[%s287 + $0x698] sm:$0xff]
        %v511 = vld [vmem:[%s287 + $0x6a0] sm:$0xff]
        %v512 = vld [vmem:[%s287 + $0x6a8] sm:$0xff]
        %v513 = vld [vmem:[%s287 + $0x6b0] sm:$0xff]
        %v514 = vld [vmem:[%s287 + $0x6b8] sm:$0xff]
        %v515 = vld [vmem:[%s287 + $0x6c0] sm:$0xff]
        %v516 = vld [vmem:[%s287 + $0x6c8] sm:$0xff]
        %v517 = vld [vmem:[%s287 + $0x6d0] sm:$0xff]
        %v518 = vld [vmem:[%s287 + $0x6d8] sm:$0xff]
        %v519 = vld [vmem:[%s287 + $0x6e0] sm:$0xff]
        %v520 = vld [vmem:[%s287 + $0x6e8] sm:$0xff]
        %v521 = vld [vmem:[%s287 + $0x6f0] sm:$0xff]
        %v522 = vld [vmem:[%s287 + $0x6f8] sm:$0xff]
        %v523 = vld [vmem:[%s287 + $0x700] sm:$0xff]
        %v524 = vld [vmem:[%s287 + $0x708] sm:$0xff]
        %v525 = vld [vmem:[%s287 + $0x710] sm:$0xff]
        %v526 = vld [vmem:[%s287 + $0x718] sm:$0xff]
        %v527 = vld [vmem:[%s287 + $0x720] sm:$0xff]
        %v528 = vld [vmem:[%s287 + $0x728] sm:$0xff]
        %v529 = vld [vmem:[%s287 + $0x730] sm:$0xff]
        %v530 = vld [vmem:[%s287 + $0x738] sm:$0xff]
        %v531 = vld [vmem:[%s287 + $0x740] sm:$0xff]
        %v532 = vld [vmem:[%s287 + $0x748] sm:$0xff]
        %v533 = vld [vmem:[%s287 + $0x750] sm:$0xff]
        %v534 = vld [vmem:[%s287 + $0x758] sm:$0xff]
        %v535 = vld [vmem:[%s287 + $0x760] sm:$0xff]
        %v536 = vld [vmem:[%s287 + $0x768] sm:$0xff]
        %v537 = vld [vmem:[%s287 + $0x770] sm:$0xff]
        %v538 = vld [vmem:[%s287 + $0x778] sm:$0xff]
        %v539 = vld [vmem:[%s287 + $0x780] sm:$0xff]
        %v540 = vld [vmem:[%s287 + $0x788] sm:$0xff]
        %v541 = vld [vmem:[%s287 + $0x790] sm:$0xff]
        %v542 = vld [vmem:[%s287 + $0x798] sm:$0xff]
        %v543 = vld [vmem:[%s287 + $0x7a0] sm:$0xff]
        %v544 = vld [vmem:[%s287 + $0x7a8] sm:$0xff]
        %v545 = vld [vmem:[%s287 + $0x7b0] sm:$0xff]
        %v546 = vld [vmem:[%s287 + $0x7b8] sm:$0xff]
        %v547 = vld [vmem:[%s287 + $0x7c0] sm:$0xff]
        %v548 = vld [vmem:[%s287 + $0x7c8] sm:$0xff]
        %v549 = vld [vmem:[%s287 + $0x7d0] sm:$0xff]
        %v550 = vld [vmem:[%s287 + $0x7d8] sm:$0xff]
        %v551 = vld [vmem:[%s287 + $0x7e0] sm:$0xff]
        %v552 = vld [vmem:[%s287 + $0x7e8] sm:$0xff]
        %v553 = vld [vmem:[%s287 + $0x7f0] sm:$0xff]
        %v554 = vld [vmem:[%s287 + $0x7f8] sm:$0xff]
        %v555 = vld [vmem:[%s287 + $0x800] sm:$0xff]
        %v556 = vld [vmem:[%s287 + $0x808] sm:$0xff]
        %v557 = vld [vmem:[%s287 + $0x810] sm:$0xff]
        %v558 = vld [vmem:[%s287 + $0x818] sm:$0xff]
        %v559 = vld [vmem:[%s287 + $0x820] sm:$0xff]
        %v560 = vld [vmem:[%s287 + $0x828] sm:$0xff]
        %v561 = vld [vmem:[%s287 + $0x830] sm:$0xff]
        %v562 = vld [vmem:[%s287 + $0x838] sm:$0xff]
        %v563 = vld [vmem:[%s287 + $0x840] sm:$0xff]
        %v564 = vld [vmem:[%s287 + $0x848] sm:$0xff]
        %v565 = vld [vmem:[%s287 + $0x850] sm:$0xff]
        %v566 = vld [vmem:[%s287 + $0x858] sm:$0xff]
        %v567 = vld [vmem:[%s287 + $0x860] sm:$0xff]
        %v568 = vld [vmem:[%s287 + $0x868] sm:$0xff]
        %v569 = vld [vmem:[%s287 + $0x870] sm:$0xff]
        %v570 = vld [vmem:[%s287 + $0x878] sm:$0xff]
        %v571 = vld [vmem:[%s287 + $0x880] sm:$0xff]
        %v572 = vld [vmem:[%s287 + $0x888] sm:$0xff]
        %v573 = vld [vmem:[%s287 + $0x890] sm:$0xff]
        %v574 = vld [vmem:[%s287 + $0x898] sm:$0xff]
        %v575 = vld [vmem:[%s287 + $0x8a0] sm:$0xff]
        %v576 = vld [vmem:[%s287 + $0x8a8] sm:$0xff]
        %v577 = vld [vmem:[%s287 + $0x8b0] sm:$0xff]
        %v578 = vld [vmem:[%s287 + $0x8b8] sm:$0xff]
        %v579 = vld [vmem:[%s287 + $0x8c0] sm:$0xff]
        %v580 = vld [vmem:[%s287 + $0x8c8] sm:$0xff]
        %v581 = vld [vmem:[%s287 + $0x8d0] sm:$0xff]
        %v582 = vld [vmem:[%s287 + $0x8d8] sm:$0xff]
        %v583 = vld [vmem:[%s287 + $0x8e0] sm:$0xff]
        %v584 = vld [vmem:[%s287 + $0x8e8] sm:$0xff]
        %v585 = vld [vmem:[%s287 + $0x8f0] sm:$0xff]
        %v586 = vld [vmem:[%s287 + $0x8f8] sm:$0xff]
        %v587 = vld [vmem:[%s287 + $0x900] sm:$0xff]
        %v588 = vld [vmem:[%s287 + $0x908] sm:$0xff]
        %v589 = vld [vmem:[%s287 + $0x910] sm:$0xff]
        %v590 = vld [vmem:[%s287 + $0x918] sm:$0xff]
        %v591 = vld [vmem:[%s287 + $0x920] sm:$0xff]
        %v592 = vld [vmem:[%s287 + $0x928] sm:$0xff]
        %v593 = vld [vmem:[%s287 + $0x930] sm:$0xff]
        %v594 = vld [vmem:[%s287 + $0x938] sm:$0xff]
        %v595 = vld [vmem:[%s287 + $0x940] sm:$0xff]
        %v596 = vld [vmem:[%s287 + $0x948] sm:$0xff]
        %v597 = vld [vmem:[%s287 + $0x950] sm:$0xff]
        %v598 = vld [vmem:[%s287 + $0x958] sm:$0xff]
        %v599 = vld [vmem:[%s287 + $0x960] sm:$0xff]
        %v600 = vld [vmem:[%s287 + $0x968] sm:$0xff]
        %v601 = vld [vmem:[%s287 + $0x970] sm:$0xff]
        %v602 = vld [vmem:[%s287 + $0x978] sm:$0xff]
        %v603 = vld [vmem:[%s287 + $0x980] sm:$0xff]
        %v604 = vld [vmem:[%s287 + $0x988] sm:$0xff]
        %v605 = vld [vmem:[%s287 + $0x990] sm:$0xff]
        %v606 = vld [vmem:[%s287 + $0x998] sm:$0xff]
        %v607 = vld [vmem:[%s287 + $0x9a0] sm:$0xff]
        %v608 = vld [vmem:[%s287 + $0x9a8] sm:$0xff]
        %v609 = vld [vmem:[%s287 + $0x9b0] sm:$0xff]
        %v610 = vld [vmem:[%s287 + $0x9b8] sm:$0xff]
        %v611 = vld [vmem:[%s287 + $0x9c0] sm:$0xff]
        %v612 = vld [vmem:[%s287 + $0x9c8] sm:$0xff]
        %v613 = vld [vmem:[%s287 + $0x9d0] sm:$0xff]
        %v614 = vld [vmem:[%s287 + $0x9d8] sm:$0xff]
        %v615 = vld [vmem:[%s287 + $0x9e0] sm:$0xff]
        %v616 = vld [vmem:[%s287 + $0x9e8] sm:$0xff]
        %v617 = vld [vmem:[%s287 + $0x9f0] sm:$0xff]
        %v618 = vld [vmem:[%s287 + $0x9f8] sm:$0xff]
        %v619 = vld [vmem:[%s287 + $0xa00] sm:$0xff]
        %v620 = vld [vmem:[%s287 + $0xa08] sm:$0xff]
        %v621 = vld [vmem:[%s287 + $0xa10] sm:$0xff]
        %v622 = vld [vmem:[%s287 + $0xa18] sm:$0xff]
        %v623 = vld [vmem:[%s287 + $0xa20] sm:$0xff]
        %v624 = vld [vmem:[%s287 + $0xa28] sm:$0xff]
        %v625 = vld [vmem:[%s287 + $0xa30] sm:$0xff]
        %v626 = vld [vmem:[%s287 + $0xa38] sm:$0xff]
        %v627 = vld [vmem:[%s287 + $0xa40] sm:$0xff]
        %v628 = vld [vmem:[%s287 + $0xa48] sm:$0xff]
        %v629 = vld [vmem:[%s287 + $0xa50] sm:$0xff]
        %v630 = vld [vmem:[%s287 + $0xa58] sm:$0xff]
        %v631 = vld [vmem:[%s287 + $0xa60] sm:$0xff]
        %v632 = vld [vmem:[%s287 + $0xa68] sm:$0xff]
        %v633 = vld [vmem:[%s287 + $0xa70] sm:$0xff]
        %v634 = vld [vmem:[%s287 + $0xa78] sm:$0xff]
        %v635 = vld [vmem:[%s287 + $0xa80] sm:$0xff]
        %v636 = vld [vmem:[%s287 + $0xa88] sm:$0xff]
        %v637 = vld [vmem:[%s287 + $0xa90] sm:$0xff]
        %v638 = vld [vmem:[%s287 + $0xa98] sm:$0xff]
        %v639 = vld [vmem:[%s287 + $0xaa0] sm:$0xff]
        %v640 = vld [vmem:[%s287 + $0xaa8] sm:$0xff]
        %v641 = vld [vmem:[%s287 + $0xab0] sm:$0xff]
        %v642 = vld [vmem:[%s287 + $0xab8] sm:$0xff]
        %v643 = vld [vmem:[%s287 + $0xac0] sm:$0xff]
        %v644 = vld [vmem:[%s287 + $0xac8] sm:$0xff]
        %v645 = vld [vmem:[%s287 + $0xad0] sm:$0xff]
        %v646 = vld [vmem:[%s287 + $0xad8] sm:$0xff]
        %v647 = vld [vmem:[%s287 + $0xae0] sm:$0xff]
        %v648 = vld [vmem:[%s287 + $0xae8] sm:$0xff]
        %v649 = vld [vmem:[%s287 + $0xaf0] sm:$0xff]
        %v650 = vld [vmem:[%s287 + $0xaf8] sm:$0xff]
        %v651 = vld [vmem:[%s287 + $0xb00] sm:$0xff]
        %v652 = vld [vmem:[%s287 + $0xb08] sm:$0xff]
        %v653 = vld [vmem:[%s287 + $0xb10] sm:$0xff]
        %v654 = vld [vmem:[%s287 + $0xb18] sm:$0xff]
        %v655 = vld [vmem:[%s287 + $0xb20] sm:$0xff]
        %v656 = vld [vmem:[%s287 + $0xb28] sm:$0xff]
        %v657 = vld [vmem:[%s287 + $0xb30] sm:$0xff]
        %v658 = vld [vmem:[%s287 + $0xb38] sm:$0xff]
        %v659 = vld [vmem:[%s287 + $0xb40] sm:$0xff]
        %v660 = vld [vmem:[%s287 + $0xb48] sm:$0xff]
        %v661 = vld [vmem:[%s287 + $0xb50] sm:$0xff]
        %v662 = vld [vmem:[%s287 + $0xb58] sm:$0xff]
        %v663 = vld [vmem:[%s287 + $0xb60] sm:$0xff]
        %v664 = vld [vmem:[%s287 + $0xb68] sm:$0xff]
        %v665 = vld [vmem:[%s287 + $0xb70] sm:$0xff]
        %v666 = vld [vmem:[%s287 + $0xb78] sm:$0xff]
        %v667 = vld [vmem:[%s287 + $0xb80] sm:$0xff]
        %v668 = vld [vmem:[%s287 + $0xb88] sm:$0xff]
        %v669 = vld [vmem:[%s287 + $0xb90] sm:$0xff]
        %v670 = vld [vmem:[%s287 + $0xb98] sm:$0xff]
        %v671 = vld [vmem:[%s287 + $0xba0] sm:$0xff]
        %v672 = vld [vmem:[%s287 + $0xba8] sm:$0xff]
        %v673 = vld [vmem:[%s287 + $0xbb0] sm:$0xff]
        %v674 = vld [vmem:[%s287 + $0xbb8] sm:$0xff]
        %v675 = vld [vmem:[%s287 + $0xbc0] sm:$0xff]
        %v676 = vld [vmem:[%s287 + $0xbc8] sm:$0xff]
        %v677 = vld [vmem:[%s287 + $0xbd0] sm:$0xff]
        %v678 = vld [vmem:[%s287 + $0xbd8] sm:$0xff]
        %v679 = vld [vmem:[%s287 + $0xbe0] sm:$0xff]
        %v680 = vld [vmem:[%s287 + $0xbe8] sm:$0xff]
        %v681 = vld [vmem:[%s287 + $0xbf0] sm:$0xff]
        %v682 = vld [vmem:[%s287 + $0xbf8] sm:$0xff]
        %v683 = vld [vmem:[%s287 + $0xc00] sm:$0xff]
        %v684 = vld [vmem:[%s287 + $0xc08] sm:$0xff]
        %v685 = vld [vmem:[%s287 + $0xc10] sm:$0xff]
        %v686 = vld [vmem:[%s287 + $0xc18] sm:$0xff]
        %v687 = vld [vmem:[%s287 + $0xc20] sm:$0xff]
        %v688 = vld [vmem:[%s287 + $0xc28] sm:$0xff]
        %v689 = vld [vmem:[%s287 + $0xc30] sm:$0xff]
        %v690 = vld [vmem:[%s287 + $0xc38] sm:$0xff]
        %v691 = vld [vmem:[%s287 + $0xc40] sm:$0xff]
        %v692 = vld [vmem:[%s287 + $0xc48] sm:$0xff]
        %v693 = vld [vmem:[%s287 + $0xc50] sm:$0xff]
        %v694 = vld [vmem:[%s287 + $0xc58] sm:$0xff]
        %v695 = vld [vmem:[%s287 + $0xc60] sm:$0xff]
        %v696 = vld [vmem:[%s287 + $0xc68] sm:$0xff]
        %v697 = vld [vmem:[%s287 + $0xc70] sm:$0xff]
        %v698 = vld [vmem:[%s287 + $0xc78] sm:$0xff]
        %v699 = vld [vmem:[%s287 + $0xc80] sm:$0xff]
        %v700 = vld [vmem:[%s287 + $0xc88] sm:$0xff]
        %v701 = vld [vmem:[%s287 + $0xc90] sm:$0xff]
        %v702 = vld [vmem:[%s287 + $0xc98] sm:$0xff]
        %v703 = vld [vmem:[%s287 + $0xca0] sm:$0xff]
        %v704 = vld [vmem:[%s287 + $0xca8] sm:$0xff]
        %v705 = vld [vmem:[%s287 + $0xcb0] sm:$0xff]
        %v706 = vld [vmem:[%s287 + $0xcb8] sm:$0xff]
        %v707 = vld [vmem:[%s287 + $0xcc0] sm:$0xff]
        %v708 = vld [vmem:[%s287 + $0xcc8] sm:$0xff]
        %v709 = vld [vmem:[%s287 + $0xcd0] sm:$0xff]
        %v710 = vld [vmem:[%s287 + $0xcd8] sm:$0xff]
        %v711 = vld [vmem:[%s287 + $0xce0] sm:$0xff]
        %v712 = vld [vmem:[%s287 + $0xce8] sm:$0xff]
        %v713 = vld [vmem:[%s287 + $0xcf0] sm:$0xff]
        %v714 = vld [vmem:[%s287 + $0xcf8] sm:$0xff]
        %v715 = vld [vmem:[%s287 + $0xd00] sm:$0xff]
        %v716 = vld [vmem:[%s287 + $0xd08] sm:$0xff]
        %v717 = vld [vmem:[%s287 + $0xd10] sm:$0xff]
        %v718 = vld [vmem:[%s287 + $0xd18] sm:$0xff]
        %v719 = vld [vmem:[%s287 + $0xd20] sm:$0xff]
        %v720 = vld [vmem:[%s287 + $0xd28] sm:$0xff]
        %v721 = vld [vmem:[%s287 + $0xd30] sm:$0xff]
        %v722 = vld [vmem:[%s287 + $0xd38] sm:$0xff]
        %v723 = vld [vmem:[%s287 + $0xd40] sm:$0xff]
        %v724 = vld [vmem:[%s287 + $0xd48] sm:$0xff]
        %v725 = vld [vmem:[%s287 + $0xd50] sm:$0xff]
        %v726 = vld [vmem:[%s287 + $0xd58] sm:$0xff]
        %v727 = vld [vmem:[%s287 + $0xd60] sm:$0xff]
        %v728 = vld [vmem:[%s287 + $0xd68] sm:$0xff]
        %v729 = vld [vmem:[%s287 + $0xd70] sm:$0xff]
        %v730 = vld [vmem:[%s287 + $0xd78] sm:$0xff]
        %v731 = vld [vmem:[%s287 + $0xd80] sm:$0xff]
        %v732 = vld [vmem:[%s287 + $0xd88] sm:$0xff]
        %v733 = vld [vmem:[%s287 + $0xd90] sm:$0xff]
        %v734 = vld [vmem:[%s287 + $0xd98] sm:$0xff]
        %v735 = vld [vmem:[%s287 + $0xda0] sm:$0xff]
        %v736 = vld [vmem:[%s287 + $0xda8] sm:$0xff]
        %v737 = vld [vmem:[%s287 + $0xdb0] sm:$0xff]
        %v738 = vld [vmem:[%s287 + $0xdb8] sm:$0xff]
        %v739 = vld [vmem:[%s287 + $0xdc0] sm:$0xff]
        %v740 = vld [vmem:[%s287 + $0xdc8] sm:$0xff]
        %v741 = vld [vmem:[%s287 + $0xdd0] sm:$0xff]
        %v742 = vld [vmem:[%s287 + $0xdd8] sm:$0xff]
        %v743 = vld [vmem:[%s287 + $0xde0] sm:$0xff]
        %v744 = vld [vmem:[%s287 + $0xde8] sm:$0xff]
        %v745 = vld [vmem:[%s287 + $0xdf0] sm:$0xff]
        %v746 = vld [vmem:[%s287 + $0xdf8] sm:$0xff]
        %v747 = vld [vmem:[%s287 + $0xe00] sm:$0xff]
        %v748 = vld [vmem:[%s287 + $0xe08] sm:$0xff]
        %v749 = vld [vmem:[%s287 + $0xe10] sm:$0xff]
        %v750 = vld [vmem:[%s287 + $0xe18] sm:$0xff]
        %v751 = vld [vmem:[%s287 + $0xe20] sm:$0xff]
        %v752 = vld [vmem:[%s287 + $0xe28] sm:$0xff]
        %v753 = vld [vmem:[%s287 + $0xe30] sm:$0xff]
        %v754 = vld [vmem:[%s287 + $0xe38] sm:$0xff]
        %v755 = vld [vmem:[%s287 + $0xe40] sm:$0xff]
        %v756 = vld [vmem:[%s287 + $0xe48] sm:$0xff]
        %v757 = vld [vmem:[%s287 + $0xe50] sm:$0xff]
        %v758 = vld [vmem:[%s287 + $0xe58] sm:$0xff]
        %v759 = vld [vmem:[%s287 + $0xe60] sm:$0xff]
        %v760 = vld [vmem:[%s287 + $0xe68] sm:$0xff]
        %v761 = vld [vmem:[%s287 + $0xe70] sm:$0xff]
        %v762 = vld [vmem:[%s287 + $0xe78] sm:$0xff]
        %v763 = vld [vmem:[%s287 + $0xe80] sm:$0xff]
        %v764 = vld [vmem:[%s287 + $0xe88] sm:$0xff]
        %v765 = vld [vmem:[%s287 + $0xe90] sm:$0xff]
        %v766 = vld [vmem:[%s287 + $0xe98] sm:$0xff]
        %v767 = vld [vmem:[%s287 + $0xea0] sm:$0xff]
        %v768 = vld [vmem:[%s287 + $0xea8] sm:$0xff]
        %v769 = vld [vmem:[%s287 + $0xeb0] sm:$0xff]
        %v770 = vld [vmem:[%s287 + $0xeb8] sm:$0xff]
        %v771 = vld [vmem:[%s287 + $0xec0] sm:$0xff]
        %v772 = vld [vmem:[%s287 + $0xec8] sm:$0xff]
        %v773 = vld [vmem:[%s287 + $0xed0] sm:$0xff]
        %v774 = vld [vmem:[%s287 + $0xed8] sm:$0xff]
        %v775 = vld [vmem:[%s287 + $0xee0] sm:$0xff]
        %v776 = vld [vmem:[%s287 + $0xee8] sm:$0xff]
        %v777 = vld [vmem:[%s287 + $0xef0] sm:$0xff]
        %v778 = vld [vmem:[%s287 + $0xef8] sm:$0xff]
        %v779 = vld [vmem:[%s287 + $0xf00] sm:$0xff]
        %v780 = vld [vmem:[%s287 + $0xf08] sm:$0xff]
        %v781 = vld [vmem:[%s287 + $0xf10] sm:$0xff]
        %v782 = vld [vmem:[%s287 + $0xf18] sm:$0xff]
        %v783 = vld [vmem:[%s287 + $0xf20] sm:$0xff]
        %v784 = vld [vmem:[%s287 + $0xf28] sm:$0xff]
        %v785 = vld [vmem:[%s287 + $0xf30] sm:$0xff]
        %v786 = vld [vmem:[%s287 + $0xf38] sm:$0xff]
        %v787 = vld [vmem:[%s287 + $0xf40] sm:$0xff]
        %v788 = vld [vmem:[%s287 + $0xf48] sm:$0xff]
        %v789 = vld [vmem:[%s287 + $0xf50] sm:$0xff]
        %v790 = vld [vmem:[%s287 + $0xf58] sm:$0xff]
        %v791 = vld [vmem:[%s287 + $0xf60] sm:$0xff]
        %v792 = vld [vmem:[%s287 + $0xf68] sm:$0xff]
        %v793 = vld [vmem:[%s287 + $0xf70] sm:$0xff]
        %v794 = vld [vmem:[%s287 + $0xf78] sm:$0xff]
        %v795 = vld [vmem:[%s287 + $0xf80] sm:$0xff]
        %v796 = vld [vmem:[%s287 + $0xf88] sm:$0xff]
        %v797 = vld [vmem:[%s287 + $0xf90] sm:$0xff]
        %v798 = vld [vmem:[%s287 + $0xf98] sm:$0xff]
        %v799 = vld [vmem:[%s287 + $0xfa0] sm:$0xff]
        %v800 = vld [vmem:[%s287 + $0xfa8] sm:$0xff]
        %v801 = vld [vmem:[%s287 + $0xfb0] sm:$0xff]
        %v802 = vld [vmem:[%s287 + $0xfb8] sm:$0xff]
        %v803 = vld [vmem:[%s287 + $0xfc0] sm:$0xff]
        %v804 = vld [vmem:[%s287 + $0xfc8] sm:$0xff]
        %v805 = vld [vmem:[%s287 + $0xfd0] sm:$0xff]
        %v806 = vld [vmem:[%s287 + $0xfd8] sm:$0xff]
        %v807 = vld [vmem:[%s287 + $0xfe0] sm:$0xff]
        %v808 = vld [vmem:[%s287 + $0xfe8] sm:$0xff]
        %v809 = vld [vmem:[%s287 + $0xff0] sm:$0xff]
        %v810 = vld [vmem:[%s287 + $0xff8] sm:$0xff]
        %v811 = vld [vmem:[%s287 + $0x1000] sm:$0xff]
        %v812 = vld [vmem:[%s287 + $0x1008] sm:$0xff]
        %v813 = vld [vmem:[%s287 + $0x1010] sm:$0xff]
        %v814 = vld [vmem:[%s287 + $0x1018] sm:$0xff]
        %v815 = vld [vmem:[%s287 + $0x1020] sm:$0xff]
        %v816 = vld [vmem:[%s287 + $0x1028] sm:$0xff]
        %v817 = vld [vmem:[%s287 + $0x1030] sm:$0xff]
        %v818 = vld [vmem:[%s287 + $0x1038] sm:$0xff]
        %v819 = vld [vmem:[%s287 + $0x1040] sm:$0xff]
        %v820 = vld [vmem:[%s287 + $0x1048] sm:$0xff]
        %v821 = vld [vmem:[%s287 + $0x1050] sm:$0xff]
        %v822 = vld [vmem:[%s287 + $0x1058] sm:$0xff]
        %v823 = vld [vmem:[%s287 + $0x1060] sm:$0xff]
        %v824 = vld [vmem:[%s287 + $0x1068] sm:$0xff]
        %v825 = vld [vmem:[%s287 + $0x1070] sm:$0xff]
        %v826 = vld [vmem:[%s287 + $0x1078] sm:$0xff]
        %v827 = vld [vmem:[%s287 + $0x1080] sm:$0xff]
        %v828 = vld [vmem:[%s287 + $0x1088] sm:$0xff]
        %v829 = vld [vmem:[%s287 + $0x1090] sm:$0xff]
        %v830 = vld [vmem:[%s287 + $0x1098] sm:$0xff]
        %v831 = vld [vmem:[%s287 + $0x10a0] sm:$0xff]
        %v832 = vld [vmem:[%s287 + $0x10a8] sm:$0xff]
        %v833 = vld [vmem:[%s287 + $0x10b0] sm:$0xff]
        %v834 = vld [vmem:[%s287 + $0x10b8] sm:$0xff]
        %v835 = vld [vmem:[%s287 + $0x10c0] sm:$0xff]
        %v836 = vld [vmem:[%s287 + $0x10c8] sm:$0xff]
        %v837 = vld [vmem:[%s287 + $0x10d0] sm:$0xff]
        %v838 = vld [vmem:[%s287 + $0x10d8] sm:$0xff]
        %v839 = vld [vmem:[%s287 + $0x10e0] sm:$0xff]
        %v840 = vld [vmem:[%s287 + $0x10e8] sm:$0xff]
        %v841 = vld [vmem:[%s287 + $0x10f0] sm:$0xff]
        %v842 = vld [vmem:[%s287 + $0x10f8] sm:$0xff]
        %v843 = vld [vmem:[%s287 + $0x1100] sm:$0xff]
        %v844 = vld [vmem:[%s287 + $0x1108] sm:$0xff]
        %v845 = vld [vmem:[%s287 + $0x1110] sm:$0xff]
        %v846 = vld [vmem:[%s287 + $0x1118] sm:$0xff]
        %v847 = vld [vmem:[%s287 + $0x1120] sm:$0xff]
        %v848 = vld [vmem:[%s287 + $0x1128] sm:$0xff]
        %v849 = vld [vmem:[%s287 + $0x1130] sm:$0xff]
        %v850 = vld [vmem:[%s287 + $0x1138] sm:$0xff]
        %v851 = vld [vmem:[%s287 + $0x1140] sm:$0xff]
        %v852 = vld [vmem:[%s287 + $0x1148] sm:$0xff]
        %v853 = vld [vmem:[%s287 + $0x1150] sm:$0xff]
        %v854 = vld [vmem:[%s287 + $0x1158] sm:$0xff]
        %v855 = vld [vmem:[%s287 + $0x1160] sm:$0xff]
        %v856 = vld [vmem:[%s287 + $0x1168] sm:$0xff]
        %v857 = vld [vmem:[%s287 + $0x1170] sm:$0xff]
        %v858 = vld [vmem:[%s287 + $0x1178] sm:$0xff]
        %v859 = vld [vmem:[%s287 + $0x1180] sm:$0xff]
        %v860 = vld [vmem:[%s287 + $0x1188] sm:$0xff]
        %v861 = vld [vmem:[%s287 + $0x1190] sm:$0xff]
        %v862 = vld [vmem:[%s287 + $0x1198] sm:$0xff]
        %v863 = vld [vmem:[%s287 + $0x11a0] sm:$0xff]
        %v864 = vld [vmem:[%s287 + $0x11a8] sm:$0xff]
        %v865 = vld [vmem:[%s287 + $0x11b0] sm:$0xff]
        %v866 = vld [vmem:[%s287 + $0x11b8] sm:$0xff]
        %v867 = vld [vmem:[%s287 + $0x11c0] sm:$0xff]
        %v868 = vld [vmem:[%s287 + $0x11c8] sm:$0xff]
        %v869 = vld [vmem:[%s287 + $0x11d0] sm:$0xff]
        %v870 = vld [vmem:[%s287 + $0x11d8] sm:$0xff]
        %v871 = vld [vmem:[%s287 + $0x11e0] sm:$0xff]
        %v872 = vld [vmem:[%s287 + $0x11e8] sm:$0xff]
        %v873 = vld [vmem:[%s287 + $0x11f0] sm:$0xff]
        %v874 = vld [vmem:[%s287 + $0x11f8] sm:$0xff]
        %v875 = vld [vmem:[%s287 + $0x1200] sm:$0xff]
        %v876 = vld [vmem:[%s287 + $0x1208] sm:$0xff]
        %v877 = vld [vmem:[%s287 + $0x1210] sm:$0xff]
        %v878 = vld [vmem:[%s287 + $0x1218] sm:$0xff]
        %v879 = vld [vmem:[%s287 + $0x1220] sm:$0xff]
        %v880 = vld [vmem:[%s287 + $0x1228] sm:$0xff]
        %v881 = vld [vmem:[%s287 + $0x1230] sm:$0xff]
        %v882 = vld [vmem:[%s287 + $0x1238] sm:$0xff]
        %v883 = vld [vmem:[%s287 + $0x1240] sm:$0xff]
        %v884 = vld [vmem:[%s287 + $0x1248] sm:$0xff]
        %v885 = vld [vmem:[%s287 + $0x1250] sm:$0xff]
        %v886 = vld [vmem:[%s287 + $0x1258] sm:$0xff]
        %v887 = vld [vmem:[%s287 + $0x1260] sm:$0xff]
        %v888 = vld [vmem:[%s287 + $0x1268] sm:$0xff]
        %v889 = vld [vmem:[%s287 + $0x1270] sm:$0xff]
        %v890 = vld [vmem:[%s287 + $0x1278] sm:$0xff]
        %v891 = vld [vmem:[%s287 + $0x1280] sm:$0xff]
        %v892 = vld [vmem:[%s287 + $0x1288] sm:$0xff]
        %v893 = vld [vmem:[%s287 + $0x1290] sm:$0xff]
        %v894 = vld [vmem:[%s287 + $0x1298] sm:$0xff]
        %v895 = vld [vmem:[%s287 + $0x12a0] sm:$0xff]
        %v896 = vld [vmem:[%s287 + $0x12a8] sm:$0xff]
        %v897 = vld [vmem:[%s287 + $0x12b0] sm:$0xff]
        %v898 = vld [vmem:[%s287 + $0x12b8] sm:$0xff]
        %v899 = vld [vmem:[%s287 + $0x12c0] sm:$0xff]
        %v900 = vld [vmem:[%s287 + $0x12c8] sm:$0xff]
        %v901 = vld [vmem:[%s287 + $0x12d0] sm:$0xff]
        %v902 = vld [vmem:[%s287 + $0x12d8] sm:$0xff]
        %v903 = vld [vmem:[%s287 + $0x12e0] sm:$0xff]
        %v904 = vld [vmem:[%s287 + $0x12e8] sm:$0xff]
        %v905 = vld [vmem:[%s287 + $0x12f0] sm:$0xff]
        %v906 = vld [vmem:[%s287 + $0x12f8] sm:$0xff]
        %v907 = vld [vmem:[%s287 + $0x1300] sm:$0xff]
        %v908 = vld [vmem:[%s287 + $0x1308] sm:$0xff]
        %v909 = vld [vmem:[%s287 + $0x1310] sm:$0xff]
        %v910 = vld [vmem:[%s287 + $0x1318] sm:$0xff]
        %v911 = vld [vmem:[%s287 + $0x1320] sm:$0xff]
        %v912 = vld [vmem:[%s287 + $0x1328] sm:$0xff]
        %v913 = vld [vmem:[%s287 + $0x1330] sm:$0xff]
        %v914 = vld [vmem:[%s287 + $0x1338] sm:$0xff]
        %v915 = vld [vmem:[%s287 + $0x1340] sm:$0xff]
        %v916 = vld [vmem:[%s287 + $0x1348] sm:$0xff]
        %v917 = vld [vmem:[%s287 + $0x1350] sm:$0xff]
        %v918 = vld [vmem:[%s287 + $0x1358] sm:$0xff]
        %v919 = vld [vmem:[%s287 + $0x1360] sm:$0xff]
        %v920 = vld [vmem:[%s287 + $0x1368] sm:$0xff]
        %v921 = vld [vmem:[%s287 + $0x1370] sm:$0xff]
        %v922 = vld [vmem:[%s287 + $0x1378] sm:$0xff]
        %v923 = vld [vmem:[%s287 + $0x1380] sm:$0xff]
        %v924 = vld [vmem:[%s287 + $0x1388] sm:$0xff]
        %v925 = vld [vmem:[%s287 + $0x1390] sm:$0xff]
        %v926 = vld [vmem:[%s287 + $0x1398] sm:$0xff]
        %v927 = vld [vmem:[%s287 + $0x13a0] sm:$0xff]
        %v928 = vld [vmem:[%s287 + $0x13a8] sm:$0xff]
        %v929 = vld [vmem:[%s287 + $0x13b0] sm:$0xff]
        %v930 = vld [vmem:[%s287 + $0x13b8] sm:$0xff]
        %v931 = vld [vmem:[%s287 + $0x13c0] sm:$0xff]
        %v932 = vld [vmem:[%s287 + $0x13c8] sm:$0xff]
        %v933 = vld [vmem:[%s287 + $0x13d0] sm:$0xff]
        %v934 = vld [vmem:[%s287 + $0x13d8] sm:$0xff]
        %v935 = vld [vmem:[%s287 + $0x13e0] sm:$0xff]
        %v936 = vld [vmem:[%s287 + $0x13e8] sm:$0xff]
        %v937 = vld [vmem:[%s287 + $0x13f0] sm:$0xff]
        %v938 = vld [vmem:[%s287 + $0x13f8] sm:$0xff]
        %v939 = vld [vmem:[%s287 + $0x1400] sm:$0xff]
        %v940 = vld [vmem:[%s287 + $0x1408] sm:$0xff]
        %v941 = vld [vmem:[%s287 + $0x1410] sm:$0xff]
        %v942 = vld [vmem:[%s287 + $0x1418] sm:$0xff]
        %v943 = vld [vmem:[%s287 + $0x1420] sm:$0xff]
        %v944 = vld [vmem:[%s287 + $0x1428] sm:$0xff]
        %v945 = vld [vmem:[%s287 + $0x1430] sm:$0xff]
        %v946 = vld [vmem:[%s287 + $0x1438] sm:$0xff]
        %v947 = vld [vmem:[%s287 + $0x1440] sm:$0xff]
        %v948 = vld [vmem:[%s287 + $0x1448] sm:$0xff]
        %v949 = vld [vmem:[%s287 + $0x1450] sm:$0xff]
        %v950 = vld [vmem:[%s287 + $0x1458] sm:$0xff]
        %v951 = vld [vmem:[%s287 + $0x1460] sm:$0xff]
        %v952 = vld [vmem:[%s287 + $0x1468] sm:$0xff]
        %v953 = vld [vmem:[%s287 + $0x1470] sm:$0xff]
        %v954 = vld [vmem:[%s287 + $0x1478] sm:$0xff]
        %v955 = vld [vmem:[%s287 + $0x1480] sm:$0xff]
        %v956 = vld [vmem:[%s287 + $0x1488] sm:$0xff]
        %v957 = vld [vmem:[%s287 + $0x1490] sm:$0xff]
        %v958 = vld [vmem:[%s287 + $0x1498] sm:$0xff]
        %v959 = vld [vmem:[%s287 + $0x14a0] sm:$0xff]
        %v960 = vld [vmem:[%s287 + $0x14a8] sm:$0xff]
        %v961 = vld [vmem:[%s287 + $0x14b0] sm:$0xff]
        %v962 = vld [vmem:[%s287 + $0x14b8] sm:$0xff]
        %v963 = vld [vmem:[%s287 + $0x14c0] sm:$0xff]
        %v964 = vld [vmem:[%s287 + $0x14c8] sm:$0xff]
        %v965 = vld [vmem:[%s287 + $0x14d0] sm:$0xff]
        %v966 = vld [vmem:[%s287 + $0x14d8] sm:$0xff]
        %v967 = vld [vmem:[%s287 + $0x14e0] sm:$0xff]
        %v968 = vld [vmem:[%s287 + $0x14e8] sm:$0xff]
        %v969 = vld [vmem:[%s287 + $0x14f0] sm:$0xff]
        %v970 = vld [vmem:[%s287 + $0x14f8] sm:$0xff]
        %v974 = vcombine.high %v296, %v296
        %v976 = vunpack.c.l.s4 1966171168
        %v977 = vunpack.c.0.s8 %v976
        %v978 = vlaneseq
        %v979 = vshrl.u32 %v978, 7
        %v980 = vsub.s32 %v977, %v979
        %v981 = vrot.slane %v296, %v980
        %v983 = vunpack.c.l.s4 1966171168
        %v984 = vunpack.c.0.s8 %v983
        %v985 = vlaneseq
        %v986 = vshrl.u32 %v985, 7
        %v987 = vsub.s32 %v984, %v986
        %v988 = vrot.slane %v974, %v987
        %v989 = vcombine.high %v981, %v981
        %v990 = vcombine.high %v988, %v988
        %v992 = vunpack.c.l.s4 1966171168
        %v993 = vunpack.c.0.s8 %v992
        %v994 = vlaneseq
        %v995 = vshrl.u32 %v994, 7
        %v996 = vsub.s32 %v993, %v995
        %v997 = vrot.slane %v981, %v996
        %v999 = vunpack.c.l.s4 1966171168
        %v1000 = vunpack.c.0.s8 %v999
        %v1001 = vlaneseq
        %v1002 = vshrl.u32 %v1001, 7
        %v1003 = vsub.s32 %v1000, %v1002
        %v1004 = vrot.slane %v988, %v1003
        %v1006 = vunpack.c.l.s4 1966171168
        %v1007 = vunpack.c.0.s8 %v1006
        %v1008 = vlaneseq
        %v1009 = vshrl.u32 %v1008, 7
        %v1010 = vsub.s32 %v1007, %v1009
        %v1011 = vrot.slane %v989, %v1010
        %v1013 = vunpack.c.l.s4 1966171168
        %v1014 = vunpack.c.0.s8 %v1013
        %v1015 = vlaneseq
        %v1016 = vshrl.u32 %v1015, 7
        %v1017 = vsub.s32 %v1014, %v1016
        %v1018 = vrot.slane %v990, %v1017
        %v1019 = vcombine.high %v997, %v997
        %v1020 = vcombine.high %v1004, %v1004
        %v1021 = vcombine.high %v1011, %v1011
        %v1022 = vcombine.high %v1018, %v1018
        %v1023 = vcombine.high %v297, %v297
        %v1025 = vunpack.c.l.s4 1966171168
        %v1026 = vunpack.c.0.s8 %v1025
        %v1027 = vlaneseq
        %v1028 = vshrl.u32 %v1027, 7
        %v1029 = vsub.s32 %v1026, %v1028
        %v1030 = vrot.slane %v297, %v1029
        %v1032 = vunpack.c.l.s4 1966171168
        %v1033 = vunpack.c.0.s8 %v1032
        %v1034 = vlaneseq
        %v1035 = vshrl.u32 %v1034, 7
        %v1036 = vsub.s32 %v1033, %v1035
        %v1037 = vrot.slane %v1023, %v1036
        %v1038 = vcombine.high %v1030, %v1030
        %v1039 = vcombine.high %v1037, %v1037
        %v1041 = vunpack.c.l.s4 1966171168
        %v1042 = vunpack.c.0.s8 %v1041
        %v1043 = vlaneseq
        %v1044 = vshrl.u32 %v1043, 7
        %v1045 = vsub.s32 %v1042, %v1044
        %v1046 = vrot.slane %v1030, %v1045
        %v1048 = vunpack.c.l.s4 1966171168
        %v1049 = vunpack.c.0.s8 %v1048
        %v1050 = vlaneseq
        %v1051 = vshrl.u32 %v1050, 7
        %v1052 = vsub.s32 %v1049, %v1051
        %v1053 = vrot.slane %v1037, %v1052
        %v1055 = vunpack.c.l.s4 1966171168
        %v1056 = vunpack.c.0.s8 %v1055
        %v1057 = vlaneseq
        %v1058 = vshrl.u32 %v1057, 7
        %v1059 = vsub.s32 %v1056, %v1058
        %v1060 = vrot.slane %v1038, %v1059
        %v1062 = vunpack.c.l.s4 1966171168
        %v1063 = vunpack.c.0.s8 %v1062
        %v1064 = vlaneseq
        %v1065 = vshrl.u32 %v1064, 7
        %v1066 = vsub.s32 %v1063, %v1065
        %v1067 = vrot.slane %v1039, %v1066
        %v1068 = vcombine.high %v1046, %v1046
        %v1069 = vcombine.high %v1053, %v1053
        %v1070 = vcombine.high %v1060, %v1060
        %v1071 = vcombine.high %v1067, %v1067
        %v1072 = vcombine.high %v298, %v298
        %v1074 = vunpack.c.l.s4 1966171168
        %v1075 = vunpack.c.0.s8 %v1074
        %v1076 = vlaneseq
        %v1077 = vshrl.u32 %v1076, 7
        %v1078 = vsub.s32 %v1075, %v1077
        %v1079 = vrot.slane %v298, %v1078
        %v1081 = vunpack.c.l.s4 1966171168
        %v1082 = vunpack.c.0.s8 %v1081
        %v1083 = vlaneseq
        %v1084 = vshrl.u32 %v1083, 7
        %v1085 = vsub.s32 %v1082, %v1084
        %v1086 = vrot.slane %v1072, %v1085
        %v1087 = vcombine.high %v1079, %v1079
        %v1089 = vunpack.c.l.s4 1966171168
        %v1090 = vunpack.c.0.s8 %v1089
        %v1091 = vlaneseq
        %v1092 = vshrl.u32 %v1091, 7
        %v1093 = vsub.s32 %v1090, %v1092
        %v1094 = vrot.slane %v1079, %v1093
        %v1096 = vunpack.c.l.s4 1966171168
        %v1097 = vunpack.c.0.s8 %v1096
        %v1098 = vlaneseq
        %v1099 = vshrl.u32 %v1098, 7
        %v1100 = vsub.s32 %v1097, %v1099
        %v1101 = vrot.slane %v1086, %v1100
        %v1103 = vunpack.c.l.s4 1966171168
        %v1104 = vunpack.c.0.s8 %v1103
        %v1105 = vlaneseq
        %v1106 = vshrl.u32 %v1105, 7
        %v1107 = vsub.s32 %v1104, %v1106
        %v1108 = vrot.slane %v1087, %v1107
        %v1109 = vcombine.high %v1094, %v1094
        %v1110 = vcombine.high %v1108, %v1108
        %v1804 = vunpack.c.l.b16 %v299
        %v1805 = vunpack.c.h.b16 %v299
        %v1806 = vunpack.c.l.b16 %v300
        %v1807 = vunpack.c.h.b16 %v300
        %v1808 = vunpack.c.l.b16 %v301
        %v1809 = vunpack.c.h.b16 %v301
        %v1810 = vunpack.c.l.b16 %v302
        %v1811 = vunpack.c.h.b16 %v302
        %v1812 = vunpack.c.l.b16 %v303
        %v1813 = vunpack.c.h.b16 %v303
        %v1814 = vunpack.c.l.b16 %v304
        %v1815 = vunpack.c.h.b16 %v304
        %v1816 = vunpack.c.l.b16 %v305
        %v1817 = vunpack.c.h.b16 %v305
        %v1818 = vunpack.c.l.b16 %v306
        %v1819 = vunpack.c.h.b16 %v306
        %v1820 = vunpack.c.l.b16 %v307
        %v1821 = vunpack.c.h.b16 %v307
        %v1822 = vunpack.c.l.b16 %v308
        %v1823 = vunpack.c.h.b16 %v308
        %v1824 = vunpack.c.l.b16 %v309
        %v1825 = vunpack.c.h.b16 %v309
        %v1826 = vunpack.c.l.b16 %v310
        %v1827 = vunpack.c.h.b16 %v310
        %v1828 = vunpack.c.l.b16 %v311
        %v1829 = vunpack.c.h.b16 %v311
        %v1830 = vunpack.c.l.b16 %v312
        %v1831 = vunpack.c.h.b16 %v312
        %v1832 = vunpack.c.l.b16 %v313
        %v1833 = vunpack.c.h.b16 %v313
        %v1834 = vunpack.c.l.b16 %v314
        %v1835 = vunpack.c.h.b16 %v314
        %v1836 = vunpack.c.l.b16 %v315
        %v1837 = vunpack.c.h.b16 %v315
        %v1838 = vunpack.c.l.b16 %v316
        %v1839 = vunpack.c.h.b16 %v316
        %v1840 = vunpack.c.l.b16 %v317
        %v1841 = vunpack.c.h.b16 %v317
        %v1842 = vunpack.c.l.b16 %v318
        %v1843 = vunpack.c.h.b16 %v318
        %v1844 = vunpack.c.l.b16 %v319
        %v1845 = vunpack.c.h.b16 %v319
        %v1846 = vunpack.c.l.b16 %v320
        %v1847 = vunpack.c.h.b16 %v320
        %v1848 = vunpack.c.l.b16 %v321
        %v1849 = vunpack.c.h.b16 %v321
        %v1850 = vunpack.c.l.b16 %v322
        %v1851 = vunpack.c.h.b16 %v322
        %v1852 = vunpack.c.l.b16 %v323
        %v1853 = vunpack.c.h.b16 %v323
        %v1854 = vunpack.c.l.b16 %v324
        %v1855 = vunpack.c.h.b16 %v324
        %v1856 = vunpack.c.l.b16 %v325
        %v1857 = vunpack.c.h.b16 %v325
        %v1858 = vunpack.c.l.b16 %v326
        %v1859 = vunpack.c.h.b16 %v326
        %v1860 = vunpack.c.l.b16 %v327
        %v1861 = vunpack.c.h.b16 %v327
        %v1862 = vunpack.c.l.b16 %v328
        %v1863 = vunpack.c.h.b16 %v328
        %v1864 = vunpack.c.l.b16 %v329
        %v1865 = vunpack.c.h.b16 %v329
        %v1866 = vunpack.c.l.b16 %v330
        %v1867 = vunpack.c.h.b16 %v330
        %v1868 = vunpack.c.l.b16 %v331
        %v1869 = vunpack.c.h.b16 %v331
        %v1870 = vunpack.c.l.b16 %v332
        %v1871 = vunpack.c.h.b16 %v332
        %v1872 = vunpack.c.l.b16 %v333
        %v1873 = vunpack.c.h.b16 %v333
        %v1874 = vunpack.c.l.b16 %v334
        %v1875 = vunpack.c.h.b16 %v334
        %v1876 = vunpack.c.l.b16 %v335
        %v1877 = vunpack.c.h.b16 %v335
        %v1878 = vunpack.c.l.b16 %v336
        %v1879 = vunpack.c.h.b16 %v336
        %v1880 = vunpack.c.l.b16 %v337
        %v1881 = vunpack.c.h.b16 %v337
        %v1882 = vunpack.c.l.b16 %v338
        %v1883 = vunpack.c.h.b16 %v338
        %v1884 = vunpack.c.l.b16 %v339
        %v1885 = vunpack.c.h.b16 %v339
        %v1886 = vunpack.c.l.b16 %v340
        %v1887 = vunpack.c.h.b16 %v340
        %v1888 = vunpack.c.l.b16 %v341
        %v1889 = vunpack.c.h.b16 %v341
        %v1890 = vunpack.c.l.b16 %v342
        %v1891 = vunpack.c.h.b16 %v342
        %v1892 = vunpack.c.l.b16 %v343
        %v1893 = vunpack.c.h.b16 %v343
        %v1894 = vunpack.c.l.b16 %v344
        %v1895 = vunpack.c.h.b16 %v344
        %v1896 = vunpack.c.l.b16 %v345
        %v1897 = vunpack.c.h.b16 %v345
        %v1898 = vunpack.c.l.b16 %v346
        %v1899 = vunpack.c.h.b16 %v346
        %v1900 = vunpack.c.l.b16 %v347
        %v1901 = vunpack.c.h.b16 %v347
        %v1902 = vunpack.c.l.b16 %v348
        %v1903 = vunpack.c.h.b16 %v348
        %v1904 = vunpack.c.l.b16 %v349
        %v1905 = vunpack.c.h.b16 %v349
        %v1906 = vunpack.c.l.b16 %v350
        %v1907 = vunpack.c.h.b16 %v350
        %v1908 = vunpack.c.l.b16 %v351
        %v1909 = vunpack.c.h.b16 %v351
        %v1910 = vunpack.c.l.b16 %v352
        %v1911 = vunpack.c.h.b16 %v352
        %v1912 = vunpack.c.l.b16 %v353
        %v1913 = vunpack.c.h.b16 %v353
        %v1914 = vunpack.c.l.b16 %v354
        %v1915 = vunpack.c.h.b16 %v354
        %v1916 = vunpack.c.l.b16 %v355
        %v1917 = vunpack.c.h.b16 %v355
        %v1918 = vunpack.c.l.b16 %v356
        %v1919 = vunpack.c.h.b16 %v356
        %v1920 = vunpack.c.l.b16 %v357
        %v1921 = vunpack.c.h.b16 %v357
        %v1922 = vunpack.c.l.b16 %v358
        %v1923 = vunpack.c.h.b16 %v358
        %v1924 = vunpack.c.l.b16 %v359
        %v1925 = vunpack.c.h.b16 %v359
        %v1926 = vunpack.c.l.b16 %v360
        %v1927 = vunpack.c.h.b16 %v360
        %v1928 = vunpack.c.l.b16 %v361
        %v1929 = vunpack.c.h.b16 %v361
        %v1930 = vunpack.c.l.b16 %v362
        %v1931 = vunpack.c.h.b16 %v362
        %v1932 = vunpack.c.l.b16 %v363
        %v1933 = vunpack.c.h.b16 %v363
        %v1934 = vunpack.c.l.b16 %v364
        %v1935 = vunpack.c.h.b16 %v364
        %v1936 = vunpack.c.l.b16 %v365
        %v1937 = vunpack.c.h.b16 %v365
        %v1938 = vunpack.c.l.b16 %v366
        %v1939 = vunpack.c.h.b16 %v366
        %v1940 = vunpack.c.l.b16 %v367
        %v1941 = vunpack.c.h.b16 %v367
        %v1942 = vunpack.c.l.b16 %v368
        %v1943 = vunpack.c.h.b16 %v368
        %v1944 = vunpack.c.l.b16 %v369
        %v1945 = vunpack.c.h.b16 %v369
        %v1946 = vunpack.c.l.b16 %v370
        %v1947 = vunpack.c.h.b16 %v370
        %v1948 = vunpack.c.l.b16 %v371
        %v1949 = vunpack.c.h.b16 %v371
        %v1950 = vunpack.c.l.b16 %v372
        %v1951 = vunpack.c.h.b16 %v372
        %v1952 = vunpack.c.l.b16 %v373
        %v1953 = vunpack.c.h.b16 %v373
        %v1954 = vunpack.c.l.b16 %v374
        %v1955 = vunpack.c.h.b16 %v374
        %v1956 = vunpack.c.l.b16 %v375
        %v1957 = vunpack.c.h.b16 %v375
        %v1958 = vunpack.c.l.b16 %v376
        %v1959 = vunpack.c.h.b16 %v376
        %v1960 = vunpack.c.l.b16 %v377
        %v1961 = vunpack.c.h.b16 %v377
        %v1962 = vunpack.c.l.b16 %v378
        %v1963 = vunpack.c.h.b16 %v378
        %v1964 = vunpack.c.l.b16 %v379
        %v1965 = vunpack.c.h.b16 %v379
        %v1966 = vunpack.c.l.b16 %v380
        %v1967 = vunpack.c.h.b16 %v380
        %v1968 = vunpack.c.l.b16 %v381
        %v1969 = vunpack.c.h.b16 %v381
        %v1970 = vunpack.c.l.b16 %v382
        %v1971 = vunpack.c.h.b16 %v382
        %v1972 = vunpack.c.l.b16 %v383
        %v1973 = vunpack.c.h.b16 %v383
        %v1974 = vunpack.c.l.b16 %v384
        %v1975 = vunpack.c.h.b16 %v384
        %v1976 = vunpack.c.l.b16 %v385
        %v1977 = vunpack.c.h.b16 %v385
        %v1978 = vunpack.c.l.b16 %v386
        %v1979 = vunpack.c.h.b16 %v386
        %v1980 = vunpack.c.l.b16 %v387
        %v1981 = vunpack.c.h.b16 %v387
        %v1982 = vunpack.c.l.b16 %v388
        %v1983 = vunpack.c.h.b16 %v388
        %v1984 = vunpack.c.l.b16 %v389
        %v1985 = vunpack.c.h.b16 %v389
        %v1986 = vunpack.c.l.b16 %v390
        %v1987 = vunpack.c.h.b16 %v390
        %v1988 = vunpack.c.l.b16 %v391
        %v1989 = vunpack.c.h.b16 %v391
        %v1990 = vunpack.c.l.b16 %v392
        %v1991 = vunpack.c.h.b16 %v392
        %v1992 = vunpack.c.l.b16 %v393
        %v1993 = vunpack.c.h.b16 %v393
        %v1994 = vunpack.c.l.b16 %v394
        %v1995 = vunpack.c.h.b16 %v394
        %v1996 = vunpack.c.l.b16 %v395
        %v1997 = vunpack.c.h.b16 %v395
        %v1998 = vunpack.c.l.b16 %v396
        %v1999 = vunpack.c.h.b16 %v396
        %v2000 = vunpack.c.l.b16 %v397
        %v2001 = vunpack.c.h.b16 %v397
        %v2002 = vunpack.c.l.b16 %v398
        %v2003 = vunpack.c.h.b16 %v398
        %v2004 = vunpack.c.l.b16 %v399
        %v2005 = vunpack.c.h.b16 %v399
        %v2006 = vunpack.c.l.b16 %v400
        %v2007 = vunpack.c.h.b16 %v400
        %v2008 = vunpack.c.l.b16 %v401
        %v2009 = vunpack.c.h.b16 %v401
        %v2010 = vunpack.c.l.b16 %v402
        %v2011 = vunpack.c.h.b16 %v402
        %v2012 = vunpack.c.l.b16 %v403
        %v2013 = vunpack.c.h.b16 %v403
        %v2014 = vunpack.c.l.b16 %v404
        %v2015 = vunpack.c.h.b16 %v404
        %v2016 = vunpack.c.l.b16 %v405
        %v2017 = vunpack.c.h.b16 %v405
        %v2018 = vunpack.c.l.b16 %v406
        %v2019 = vunpack.c.h.b16 %v406
        %v2020 = vunpack.c.l.b16 %v407
        %v2021 = vunpack.c.h.b16 %v407
        %v2022 = vunpack.c.l.b16 %v408
        %v2023 = vunpack.c.h.b16 %v408
        %v2024 = vunpack.c.l.b16 %v409
        %v2025 = vunpack.c.h.b16 %v409
        %v2026 = vunpack.c.l.b16 %v410
        %v2027 = vunpack.c.h.b16 %v410
        %v2028 = vunpack.c.l.b16 %v411
        %v2029 = vunpack.c.h.b16 %v411
        %v2030 = vunpack.c.l.b16 %v412
        %v2031 = vunpack.c.h.b16 %v412
        %v2032 = vunpack.c.l.b16 %v413
        %v2033 = vunpack.c.h.b16 %v413
        %v2034 = vunpack.c.l.b16 %v414
        %v2035 = vunpack.c.h.b16 %v414
        %v2036 = vunpack.c.l.b16 %v415
        %v2037 = vunpack.c.h.b16 %v415
        %v2038 = vunpack.c.l.b16 %v416
        %v2039 = vunpack.c.h.b16 %v416
        %v2040 = vunpack.c.l.b16 %v417
        %v2041 = vunpack.c.h.b16 %v417
        %v2042 = vunpack.c.l.b16 %v418
        %v2043 = vunpack.c.h.b16 %v418
        %v2044 = vunpack.c.l.b16 %v419
        %v2045 = vunpack.c.h.b16 %v419
        %v2046 = vunpack.c.l.b16 %v420
        %v2047 = vunpack.c.h.b16 %v420
        %v2048 = vunpack.c.l.b16 %v421
        %v2049 = vunpack.c.h.b16 %v421
        %v2050 = vunpack.c.l.b16 %v422
        %v2051 = vunpack.c.h.b16 %v422
        %v2052 = vunpack.c.l.b16 %v423
        %v2053 = vunpack.c.h.b16 %v423
        %v2054 = vunpack.c.l.b16 %v424
        %v2055 = vunpack.c.h.b16 %v424
        %v2056 = vunpack.c.l.b16 %v425
        %v2057 = vunpack.c.h.b16 %v425
        %v2058 = vunpack.c.l.b16 %v426
        %v2059 = vunpack.c.h.b16 %v426
        %v2060 = vunpack.c.l.b16 %v427
        %v2061 = vunpack.c.h.b16 %v427
        %v2062 = vunpack.c.l.b16 %v428
        %v2063 = vunpack.c.h.b16 %v428
        %v2064 = vunpack.c.l.b16 %v429
        %v2065 = vunpack.c.h.b16 %v429
        %v2066 = vunpack.c.l.b16 %v430
        %v2067 = vunpack.c.h.b16 %v430
        %v2068 = vunpack.c.l.b16 %v431
        %v2069 = vunpack.c.h.b16 %v431
        %v2070 = vunpack.c.l.b16 %v432
        %v2071 = vunpack.c.h.b16 %v432
        %v2072 = vunpack.c.l.b16 %v433
        %v2073 = vunpack.c.h.b16 %v433
        %v2074 = vunpack.c.l.b16 %v434
        %v2075 = vunpack.c.h.b16 %v434
        %v2076 = vunpack.c.l.b16 %v435
        %v2077 = vunpack.c.h.b16 %v435
        %v2078 = vunpack.c.l.b16 %v436
        %v2079 = vunpack.c.h.b16 %v436
        %v2080 = vunpack.c.l.b16 %v437
        %v2081 = vunpack.c.h.b16 %v437
        %v2082 = vunpack.c.l.b16 %v438
        %v2083 = vunpack.c.h.b16 %v438
        %v2084 = vunpack.c.l.b16 %v439
        %v2085 = vunpack.c.h.b16 %v439
        %v2086 = vunpack.c.l.b16 %v440
        %v2087 = vunpack.c.h.b16 %v440
        %v2088 = vunpack.c.l.b16 %v441
        %v2089 = vunpack.c.h.b16 %v441
        %v2090 = vunpack.c.l.b16 %v442
        %v2091 = vunpack.c.h.b16 %v442
        %v2092 = vunpack.c.l.b16 %v443
        %v2093 = vunpack.c.h.b16 %v443
        %v2094 = vunpack.c.l.b16 %v444
        %v2095 = vunpack.c.h.b16 %v444
        %v2096 = vunpack.c.l.b16 %v445
        %v2097 = vunpack.c.h.b16 %v445
        %v2098 = vunpack.c.l.b16 %v446
        %v2099 = vunpack.c.h.b16 %v446
        %v2100 = vunpack.c.l.b16 %v447
        %v2101 = vunpack.c.h.b16 %v447
        %v2102 = vunpack.c.l.b16 %v448
        %v2103 = vunpack.c.h.b16 %v448
        %v2104 = vunpack.c.l.b16 %v449
        %v2105 = vunpack.c.h.b16 %v449
        %v2106 = vunpack.c.l.b16 %v450
        %v2107 = vunpack.c.h.b16 %v450
        %v2108 = vunpack.c.l.b16 %v451
        %v2109 = vunpack.c.h.b16 %v451
        %v2110 = vunpack.c.l.b16 %v452
        %v2111 = vunpack.c.h.b16 %v452
        %v2112 = vunpack.c.l.b16 %v453
        %v2113 = vunpack.c.h.b16 %v453
        %v2114 = vunpack.c.l.b16 %v454
        %v2115 = vunpack.c.h.b16 %v454
        %v2116 = vunpack.c.l.b16 %v455
        %v2117 = vunpack.c.h.b16 %v455
        %v2118 = vunpack.c.l.b16 %v456
        %v2119 = vunpack.c.h.b16 %v456
        %v2120 = vunpack.c.l.b16 %v457
        %v2121 = vunpack.c.h.b16 %v457
        %v2122 = vunpack.c.l.b16 %v458
        %v2123 = vunpack.c.h.b16 %v458
        %v2124 = vunpack.c.l.b16 %v459
        %v2125 = vunpack.c.h.b16 %v459
        %v2126 = vunpack.c.l.b16 %v460
        %v2127 = vunpack.c.h.b16 %v460
        %v2128 = vunpack.c.l.b16 %v461
        %v2129 = vunpack.c.h.b16 %v461
        %v2130 = vunpack.c.l.b16 %v462
        %v2131 = vunpack.c.h.b16 %v462
        %v2132 = vunpack.c.l.b16 %v463
        %v2133 = vunpack.c.h.b16 %v463
        %v2134 = vunpack.c.l.b16 %v464
        %v2135 = vunpack.c.h.b16 %v464
        %v2136 = vunpack.c.l.b16 %v465
        %v2137 = vunpack.c.h.b16 %v465
        %v2138 = vunpack.c.l.b16 %v466
        %v2139 = vunpack.c.h.b16 %v466
        %v2140 = vunpack.c.l.b16 %v467
        %v2141 = vunpack.c.h.b16 %v467
        %v2142 = vunpack.c.l.b16 %v468
        %v2143 = vunpack.c.h.b16 %v468
        %v2144 = vunpack.c.l.b16 %v469
        %v2145 = vunpack.c.h.b16 %v469
        %v2146 = vunpack.c.l.b16 %v470
        %v2147 = vunpack.c.h.b16 %v470
        %v2148 = vunpack.c.l.b16 %v471
        %v2149 = vunpack.c.h.b16 %v471
        %v2150 = vunpack.c.l.b16 %v472
        %v2151 = vunpack.c.h.b16 %v472
        %v2152 = vunpack.c.l.b16 %v473
        %v2153 = vunpack.c.h.b16 %v473
        %v2154 = vunpack.c.l.b16 %v474
        %v2155 = vunpack.c.h.b16 %v474
        %v2156 = vunpack.c.l.b16 %v475
        %v2157 = vunpack.c.h.b16 %v475
        %v2158 = vunpack.c.l.b16 %v476
        %v2159 = vunpack.c.h.b16 %v476
        %v2160 = vunpack.c.l.b16 %v477
        %v2161 = vunpack.c.h.b16 %v477
        %v2162 = vunpack.c.l.b16 %v478
        %v2163 = vunpack.c.h.b16 %v478
        %v2164 = vunpack.c.l.b16 %v479
        %v2165 = vunpack.c.h.b16 %v479
        %v2166 = vunpack.c.l.b16 %v480
        %v2167 = vunpack.c.h.b16 %v480
        %v2168 = vunpack.c.l.b16 %v481
        %v2169 = vunpack.c.h.b16 %v481
        %v2170 = vunpack.c.l.b16 %v482
        %v2171 = vunpack.c.h.b16 %v482
        %v2172 = vunpack.c.l.b16 %v483
        %v2173 = vunpack.c.h.b16 %v483
        %v2174 = vunpack.c.l.b16 %v484
        %v2175 = vunpack.c.h.b16 %v484
        %v2176 = vunpack.c.l.b16 %v485
        %v2177 = vunpack.c.h.b16 %v485
        %v2178 = vunpack.c.l.b16 %v486
        %v2179 = vunpack.c.h.b16 %v486
        %v2180 = vunpack.c.l.b16 %v487
        %v2181 = vunpack.c.h.b16 %v487
        %v2182 = vunpack.c.l.b16 %v488
        %v2183 = vunpack.c.h.b16 %v488
        %v2184 = vunpack.c.l.b16 %v489
        %v2185 = vunpack.c.h.b16 %v489
        %v2186 = vunpack.c.l.b16 %v490
        %v2187 = vunpack.c.h.b16 %v490
        %v2188 = vunpack.c.l.b16 %v491
        %v2189 = vunpack.c.h.b16 %v491
        %v2190 = vunpack.c.l.b16 %v492
        %v2191 = vunpack.c.h.b16 %v492
        %v2192 = vunpack.c.l.b16 %v493
        %v2193 = vunpack.c.h.b16 %v493
        %v2194 = vunpack.c.l.b16 %v494
        %v2195 = vunpack.c.h.b16 %v494
        %v2196 = vunpack.c.l.b16 %v495
        %v2197 = vunpack.c.h.b16 %v495
        %v2198 = vunpack.c.l.b16 %v496
        %v2199 = vunpack.c.h.b16 %v496
        %v2200 = vunpack.c.l.b16 %v497
        %v2201 = vunpack.c.h.b16 %v497
        %v2202 = vunpack.c.l.b16 %v498
        %v2203 = vunpack.c.h.b16 %v498
        %v2204 = vunpack.c.l.b16 %v499
        %v2205 = vunpack.c.h.b16 %v499
        %v2206 = vunpack.c.l.b16 %v500
        %v2207 = vunpack.c.h.b16 %v500
        %v2208 = vunpack.c.l.b16 %v501
        %v2209 = vunpack.c.h.b16 %v501
        %v2210 = vunpack.c.l.b16 %v502
        %v2211 = vunpack.c.h.b16 %v502
        %v2212 = vunpack.c.l.b16 %v503
        %v2213 = vunpack.c.h.b16 %v503
        %v2214 = vunpack.c.l.b16 %v504
        %v2215 = vunpack.c.h.b16 %v504
        %v2216 = vunpack.c.l.b16 %v505
        %v2217 = vunpack.c.h.b16 %v505
        %v2218 = vunpack.c.l.b16 %v506
        %v2219 = vunpack.c.h.b16 %v506
        %v2220 = vunpack.c.l.b16 %v507
        %v2221 = vunpack.c.h.b16 %v507
        %v2222 = vunpack.c.l.b16 %v508
        %v2223 = vunpack.c.h.b16 %v508
        %v2224 = vunpack.c.l.b16 %v509
        %v2225 = vunpack.c.h.b16 %v509
        %v2226 = vunpack.c.l.b16 %v510
        %v2227 = vunpack.c.h.b16 %v510
        %v2228 = vunpack.c.l.b16 %v511
        %v2229 = vunpack.c.h.b16 %v511
        %v2230 = vunpack.c.l.b16 %v512
        %v2231 = vunpack.c.h.b16 %v512
        %v2232 = vunpack.c.l.b16 %v513
        %v2233 = vunpack.c.h.b16 %v513
        %v2234 = vunpack.c.l.b16 %v514
        %v2235 = vunpack.c.h.b16 %v514
        %v2236 = vunpack.c.l.b16 %v515
        %v2237 = vunpack.c.h.b16 %v515
        %v2238 = vunpack.c.l.b16 %v516
        %v2239 = vunpack.c.h.b16 %v516
        %v2240 = vunpack.c.l.b16 %v517
        %v2241 = vunpack.c.h.b16 %v517
        %v2242 = vunpack.c.l.b16 %v518
        %v2243 = vunpack.c.h.b16 %v518
        %v2244 = vunpack.c.l.b16 %v519
        %v2245 = vunpack.c.h.b16 %v519
        %v2246 = vunpack.c.l.b16 %v520
        %v2247 = vunpack.c.h.b16 %v520
        %v2248 = vunpack.c.l.b16 %v521
        %v2249 = vunpack.c.h.b16 %v521
        %v2250 = vunpack.c.l.b16 %v522
        %v2251 = vunpack.c.h.b16 %v522
        %v2252 = vunpack.c.l.b16 %v523
        %v2253 = vunpack.c.h.b16 %v523
        %v2254 = vunpack.c.l.b16 %v524
        %v2255 = vunpack.c.h.b16 %v524
        %v2256 = vunpack.c.l.b16 %v525
        %v2257 = vunpack.c.h.b16 %v525
        %v2258 = vunpack.c.l.b16 %v526
        %v2259 = vunpack.c.h.b16 %v526
        %v2260 = vunpack.c.l.b16 %v527
        %v2261 = vunpack.c.h.b16 %v527
        %v2262 = vunpack.c.l.b16 %v528
        %v2263 = vunpack.c.h.b16 %v528
        %v2264 = vunpack.c.l.b16 %v529
        %v2265 = vunpack.c.h.b16 %v529
        %v2266 = vunpack.c.l.b16 %v530
        %v2267 = vunpack.c.h.b16 %v530
        %v2268 = vunpack.c.l.b16 %v531
        %v2269 = vunpack.c.h.b16 %v531
        %v2270 = vunpack.c.l.b16 %v532
        %v2271 = vunpack.c.h.b16 %v532
        %v2272 = vunpack.c.l.b16 %v533
        %v2273 = vunpack.c.h.b16 %v533
        %v2274 = vunpack.c.l.b16 %v534
        %v2275 = vunpack.c.h.b16 %v534
        %v2276 = vunpack.c.l.b16 %v535
        %v2277 = vunpack.c.h.b16 %v535
        %v2278 = vunpack.c.l.b16 %v536
        %v2279 = vunpack.c.h.b16 %v536
        %v2280 = vunpack.c.l.b16 %v537
        %v2281 = vunpack.c.h.b16 %v537
        %v2282 = vunpack.c.l.b16 %v538
        %v2283 = vunpack.c.h.b16 %v538
        %v2284 = vunpack.c.l.b16 %v539
        %v2285 = vunpack.c.h.b16 %v539
        %v2286 = vunpack.c.l.b16 %v540
        %v2287 = vunpack.c.h.b16 %v540
        %v2288 = vunpack.c.l.b16 %v541
        %v2289 = vunpack.c.h.b16 %v541
        %v2290 = vunpack.c.l.b16 %v542
        %v2291 = vunpack.c.h.b16 %v542
        %v2292 = vunpack.c.l.b16 %v543
        %v2293 = vunpack.c.h.b16 %v543
        %v2294 = vunpack.c.l.b16 %v544
        %v2295 = vunpack.c.h.b16 %v544
        %v2296 = vunpack.c.l.b16 %v545
        %v2297 = vunpack.c.h.b16 %v545
        %v2298 = vunpack.c.l.b16 %v546
        %v2299 = vunpack.c.h.b16 %v546
        %v2300 = vunpack.c.l.b16 %v547
        %v2301 = vunpack.c.h.b16 %v547
        %v2302 = vunpack.c.l.b16 %v548
        %v2303 = vunpack.c.h.b16 %v548
        %v2304 = vunpack.c.l.b16 %v549
        %v2305 = vunpack.c.h.b16 %v549
        %v2306 = vunpack.c.l.b16 %v550
        %v2307 = vunpack.c.h.b16 %v550
        %v2308 = vunpack.c.l.b16 %v551
        %v2309 = vunpack.c.h.b16 %v551
        %v2310 = vunpack.c.l.b16 %v552
        %v2311 = vunpack.c.h.b16 %v552
        %v2312 = vunpack.c.l.b16 %v553
        %v2313 = vunpack.c.h.b16 %v553
        %v2314 = vunpack.c.l.b16 %v554
        %v2315 = vunpack.c.h.b16 %v554
        %v2316 = vunpack.c.l.b16 %v555
        %v2317 = vunpack.c.h.b16 %v555
        %v2318 = vunpack.c.l.b16 %v556
        %v2319 = vunpack.c.h.b16 %v556
        %v2320 = vunpack.c.l.b16 %v557
        %v2321 = vunpack.c.h.b16 %v557
        %v2322 = vunpack.c.l.b16 %v558
        %v2323 = vunpack.c.h.b16 %v558
        %v2324 = vunpack.c.l.b16 %v559
        %v2325 = vunpack.c.h.b16 %v559
        %v2326 = vunpack.c.l.b16 %v560
        %v2327 = vunpack.c.h.b16 %v560
        %v2328 = vunpack.c.l.b16 %v561
        %v2329 = vunpack.c.h.b16 %v561
        %v2330 = vunpack.c.l.b16 %v562
        %v2331 = vunpack.c.h.b16 %v562
        %v2332 = vunpack.c.l.b16 %v563
        %v2333 = vunpack.c.h.b16 %v563
        %v2334 = vunpack.c.l.b16 %v564
        %v2335 = vunpack.c.h.b16 %v564
        %v2336 = vunpack.c.l.b16 %v565
        %v2337 = vunpack.c.h.b16 %v565
        %v2338 = vunpack.c.l.b16 %v566
        %v2339 = vunpack.c.h.b16 %v566
        %v2340 = vunpack.c.l.b16 %v567
        %v2341 = vunpack.c.h.b16 %v567
        %v2342 = vunpack.c.l.b16 %v568
        %v2343 = vunpack.c.h.b16 %v568
        %v2344 = vunpack.c.l.b16 %v569
        %v2345 = vunpack.c.h.b16 %v569
        %v2346 = vunpack.c.l.b16 %v570
        %v2347 = vunpack.c.h.b16 %v570
        %v2348 = vunpack.c.l.b16 %v571
        %v2349 = vunpack.c.h.b16 %v571
        %v2350 = vunpack.c.l.b16 %v572
        %v2351 = vunpack.c.h.b16 %v572
        %v2352 = vunpack.c.l.b16 %v573
        %v2353 = vunpack.c.h.b16 %v573
        %v2354 = vunpack.c.l.b16 %v574
        %v2355 = vunpack.c.h.b16 %v574
        %v2356 = vunpack.c.l.b16 %v575
        %v2357 = vunpack.c.h.b16 %v575
        %v2358 = vunpack.c.l.b16 %v576
        %v2359 = vunpack.c.h.b16 %v576
        %v2360 = vunpack.c.l.b16 %v577
        %v2361 = vunpack.c.h.b16 %v577
        %v2362 = vunpack.c.l.b16 %v578
        %v2363 = vunpack.c.h.b16 %v578
        %v2364 = vunpack.c.l.b16 %v579
        %v2365 = vunpack.c.h.b16 %v579
        %v2366 = vunpack.c.l.b16 %v580
        %v2367 = vunpack.c.h.b16 %v580
        %v2368 = vunpack.c.l.b16 %v581
        %v2369 = vunpack.c.h.b16 %v581
        %v2370 = vunpack.c.l.b16 %v582
        %v2371 = vunpack.c.h.b16 %v582
        %v2372 = vunpack.c.l.b16 %v583
        %v2373 = vunpack.c.h.b16 %v583
        %v2374 = vunpack.c.l.b16 %v584
        %v2375 = vunpack.c.h.b16 %v584
        %v2376 = vunpack.c.l.b16 %v585
        %v2377 = vunpack.c.h.b16 %v585
        %v2378 = vunpack.c.l.b16 %v586
        %v2379 = vunpack.c.h.b16 %v586
        %v2380 = vunpack.c.l.b16 %v587
        %v2381 = vunpack.c.h.b16 %v587
        %v2382 = vunpack.c.l.b16 %v588
        %v2383 = vunpack.c.h.b16 %v588
        %v2384 = vunpack.c.l.b16 %v589
        %v2385 = vunpack.c.h.b16 %v589
        %v2386 = vunpack.c.l.b16 %v590
        %v2387 = vunpack.c.h.b16 %v590
        %v2388 = vunpack.c.l.b16 %v591
        %v2389 = vunpack.c.h.b16 %v591
        %v2390 = vunpack.c.l.b16 %v592
        %v2391 = vunpack.c.h.b16 %v592
        %v2392 = vunpack.c.l.b16 %v593
        %v2393 = vunpack.c.h.b16 %v593
        %v2394 = vunpack.c.l.b16 %v594
        %v2395 = vunpack.c.h.b16 %v594
        %v2396 = vunpack.c.l.b16 %v595
        %v2397 = vunpack.c.h.b16 %v595
        %v2398 = vunpack.c.l.b16 %v596
        %v2399 = vunpack.c.h.b16 %v596
        %v2400 = vunpack.c.l.b16 %v597
        %v2401 = vunpack.c.h.b16 %v597
        %v2402 = vunpack.c.l.b16 %v598
        %v2403 = vunpack.c.h.b16 %v598
        %v2404 = vunpack.c.l.b16 %v599
        %v2405 = vunpack.c.h.b16 %v599
        %v2406 = vunpack.c.l.b16 %v600
        %v2407 = vunpack.c.h.b16 %v600
        %v2408 = vunpack.c.l.b16 %v601
        %v2409 = vunpack.c.h.b16 %v601
        %v2410 = vunpack.c.l.b16 %v602
        %v2411 = vunpack.c.h.b16 %v602
        %v2412 = vunpack.c.l.b16 %v603
        %v2413 = vunpack.c.h.b16 %v603
        %v2414 = vunpack.c.l.b16 %v604
        %v2415 = vunpack.c.h.b16 %v604
        %v2416 = vunpack.c.l.b16 %v605
        %v2417 = vunpack.c.h.b16 %v605
        %v2418 = vunpack.c.l.b16 %v606
        %v2419 = vunpack.c.h.b16 %v606
        %v2420 = vunpack.c.l.b16 %v607
        %v2421 = vunpack.c.h.b16 %v607
        %v2422 = vunpack.c.l.b16 %v608
        %v2423 = vunpack.c.h.b16 %v608
        %v2424 = vunpack.c.l.b16 %v609
        %v2425 = vunpack.c.h.b16 %v609
        %v2426 = vunpack.c.l.b16 %v610
        %v2427 = vunpack.c.h.b16 %v610
        %v2428 = vunpack.c.l.b16 %v611
        %v2429 = vunpack.c.h.b16 %v611
        %v2430 = vunpack.c.l.b16 %v612
        %v2431 = vunpack.c.h.b16 %v612
        %v2432 = vunpack.c.l.b16 %v613
        %v2433 = vunpack.c.h.b16 %v613
        %v2434 = vunpack.c.l.b16 %v614
        %v2435 = vunpack.c.h.b16 %v614
        %v2436 = vunpack.c.l.b16 %v615
        %v2437 = vunpack.c.h.b16 %v615
        %v2438 = vunpack.c.l.b16 %v616
        %v2439 = vunpack.c.h.b16 %v616
        %v2440 = vunpack.c.l.b16 %v617
        %v2441 = vunpack.c.h.b16 %v617
        %v2442 = vunpack.c.l.b16 %v618
        %v2443 = vunpack.c.h.b16 %v618
        %v2444 = vunpack.c.l.b16 %v619
        %v2445 = vunpack.c.h.b16 %v619
        %v2446 = vunpack.c.l.b16 %v620
        %v2447 = vunpack.c.h.b16 %v620
        %v2448 = vunpack.c.l.b16 %v621
        %v2449 = vunpack.c.h.b16 %v621
        %v2450 = vunpack.c.l.b16 %v622
        %v2451 = vunpack.c.h.b16 %v622
        %v2452 = vunpack.c.l.b16 %v623
        %v2453 = vunpack.c.h.b16 %v623
        %v2454 = vunpack.c.l.b16 %v624
        %v2455 = vunpack.c.h.b16 %v624
        %v2456 = vunpack.c.l.b16 %v625
        %v2457 = vunpack.c.h.b16 %v625
        %v2458 = vunpack.c.l.b16 %v626
        %v2459 = vunpack.c.h.b16 %v626
        %v2460 = vunpack.c.l.b16 %v627
        %v2461 = vunpack.c.h.b16 %v627
        %v2462 = vunpack.c.l.b16 %v628
        %v2463 = vunpack.c.h.b16 %v628
        %v2464 = vunpack.c.l.b16 %v629
        %v2465 = vunpack.c.h.b16 %v629
        %v2466 = vunpack.c.l.b16 %v630
        %v2467 = vunpack.c.h.b16 %v630
        %v2468 = vunpack.c.l.b16 %v631
        %v2469 = vunpack.c.h.b16 %v631
        %v2470 = vunpack.c.l.b16 %v632
        %v2471 = vunpack.c.h.b16 %v632
        %v2472 = vunpack.c.l.b16 %v633
        %v2473 = vunpack.c.h.b16 %v633
        %v2474 = vunpack.c.l.b16 %v634
        %v2475 = vunpack.c.h.b16 %v634
        %v2476 = vunpack.c.l.b16 %v635
        %v2477 = vunpack.c.h.b16 %v635
        %v2478 = vunpack.c.l.b16 %v636
        %v2479 = vunpack.c.h.b16 %v636
        %v2480 = vunpack.c.l.b16 %v637
        %v2481 = vunpack.c.h.b16 %v637
        %v2482 = vunpack.c.l.b16 %v638
        %v2483 = vunpack.c.h.b16 %v638
        %v2484 = vunpack.c.l.b16 %v639
        %v2485 = vunpack.c.h.b16 %v639
        %v2486 = vunpack.c.l.b16 %v640
        %v2487 = vunpack.c.h.b16 %v640
        %v2488 = vunpack.c.l.b16 %v641
        %v2489 = vunpack.c.h.b16 %v641
        %v2490 = vunpack.c.l.b16 %v642
        %v2491 = vunpack.c.h.b16 %v642
        %v2492 = vunpack.c.l.b16 %v643
        %v2493 = vunpack.c.h.b16 %v643
        %v2494 = vunpack.c.l.b16 %v644
        %v2495 = vunpack.c.h.b16 %v644
        %v2496 = vunpack.c.l.b16 %v645
        %v2497 = vunpack.c.h.b16 %v645
        %v2498 = vunpack.c.l.b16 %v646
        %v2499 = vunpack.c.h.b16 %v646
        %v2500 = vunpack.c.l.b16 %v647
        %v2501 = vunpack.c.h.b16 %v647
        %v2502 = vunpack.c.l.b16 %v648
        %v2503 = vunpack.c.h.b16 %v648
        %v2504 = vunpack.c.l.b16 %v649
        %v2505 = vunpack.c.h.b16 %v649
        %v2506 = vunpack.c.l.b16 %v650
        %v2507 = vunpack.c.h.b16 %v650
        %v2508 = vunpack.c.l.b16 %v651
        %v2509 = vunpack.c.h.b16 %v651
        %v2510 = vunpack.c.l.b16 %v652
        %v2511 = vunpack.c.h.b16 %v652
        %v2512 = vunpack.c.l.b16 %v653
        %v2513 = vunpack.c.h.b16 %v653
        %v2514 = vunpack.c.l.b16 %v654
        %v2515 = vunpack.c.h.b16 %v654
        %v2516 = vunpack.c.l.b16 %v655
        %v2517 = vunpack.c.h.b16 %v655
        %v2518 = vunpack.c.l.b16 %v656
        %v2519 = vunpack.c.h.b16 %v656
        %v2520 = vunpack.c.l.b16 %v657
        %v2521 = vunpack.c.h.b16 %v657
        %v2522 = vunpack.c.l.b16 %v658
        %v2523 = vunpack.c.h.b16 %v658
        %v2524 = vunpack.c.l.b16 %v659
        %v2525 = vunpack.c.h.b16 %v659
        %v2526 = vunpack.c.l.b16 %v660
        %v2527 = vunpack.c.h.b16 %v660
        %v2528 = vunpack.c.l.b16 %v661
        %v2529 = vunpack.c.h.b16 %v661
        %v2530 = vunpack.c.l.b16 %v662
        %v2531 = vunpack.c.h.b16 %v662
        %v2532 = vunpack.c.l.b16 %v663
        %v2533 = vunpack.c.h.b16 %v663
        %v2534 = vunpack.c.l.b16 %v664
        %v2535 = vunpack.c.h.b16 %v664
        %v2536 = vunpack.c.l.b16 %v665
        %v2537 = vunpack.c.h.b16 %v665
        %v2538 = vunpack.c.l.b16 %v666
        %v2539 = vunpack.c.h.b16 %v666
        %v2540 = vunpack.c.l.b16 %v667
        %v2541 = vunpack.c.h.b16 %v667
        %v2542 = vunpack.c.l.b16 %v668
        %v2543 = vunpack.c.h.b16 %v668
        %v2544 = vunpack.c.l.b16 %v669
        %v2545 = vunpack.c.h.b16 %v669
        %v2546 = vunpack.c.l.b16 %v670
        %v2547 = vunpack.c.h.b16 %v670
        %v2548 = vunpack.c.l.b16 %v671
        %v2549 = vunpack.c.h.b16 %v671
        %v2550 = vunpack.c.l.b16 %v672
        %v2551 = vunpack.c.h.b16 %v672
        %v2552 = vunpack.c.l.b16 %v673
        %v2553 = vunpack.c.h.b16 %v673
        %v2554 = vunpack.c.l.b16 %v674
        %v2555 = vunpack.c.h.b16 %v674
        %v2556 = vunpack.c.l.b16 %v675
        %v2557 = vunpack.c.h.b16 %v675
        %v2558 = vunpack.c.l.b16 %v676
        %v2559 = vunpack.c.h.b16 %v676
        %v2560 = vunpack.c.l.b16 %v677
        %v2561 = vunpack.c.h.b16 %v677
        %v2562 = vunpack.c.l.b16 %v678
        %v2563 = vunpack.c.h.b16 %v678
        %v2564 = vunpack.c.l.b16 %v679
        %v2565 = vunpack.c.h.b16 %v679
        %v2566 = vunpack.c.l.b16 %v680
        %v2567 = vunpack.c.h.b16 %v680
        %v2568 = vunpack.c.l.b16 %v681
        %v2569 = vunpack.c.h.b16 %v681
        %v2570 = vunpack.c.l.b16 %v682
        %v2571 = vunpack.c.h.b16 %v682
        %v2572 = vunpack.c.l.b16 %v683
        %v2573 = vunpack.c.h.b16 %v683
        %v2574 = vunpack.c.l.b16 %v684
        %v2575 = vunpack.c.h.b16 %v684
        %v2576 = vunpack.c.l.b16 %v685
        %v2577 = vunpack.c.h.b16 %v685
        %v2578 = vunpack.c.l.b16 %v686
        %v2579 = vunpack.c.h.b16 %v686
        %v2580 = vunpack.c.l.b16 %v687
        %v2581 = vunpack.c.h.b16 %v687
        %v2582 = vunpack.c.l.b16 %v688
        %v2583 = vunpack.c.h.b16 %v688
        %v2584 = vunpack.c.l.b16 %v689
        %v2585 = vunpack.c.h.b16 %v689
        %v2586 = vunpack.c.l.b16 %v690
        %v2587 = vunpack.c.h.b16 %v690
        %v2588 = vunpack.c.l.b16 %v691
        %v2589 = vunpack.c.h.b16 %v691
        %v2590 = vunpack.c.l.b16 %v692
        %v2591 = vunpack.c.h.b16 %v692
        %v2592 = vunpack.c.l.b16 %v693
        %v2593 = vunpack.c.h.b16 %v693
        %v2594 = vunpack.c.l.b16 %v694
        %v2595 = vunpack.c.h.b16 %v694
        %v2596 = vunpack.c.l.b16 %v695
        %v2597 = vunpack.c.h.b16 %v695
        %v2598 = vunpack.c.l.b16 %v696
        %v2599 = vunpack.c.h.b16 %v696
        %v2600 = vunpack.c.l.b16 %v697
        %v2601 = vunpack.c.h.b16 %v697
        %v2602 = vunpack.c.l.b16 %v698
        %v2603 = vunpack.c.h.b16 %v698
        %v2604 = vunpack.c.l.b16 %v699
        %v2605 = vunpack.c.h.b16 %v699
        %v2606 = vunpack.c.l.b16 %v700
        %v2607 = vunpack.c.h.b16 %v700
        %v2608 = vunpack.c.l.b16 %v701
        %v2609 = vunpack.c.h.b16 %v701
        %v2610 = vunpack.c.l.b16 %v702
        %v2611 = vunpack.c.h.b16 %v702
        %v2612 = vunpack.c.l.b16 %v703
        %v2613 = vunpack.c.h.b16 %v703
        %v2614 = vunpack.c.l.b16 %v704
        %v2615 = vunpack.c.h.b16 %v704
        %v2616 = vunpack.c.l.b16 %v705
        %v2617 = vunpack.c.h.b16 %v705
        %v2618 = vunpack.c.l.b16 %v706
        %v2619 = vunpack.c.h.b16 %v706
        %v2620 = vunpack.c.l.b16 %v707
        %v2621 = vunpack.c.h.b16 %v707
        %v2622 = vunpack.c.l.b16 %v708
        %v2623 = vunpack.c.h.b16 %v708
        %v2624 = vunpack.c.l.b16 %v709
        %v2625 = vunpack.c.h.b16 %v709
        %v2626 = vunpack.c.l.b16 %v710
        %v2627 = vunpack.c.h.b16 %v710
        %v2628 = vunpack.c.l.b16 %v711
        %v2629 = vunpack.c.h.b16 %v711
        %v2630 = vunpack.c.l.b16 %v712
        %v2631 = vunpack.c.h.b16 %v712
        %v2632 = vunpack.c.l.b16 %v713
        %v2633 = vunpack.c.h.b16 %v713
        %v2634 = vunpack.c.l.b16 %v714
        %v2635 = vunpack.c.h.b16 %v714
        %v2636 = vunpack.c.l.b16 %v715
        %v2637 = vunpack.c.h.b16 %v715
        %v2638 = vunpack.c.l.b16 %v716
        %v2639 = vunpack.c.h.b16 %v716
        %v2640 = vunpack.c.l.b16 %v717
        %v2641 = vunpack.c.h.b16 %v717
        %v2642 = vunpack.c.l.b16 %v718
        %v2643 = vunpack.c.h.b16 %v718
        %v2644 = vunpack.c.l.b16 %v719
        %v2645 = vunpack.c.h.b16 %v719
        %v2646 = vunpack.c.l.b16 %v720
        %v2647 = vunpack.c.h.b16 %v720
        %v2648 = vunpack.c.l.b16 %v721
        %v2649 = vunpack.c.h.b16 %v721
        %v2650 = vunpack.c.l.b16 %v722
        %v2651 = vunpack.c.h.b16 %v722
        %v2652 = vunpack.c.l.b16 %v723
        %v2653 = vunpack.c.h.b16 %v723
        %v2654 = vunpack.c.l.b16 %v724
        %v2655 = vunpack.c.h.b16 %v724
        %v2656 = vunpack.c.l.b16 %v725
        %v2657 = vunpack.c.h.b16 %v725
        %v2658 = vunpack.c.l.b16 %v726
        %v2659 = vunpack.c.h.b16 %v726
        %v2660 = vunpack.c.l.b16 %v727
        %v2661 = vunpack.c.h.b16 %v727
        %v2662 = vunpack.c.l.b16 %v728
        %v2663 = vunpack.c.h.b16 %v728
        %v2664 = vunpack.c.l.b16 %v729
        %v2665 = vunpack.c.h.b16 %v729
        %v2666 = vunpack.c.l.b16 %v730
        %v2667 = vunpack.c.h.b16 %v730
        %v2668 = vunpack.c.l.b16 %v731
        %v2669 = vunpack.c.h.b16 %v731
        %v2670 = vunpack.c.l.b16 %v732
        %v2671 = vunpack.c.h.b16 %v732
        %v2672 = vunpack.c.l.b16 %v733
        %v2673 = vunpack.c.h.b16 %v733
        %v2674 = vunpack.c.l.b16 %v734
        %v2675 = vunpack.c.h.b16 %v734
        %v2676 = vunpack.c.l.b16 %v735
        %v2677 = vunpack.c.h.b16 %v735
        %v2678 = vunpack.c.l.b16 %v736
        %v2679 = vunpack.c.h.b16 %v736
        %v2680 = vunpack.c.l.b16 %v737
        %v2681 = vunpack.c.h.b16 %v737
        %v2682 = vunpack.c.l.b16 %v738
        %v2683 = vunpack.c.h.b16 %v738
        %v2684 = vunpack.c.l.b16 %v739
        %v2685 = vunpack.c.h.b16 %v739
        %v2686 = vunpack.c.l.b16 %v740
        %v2687 = vunpack.c.h.b16 %v740
        %v2688 = vunpack.c.l.b16 %v741
        %v2689 = vunpack.c.h.b16 %v741
        %v2690 = vunpack.c.l.b16 %v742
        %v2691 = vunpack.c.h.b16 %v742
        %v2692 = vunpack.c.l.b16 %v743
        %v2693 = vunpack.c.h.b16 %v743
        %v2694 = vunpack.c.l.b16 %v744
        %v2695 = vunpack.c.h.b16 %v744
        %v2696 = vunpack.c.l.b16 %v745
        %v2697 = vunpack.c.h.b16 %v745
        %v2698 = vunpack.c.l.b16 %v746
        %v2699 = vunpack.c.h.b16 %v746
        %v2700 = vunpack.c.l.b16 %v747
        %v2701 = vunpack.c.h.b16 %v747
        %v2702 = vunpack.c.l.b16 %v748
        %v2703 = vunpack.c.h.b16 %v748
        %v2704 = vunpack.c.l.b16 %v749
        %v2705 = vunpack.c.h.b16 %v749
        %v2706 = vunpack.c.l.b16 %v750
        %v2707 = vunpack.c.h.b16 %v750
        %v2708 = vunpack.c.l.b16 %v751
        %v2709 = vunpack.c.h.b16 %v751
        %v2710 = vunpack.c.l.b16 %v752
        %v2711 = vunpack.c.h.b16 %v752
        %v2712 = vunpack.c.l.b16 %v753
        %v2713 = vunpack.c.h.b16 %v753
        %v2714 = vunpack.c.l.b16 %v754
        %v2715 = vunpack.c.h.b16 %v754
        %v2716 = vunpack.c.l.b16 %v755
        %v2717 = vunpack.c.h.b16 %v755
        %v2718 = vunpack.c.l.b16 %v756
        %v2719 = vunpack.c.h.b16 %v756
        %v2720 = vunpack.c.l.b16 %v757
        %v2721 = vunpack.c.h.b16 %v757
        %v2722 = vunpack.c.l.b16 %v758
        %v2723 = vunpack.c.h.b16 %v758
        %v2724 = vunpack.c.l.b16 %v759
        %v2725 = vunpack.c.h.b16 %v759
        %v2726 = vunpack.c.l.b16 %v760
        %v2727 = vunpack.c.h.b16 %v760
        %v2728 = vunpack.c.l.b16 %v761
        %v2729 = vunpack.c.h.b16 %v761
        %v2730 = vunpack.c.l.b16 %v762
        %v2731 = vunpack.c.h.b16 %v762
        %v2732 = vunpack.c.l.b16 %v763
        %v2733 = vunpack.c.h.b16 %v763
        %v2734 = vunpack.c.l.b16 %v764
        %v2735 = vunpack.c.h.b16 %v764
        %v2736 = vunpack.c.l.b16 %v765
        %v2737 = vunpack.c.h.b16 %v765
        %v2738 = vunpack.c.l.b16 %v766
        %v2739 = vunpack.c.h.b16 %v766
        %v2740 = vunpack.c.l.b16 %v767
        %v2741 = vunpack.c.h.b16 %v767
        %v2742 = vunpack.c.l.b16 %v768
        %v2743 = vunpack.c.h.b16 %v768
        %v2744 = vunpack.c.l.b16 %v769
        %v2745 = vunpack.c.h.b16 %v769
        %v2746 = vunpack.c.l.b16 %v770
        %v2747 = vunpack.c.h.b16 %v770
        %v2748 = vunpack.c.l.b16 %v771
        %v2749 = vunpack.c.h.b16 %v771
        %v2750 = vunpack.c.l.b16 %v772
        %v2751 = vunpack.c.h.b16 %v772
        %v2752 = vunpack.c.l.b16 %v773
        %v2753 = vunpack.c.h.b16 %v773
        %v2754 = vunpack.c.l.b16 %v774
        %v2755 = vunpack.c.h.b16 %v774
        %v2756 = vunpack.c.l.b16 %v775
        %v2757 = vunpack.c.h.b16 %v775
        %v2758 = vunpack.c.l.b16 %v776
        %v2759 = vunpack.c.h.b16 %v776
        %v2760 = vunpack.c.l.b16 %v777
        %v2761 = vunpack.c.h.b16 %v777
        %v2762 = vunpack.c.l.b16 %v778
        %v2763 = vunpack.c.h.b16 %v778
        %v2764 = vunpack.c.l.b16 %v779
        %v2765 = vunpack.c.h.b16 %v779
        %v2766 = vunpack.c.l.b16 %v780
        %v2767 = vunpack.c.h.b16 %v780
        %v2768 = vunpack.c.l.b16 %v781
        %v2769 = vunpack.c.h.b16 %v781
        %v2770 = vunpack.c.l.b16 %v782
        %v2771 = vunpack.c.h.b16 %v782
        %v2772 = vunpack.c.l.b16 %v783
        %v2773 = vunpack.c.h.b16 %v783
        %v2774 = vunpack.c.l.b16 %v784
        %v2775 = vunpack.c.h.b16 %v784
        %v2776 = vunpack.c.l.b16 %v785
        %v2777 = vunpack.c.h.b16 %v785
        %v2778 = vunpack.c.l.b16 %v786
        %v2779 = vunpack.c.h.b16 %v786
        %v2780 = vunpack.c.l.b16 %v787
        %v2781 = vunpack.c.h.b16 %v787
        %v2782 = vunpack.c.l.b16 %v788
        %v2783 = vunpack.c.h.b16 %v788
        %v2784 = vunpack.c.l.b16 %v789
        %v2785 = vunpack.c.h.b16 %v789
        %v2786 = vunpack.c.l.b16 %v790
        %v2787 = vunpack.c.h.b16 %v790
        %v2788 = vunpack.c.l.b16 %v791
        %v2789 = vunpack.c.h.b16 %v791
        %v2790 = vunpack.c.l.b16 %v792
        %v2791 = vunpack.c.h.b16 %v792
        %v2792 = vunpack.c.l.b16 %v793
        %v2793 = vunpack.c.h.b16 %v793
        %v2794 = vunpack.c.l.b16 %v794
        %v2795 = vunpack.c.h.b16 %v794
        %v2796 = vunpack.c.l.b16 %v795
        %v2797 = vunpack.c.h.b16 %v795
        %v2798 = vunpack.c.l.b16 %v796
        %v2799 = vunpack.c.h.b16 %v796
        %v2800 = vunpack.c.l.b16 %v797
        %v2801 = vunpack.c.h.b16 %v797
        %v2802 = vunpack.c.l.b16 %v798
        %v2803 = vunpack.c.h.b16 %v798
        %v2804 = vunpack.c.l.b16 %v799
        %v2805 = vunpack.c.h.b16 %v799
        %v2806 = vunpack.c.l.b16 %v800
        %v2807 = vunpack.c.h.b16 %v800
        %v2808 = vunpack.c.l.b16 %v801
        %v2809 = vunpack.c.h.b16 %v801
        %v2810 = vunpack.c.l.b16 %v802
        %v2811 = vunpack.c.h.b16 %v802
        %v2812 = vunpack.c.l.b16 %v803
        %v2813 = vunpack.c.h.b16 %v803
        %v2814 = vunpack.c.l.b16 %v804
        %v2815 = vunpack.c.h.b16 %v804
        %v2816 = vunpack.c.l.b16 %v805
        %v2817 = vunpack.c.h.b16 %v805
        %v2818 = vunpack.c.l.b16 %v806
        %v2819 = vunpack.c.h.b16 %v806
        %v2820 = vunpack.c.l.b16 %v807
        %v2821 = vunpack.c.h.b16 %v807
        %v2822 = vunpack.c.l.b16 %v808
        %v2823 = vunpack.c.h.b16 %v808
        %v2824 = vunpack.c.l.b16 %v809
        %v2825 = vunpack.c.h.b16 %v809
        %v2826 = vunpack.c.l.b16 %v810
        %v2827 = vunpack.c.h.b16 %v810
        %v2828 = vunpack.c.l.b16 %v811
        %v2829 = vunpack.c.h.b16 %v811
        %v2830 = vunpack.c.l.b16 %v812
        %v2831 = vunpack.c.h.b16 %v812
        %v2832 = vunpack.c.l.b16 %v813
        %v2833 = vunpack.c.h.b16 %v813
        %v2834 = vunpack.c.l.b16 %v814
        %v2835 = vunpack.c.h.b16 %v814
        %v2836 = vunpack.c.l.b16 %v815
        %v2837 = vunpack.c.h.b16 %v815
        %v2838 = vunpack.c.l.b16 %v816
        %v2839 = vunpack.c.h.b16 %v816
        %v2840 = vunpack.c.l.b16 %v817
        %v2841 = vunpack.c.h.b16 %v817
        %v2842 = vunpack.c.l.b16 %v818
        %v2843 = vunpack.c.h.b16 %v818
        %v2844 = vunpack.c.l.b16 %v819
        %v2845 = vunpack.c.h.b16 %v819
        %v2846 = vunpack.c.l.b16 %v820
        %v2847 = vunpack.c.h.b16 %v820
        %v2848 = vunpack.c.l.b16 %v821
        %v2849 = vunpack.c.h.b16 %v821
        %v2850 = vunpack.c.l.b16 %v822
        %v2851 = vunpack.c.h.b16 %v822
        %v2852 = vunpack.c.l.b16 %v823
        %v2853 = vunpack.c.h.b16 %v823
        %v2854 = vunpack.c.l.b16 %v824
        %v2855 = vunpack.c.h.b16 %v824
        %v2856 = vunpack.c.l.b16 %v825
        %v2857 = vunpack.c.h.b16 %v825
        %v2858 = vunpack.c.l.b16 %v826
        %v2859 = vunpack.c.h.b16 %v826
        %v2860 = vunpack.c.l.b16 %v827
        %v2861 = vunpack.c.h.b16 %v827
        %v2862 = vunpack.c.l.b16 %v828
        %v2863 = vunpack.c.h.b16 %v828
        %v2864 = vunpack.c.l.b16 %v829
        %v2865 = vunpack.c.h.b16 %v829
        %v2866 = vunpack.c.l.b16 %v830
        %v2867 = vunpack.c.h.b16 %v830
        %v2868 = vunpack.c.l.b16 %v831
        %v2869 = vunpack.c.h.b16 %v831
        %v2870 = vunpack.c.l.b16 %v832
        %v2871 = vunpack.c.h.b16 %v832
        %v2872 = vunpack.c.l.b16 %v833
        %v2873 = vunpack.c.h.b16 %v833
        %v2874 = vunpack.c.l.b16 %v834
        %v2875 = vunpack.c.h.b16 %v834
        %v2876 = vunpack.c.l.b16 %v835
        %v2877 = vunpack.c.h.b16 %v835
        %v2878 = vunpack.c.l.b16 %v836
        %v2879 = vunpack.c.h.b16 %v836
        %v2880 = vunpack.c.l.b16 %v837
        %v2881 = vunpack.c.h.b16 %v837
        %v2882 = vunpack.c.l.b16 %v838
        %v2883 = vunpack.c.h.b16 %v838
        %v2884 = vunpack.c.l.b16 %v839
        %v2885 = vunpack.c.h.b16 %v839
        %v2886 = vunpack.c.l.b16 %v840
        %v2887 = vunpack.c.h.b16 %v840
        %v2888 = vunpack.c.l.b16 %v841
        %v2889 = vunpack.c.h.b16 %v841
        %v2890 = vunpack.c.l.b16 %v842
        %v2891 = vunpack.c.h.b16 %v842
        %v2892 = vunpack.c.l.b16 %v843
        %v2893 = vunpack.c.h.b16 %v843
        %v2894 = vunpack.c.l.b16 %v844
        %v2895 = vunpack.c.h.b16 %v844
        %v2896 = vunpack.c.l.b16 %v845
        %v2897 = vunpack.c.h.b16 %v845
        %v2898 = vunpack.c.l.b16 %v846
        %v2899 = vunpack.c.h.b16 %v846
        %v2900 = vunpack.c.l.b16 %v847
        %v2901 = vunpack.c.h.b16 %v847
        %v2902 = vunpack.c.l.b16 %v848
        %v2903 = vunpack.c.h.b16 %v848
        %v2904 = vunpack.c.l.b16 %v849
        %v2905 = vunpack.c.h.b16 %v849
        %v2906 = vunpack.c.l.b16 %v850
        %v2907 = vunpack.c.h.b16 %v850
        %v2908 = vunpack.c.l.b16 %v851
        %v2909 = vunpack.c.h.b16 %v851
        %v2910 = vunpack.c.l.b16 %v852
        %v2911 = vunpack.c.h.b16 %v852
        %v2912 = vunpack.c.l.b16 %v853
        %v2913 = vunpack.c.h.b16 %v853
        %v2914 = vunpack.c.l.b16 %v854
        %v2915 = vunpack.c.h.b16 %v854
        %v2916 = vunpack.c.l.b16 %v855
        %v2917 = vunpack.c.h.b16 %v855
        %v2918 = vunpack.c.l.b16 %v856
        %v2919 = vunpack.c.h.b16 %v856
        %v2920 = vunpack.c.l.b16 %v857
        %v2921 = vunpack.c.h.b16 %v857
        %v2922 = vunpack.c.l.b16 %v858
        %v2923 = vunpack.c.h.b16 %v858
        %v2924 = vunpack.c.l.b16 %v859
        %v2925 = vunpack.c.h.b16 %v859
        %v2926 = vunpack.c.l.b16 %v860
        %v2927 = vunpack.c.h.b16 %v860
        %v2928 = vunpack.c.l.b16 %v861
        %v2929 = vunpack.c.h.b16 %v861
        %v2930 = vunpack.c.l.b16 %v862
        %v2931 = vunpack.c.h.b16 %v862
        %v2932 = vunpack.c.l.b16 %v863
        %v2933 = vunpack.c.h.b16 %v863
        %v2934 = vunpack.c.l.b16 %v864
        %v2935 = vunpack.c.h.b16 %v864
        %v2936 = vunpack.c.l.b16 %v865
        %v2937 = vunpack.c.h.b16 %v865
        %v2938 = vunpack.c.l.b16 %v866
        %v2939 = vunpack.c.h.b16 %v866
        %v2940 = vunpack.c.l.b16 %v867
        %v2941 = vunpack.c.h.b16 %v867
        %v2942 = vunpack.c.l.b16 %v868
        %v2943 = vunpack.c.h.b16 %v868
        %v2944 = vunpack.c.l.b16 %v869
        %v2945 = vunpack.c.h.b16 %v869
        %v2946 = vunpack.c.l.b16 %v870
        %v2947 = vunpack.c.h.b16 %v870
        %v2948 = vunpack.c.l.b16 %v871
        %v2949 = vunpack.c.h.b16 %v871
        %v2950 = vunpack.c.l.b16 %v872
        %v2951 = vunpack.c.h.b16 %v872
        %v2952 = vunpack.c.l.b16 %v873
        %v2953 = vunpack.c.h.b16 %v873
        %v2954 = vunpack.c.l.b16 %v874
        %v2955 = vunpack.c.h.b16 %v874
        %v2956 = vunpack.c.l.b16 %v875
        %v2957 = vunpack.c.h.b16 %v875
        %v2958 = vunpack.c.l.b16 %v876
        %v2959 = vunpack.c.h.b16 %v876
        %v2960 = vunpack.c.l.b16 %v877
        %v2961 = vunpack.c.h.b16 %v877
        %v2962 = vunpack.c.l.b16 %v878
        %v2963 = vunpack.c.h.b16 %v878
        %v2964 = vunpack.c.l.b16 %v879
        %v2965 = vunpack.c.h.b16 %v879
        %v2966 = vunpack.c.l.b16 %v880
        %v2967 = vunpack.c.h.b16 %v880
        %v2968 = vunpack.c.l.b16 %v881
        %v2969 = vunpack.c.h.b16 %v881
        %v2970 = vunpack.c.l.b16 %v882
        %v2971 = vunpack.c.h.b16 %v882
        %v2972 = vunpack.c.l.b16 %v883
        %v2973 = vunpack.c.h.b16 %v883
        %v2974 = vunpack.c.l.b16 %v884
        %v2975 = vunpack.c.h.b16 %v884
        %v2976 = vunpack.c.l.b16 %v885
        %v2977 = vunpack.c.h.b16 %v885
        %v2978 = vunpack.c.l.b16 %v886
        %v2979 = vunpack.c.h.b16 %v886
        %v2980 = vunpack.c.l.b16 %v887
        %v2981 = vunpack.c.h.b16 %v887
        %v2982 = vunpack.c.l.b16 %v888
        %v2983 = vunpack.c.h.b16 %v888
        %v2984 = vunpack.c.l.b16 %v889
        %v2985 = vunpack.c.h.b16 %v889
        %v2986 = vunpack.c.l.b16 %v890
        %v2987 = vunpack.c.h.b16 %v890
        %v2988 = vunpack.c.l.b16 %v891
        %v2989 = vunpack.c.h.b16 %v891
        %v2990 = vunpack.c.l.b16 %v892
        %v2991 = vunpack.c.h.b16 %v892
        %v2992 = vunpack.c.l.b16 %v893
        %v2993 = vunpack.c.h.b16 %v893
        %v2994 = vunpack.c.l.b16 %v894
        %v2995 = vunpack.c.h.b16 %v894
        %v2996 = vunpack.c.l.b16 %v895
        %v2997 = vunpack.c.h.b16 %v895
        %v2998 = vunpack.c.l.b16 %v896
        %v2999 = vunpack.c.h.b16 %v896
        %v3000 = vunpack.c.l.b16 %v897
        %v3001 = vunpack.c.h.b16 %v897
        %v3002 = vunpack.c.l.b16 %v898
        %v3003 = vunpack.c.h.b16 %v898
        %v3004 = vunpack.c.l.b16 %v899
        %v3005 = vunpack.c.h.b16 %v899
        %v3006 = vunpack.c.l.b16 %v900
        %v3007 = vunpack.c.h.b16 %v900
        %v3008 = vunpack.c.l.b16 %v901
        %v3009 = vunpack.c.h.b16 %v901
        %v3010 = vunpack.c.l.b16 %v902
        %v3011 = vunpack.c.h.b16 %v902
        %v3012 = vunpack.c.l.b16 %v903
        %v3013 = vunpack.c.h.b16 %v903
        %v3014 = vunpack.c.l.b16 %v904
        %v3015 = vunpack.c.h.b16 %v904
        %v3016 = vunpack.c.l.b16 %v905
        %v3017 = vunpack.c.h.b16 %v905
        %v3018 = vunpack.c.l.b16 %v906
        %v3019 = vunpack.c.h.b16 %v906
        %v3020 = vunpack.c.l.b16 %v907
        %v3021 = vunpack.c.h.b16 %v907
        %v3022 = vunpack.c.l.b16 %v908
        %v3023 = vunpack.c.h.b16 %v908
        %v3024 = vunpack.c.l.b16 %v909
        %v3025 = vunpack.c.h.b16 %v909
        %v3026 = vunpack.c.l.b16 %v910
        %v3027 = vunpack.c.h.b16 %v910
        %v3028 = vunpack.c.l.b16 %v911
        %v3029 = vunpack.c.h.b16 %v911
        %v3030 = vunpack.c.l.b16 %v912
        %v3031 = vunpack.c.h.b16 %v912
        %v3032 = vunpack.c.l.b16 %v913
        %v3033 = vunpack.c.h.b16 %v913
        %v3034 = vunpack.c.l.b16 %v914
        %v3035 = vunpack.c.h.b16 %v914
        %v3036 = vunpack.c.l.b16 %v915
        %v3037 = vunpack.c.h.b16 %v915
        %v3038 = vunpack.c.l.b16 %v916
        %v3039 = vunpack.c.h.b16 %v916
        %v3040 = vunpack.c.l.b16 %v917
        %v3041 = vunpack.c.h.b16 %v917
        %v3042 = vunpack.c.l.b16 %v918
        %v3043 = vunpack.c.h.b16 %v918
        %v3044 = vunpack.c.l.b16 %v919
        %v3045 = vunpack.c.h.b16 %v919
        %v3046 = vunpack.c.l.b16 %v920
        %v3047 = vunpack.c.h.b16 %v920
        %v3048 = vunpack.c.l.b16 %v921
        %v3049 = vunpack.c.h.b16 %v921
        %v3050 = vunpack.c.l.b16 %v922
        %v3051 = vunpack.c.h.b16 %v922
        %v3052 = vunpack.c.l.b16 %v923
        %v3053 = vunpack.c.h.b16 %v923
        %v3054 = vunpack.c.l.b16 %v924
        %v3055 = vunpack.c.h.b16 %v924
        %v3056 = vunpack.c.l.b16 %v925
        %v3057 = vunpack.c.h.b16 %v925
        %v3058 = vunpack.c.l.b16 %v926
        %v3059 = vunpack.c.h.b16 %v926
        %v3060 = vunpack.c.l.b16 %v927
        %v3061 = vunpack.c.h.b16 %v927
        %v3062 = vunpack.c.l.b16 %v928
        %v3063 = vunpack.c.h.b16 %v928
        %v3064 = vunpack.c.l.b16 %v929
        %v3065 = vunpack.c.h.b16 %v929
        %v3066 = vunpack.c.l.b16 %v930
        %v3067 = vunpack.c.h.b16 %v930
        %v3068 = vunpack.c.l.b16 %v931
        %v3069 = vunpack.c.h.b16 %v931
        %v3070 = vunpack.c.l.b16 %v932
        %v3071 = vunpack.c.h.b16 %v932
        %v3072 = vunpack.c.l.b16 %v933
        %v3073 = vunpack.c.h.b16 %v933
        %v3074 = vunpack.c.l.b16 %v934
        %v3075 = vunpack.c.h.b16 %v934
        %v3076 = vunpack.c.l.b16 %v935
        %v3077 = vunpack.c.h.b16 %v935
        %v3078 = vunpack.c.l.b16 %v936
        %v3079 = vunpack.c.h.b16 %v936
        %v3080 = vunpack.c.l.b16 %v937
        %v3081 = vunpack.c.h.b16 %v937
        %v3082 = vunpack.c.l.b16 %v938
        %v3083 = vunpack.c.h.b16 %v938
        %v3084 = vunpack.c.l.b16 %v939
        %v3085 = vunpack.c.h.b16 %v939
        %v3086 = vunpack.c.l.b16 %v940
        %v3087 = vunpack.c.h.b16 %v940
        %v3088 = vunpack.c.l.b16 %v941
        %v3089 = vunpack.c.h.b16 %v941
        %v3090 = vunpack.c.l.b16 %v942
        %v3091 = vunpack.c.h.b16 %v942
        %v3092 = vunpack.c.l.b16 %v943
        %v3093 = vunpack.c.h.b16 %v943
        %v3094 = vunpack.c.l.b16 %v944
        %v3095 = vunpack.c.h.b16 %v944
        %v3096 = vunpack.c.l.b16 %v945
        %v3097 = vunpack.c.h.b16 %v945
        %v3098 = vunpack.c.l.b16 %v946
        %v3099 = vunpack.c.h.b16 %v946
        %v3100 = vunpack.c.l.b16 %v947
        %v3101 = vunpack.c.h.b16 %v947
        %v3102 = vunpack.c.l.b16 %v948
        %v3103 = vunpack.c.h.b16 %v948
        %v3104 = vunpack.c.l.b16 %v949
        %v3105 = vunpack.c.h.b16 %v949
        %v3106 = vunpack.c.l.b16 %v950
        %v3107 = vunpack.c.h.b16 %v950
        %v3108 = vunpack.c.l.b16 %v951
        %v3109 = vunpack.c.h.b16 %v951
        %v3110 = vunpack.c.l.b16 %v952
        %v3111 = vunpack.c.h.b16 %v952
        %v3112 = vunpack.c.l.b16 %v953
        %v3113 = vunpack.c.h.b16 %v953
        %v3114 = vunpack.c.l.b16 %v954
        %v3115 = vunpack.c.h.b16 %v954
        %v3116 = vunpack.c.l.b16 %v955
        %v3117 = vunpack.c.h.b16 %v955
        %v3118 = vunpack.c.l.b16 %v956
        %v3119 = vunpack.c.h.b16 %v956
        %v3120 = vunpack.c.l.b16 %v957
        %v3121 = vunpack.c.h.b16 %v957
        %v3122 = vunpack.c.l.b16 %v958
        %v3123 = vunpack.c.h.b16 %v958
        %v3124 = vunpack.c.l.b16 %v959
        %v3125 = vunpack.c.h.b16 %v959
        %v3126 = vunpack.c.l.b16 %v960
        %v3127 = vunpack.c.h.b16 %v960
        %v3128 = vunpack.c.l.b16 %v961
        %v3129 = vunpack.c.h.b16 %v961
        %v3130 = vunpack.c.l.b16 %v962
        %v3131 = vunpack.c.h.b16 %v962
        %v3132 = vunpack.c.l.b16 %v963
        %v3133 = vunpack.c.h.b16 %v963
        %v3134 = vunpack.c.l.b16 %v964
        %v3135 = vunpack.c.h.b16 %v964
        %v3136 = vunpack.c.l.b16 %v965
        %v3137 = vunpack.c.h.b16 %v965
        %v3138 = vunpack.c.l.b16 %v966
        %v3139 = vunpack.c.h.b16 %v966
        %v3140 = vunpack.c.l.b16 %v967
        %v3141 = vunpack.c.h.b16 %v967
        %v3142 = vunpack.c.l.b16 %v968
        %v3143 = vunpack.c.h.b16 %v968
        %v3144 = vunpack.c.l.b16 %v969
        %v3145 = vunpack.c.h.b16 %v969
        %v3146 = vunpack.c.l.b16 %v970
        %v3147 = vunpack.c.h.b16 %v970
        %v3148 = vpack.c.b16 %v1808, %v1804
        %v3149 = vpack.c.b16 %v1809, %v1805
        %v3150 = vpack.c.b16 %v1810, %v1806
        %v3151 = vpack.c.b16 %v1811, %v1807
        %v3152 = vpack.c.b16 %v1816, %v1812
        %v3153 = vpack.c.b16 %v1817, %v1813
        %v3154 = vpack.c.b16 %v1818, %v1814
        %v3155 = vpack.c.b16 %v1819, %v1815
        %v3156 = vpack.c.b16 %v1824, %v1820
        %v3157 = vpack.c.b16 %v1825, %v1821
        %v3158 = vpack.c.b16 %v1826, %v1822
        %v3159 = vpack.c.b16 %v1827, %v1823
        %v3160 = vpack.c.b16 %v1832, %v1828
        %v3161 = vpack.c.b16 %v1833, %v1829
        %v3162 = vpack.c.b16 %v1834, %v1830
        %v3163 = vpack.c.b16 %v1835, %v1831
        %v3164 = vpack.c.b16 %v1840, %v1836
        %v3165 = vpack.c.b16 %v1841, %v1837
        %v3166 = vpack.c.b16 %v1842, %v1838
        %v3167 = vpack.c.b16 %v1843, %v1839
        %v3168 = vpack.c.b16 %v1848, %v1844
        %v3169 = vpack.c.b16 %v1849, %v1845
        %v3170 = vpack.c.b16 %v1850, %v1846
        %v3171 = vpack.c.b16 %v1851, %v1847
        %v3172 = vpack.c.b16 %v1856, %v1852
        %v3173 = vpack.c.b16 %v1857, %v1853
        %v3174 = vpack.c.b16 %v1858, %v1854
        %v3175 = vpack.c.b16 %v1859, %v1855
        %v3176 = vpack.c.b16 %v1864, %v1860
        %v3177 = vpack.c.b16 %v1865, %v1861
        %v3178 = vpack.c.b16 %v1866, %v1862
        %v3179 = vpack.c.b16 %v1867, %v1863
        %v3180 = vpack.c.b16 %v1872, %v1868
        %v3181 = vpack.c.b16 %v1873, %v1869
        %v3182 = vpack.c.b16 %v1874, %v1870
        %v3183 = vpack.c.b16 %v1875, %v1871
        %v3184 = vpack.c.b16 %v1880, %v1876
        %v3185 = vpack.c.b16 %v1881, %v1877
        %v3186 = vpack.c.b16 %v1882, %v1878
        %v3187 = vpack.c.b16 %v1883, %v1879
        %v3188 = vpack.c.b16 %v1888, %v1884
        %v3189 = vpack.c.b16 %v1889, %v1885
        %v3190 = vpack.c.b16 %v1890, %v1886
        %v3191 = vpack.c.b16 %v1891, %v1887
        %v3192 = vpack.c.b16 %v1896, %v1892
        %v3193 = vpack.c.b16 %v1897, %v1893
        %v3194 = vpack.c.b16 %v1898, %v1894
        %v3195 = vpack.c.b16 %v1899, %v1895
        %v3196 = vpack.c.b16 %v1904, %v1900
        %v3197 = vpack.c.b16 %v1905, %v1901
        %v3198 = vpack.c.b16 %v1906, %v1902
        %v3199 = vpack.c.b16 %v1907, %v1903
        %v3200 = vpack.c.b16 %v1912, %v1908
        %v3201 = vpack.c.b16 %v1913, %v1909
        %v3202 = vpack.c.b16 %v1914, %v1910
        %v3203 = vpack.c.b16 %v1915, %v1911
        %v3204 = vpack.c.b16 %v1920, %v1916
        %v3205 = vpack.c.b16 %v1921, %v1917
        %v3206 = vpack.c.b16 %v1922, %v1918
        %v3207 = vpack.c.b16 %v1923, %v1919
        %v3208 = vpack.c.b16 %v1928, %v1924
        %v3209 = vpack.c.b16 %v1929, %v1925
        %v3210 = vpack.c.b16 %v1930, %v1926
        %v3211 = vpack.c.b16 %v1931, %v1927
        %v3212 = vpack.c.b16 %v1936, %v1932
        %v3213 = vpack.c.b16 %v1937, %v1933
        %v3214 = vpack.c.b16 %v1938, %v1934
        %v3215 = vpack.c.b16 %v1939, %v1935
        %v3216 = vpack.c.b16 %v1944, %v1940
        %v3217 = vpack.c.b16 %v1945, %v1941
        %v3218 = vpack.c.b16 %v1946, %v1942
        %v3219 = vpack.c.b16 %v1947, %v1943
        %v3220 = vpack.c.b16 %v1952, %v1948
        %v3221 = vpack.c.b16 %v1953, %v1949
        %v3222 = vpack.c.b16 %v1954, %v1950
        %v3223 = vpack.c.b16 %v1955, %v1951
        %v3224 = vpack.c.b16 %v1960, %v1956
        %v3225 = vpack.c.b16 %v1961, %v1957
        %v3226 = vpack.c.b16 %v1962, %v1958
        %v3227 = vpack.c.b16 %v1963, %v1959
        %v3228 = vpack.c.b16 %v1968, %v1964
        %v3229 = vpack.c.b16 %v1969, %v1965
        %v3230 = vpack.c.b16 %v1970, %v1966
        %v3231 = vpack.c.b16 %v1971, %v1967
        %v3232 = vpack.c.b16 %v1976, %v1972
        %v3233 = vpack.c.b16 %v1977, %v1973
        %v3234 = vpack.c.b16 %v1978, %v1974
        %v3235 = vpack.c.b16 %v1979, %v1975
        %v3236 = vpack.c.b16 %v1984, %v1980
        %v3237 = vpack.c.b16 %v1985, %v1981
        %v3238 = vpack.c.b16 %v1986, %v1982
        %v3239 = vpack.c.b16 %v1987, %v1983
        %v3240 = vpack.c.b16 %v1992, %v1988
        %v3241 = vpack.c.b16 %v1993, %v1989
        %v3242 = vpack.c.b16 %v1994, %v1990
        %v3243 = vpack.c.b16 %v1995, %v1991
        %v3244 = vpack.c.b16 %v2000, %v1996
        %v3245 = vpack.c.b16 %v2001, %v1997
        %v3246 = vpack.c.b16 %v2002, %v1998
        %v3247 = vpack.c.b16 %v2003, %v1999
        %v3248 = vpack.c.b16 %v2008, %v2004
        %v3249 = vpack.c.b16 %v2009, %v2005
        %v3250 = vpack.c.b16 %v2010, %v2006
        %v3251 = vpack.c.b16 %v2011, %v2007
        %v3252 = vpack.c.b16 %v2016, %v2012
        %v3253 = vpack.c.b16 %v2017, %v2013
        %v3254 = vpack.c.b16 %v2018, %v2014
        %v3255 = vpack.c.b16 %v2019, %v2015
        %v3256 = vpack.c.b16 %v2024, %v2020
        %v3257 = vpack.c.b16 %v2025, %v2021
        %v3258 = vpack.c.b16 %v2026, %v2022
        %v3259 = vpack.c.b16 %v2027, %v2023
        %v3260 = vpack.c.b16 %v2032, %v2028
        %v3261 = vpack.c.b16 %v2033, %v2029
        %v3262 = vpack.c.b16 %v2034, %v2030
        %v3263 = vpack.c.b16 %v2035, %v2031
        %v3264 = vpack.c.b16 %v2040, %v2036
        %v3265 = vpack.c.b16 %v2041, %v2037
        %v3266 = vpack.c.b16 %v2042, %v2038
        %v3267 = vpack.c.b16 %v2043, %v2039
        %v3268 = vpack.c.b16 %v2048, %v2044
        %v3269 = vpack.c.b16 %v2049, %v2045
        %v3270 = vpack.c.b16 %v2050, %v2046
        %v3271 = vpack.c.b16 %v2051, %v2047
        %v3272 = vpack.c.b16 %v2056, %v2052
        %v3273 = vpack.c.b16 %v2057, %v2053
        %v3274 = vpack.c.b16 %v2058, %v2054
        %v3275 = vpack.c.b16 %v2059, %v2055
        %v3276 = vpack.c.b16 %v2064, %v2060
        %v3277 = vpack.c.b16 %v2065, %v2061
        %v3278 = vpack.c.b16 %v2066, %v2062
        %v3279 = vpack.c.b16 %v2067, %v2063
        %v3280 = vpack.c.b16 %v2072, %v2068
        %v3281 = vpack.c.b16 %v2073, %v2069
        %v3282 = vpack.c.b16 %v2074, %v2070
        %v3283 = vpack.c.b16 %v2075, %v2071
        %v3284 = vpack.c.b16 %v2080, %v2076
        %v3285 = vpack.c.b16 %v2081, %v2077
        %v3286 = vpack.c.b16 %v2082, %v2078
        %v3287 = vpack.c.b16 %v2083, %v2079
        %v3288 = vpack.c.b16 %v2088, %v2084
        %v3289 = vpack.c.b16 %v2089, %v2085
        %v3290 = vpack.c.b16 %v2090, %v2086
        %v3291 = vpack.c.b16 %v2091, %v2087
        %v3292 = vpack.c.b16 %v2096, %v2092
        %v3293 = vpack.c.b16 %v2097, %v2093
        %v3294 = vpack.c.b16 %v2098, %v2094
        %v3295 = vpack.c.b16 %v2099, %v2095
        %v3296 = vpack.c.b16 %v2104, %v2100
        %v3297 = vpack.c.b16 %v2105, %v2101
        %v3298 = vpack.c.b16 %v2106, %v2102
        %v3299 = vpack.c.b16 %v2107, %v2103
        %v3300 = vpack.c.b16 %v2112, %v2108
        %v3301 = vpack.c.b16 %v2113, %v2109
        %v3302 = vpack.c.b16 %v2114, %v2110
        %v3303 = vpack.c.b16 %v2115, %v2111
        %v3304 = vpack.c.b16 %v2120, %v2116
        %v3305 = vpack.c.b16 %v2121, %v2117
        %v3306 = vpack.c.b16 %v2122, %v2118
        %v3307 = vpack.c.b16 %v2123, %v2119
        %v3308 = vpack.c.b16 %v2128, %v2124
        %v3309 = vpack.c.b16 %v2129, %v2125
        %v3310 = vpack.c.b16 %v2130, %v2126
        %v3311 = vpack.c.b16 %v2131, %v2127
        %v3312 = vpack.c.b16 %v2136, %v2132
        %v3313 = vpack.c.b16 %v2137, %v2133
        %v3314 = vpack.c.b16 %v2138, %v2134
        %v3315 = vpack.c.b16 %v2139, %v2135
        %v3316 = vpack.c.b16 %v2144, %v2140
        %v3317 = vpack.c.b16 %v2145, %v2141
        %v3318 = vpack.c.b16 %v2146, %v2142
        %v3319 = vpack.c.b16 %v2147, %v2143
        %v3320 = vpack.c.b16 %v2152, %v2148
        %v3321 = vpack.c.b16 %v2153, %v2149
        %v3322 = vpack.c.b16 %v2154, %v2150
        %v3323 = vpack.c.b16 %v2155, %v2151
        %v3324 = vpack.c.b16 %v2160, %v2156
        %v3325 = vpack.c.b16 %v2161, %v2157
        %v3326 = vpack.c.b16 %v2162, %v2158
        %v3327 = vpack.c.b16 %v2163, %v2159
        %v3328 = vpack.c.b16 %v2168, %v2164
        %v3329 = vpack.c.b16 %v2169, %v2165
        %v3330 = vpack.c.b16 %v2170, %v2166
        %v3331 = vpack.c.b16 %v2171, %v2167
        %v3332 = vpack.c.b16 %v2176, %v2172
        %v3333 = vpack.c.b16 %v2177, %v2173
        %v3334 = vpack.c.b16 %v2178, %v2174
        %v3335 = vpack.c.b16 %v2179, %v2175
        %v3336 = vpack.c.b16 %v2184, %v2180
        %v3337 = vpack.c.b16 %v2185, %v2181
        %v3338 = vpack.c.b16 %v2186, %v2182
        %v3339 = vpack.c.b16 %v2187, %v2183
        %v3340 = vpack.c.b16 %v2192, %v2188
        %v3341 = vpack.c.b16 %v2193, %v2189
        %v3342 = vpack.c.b16 %v2194, %v2190
        %v3343 = vpack.c.b16 %v2195, %v2191
        %v3344 = vpack.c.b16 %v2200, %v2196
        %v3345 = vpack.c.b16 %v2201, %v2197
        %v3346 = vpack.c.b16 %v2202, %v2198
        %v3347 = vpack.c.b16 %v2203, %v2199
        %v3348 = vpack.c.b16 %v2208, %v2204
        %v3349 = vpack.c.b16 %v2209, %v2205
        %v3350 = vpack.c.b16 %v2210, %v2206
        %v3351 = vpack.c.b16 %v2211, %v2207
        %v3352 = vpack.c.b16 %v2216, %v2212
        %v3353 = vpack.c.b16 %v2217, %v2213
        %v3354 = vpack.c.b16 %v2218, %v2214
        %v3355 = vpack.c.b16 %v2219, %v2215
        %v3356 = vpack.c.b16 %v2224, %v2220
        %v3357 = vpack.c.b16 %v2225, %v2221
        %v3358 = vpack.c.b16 %v2226, %v2222
        %v3359 = vpack.c.b16 %v2227, %v2223
        %v3360 = vpack.c.b16 %v2232, %v2228
        %v3361 = vpack.c.b16 %v2233, %v2229
        %v3362 = vpack.c.b16 %v2234, %v2230
        %v3363 = vpack.c.b16 %v2235, %v2231
        %v3364 = vpack.c.b16 %v2240, %v2236
        %v3365 = vpack.c.b16 %v2241, %v2237
        %v3366 = vpack.c.b16 %v2242, %v2238
        %v3367 = vpack.c.b16 %v2243, %v2239
        %v3368 = vpack.c.b16 %v2248, %v2244
        %v3369 = vpack.c.b16 %v2249, %v2245
        %v3370 = vpack.c.b16 %v2250, %v2246
        %v3371 = vpack.c.b16 %v2251, %v2247
        %v3372 = vpack.c.b16 %v2256, %v2252
        %v3373 = vpack.c.b16 %v2257, %v2253
        %v3374 = vpack.c.b16 %v2258, %v2254
        %v3375 = vpack.c.b16 %v2259, %v2255
        %v3376 = vpack.c.b16 %v2264, %v2260
        %v3377 = vpack.c.b16 %v2265, %v2261
        %v3378 = vpack.c.b16 %v2266, %v2262
        %v3379 = vpack.c.b16 %v2267, %v2263
        %v3380 = vpack.c.b16 %v2272, %v2268
        %v3381 = vpack.c.b16 %v2273, %v2269
        %v3382 = vpack.c.b16 %v2274, %v2270
        %v3383 = vpack.c.b16 %v2275, %v2271
        %v3384 = vpack.c.b16 %v2280, %v2276
        %v3385 = vpack.c.b16 %v2281, %v2277
        %v3386 = vpack.c.b16 %v2282, %v2278
        %v3387 = vpack.c.b16 %v2283, %v2279
        %v3388 = vpack.c.b16 %v2288, %v2284
        %v3389 = vpack.c.b16 %v2289, %v2285
        %v3390 = vpack.c.b16 %v2290, %v2286
        %v3391 = vpack.c.b16 %v2291, %v2287
        %v3392 = vpack.c.b16 %v2296, %v2292
        %v3393 = vpack.c.b16 %v2297, %v2293
        %v3394 = vpack.c.b16 %v2298, %v2294
        %v3395 = vpack.c.b16 %v2299, %v2295
        %v3396 = vpack.c.b16 %v2304, %v2300
        %v3397 = vpack.c.b16 %v2305, %v2301
        %v3398 = vpack.c.b16 %v2306, %v2302
        %v3399 = vpack.c.b16 %v2307, %v2303
        %v3400 = vpack.c.b16 %v2312, %v2308
        %v3401 = vpack.c.b16 %v2313, %v2309
        %v3402 = vpack.c.b16 %v2314, %v2310
        %v3403 = vpack.c.b16 %v2315, %v2311
        %v3404 = vpack.c.b16 %v2320, %v2316
        %v3405 = vpack.c.b16 %v2321, %v2317
        %v3406 = vpack.c.b16 %v2322, %v2318
        %v3407 = vpack.c.b16 %v2323, %v2319
        %v3408 = vpack.c.b16 %v2328, %v2324
        %v3409 = vpack.c.b16 %v2329, %v2325
        %v3410 = vpack.c.b16 %v2330, %v2326
        %v3411 = vpack.c.b16 %v2331, %v2327
        %v3412 = vpack.c.b16 %v2336, %v2332
        %v3413 = vpack.c.b16 %v2337, %v2333
        %v3414 = vpack.c.b16 %v2338, %v2334
        %v3415 = vpack.c.b16 %v2339, %v2335
        %v3416 = vpack.c.b16 %v2344, %v2340
        %v3417 = vpack.c.b16 %v2345, %v2341
        %v3418 = vpack.c.b16 %v2346, %v2342
        %v3419 = vpack.c.b16 %v2347, %v2343
        %v3420 = vpack.c.b16 %v2352, %v2348
        %v3421 = vpack.c.b16 %v2353, %v2349
        %v3422 = vpack.c.b16 %v2354, %v2350
        %v3423 = vpack.c.b16 %v2355, %v2351
        %v3424 = vpack.c.b16 %v2360, %v2356
        %v3425 = vpack.c.b16 %v2361, %v2357
        %v3426 = vpack.c.b16 %v2362, %v2358
        %v3427 = vpack.c.b16 %v2363, %v2359
        %v3428 = vpack.c.b16 %v2368, %v2364
        %v3429 = vpack.c.b16 %v2369, %v2365
        %v3430 = vpack.c.b16 %v2370, %v2366
        %v3431 = vpack.c.b16 %v2371, %v2367
        %v3432 = vpack.c.b16 %v2376, %v2372
        %v3433 = vpack.c.b16 %v2377, %v2373
        %v3434 = vpack.c.b16 %v2378, %v2374
        %v3435 = vpack.c.b16 %v2379, %v2375
        %v3436 = vpack.c.b16 %v2384, %v2380
        %v3437 = vpack.c.b16 %v2385, %v2381
        %v3438 = vpack.c.b16 %v2386, %v2382
        %v3439 = vpack.c.b16 %v2387, %v2383
        %v3440 = vpack.c.b16 %v2392, %v2388
        %v3441 = vpack.c.b16 %v2393, %v2389
        %v3442 = vpack.c.b16 %v2394, %v2390
        %v3443 = vpack.c.b16 %v2395, %v2391
        %v3444 = vpack.c.b16 %v2400, %v2396
        %v3445 = vpack.c.b16 %v2401, %v2397
        %v3446 = vpack.c.b16 %v2402, %v2398
        %v3447 = vpack.c.b16 %v2403, %v2399
        %v3448 = vpack.c.b16 %v2408, %v2404
        %v3449 = vpack.c.b16 %v2409, %v2405
        %v3450 = vpack.c.b16 %v2410, %v2406
        %v3451 = vpack.c.b16 %v2411, %v2407
        %v3452 = vpack.c.b16 %v2416, %v2412
        %v3453 = vpack.c.b16 %v2417, %v2413
        %v3454 = vpack.c.b16 %v2418, %v2414
        %v3455 = vpack.c.b16 %v2419, %v2415
        %v3456 = vpack.c.b16 %v2424, %v2420
        %v3457 = vpack.c.b16 %v2425, %v2421
        %v3458 = vpack.c.b16 %v2426, %v2422
        %v3459 = vpack.c.b16 %v2427, %v2423
        %v3460 = vpack.c.b16 %v2432, %v2428
        %v3461 = vpack.c.b16 %v2433, %v2429
        %v3462 = vpack.c.b16 %v2434, %v2430
        %v3463 = vpack.c.b16 %v2435, %v2431
        %v3464 = vpack.c.b16 %v2440, %v2436
        %v3465 = vpack.c.b16 %v2441, %v2437
        %v3466 = vpack.c.b16 %v2442, %v2438
        %v3467 = vpack.c.b16 %v2443, %v2439
        %v3468 = vpack.c.b16 %v2448, %v2444
        %v3469 = vpack.c.b16 %v2449, %v2445
        %v3470 = vpack.c.b16 %v2450, %v2446
        %v3471 = vpack.c.b16 %v2451, %v2447
        %v3472 = vpack.c.b16 %v2456, %v2452
        %v3473 = vpack.c.b16 %v2457, %v2453
        %v3474 = vpack.c.b16 %v2458, %v2454
        %v3475 = vpack.c.b16 %v2459, %v2455
        %v3476 = vpack.c.b16 %v2464, %v2460
        %v3477 = vpack.c.b16 %v2465, %v2461
        %v3478 = vpack.c.b16 %v2466, %v2462
        %v3479 = vpack.c.b16 %v2467, %v2463
        %v3480 = vpack.c.b16 %v2472, %v2468
        %v3481 = vpack.c.b16 %v2473, %v2469
        %v3482 = vpack.c.b16 %v2474, %v2470
        %v3483 = vpack.c.b16 %v2475, %v2471
        %v3484 = vpack.c.b16 %v2480, %v2476
        %v3485 = vpack.c.b16 %v2481, %v2477
        %v3486 = vpack.c.b16 %v2482, %v2478
        %v3487 = vpack.c.b16 %v2483, %v2479
        %v3488 = vpack.c.b16 %v2488, %v2484
        %v3489 = vpack.c.b16 %v2489, %v2485
        %v3490 = vpack.c.b16 %v2490, %v2486
        %v3491 = vpack.c.b16 %v2491, %v2487
        %v3492 = vpack.c.b16 %v2496, %v2492
        %v3493 = vpack.c.b16 %v2497, %v2493
        %v3494 = vpack.c.b16 %v2498, %v2494
        %v3495 = vpack.c.b16 %v2499, %v2495
        %v3496 = vpack.c.b16 %v2504, %v2500
        %v3497 = vpack.c.b16 %v2505, %v2501
        %v3498 = vpack.c.b16 %v2506, %v2502
        %v3499 = vpack.c.b16 %v2507, %v2503
        %v3500 = vpack.c.b16 %v2512, %v2508
        %v3501 = vpack.c.b16 %v2513, %v2509
        %v3502 = vpack.c.b16 %v2514, %v2510
        %v3503 = vpack.c.b16 %v2515, %v2511
        %v3504 = vpack.c.b16 %v2520, %v2516
        %v3505 = vpack.c.b16 %v2521, %v2517
        %v3506 = vpack.c.b16 %v2522, %v2518
        %v3507 = vpack.c.b16 %v2523, %v2519
        %v3508 = vpack.c.b16 %v2528, %v2524
        %v3509 = vpack.c.b16 %v2529, %v2525
        %v3510 = vpack.c.b16 %v2530, %v2526
        %v3511 = vpack.c.b16 %v2531, %v2527
        %v3512 = vpack.c.b16 %v2536, %v2532
        %v3513 = vpack.c.b16 %v2537, %v2533
        %v3514 = vpack.c.b16 %v2538, %v2534
        %v3515 = vpack.c.b16 %v2539, %v2535
        %v3516 = vpack.c.b16 %v2544, %v2540
        %v3517 = vpack.c.b16 %v2545, %v2541
        %v3518 = vpack.c.b16 %v2546, %v2542
        %v3519 = vpack.c.b16 %v2547, %v2543
        %v3520 = vpack.c.b16 %v2552, %v2548
        %v3521 = vpack.c.b16 %v2553, %v2549
        %v3522 = vpack.c.b16 %v2554, %v2550
        %v3523 = vpack.c.b16 %v2555, %v2551
        %v3524 = vpack.c.b16 %v2560, %v2556
        %v3525 = vpack.c.b16 %v2561, %v2557
        %v3526 = vpack.c.b16 %v2562, %v2558
        %v3527 = vpack.c.b16 %v2563, %v2559
        %v3528 = vpack.c.b16 %v2568, %v2564
        %v3529 = vpack.c.b16 %v2569, %v2565
        %v3530 = vpack.c.b16 %v2570, %v2566
        %v3531 = vpack.c.b16 %v2571, %v2567
        %v3532 = vpack.c.b16 %v2576, %v2572
        %v3533 = vpack.c.b16 %v2577, %v2573
        %v3534 = vpack.c.b16 %v2578, %v2574
        %v3535 = vpack.c.b16 %v2579, %v2575
        %v3536 = vpack.c.b16 %v2584, %v2580
        %v3537 = vpack.c.b16 %v2585, %v2581
        %v3538 = vpack.c.b16 %v2586, %v2582
        %v3539 = vpack.c.b16 %v2587, %v2583
        %v3540 = vpack.c.b16 %v2592, %v2588
        %v3541 = vpack.c.b16 %v2593, %v2589
        %v3542 = vpack.c.b16 %v2594, %v2590
        %v3543 = vpack.c.b16 %v2595, %v2591
        %v3544 = vpack.c.b16 %v2600, %v2596
        %v3545 = vpack.c.b16 %v2601, %v2597
        %v3546 = vpack.c.b16 %v2602, %v2598
        %v3547 = vpack.c.b16 %v2603, %v2599
        %v3548 = vpack.c.b16 %v2608, %v2604
        %v3549 = vpack.c.b16 %v2609, %v2605
        %v3550 = vpack.c.b16 %v2610, %v2606
        %v3551 = vpack.c.b16 %v2611, %v2607
        %v3552 = vpack.c.b16 %v2616, %v2612
        %v3553 = vpack.c.b16 %v2617, %v2613
        %v3554 = vpack.c.b16 %v2618, %v2614
        %v3555 = vpack.c.b16 %v2619, %v2615
        %v3556 = vpack.c.b16 %v2624, %v2620
        %v3557 = vpack.c.b16 %v2625, %v2621
        %v3558 = vpack.c.b16 %v2626, %v2622
        %v3559 = vpack.c.b16 %v2627, %v2623
        %v3560 = vpack.c.b16 %v2632, %v2628
        %v3561 = vpack.c.b16 %v2633, %v2629
        %v3562 = vpack.c.b16 %v2634, %v2630
        %v3563 = vpack.c.b16 %v2635, %v2631
        %v3564 = vpack.c.b16 %v2640, %v2636
        %v3565 = vpack.c.b16 %v2641, %v2637
        %v3566 = vpack.c.b16 %v2642, %v2638
        %v3567 = vpack.c.b16 %v2643, %v2639
        %v3568 = vpack.c.b16 %v2648, %v2644
        %v3569 = vpack.c.b16 %v2649, %v2645
        %v3570 = vpack.c.b16 %v2650, %v2646
        %v3571 = vpack.c.b16 %v2651, %v2647
        %v3572 = vpack.c.b16 %v2656, %v2652
        %v3573 = vpack.c.b16 %v2657, %v2653
        %v3574 = vpack.c.b16 %v2658, %v2654
        %v3575 = vpack.c.b16 %v2659, %v2655
        %v3576 = vpack.c.b16 %v2664, %v2660
        %v3577 = vpack.c.b16 %v2665, %v2661
        %v3578 = vpack.c.b16 %v2666, %v2662
        %v3579 = vpack.c.b16 %v2667, %v2663
        %v3580 = vpack.c.b16 %v2672, %v2668
        %v3581 = vpack.c.b16 %v2673, %v2669
        %v3582 = vpack.c.b16 %v2674, %v2670
        %v3583 = vpack.c.b16 %v2675, %v2671
        %v3584 = vpack.c.b16 %v2680, %v2676
        %v3585 = vpack.c.b16 %v2681, %v2677
        %v3586 = vpack.c.b16 %v2682, %v2678
        %v3587 = vpack.c.b16 %v2683, %v2679
        %v3588 = vpack.c.b16 %v2688, %v2684
        %v3589 = vpack.c.b16 %v2689, %v2685
        %v3590 = vpack.c.b16 %v2690, %v2686
        %v3591 = vpack.c.b16 %v2691, %v2687
        %v3592 = vpack.c.b16 %v2696, %v2692
        %v3593 = vpack.c.b16 %v2697, %v2693
        %v3594 = vpack.c.b16 %v2698, %v2694
        %v3595 = vpack.c.b16 %v2699, %v2695
        %v3596 = vpack.c.b16 %v2704, %v2700
        %v3597 = vpack.c.b16 %v2705, %v2701
        %v3598 = vpack.c.b16 %v2706, %v2702
        %v3599 = vpack.c.b16 %v2707, %v2703
        %v3600 = vpack.c.b16 %v2712, %v2708
        %v3601 = vpack.c.b16 %v2713, %v2709
        %v3602 = vpack.c.b16 %v2714, %v2710
        %v3603 = vpack.c.b16 %v2715, %v2711
        %v3604 = vpack.c.b16 %v2720, %v2716
        %v3605 = vpack.c.b16 %v2721, %v2717
        %v3606 = vpack.c.b16 %v2722, %v2718
        %v3607 = vpack.c.b16 %v2723, %v2719
        %v3608 = vpack.c.b16 %v2728, %v2724
        %v3609 = vpack.c.b16 %v2729, %v2725
        %v3610 = vpack.c.b16 %v2730, %v2726
        %v3611 = vpack.c.b16 %v2731, %v2727
        %v3612 = vpack.c.b16 %v2736, %v2732
        %v3613 = vpack.c.b16 %v2737, %v2733
        %v3614 = vpack.c.b16 %v2738, %v2734
        %v3615 = vpack.c.b16 %v2739, %v2735
        %v3616 = vpack.c.b16 %v2744, %v2740
        %v3617 = vpack.c.b16 %v2745, %v2741
        %v3618 = vpack.c.b16 %v2746, %v2742
        %v3619 = vpack.c.b16 %v2747, %v2743
        %v3620 = vpack.c.b16 %v2752, %v2748
        %v3621 = vpack.c.b16 %v2753, %v2749
        %v3622 = vpack.c.b16 %v2754, %v2750
        %v3623 = vpack.c.b16 %v2755, %v2751
        %v3624 = vpack.c.b16 %v2760, %v2756
        %v3625 = vpack.c.b16 %v2761, %v2757
        %v3626 = vpack.c.b16 %v2762, %v2758
        %v3627 = vpack.c.b16 %v2763, %v2759
        %v3628 = vpack.c.b16 %v2768, %v2764
        %v3629 = vpack.c.b16 %v2769, %v2765
        %v3630 = vpack.c.b16 %v2770, %v2766
        %v3631 = vpack.c.b16 %v2771, %v2767
        %v3632 = vpack.c.b16 %v2776, %v2772
        %v3633 = vpack.c.b16 %v2777, %v2773
        %v3634 = vpack.c.b16 %v2778, %v2774
        %v3635 = vpack.c.b16 %v2779, %v2775
        %v3636 = vpack.c.b16 %v2784, %v2780
        %v3637 = vpack.c.b16 %v2785, %v2781
        %v3638 = vpack.c.b16 %v2786, %v2782
        %v3639 = vpack.c.b16 %v2787, %v2783
        %v3640 = vpack.c.b16 %v2792, %v2788
        %v3641 = vpack.c.b16 %v2793, %v2789
        %v3642 = vpack.c.b16 %v2794, %v2790
        %v3643 = vpack.c.b16 %v2795, %v2791
        %v3644 = vpack.c.b16 %v2800, %v2796
        %v3645 = vpack.c.b16 %v2801, %v2797
        %v3646 = vpack.c.b16 %v2802, %v2798
        %v3647 = vpack.c.b16 %v2803, %v2799
        %v3648 = vpack.c.b16 %v2808, %v2804
        %v3649 = vpack.c.b16 %v2809, %v2805
        %v3650 = vpack.c.b16 %v2810, %v2806
        %v3651 = vpack.c.b16 %v2811, %v2807
        %v3652 = vpack.c.b16 %v2816, %v2812
        %v3653 = vpack.c.b16 %v2817, %v2813
        %v3654 = vpack.c.b16 %v2818, %v2814
        %v3655 = vpack.c.b16 %v2819, %v2815
        %v3656 = vpack.c.b16 %v2824, %v2820
        %v3657 = vpack.c.b16 %v2825, %v2821
        %v3658 = vpack.c.b16 %v2826, %v2822
        %v3659 = vpack.c.b16 %v2827, %v2823
        %v3660 = vpack.c.b16 %v2832, %v2828
        %v3661 = vpack.c.b16 %v2833, %v2829
        %v3662 = vpack.c.b16 %v2834, %v2830
        %v3663 = vpack.c.b16 %v2835, %v2831
        %v3664 = vpack.c.b16 %v2840, %v2836
        %v3665 = vpack.c.b16 %v2841, %v2837
        %v3666 = vpack.c.b16 %v2842, %v2838
        %v3667 = vpack.c.b16 %v2843, %v2839
        %v3668 = vpack.c.b16 %v2848, %v2844
        %v3669 = vpack.c.b16 %v2849, %v2845
        %v3670 = vpack.c.b16 %v2850, %v2846
        %v3671 = vpack.c.b16 %v2851, %v2847
        %v3672 = vpack.c.b16 %v2856, %v2852
        %v3673 = vpack.c.b16 %v2857, %v2853
        %v3674 = vpack.c.b16 %v2858, %v2854
        %v3675 = vpack.c.b16 %v2859, %v2855
        %v3676 = vpack.c.b16 %v2864, %v2860
        %v3677 = vpack.c.b16 %v2865, %v2861
        %v3678 = vpack.c.b16 %v2866, %v2862
        %v3679 = vpack.c.b16 %v2867, %v2863
        %v3680 = vpack.c.b16 %v2872, %v2868
        %v3681 = vpack.c.b16 %v2873, %v2869
        %v3682 = vpack.c.b16 %v2874, %v2870
        %v3683 = vpack.c.b16 %v2875, %v2871
        %v3684 = vpack.c.b16 %v2880, %v2876
        %v3685 = vpack.c.b16 %v2881, %v2877
        %v3686 = vpack.c.b16 %v2882, %v2878
        %v3687 = vpack.c.b16 %v2883, %v2879
        %v3688 = vpack.c.b16 %v2888, %v2884
        %v3689 = vpack.c.b16 %v2889, %v2885
        %v3690 = vpack.c.b16 %v2890, %v2886
        %v3691 = vpack.c.b16 %v2891, %v2887
        %v3692 = vpack.c.b16 %v2896, %v2892
        %v3693 = vpack.c.b16 %v2897, %v2893
        %v3694 = vpack.c.b16 %v2898, %v2894
        %v3695 = vpack.c.b16 %v2899, %v2895
        %v3696 = vpack.c.b16 %v2904, %v2900
        %v3697 = vpack.c.b16 %v2905, %v2901
        %v3698 = vpack.c.b16 %v2906, %v2902
        %v3699 = vpack.c.b16 %v2907, %v2903
        %v3700 = vpack.c.b16 %v2912, %v2908
        %v3701 = vpack.c.b16 %v2913, %v2909
        %v3702 = vpack.c.b16 %v2914, %v2910
        %v3703 = vpack.c.b16 %v2915, %v2911
        %v3704 = vpack.c.b16 %v2920, %v2916
        %v3705 = vpack.c.b16 %v2921, %v2917
        %v3706 = vpack.c.b16 %v2922, %v2918
        %v3707 = vpack.c.b16 %v2923, %v2919
        %v3708 = vpack.c.b16 %v2928, %v2924
        %v3709 = vpack.c.b16 %v2929, %v2925
        %v3710 = vpack.c.b16 %v2930, %v2926
        %v3711 = vpack.c.b16 %v2931, %v2927
        %v3712 = vpack.c.b16 %v2936, %v2932
        %v3713 = vpack.c.b16 %v2937, %v2933
        %v3714 = vpack.c.b16 %v2938, %v2934
        %v3715 = vpack.c.b16 %v2939, %v2935
        %v3716 = vpack.c.b16 %v2944, %v2940
        %v3717 = vpack.c.b16 %v2945, %v2941
        %v3718 = vpack.c.b16 %v2946, %v2942
        %v3719 = vpack.c.b16 %v2947, %v2943
        %v3720 = vpack.c.b16 %v2952, %v2948
        %v3721 = vpack.c.b16 %v2953, %v2949
        %v3722 = vpack.c.b16 %v2954, %v2950
        %v3723 = vpack.c.b16 %v2955, %v2951
        %v3724 = vpack.c.b16 %v2960, %v2956
        %v3725 = vpack.c.b16 %v2961, %v2957
        %v3726 = vpack.c.b16 %v2962, %v2958
        %v3727 = vpack.c.b16 %v2963, %v2959
        %v3728 = vpack.c.b16 %v2968, %v2964
        %v3729 = vpack.c.b16 %v2969, %v2965
        %v3730 = vpack.c.b16 %v2970, %v2966
        %v3731 = vpack.c.b16 %v2971, %v2967
        %v3732 = vpack.c.b16 %v2976, %v2972
        %v3733 = vpack.c.b16 %v2977, %v2973
        %v3734 = vpack.c.b16 %v2978, %v2974
        %v3735 = vpack.c.b16 %v2979, %v2975
        %v3736 = vpack.c.b16 %v2984, %v2980
        %v3737 = vpack.c.b16 %v2985, %v2981
        %v3738 = vpack.c.b16 %v2986, %v2982
        %v3739 = vpack.c.b16 %v2987, %v2983
        %v3740 = vpack.c.b16 %v2992, %v2988
        %v3741 = vpack.c.b16 %v2993, %v2989
        %v3742 = vpack.c.b16 %v2994, %v2990
        %v3743 = vpack.c.b16 %v2995, %v2991
        %v3744 = vpack.c.b16 %v3000, %v2996
        %v3745 = vpack.c.b16 %v3001, %v2997
        %v3746 = vpack.c.b16 %v3002, %v2998
        %v3747 = vpack.c.b16 %v3003, %v2999
        %v3748 = vpack.c.b16 %v3008, %v3004
        %v3749 = vpack.c.b16 %v3009, %v3005
        %v3750 = vpack.c.b16 %v3010, %v3006
        %v3751 = vpack.c.b16 %v3011, %v3007
        %v3752 = vpack.c.b16 %v3016, %v3012
        %v3753 = vpack.c.b16 %v3017, %v3013
        %v3754 = vpack.c.b16 %v3018, %v3014
        %v3755 = vpack.c.b16 %v3019, %v3015
        %v3756 = vpack.c.b16 %v3024, %v3020
        %v3757 = vpack.c.b16 %v3025, %v3021
        %v3758 = vpack.c.b16 %v3026, %v3022
        %v3759 = vpack.c.b16 %v3027, %v3023
        %v3760 = vpack.c.b16 %v3032, %v3028
        %v3761 = vpack.c.b16 %v3033, %v3029
        %v3762 = vpack.c.b16 %v3034, %v3030
        %v3763 = vpack.c.b16 %v3035, %v3031
        %v3764 = vpack.c.b16 %v3040, %v3036
        %v3765 = vpack.c.b16 %v3041, %v3037
        %v3766 = vpack.c.b16 %v3042, %v3038
        %v3767 = vpack.c.b16 %v3043, %v3039
        %v3768 = vpack.c.b16 %v3048, %v3044
        %v3769 = vpack.c.b16 %v3049, %v3045
        %v3770 = vpack.c.b16 %v3050, %v3046
        %v3771 = vpack.c.b16 %v3051, %v3047
        %v3772 = vpack.c.b16 %v3056, %v3052
        %v3773 = vpack.c.b16 %v3057, %v3053
        %v3774 = vpack.c.b16 %v3058, %v3054
        %v3775 = vpack.c.b16 %v3059, %v3055
        %v3776 = vpack.c.b16 %v3064, %v3060
        %v3777 = vpack.c.b16 %v3065, %v3061
        %v3778 = vpack.c.b16 %v3066, %v3062
        %v3779 = vpack.c.b16 %v3067, %v3063
        %v3780 = vpack.c.b16 %v3072, %v3068
        %v3781 = vpack.c.b16 %v3073, %v3069
        %v3782 = vpack.c.b16 %v3074, %v3070
        %v3783 = vpack.c.b16 %v3075, %v3071
        %v3784 = vpack.c.b16 %v3080, %v3076
        %v3785 = vpack.c.b16 %v3081, %v3077
        %v3786 = vpack.c.b16 %v3082, %v3078
        %v3787 = vpack.c.b16 %v3083, %v3079
        %v3788 = vpack.c.b16 %v3088, %v3084
        %v3789 = vpack.c.b16 %v3089, %v3085
        %v3790 = vpack.c.b16 %v3090, %v3086
        %v3791 = vpack.c.b16 %v3091, %v3087
        %v3792 = vpack.c.b16 %v3096, %v3092
        %v3793 = vpack.c.b16 %v3097, %v3093
        %v3794 = vpack.c.b16 %v3098, %v3094
        %v3795 = vpack.c.b16 %v3099, %v3095
        %v3796 = vpack.c.b16 %v3104, %v3100
        %v3797 = vpack.c.b16 %v3105, %v3101
        %v3798 = vpack.c.b16 %v3106, %v3102
        %v3799 = vpack.c.b16 %v3107, %v3103
        %v3800 = vpack.c.b16 %v3112, %v3108
        %v3801 = vpack.c.b16 %v3113, %v3109
        %v3802 = vpack.c.b16 %v3114, %v3110
        %v3803 = vpack.c.b16 %v3115, %v3111
        %v3804 = vpack.c.b16 %v3120, %v3116
        %v3805 = vpack.c.b16 %v3121, %v3117
        %v3806 = vpack.c.b16 %v3122, %v3118
        %v3807 = vpack.c.b16 %v3123, %v3119
        %v3808 = vpack.c.b16 %v3128, %v3124
        %v3809 = vpack.c.b16 %v3129, %v3125
        %v3810 = vpack.c.b16 %v3130, %v3126
        %v3811 = vpack.c.b16 %v3131, %v3127
        %v3812 = vpack.c.b16 %v3136, %v3132
        %v3813 = vpack.c.b16 %v3137, %v3133
        %v3814 = vpack.c.b16 %v3138, %v3134
        %v3815 = vpack.c.b16 %v3139, %v3135
        %v3816 = vpack.c.b16 %v3144, %v3140
        %v3817 = vpack.c.b16 %v3145, %v3141
        %v3818 = vpack.c.b16 %v3146, %v3142
        %v3819 = vpack.c.b16 %v3147, %v3143
        %4492 = vmatprep.subr.bf16.mxu0 %v3149
        %4493 = vmatpush1.bf16.msra.mxu0 %v3148
        %4494 = vmatprep.subr.bf16.mxu0 %v3153
        %4495 = vmatpush1.bf16.msra.mxu0 %v3152
        %4496 = vmatprep.subr.bf16.mxu0 %v3157
        %4497 = vmatpush1.bf16.msra.mxu0 %v3156
        %4498 = vmatprep.subr.bf16.mxu0 %v3161
        %4499 = vmatpush1.bf16.msra.mxu0 %v3160
        %4500 = vmatprep.subr.bf16.mxu0 %v3165
        %4501 = vmatpush1.bf16.msra.mxu0 %v3164
        %4502 = vmatprep.subr.bf16.mxu0 %v3169
        %4503 = vmatpush1.bf16.msra.mxu0 %v3168
        %4504 = vmatprep.subr.bf16.mxu0 %v3173
        %4505 = vmatpush1.bf16.msra.mxu0 %v3172
        %4506 = vmatprep.subr.bf16.mxu0 %v3177
        %4507 = vmatpush1.bf16.msra.mxu0 %v3176
        %4508 = vmatprep.subr.bf16.mxu0 %v3181
        %4509 = vmatpush1.bf16.msra.mxu0 %v3180
        %4510 = vmatprep.subr.bf16.mxu0 %v3185
        %4511 = vmatpush1.bf16.msra.mxu0 %v3184
        %4512 = vmatprep.subr.bf16.mxu0 %v3189
        %4513 = vmatpush1.bf16.msra.mxu0 %v3188
        %4514 = vmatprep.subr.bf16.mxu0 %v3193
        %4515 = vmatpush1.bf16.msra.mxu0 %v3192
        %4516 = vmatprep.subr.bf16.mxu0 %v3197
        %4517 = vmatpush1.bf16.msra.mxu0 %v3196
        %4518 = vmatprep.subr.bf16.mxu0 %v3201
        %4519 = vmatpush1.bf16.msra.mxu0 %v3200
        %4520 = vmatprep.subr.bf16.mxu0 %v3205
        %4521 = vmatpush1.bf16.msra.mxu0 %v3204
        %4522 = vmatprep.subr.bf16.mxu0 %v3209
        %4523 = vmatpush1.bf16.msra.mxu0 %v3208
        %4524 = vmatprep.mubr.bf16.mxu0 %v1011
        %4525 = vmatmul.mubr.bf16.gmra.mrb[0].mxu0 %v997
        %v4526 = vpop.f32.mrb[0].mxu0
        %v4527 = vadd.f32 0.0, %v4526
        %v4528 = vpop.f32.mrb[0].mxu0
        %v4529 = vadd.f32 0.0, %v4528
        %v4530 = vpop.f32.mrb[0].mxu0
        %v4531 = vpop.f32.mrb[0].mxu0
        %4532 = vdwg.mxu0
        %4533 = vmatprep.subr.bf16.mxu0 %v3213
        %4534 = vmatpush1.bf16.msra.mxu0 %v3212
        %4535 = vmatprep.subr.bf16.mxu0 %v3217
        %4536 = vmatpush1.bf16.msra.mxu0 %v3216
        %4537 = vmatprep.subr.bf16.mxu0 %v3221
        %4538 = vmatpush1.bf16.msra.mxu0 %v3220
        %4539 = vmatprep.subr.bf16.mxu0 %v3225
        %4540 = vmatpush1.bf16.msra.mxu0 %v3224
        %4541 = vmatprep.subr.bf16.mxu0 %v3229
        %4542 = vmatpush1.bf16.msra.mxu0 %v3228
        %4543 = vmatprep.subr.bf16.mxu0 %v3233
        %4544 = vmatpush1.bf16.msra.mxu0 %v3232
        %4545 = vmatprep.subr.bf16.mxu0 %v3237
        %4546 = vmatpush1.bf16.msra.mxu0 %v3236
        %4547 = vmatprep.subr.bf16.mxu0 %v3241
        %4548 = vmatpush1.bf16.msra.mxu0 %v3240
        %4549 = vmatprep.subr.bf16.mxu0 %v3245
        %4550 = vmatpush1.bf16.msra.mxu0 %v3244
        %4551 = vmatprep.subr.bf16.mxu0 %v3249
        %4552 = vmatpush1.bf16.msra.mxu0 %v3248
        %4553 = vmatprep.subr.bf16.mxu0 %v3253
        %4554 = vmatpush1.bf16.msra.mxu0 %v3252
        %4555 = vmatprep.subr.bf16.mxu0 %v3257
        %4556 = vmatpush1.bf16.msra.mxu0 %v3256
        %4557 = vmatprep.subr.bf16.mxu0 %v3261
        %4558 = vmatpush1.bf16.msra.mxu0 %v3260
        %4559 = vmatprep.subr.bf16.mxu0 %v3265
        %4560 = vmatpush1.bf16.msra.mxu0 %v3264
        %4561 = vmatprep.subr.bf16.mxu0 %v3269
        %4562 = vmatpush1.bf16.msra.mxu0 %v3268
        %4563 = vmatprep.subr.bf16.mxu0 %v3273
        %4564 = vmatpush1.bf16.msra.mxu0 %v3272
        %4565 = vmatprep.mubr.bf16.mxu0 %v1021
        %4566 = vmatmul.mubr.bf16.gmra.mrb[0].mxu0 %v1019
        %v4567 = vpop.f32.mrb[0].mxu0
        %v4568 = vadd.f32 %v4527, %v4567
        %v4569 = vpop.f32.mrb[0].mxu0
        %v4570 = vadd.f32 %v4529, %v4569
        %v4571 = vpop.f32.mrb[0].mxu0
        %v4572 = vpop.f32.mrb[0].mxu0
        %4573 = vdwg.mxu0
        %4574 = vmatprep.subr.bf16.mxu0 %v3277
        %4575 = vmatpush1.bf16.msra.mxu0 %v3276
        %4576 = vmatprep.subr.bf16.mxu0 %v3281
        %4577 = vmatpush1.bf16.msra.mxu0 %v3280
        %4578 = vmatprep.subr.bf16.mxu0 %v3285
        %4579 = vmatpush1.bf16.msra.mxu0 %v3284
        %4580 = vmatprep.subr.bf16.mxu0 %v3289
        %4581 = vmatpush1.bf16.msra.mxu0 %v3288
        %4582 = vmatprep.subr.bf16.mxu0 %v3293
        %4583 = vmatpush1.bf16.msra.mxu0 %v3292
        %4584 = vmatprep.subr.bf16.mxu0 %v3297
        %4585 = vmatpush1.bf16.msra.mxu0 %v3296
        %4586 = vmatprep.subr.bf16.mxu0 %v3301
        %4587 = vmatpush1.bf16.msra.mxu0 %v3300
        %4588 = vmatprep.subr.bf16.mxu0 %v3305
        %4589 = vmatpush1.bf16.msra.mxu0 %v3304
        %4590 = vmatprep.subr.bf16.mxu0 %v3309
        %4591 = vmatpush1.bf16.msra.mxu0 %v3308
        %4592 = vmatprep.subr.bf16.mxu0 %v3313
        %4593 = vmatpush1.bf16.msra.mxu0 %v3312
        %4594 = vmatprep.subr.bf16.mxu0 %v3317
        %4595 = vmatpush1.bf16.msra.mxu0 %v3316
        %4596 = vmatprep.subr.bf16.mxu0 %v3321
        %4597 = vmatpush1.bf16.msra.mxu0 %v3320
        %4598 = vmatprep.subr.bf16.mxu0 %v3325
        %4599 = vmatpush1.bf16.msra.mxu0 %v3324
        %4600 = vmatprep.subr.bf16.mxu0 %v3329
        %4601 = vmatpush1.bf16.msra.mxu0 %v3328
        %4602 = vmatprep.subr.bf16.mxu0 %v3333
        %4603 = vmatpush1.bf16.msra.mxu0 %v3332
        %4604 = vmatprep.subr.bf16.mxu0 %v3337
        %4605 = vmatpush1.bf16.msra.mxu0 %v3336
        %4606 = vmatprep.mubr.bf16.mxu0 %v1018
        %4607 = vmatmul.mubr.bf16.gmra.mrb[0].mxu0 %v1004
        %v4608 = vpop.f32.mrb[0].mxu0
        %v4609 = vadd.f32 %v4568, %v4608
        %v4610 = vpop.f32.mrb[0].mxu0
        %v4611 = vadd.f32 %v4570, %v4610
        %v4612 = vpop.f32.mrb[0].mxu0
        %v4613 = vpop.f32.mrb[0].mxu0
        %4614 = vdwg.mxu0
        %4615 = vmatprep.subr.bf16.mxu0 %v3341
        %4616 = vmatpush1.bf16.msra.mxu0 %v3340
        %4617 = vmatprep.subr.bf16.mxu0 %v3345
        %4618 = vmatpush1.bf16.msra.mxu0 %v3344
        %4619 = vmatprep.subr.bf16.mxu0 %v3349
        %4620 = vmatpush1.bf16.msra.mxu0 %v3348
        %4621 = vmatprep.subr.bf16.mxu0 %v3353
        %4622 = vmatpush1.bf16.msra.mxu0 %v3352
        %4623 = vmatprep.subr.bf16.mxu0 %v3357
        %4624 = vmatpush1.bf16.msra.mxu0 %v3356
        %4625 = vmatprep.subr.bf16.mxu0 %v3361
        %4626 = vmatpush1.bf16.msra.mxu0 %v3360
        %4627 = vmatprep.subr.bf16.mxu0 %v3365
        %4628 = vmatpush1.bf16.msra.mxu0 %v3364
        %4629 = vmatprep.subr.bf16.mxu0 %v3369
        %4630 = vmatpush1.bf16.msra.mxu0 %v3368
        %4631 = vmatprep.subr.bf16.mxu0 %v3373
        %4632 = vmatpush1.bf16.msra.mxu0 %v3372
        %4633 = vmatprep.subr.bf16.mxu0 %v3377
        %4634 = vmatpush1.bf16.msra.mxu0 %v3376
        %4635 = vmatprep.subr.bf16.mxu0 %v3381
        %4636 = vmatpush1.bf16.msra.mxu0 %v3380
        %4637 = vmatprep.subr.bf16.mxu0 %v3385
        %4638 = vmatpush1.bf16.msra.mxu0 %v3384
        %4639 = vmatprep.subr.bf16.mxu0 %v3389
        %4640 = vmatpush1.bf16.msra.mxu0 %v3388
        %4641 = vmatprep.subr.bf16.mxu0 %v3393
        %4642 = vmatpush1.bf16.msra.mxu0 %v3392
        %4643 = vmatprep.subr.bf16.mxu0 %v3397
        %4644 = vmatpush1.bf16.msra.mxu0 %v3396
        %4645 = vmatprep.subr.bf16.mxu0 %v3401
        %4646 = vmatpush1.bf16.msra.mxu0 %v3400
        %4647 = vmatprep.mubr.bf16.mxu0 %v1022
        %4648 = vmatmul.mubr.bf16.gmra.mrb[0].mxu0 %v1020
        %v4649 = vpop.f32.mrb[0].mxu0
        %v4650 = vadd.f32 %v4609, %v4649
        %v4651 = vpop.f32.mrb[0].mxu0
        %v4652 = vadd.f32 %v4611, %v4651
        %v4653 = vpop.f32.mrb[0].mxu0
        %v4654 = vpop.f32.mrb[0].mxu0
        %4655 = vdwg.mxu0
        %4656 = vmatprep.subr.bf16.mxu0 %v3405
        %4657 = vmatpush1.bf16.msra.mxu0 %v3404
        %4658 = vmatprep.subr.bf16.mxu0 %v3409
        %4659 = vmatpush1.bf16.msra.mxu0 %v3408
        %4660 = vmatprep.subr.bf16.mxu0 %v3413
        %4661 = vmatpush1.bf16.msra.mxu0 %v3412
        %4662 = vmatprep.subr.bf16.mxu0 %v3417
        %4663 = vmatpush1.bf16.msra.mxu0 %v3416
        %4664 = vmatprep.subr.bf16.mxu0 %v3421
        %4665 = vmatpush1.bf16.msra.mxu0 %v3420
        %4666 = vmatprep.subr.bf16.mxu0 %v3425
        %4667 = vmatpush1.bf16.msra.mxu0 %v3424
        %4668 = vmatprep.subr.bf16.mxu0 %v3429
        %4669 = vmatpush1.bf16.msra.mxu0 %v3428
        %4670 = vmatprep.subr.bf16.mxu0 %v3433
        %4671 = vmatpush1.bf16.msra.mxu0 %v3432
        %4672 = vmatprep.subr.bf16.mxu0 %v3437
        %4673 = vmatpush1.bf16.msra.mxu0 %v3436
        %4674 = vmatprep.subr.bf16.mxu0 %v3441
        %4675 = vmatpush1.bf16.msra.mxu0 %v3440
        %4676 = vmatprep.subr.bf16.mxu0 %v3445
        %4677 = vmatpush1.bf16.msra.mxu0 %v3444
        %4678 = vmatprep.subr.bf16.mxu0 %v3449
        %4679 = vmatpush1.bf16.msra.mxu0 %v3448
        %4680 = vmatprep.subr.bf16.mxu0 %v3453
        %4681 = vmatpush1.bf16.msra.mxu0 %v3452
        %4682 = vmatprep.subr.bf16.mxu0 %v3457
        %4683 = vmatpush1.bf16.msra.mxu0 %v3456
        %4684 = vmatprep.subr.bf16.mxu0 %v3461
        %4685 = vmatpush1.bf16.msra.mxu0 %v3460
        %4686 = vmatprep.subr.bf16.mxu0 %v3465
        %4687 = vmatpush1.bf16.msra.mxu0 %v3464
        %4688 = vmatprep.mubr.bf16.mxu0 %v1060
        %4689 = vmatmul.mubr.bf16.gmra.mrb[0].mxu0 %v1046
        %v4690 = vpop.f32.mrb[0].mxu0
        %v4691 = vadd.f32 %v4650, %v4690
        %v4692 = vpop.f32.mrb[0].mxu0
        %v4693 = vadd.f32 %v4652, %v4692
        %v4694 = vpop.f32.mrb[0].mxu0
        %v4695 = vpop.f32.mrb[0].mxu0
        %4696 = vdwg.mxu0
        %4697 = vmatprep.subr.bf16.mxu0 %v3469
        %4698 = vmatpush1.bf16.msra.mxu0 %v3468
        %4699 = vmatprep.subr.bf16.mxu0 %v3473
        %4700 = vmatpush1.bf16.msra.mxu0 %v3472
        %4701 = vmatprep.subr.bf16.mxu0 %v3477
        %4702 = vmatpush1.bf16.msra.mxu0 %v3476
        %4703 = vmatprep.subr.bf16.mxu0 %v3481
        %4704 = vmatpush1.bf16.msra.mxu0 %v3480
        %4705 = vmatprep.subr.bf16.mxu0 %v3485
        %4706 = vmatpush1.bf16.msra.mxu0 %v3484
        %4707 = vmatprep.subr.bf16.mxu0 %v3489
        %4708 = vmatpush1.bf16.msra.mxu0 %v3488
        %4709 = vmatprep.subr.bf16.mxu0 %v3493
        %4710 = vmatpush1.bf16.msra.mxu0 %v3492
        %4711 = vmatprep.subr.bf16.mxu0 %v3497
        %4712 = vmatpush1.bf16.msra.mxu0 %v3496
        %4713 = vmatprep.subr.bf16.mxu0 %v3501
        %4714 = vmatpush1.bf16.msra.mxu0 %v3500
        %4715 = vmatprep.subr.bf16.mxu0 %v3505
        %4716 = vmatpush1.bf16.msra.mxu0 %v3504
        %4717 = vmatprep.subr.bf16.mxu0 %v3509
        %4718 = vmatpush1.bf16.msra.mxu0 %v3508
        %4719 = vmatprep.subr.bf16.mxu0 %v3513
        %4720 = vmatpush1.bf16.msra.mxu0 %v3512
        %4721 = vmatprep.subr.bf16.mxu0 %v3517
        %4722 = vmatpush1.bf16.msra.mxu0 %v3516
        %4723 = vmatprep.subr.bf16.mxu0 %v3521
        %4724 = vmatpush1.bf16.msra.mxu0 %v3520
        %4725 = vmatprep.subr.bf16.mxu0 %v3525
        %4726 = vmatpush1.bf16.msra.mxu0 %v3524
        %4727 = vmatprep.subr.bf16.mxu0 %v3529
        %4728 = vmatpush1.bf16.msra.mxu0 %v3528
        %4729 = vmatprep.mubr.bf16.mxu0 %v1070
        %4730 = vmatmul.mubr.bf16.gmra.mrb[0].mxu0 %v1068
        %v4731 = vpop.f32.mrb[0].mxu0
        %v4732 = vadd.f32 %v4691, %v4731
        %v4733 = vpop.f32.mrb[0].mxu0
        %v4734 = vadd.f32 %v4693, %v4733
        %v4735 = vpop.f32.mrb[0].mxu0
        %v4736 = vpop.f32.mrb[0].mxu0
        %4737 = vdwg.mxu0
        %4738 = vmatprep.subr.bf16.mxu0 %v3533
        %4739 = vmatpush1.bf16.msra.mxu0 %v3532
        %4740 = vmatprep.subr.bf16.mxu0 %v3537
        %4741 = vmatpush1.bf16.msra.mxu0 %v3536
        %4742 = vmatprep.subr.bf16.mxu0 %v3541
        %4743 = vmatpush1.bf16.msra.mxu0 %v3540
        %4744 = vmatprep.subr.bf16.mxu0 %v3545
        %4745 = vmatpush1.bf16.msra.mxu0 %v3544
        %4746 = vmatprep.subr.bf16.mxu0 %v3549
        %4747 = vmatpush1.bf16.msra.mxu0 %v3548
        %4748 = vmatprep.subr.bf16.mxu0 %v3553
        %4749 = vmatpush1.bf16.msra.mxu0 %v3552
        %4750 = vmatprep.subr.bf16.mxu0 %v3557
        %4751 = vmatpush1.bf16.msra.mxu0 %v3556
        %4752 = vmatprep.subr.bf16.mxu0 %v3561
        %4753 = vmatpush1.bf16.msra.mxu0 %v3560
        %4754 = vmatprep.subr.bf16.mxu0 %v3565
        %4755 = vmatpush1.bf16.msra.mxu0 %v3564
        %4756 = vmatprep.subr.bf16.mxu0 %v3569
        %4757 = vmatpush1.bf16.msra.mxu0 %v3568
        %4758 = vmatprep.subr.bf16.mxu0 %v3573
        %4759 = vmatpush1.bf16.msra.mxu0 %v3572
        %4760 = vmatprep.subr.bf16.mxu0 %v3577
        %4761 = vmatpush1.bf16.msra.mxu0 %v3576
        %4762 = vmatprep.subr.bf16.mxu0 %v3581
        %4763 = vmatpush1.bf16.msra.mxu0 %v3580
        %4764 = vmatprep.subr.bf16.mxu0 %v3585
        %4765 = vmatpush1.bf16.msra.mxu0 %v3584
        %4766 = vmatprep.subr.bf16.mxu0 %v3589
        %4767 = vmatpush1.bf16.msra.mxu0 %v3588
        %4768 = vmatprep.subr.bf16.mxu0 %v3593
        %4769 = vmatpush1.bf16.msra.mxu0 %v3592
        %4770 = vmatprep.mubr.bf16.mxu0 %v1067
        %4771 = vmatmul.mubr.bf16.gmra.mrb[0].mxu0 %v1053
        %v4772 = vpop.f32.mrb[0].mxu0
        %v4773 = vadd.f32 %v4732, %v4772
        %v4774 = vpop.f32.mrb[0].mxu0
        %v4775 = vadd.f32 %v4734, %v4774
        %v4776 = vpop.f32.mrb[0].mxu0
        %v4777 = vpop.f32.mrb[0].mxu0
        %4778 = vdwg.mxu0
        %4779 = vmatprep.subr.bf16.mxu0 %v3597
        %4780 = vmatpush1.bf16.msra.mxu0 %v3596
        %4781 = vmatprep.subr.bf16.mxu0 %v3601
        %4782 = vmatpush1.bf16.msra.mxu0 %v3600
        %4783 = vmatprep.subr.bf16.mxu0 %v3605
        %4784 = vmatpush1.bf16.msra.mxu0 %v3604
        %4785 = vmatprep.subr.bf16.mxu0 %v3609
        %4786 = vmatpush1.bf16.msra.mxu0 %v3608
        %4787 = vmatprep.subr.bf16.mxu0 %v3613
        %4788 = vmatpush1.bf16.msra.mxu0 %v3612
        %4789 = vmatprep.subr.bf16.mxu0 %v3617
        %4790 = vmatpush1.bf16.msra.mxu0 %v3616
        %4791 = vmatprep.subr.bf16.mxu0 %v3621
        %4792 = vmatpush1.bf16.msra.mxu0 %v3620
        %4793 = vmatprep.subr.bf16.mxu0 %v3625
        %4794 = vmatpush1.bf16.msra.mxu0 %v3624
        %4795 = vmatprep.subr.bf16.mxu0 %v3629
        %4796 = vmatpush1.bf16.msra.mxu0 %v3628
        %4797 = vmatprep.subr.bf16.mxu0 %v3633
        %4798 = vmatpush1.bf16.msra.mxu0 %v3632
        %4799 = vmatprep.subr.bf16.mxu0 %v3637
        %4800 = vmatpush1.bf16.msra.mxu0 %v3636
        %4801 = vmatprep.subr.bf16.mxu0 %v3641
        %4802 = vmatpush1.bf16.msra.mxu0 %v3640
        %4803 = vmatprep.subr.bf16.mxu0 %v3645
        %4804 = vmatpush1.bf16.msra.mxu0 %v3644
        %4805 = vmatprep.subr.bf16.mxu0 %v3649
        %4806 = vmatpush1.bf16.msra.mxu0 %v3648
        %4807 = vmatprep.subr.bf16.mxu0 %v3653
        %4808 = vmatpush1.bf16.msra.mxu0 %v3652
        %4809 = vmatprep.subr.bf16.mxu0 %v3657
        %4810 = vmatpush1.bf16.msra.mxu0 %v3656
        %4811 = vmatprep.mubr.bf16.mxu0 %v1071
        %4812 = vmatmul.mubr.bf16.gmra.mrb[0].mxu0 %v1069
        %v4813 = vpop.f32.mrb[0].mxu0
        %v4814 = vadd.f32 %v4773, %v4813
        %v4815 = vpop.f32.mrb[0].mxu0
        %v4816 = vadd.f32 %v4775, %v4815
        %v4817 = vpop.f32.mrb[0].mxu0
        %v4818 = vpop.f32.mrb[0].mxu0
        %4819 = vdwg.mxu0
        %4820 = vmatprep.subr.bf16.mxu0 %v3661
        %4821 = vmatpush1.bf16.msra.mxu0 %v3660
        %4822 = vmatprep.subr.bf16.mxu0 %v3665
        %4823 = vmatpush1.bf16.msra.mxu0 %v3664
        %4824 = vmatprep.subr.bf16.mxu0 %v3669
        %4825 = vmatpush1.bf16.msra.mxu0 %v3668
        %4826 = vmatprep.subr.bf16.mxu0 %v3673
        %4827 = vmatpush1.bf16.msra.mxu0 %v3672
        %4828 = vmatprep.subr.bf16.mxu0 %v3677
        %4829 = vmatpush1.bf16.msra.mxu0 %v3676
        %4830 = vmatprep.subr.bf16.mxu0 %v3681
        %4831 = vmatpush1.bf16.msra.mxu0 %v3680
        %4832 = vmatprep.subr.bf16.mxu0 %v3685
        %4833 = vmatpush1.bf16.msra.mxu0 %v3684
        %4834 = vmatprep.subr.bf16.mxu0 %v3689
        %4835 = vmatpush1.bf16.msra.mxu0 %v3688
        %4836 = vmatprep.subr.bf16.mxu0 %v3693
        %4837 = vmatpush1.bf16.msra.mxu0 %v3692
        %4838 = vmatprep.subr.bf16.mxu0 %v3697
        %4839 = vmatpush1.bf16.msra.mxu0 %v3696
        %4840 = vmatprep.subr.bf16.mxu0 %v3701
        %4841 = vmatpush1.bf16.msra.mxu0 %v3700
        %4842 = vmatprep.subr.bf16.mxu0 %v3705
        %4843 = vmatpush1.bf16.msra.mxu0 %v3704
        %4844 = vmatprep.subr.bf16.mxu0 %v3709
        %4845 = vmatpush1.bf16.msra.mxu0 %v3708
        %4846 = vmatprep.subr.bf16.mxu0 %v3713
        %4847 = vmatpush1.bf16.msra.mxu0 %v3712
        %4848 = vmatprep.subr.bf16.mxu0 %v3717
        %4849 = vmatpush1.bf16.msra.mxu0 %v3716
        %4850 = vmatprep.subr.bf16.mxu0 %v3721
        %4851 = vmatpush1.bf16.msra.mxu0 %v3720
        %4852 = vmatprep.mubr.bf16.mxu0 %v1108
        %4853 = vmatmul.mubr.bf16.gmra.mrb[0].mxu0 %v1094
        %v4854 = vpop.f32.mrb[0].mxu0
        %v4855 = vadd.f32 %v4814, %v4854
        %v4856 = vpop.f32.mrb[0].mxu0
        %v4857 = vadd.f32 %v4816, %v4856
        %v4858 = vpop.f32.mrb[0].mxu0
        %v4859 = vpop.f32.mrb[0].mxu0
        %4860 = vdwg.mxu0
        %4861 = vmatprep.subr.bf16.mxu0 %v3725
        %4862 = vmatpush1.bf16.msra.mxu0 %v3724
        %4863 = vmatprep.subr.bf16.mxu0 %v3729
        %4864 = vmatpush1.bf16.msra.mxu0 %v3728
        %4865 = vmatprep.subr.bf16.mxu0 %v3733
        %4866 = vmatpush1.bf16.msra.mxu0 %v3732
        %4867 = vmatprep.subr.bf16.mxu0 %v3737
        %4868 = vmatpush1.bf16.msra.mxu0 %v3736
        %4869 = vmatprep.subr.bf16.mxu0 %v3741
        %4870 = vmatpush1.bf16.msra.mxu0 %v3740
        %4871 = vmatprep.subr.bf16.mxu0 %v3745
        %4872 = vmatpush1.bf16.msra.mxu0 %v3744
        %4873 = vmatprep.subr.bf16.mxu0 %v3749
        %4874 = vmatpush1.bf16.msra.mxu0 %v3748
        %4875 = vmatprep.subr.bf16.mxu0 %v3753
        %4876 = vmatpush1.bf16.msra.mxu0 %v3752
        %4877 = vmatprep.subr.bf16.mxu0 %v3757
        %4878 = vmatpush1.bf16.msra.mxu0 %v3756
        %4879 = vmatprep.subr.bf16.mxu0 %v3761
        %4880 = vmatpush1.bf16.msra.mxu0 %v3760
        %4881 = vmatprep.subr.bf16.mxu0 %v3765
        %4882 = vmatpush1.bf16.msra.mxu0 %v3764
        %4883 = vmatprep.subr.bf16.mxu0 %v3769
        %4884 = vmatpush1.bf16.msra.mxu0 %v3768
        %4885 = vmatprep.subr.bf16.mxu0 %v3773
        %4886 = vmatpush1.bf16.msra.mxu0 %v3772
        %4887 = vmatprep.subr.bf16.mxu0 %v3777
        %4888 = vmatpush1.bf16.msra.mxu0 %v3776
        %4889 = vmatprep.subr.bf16.mxu0 %v3781
        %4890 = vmatpush1.bf16.msra.mxu0 %v3780
        %4891 = vmatprep.subr.bf16.mxu0 %v3785
        %4892 = vmatpush1.bf16.msra.mxu0 %v3784
        %4893 = vmatprep.mubr.bf16.mxu0 %v1110
        %4894 = vmatmul.mubr.bf16.gmra.mrb[0].mxu0 %v1109
        %v4895 = vpop.f32.mrb[0].mxu0
        %v4896 = vadd.f32 %v4855, %v4895
        %v4897 = vpop.f32.mrb[0].mxu0
        %v4898 = vadd.f32 %v4857, %v4897
        %v4899 = vpop.f32.mrb[0].mxu0
        %v4900 = vpop.f32.mrb[0].mxu0
        %4901 = vdwg.mxu0
        %4902 = vmatprep.subr.bf16.mxu0 %v3789
        %4903 = vmatpush1.bf16.msra.mxu0 %v3788
        %4904 = vmatprep.subr.bf16.mxu0 %v3793
        %4905 = vmatpush1.bf16.msra.mxu0 %v3792
        %4906 = vmatprep.subr.bf16.mxu0 %v3797
        %4907 = vmatpush1.bf16.msra.mxu0 %v3796
        %4908 = vmatprep.subr.bf16.mxu0 %v3801
        %4909 = vmatpush1.bf16.msra.mxu0 %v3800
        %4910 = vmatprep.subr.bf16.mxu0 %v3805
        %4911 = vmatpush1.bf16.msra.mxu0 %v3804
        %4912 = vmatprep.subr.bf16.mxu0 %v3809
        %4913 = vmatpush1.bf16.msra.mxu0 %v3808
        %4914 = vmatprep.subr.bf16.mxu0 %v3813
        %4915 = vmatpush1.bf16.msra.mxu0 %v3812
        %4916 = vmatprep.subr.bf16.mxu0 %v3817
        %4917 = vmatpush1.bf16.msra.mxu0 %v3816
        %4918 = vmatprep.subr.bf16.mxu0 0
        %4919 = vmatpush1.bf16.msra.mxu0 0
        %4920 = vmatprep.subr.bf16.mxu0 0
        %4921 = vmatpush1.bf16.msra.mxu0 0
        %4922 = vmatprep.subr.bf16.mxu0 0
        %4923 = vmatpush1.bf16.msra.mxu0 0
        %4924 = vmatprep.subr.bf16.mxu0 0
        %4925 = vmatpush1.bf16.msra.mxu0 0
        %4926 = vmatprep.subr.bf16.mxu0 0
        %4927 = vmatpush1.bf16.msra.mxu0 0
        %4928 = vmatprep.subr.bf16.mxu0 0
        %4929 = vmatpush1.bf16.msra.mxu0 0
        %4930 = vmatprep.subr.bf16.mxu0 0
        %4931 = vmatpush1.bf16.msra.mxu0 0
        %4932 = vmatprep.subr.bf16.mxu0 0
        %4933 = vmatpush1.bf16.msra.mxu0 0
        %4934 = vmatprep.mubr.bf16.mxu0 0
        %4935 = vmatmul.mubr.bf16.gmra.mrb[0].mxu0 %v1101
        %v4936 = vpop.f32.mrb[0].mxu0
        %v4937 = vadd.f32 %v4896, %v4936
        %v4938 = vpop.f32.mrb[0].mxu0
        %v4939 = vadd.f32 %v4898, %v4938
        %v4940 = vpop.f32.mrb[0].mxu0
        %v4941 = vpop.f32.mrb[0].mxu0
        %4942 = vdwg.mxu0
        %4943 = vmatprep.subr.bf16.mxu0 %v3151
        %4944 = vmatpush1.bf16.msra.mxu0 %v3150
        %4945 = vmatprep.subr.bf16.mxu0 %v3155
        %4946 = vmatpush1.bf16.msra.mxu0 %v3154
        %4947 = vmatprep.subr.bf16.mxu0 %v3159
        %4948 = vmatpush1.bf16.msra.mxu0 %v3158
        %4949 = vmatprep.subr.bf16.mxu0 %v3163
        %4950 = vmatpush1.bf16.msra.mxu0 %v3162
        %4951 = vmatprep.subr.bf16.mxu0 %v3167
        %4952 = vmatpush1.bf16.msra.mxu0 %v3166
        %4953 = vmatprep.subr.bf16.mxu0 %v3171
        %4954 = vmatpush1.bf16.msra.mxu0 %v3170
        %4955 = vmatprep.subr.bf16.mxu0 %v3175
        %4956 = vmatpush1.bf16.msra.mxu0 %v3174
        %4957 = vmatprep.subr.bf16.mxu0 %v3179
        %4958 = vmatpush1.bf16.msra.mxu0 %v3178
        %4959 = vmatprep.subr.bf16.mxu0 %v3183
        %4960 = vmatpush1.bf16.msra.mxu0 %v3182
        %4961 = vmatprep.subr.bf16.mxu0 %v3187
        %4962 = vmatpush1.bf16.msra.mxu0 %v3186
        %4963 = vmatprep.subr.bf16.mxu0 %v3191
        %4964 = vmatpush1.bf16.msra.mxu0 %v3190
        %4965 = vmatprep.subr.bf16.mxu0 %v3195
        %4966 = vmatpush1.bf16.msra.mxu0 %v3194
        %4967 = vmatprep.subr.bf16.mxu0 %v3199
        %4968 = vmatpush1.bf16.msra.mxu0 %v3198
        %4969 = vmatprep.subr.bf16.mxu0 %v3203
        %4970 = vmatpush1.bf16.msra.mxu0 %v3202
        %4971 = vmatprep.subr.bf16.mxu0 %v3207
        %4972 = vmatpush1.bf16.msra.mxu0 %v3206
        %4973 = vmatprep.subr.bf16.mxu0 %v3211
        %4974 = vmatpush1.bf16.msra.mxu0 %v3210
        %4975 = vmatprep.mubr.bf16.mxu0 %v1011
        %4976 = vmatmul.mubr.bf16.gmra.mrb[0].mxu0 %v997
        %v4977 = vpop.f32.mrb[0].mxu0
        %v4978 = vadd.f32 0.0, %v4977
        %v4979 = vpop.f32.mrb[0].mxu0
        %v4980 = vadd.f32 0.0, %v4979
        %v4981 = vpop.f32.mrb[0].mxu0
        %v4982 = vpop.f32.mrb[0].mxu0
        %4983 = vdwg.mxu0
        %4984 = vmatprep.subr.bf16.mxu0 %v3215
        %4985 = vmatpush1.bf16.msra.mxu0 %v3214
        %4986 = vmatprep.subr.bf16.mxu0 %v3219
        %4987 = vmatpush1.bf16.msra.mxu0 %v3218
        %4988 = vmatprep.subr.bf16.mxu0 %v3223
        %4989 = vmatpush1.bf16.msra.mxu0 %v3222
        %4990 = vmatprep.subr.bf16.mxu0 %v3227
        %4991 = vmatpush1.bf16.msra.mxu0 %v3226
        %4992 = vmatprep.subr.bf16.mxu0 %v3231
        %4993 = vmatpush1.bf16.msra.mxu0 %v3230
        %4994 = vmatprep.subr.bf16.mxu0 %v3235
        %4995 = vmatpush1.bf16.msra.mxu0 %v3234
        %4996 = vmatprep.subr.bf16.mxu0 %v3239
        %4997 = vmatpush1.bf16.msra.mxu0 %v3238
        %4998 = vmatprep.subr.bf16.mxu0 %v3243
        %4999 = vmatpush1.bf16.msra.mxu0 %v3242
        %5000 = vmatprep.subr.bf16.mxu0 %v3247
        %5001 = vmatpush1.bf16.msra.mxu0 %v3246
        %5002 = vmatprep.subr.bf16.mxu0 %v3251
        %5003 = vmatpush1.bf16.msra.mxu0 %v3250
        %5004 = vmatprep.subr.bf16.mxu0 %v3255
        %5005 = vmatpush1.bf16.msra.mxu0 %v3254
        %5006 = vmatprep.subr.bf16.mxu0 %v3259
        %5007 = vmatpush1.bf16.msra.mxu0 %v3258
        %5008 = vmatprep.subr.bf16.mxu0 %v3263
        %5009 = vmatpush1.bf16.msra.mxu0 %v3262
        %5010 = vmatprep.subr.bf16.mxu0 %v3267
        %5011 = vmatpush1.bf16.msra.mxu0 %v3266
        %5012 = vmatprep.subr.bf16.mxu0 %v3271
        %5013 = vmatpush1.bf16.msra.mxu0 %v3270
        %5014 = vmatprep.subr.bf16.mxu0 %v3275
        %5015 = vmatpush1.bf16.msra.mxu0 %v3274
        %5016 = vmatprep.mubr.bf16.mxu0 %v1021
        %5017 = vmatmul.mubr.bf16.gmra.mrb[0].mxu0 %v1019
        %v5018 = vpop.f32.mrb[0].mxu0
        %v5019 = vadd.f32 %v4978, %v5018
        %v5020 = vpop.f32.mrb[0].mxu0
        %v5021 = vadd.f32 %v4980, %v5020
        %v5022 = vpop.f32.mrb[0].mxu0
        %v5023 = vpop.f32.mrb[0].mxu0
        %5024 = vdwg.mxu0
        %5025 = vmatprep.subr.bf16.mxu0 %v3279
        %5026 = vmatpush1.bf16.msra.mxu0 %v3278
        %5027 = vmatprep.subr.bf16.mxu0 %v3283
        %5028 = vmatpush1.bf16.msra.mxu0 %v3282
        %5029 = vmatprep.subr.bf16.mxu0 %v3287
        %5030 = vmatpush1.bf16.msra.mxu0 %v3286
        %5031 = vmatprep.subr.bf16.mxu0 %v3291
        %5032 = vmatpush1.bf16.msra.mxu0 %v3290
        %5033 = vmatprep.subr.bf16.mxu0 %v3295
        %5034 = vmatpush1.bf16.msra.mxu0 %v3294
        %5035 = vmatprep.subr.bf16.mxu0 %v3299
        %5036 = vmatpush1.bf16.msra.mxu0 %v3298
        %5037 = vmatprep.subr.bf16.mxu0 %v3303
        %5038 = vmatpush1.bf16.msra.mxu0 %v3302
        %5039 = vmatprep.subr.bf16.mxu0 %v3307
        %5040 = vmatpush1.bf16.msra.mxu0 %v3306
        %5041 = vmatprep.subr.bf16.mxu0 %v3311
        %5042 = vmatpush1.bf16.msra.mxu0 %v3310
        %5043 = vmatprep.subr.bf16.mxu0 %v3315
        %5044 = vmatpush1.bf16.msra.mxu0 %v3314
        %5045 = vmatprep.subr.bf16.mxu0 %v3319
        %5046 = vmatpush1.bf16.msra.mxu0 %v3318
        %5047 = vmatprep.subr.bf16.mxu0 %v3323
        %5048 = vmatpush1.bf16.msra.mxu0 %v3322
        %5049 = vmatprep.subr.bf16.mxu0 %v3327
        %5050 = vmatpush1.bf16.msra.mxu0 %v3326
        %5051 = vmatprep.subr.bf16.mxu0 %v3331
        %5052 = vmatpush1.bf16.msra.mxu0 %v3330
        %5053 = vmatprep.subr.bf16.mxu0 %v3335
        %5054 = vmatpush1.bf16.msra.mxu0 %v3334
        %5055 = vmatprep.subr.bf16.mxu0 %v3339
        %5056 = vmatpush1.bf16.msra.mxu0 %v3338
        %5057 = vmatprep.mubr.bf16.mxu0 %v1018
        %5058 = vmatmul.mubr.bf16.gmra.mrb[0].mxu0 %v1004
        %v5059 = vpop.f32.mrb[0].mxu0
        %v5060 = vadd.f32 %v5019, %v5059
        %v5061 = vpop.f32.mrb[0].mxu0
        %v5062 = vadd.f32 %v5021, %v5061
        %v5063 = vpop.f32.mrb[0].mxu0
        %v5064 = vpop.f32.mrb[0].mxu0
        %5065 = vdwg.mxu0
        %5066 = vmatprep.subr.bf16.mxu0 %v3343
        %5067 = vmatpush1.bf16.msra.mxu0 %v3342
        %5068 = vmatprep.subr.bf16.mxu0 %v3347
        %5069 = vmatpush1.bf16.msra.mxu0 %v3346
        %5070 = vmatprep.subr.bf16.mxu0 %v3351
        %5071 = vmatpush1.bf16.msra.mxu0 %v3350
        %5072 = vmatprep.subr.bf16.mxu0 %v3355
        %5073 = vmatpush1.bf16.msra.mxu0 %v3354
        %5074 = vmatprep.subr.bf16.mxu0 %v3359
        %5075 = vmatpush1.bf16.msra.mxu0 %v3358
        %5076 = vmatprep.subr.bf16.mxu0 %v3363
        %5077 = vmatpush1.bf16.msra.mxu0 %v3362
        %5078 = vmatprep.subr.bf16.mxu0 %v3367
        %5079 = vmatpush1.bf16.msra.mxu0 %v3366
        %5080 = vmatprep.subr.bf16.mxu0 %v3371
        %5081 = vmatpush1.bf16.msra.mxu0 %v3370
        %5082 = vmatprep.subr.bf16.mxu0 %v3375
        %5083 = vmatpush1.bf16.msra.mxu0 %v3374
        %5084 = vmatprep.subr.bf16.mxu0 %v3379
        %5085 = vmatpush1.bf16.msra.mxu0 %v3378
        %5086 = vmatprep.subr.bf16.mxu0 %v3383
        %5087 = vmatpush1.bf16.msra.mxu0 %v3382
        %5088 = vmatprep.subr.bf16.mxu0 %v3387
        %5089 = vmatpush1.bf16.msra.mxu0 %v3386
        %5090 = vmatprep.subr.bf16.mxu0 %v3391
        %5091 = vmatpush1.bf16.msra.mxu0 %v3390
        %5092 = vmatprep.subr.bf16.mxu0 %v3395
        %5093 = vmatpush1.bf16.msra.mxu0 %v3394
        %5094 = vmatprep.subr.bf16.mxu0 %v3399
        %5095 = vmatpush1.bf16.msra.mxu0 %v3398
        %5096 = vmatprep.subr.bf16.mxu0 %v3403
        %5097 = vmatpush1.bf16.msra.mxu0 %v3402
        %5098 = vmatprep.mubr.bf16.mxu0 %v1022
        %5099 = vmatmul.mubr.bf16.gmra.mrb[0].mxu0 %v1020
        %v5100 = vpop.f32.mrb[0].mxu0
        %v5101 = vadd.f32 %v5060, %v5100
        %v5102 = vpop.f32.mrb[0].mxu0
        %v5103 = vadd.f32 %v5062, %v5102
        %v5104 = vpop.f32.mrb[0].mxu0
        %v5105 = vpop.f32.mrb[0].mxu0
        %5106 = vdwg.mxu0
        %5107 = vmatprep.subr.bf16.mxu0 %v3407
        %5108 = vmatpush1.bf16.msra.mxu0 %v3406
        %5109 = vmatprep.subr.bf16.mxu0 %v3411
        %5110 = vmatpush1.bf16.msra.mxu0 %v3410
        %5111 = vmatprep.subr.bf16.mxu0 %v3415
        %5112 = vmatpush1.bf16.msra.mxu0 %v3414
        %5113 = vmatprep.subr.bf16.mxu0 %v3419
        %5114 = vmatpush1.bf16.msra.mxu0 %v3418
        %5115 = vmatprep.subr.bf16.mxu0 %v3423
        %5116 = vmatpush1.bf16.msra.mxu0 %v3422
        %5117 = vmatprep.subr.bf16.mxu0 %v3427
        %5118 = vmatpush1.bf16.msra.mxu0 %v3426
        %5119 = vmatprep.subr.bf16.mxu0 %v3431
        %5120 = vmatpush1.bf16.msra.mxu0 %v3430
        %5121 = vmatprep.subr.bf16.mxu0 %v3435
        %5122 = vmatpush1.bf16.msra.mxu0 %v3434
        %5123 = vmatprep.subr.bf16.mxu0 %v3439
        %5124 = vmatpush1.bf16.msra.mxu0 %v3438
        %5125 = vmatprep.subr.bf16.mxu0 %v3443
        %5126 = vmatpush1.bf16.msra.mxu0 %v3442
        %5127 = vmatprep.subr.bf16.mxu0 %v3447
        %5128 = vmatpush1.bf16.msra.mxu0 %v3446
        %5129 = vmatprep.subr.bf16.mxu0 %v3451
        %5130 = vmatpush1.bf16.msra.mxu0 %v3450
        %5131 = vmatprep.subr.bf16.mxu0 %v3455
        %5132 = vmatpush1.bf16.msra.mxu0 %v3454
        %5133 = vmatprep.subr.bf16.mxu0 %v3459
        %5134 = vmatpush1.bf16.msra.mxu0 %v3458
        %5135 = vmatprep.subr.bf16.mxu0 %v3463
        %5136 = vmatpush1.bf16.msra.mxu0 %v3462
        %5137 = vmatprep.subr.bf16.mxu0 %v3467
        %5138 = vmatpush1.bf16.msra.mxu0 %v3466
        %5139 = vmatprep.mubr.bf16.mxu0 %v1060
        %5140 = vmatmul.mubr.bf16.gmra.mrb[0].mxu0 %v1046
        %v5141 = vpop.f32.mrb[0].mxu0
        %v5142 = vadd.f32 %v5101, %v5141
        %v5143 = vpop.f32.mrb[0].mxu0
        %v5144 = vadd.f32 %v5103, %v5143
        %v5145 = vpop.f32.mrb[0].mxu0
        %v5146 = vpop.f32.mrb[0].mxu0
        %5147 = vdwg.mxu0
        %5148 = vmatprep.subr.bf16.mxu0 %v3471
        %5149 = vmatpush1.bf16.msra.mxu0 %v3470
        %5150 = vmatprep.subr.bf16.mxu0 %v3475
        %5151 = vmatpush1.bf16.msra.mxu0 %v3474
        %5152 = vmatprep.subr.bf16.mxu0 %v3479
        %5153 = vmatpush1.bf16.msra.mxu0 %v3478
        %5154 = vmatprep.subr.bf16.mxu0 %v3483
        %5155 = vmatpush1.bf16.msra.mxu0 %v3482
        %5156 = vmatprep.subr.bf16.mxu0 %v3487
        %5157 = vmatpush1.bf16.msra.mxu0 %v3486
        %5158 = vmatprep.subr.bf16.mxu0 %v3491
        %5159 = vmatpush1.bf16.msra.mxu0 %v3490
        %5160 = vmatprep.subr.bf16.mxu0 %v3495
        %5161 = vmatpush1.bf16.msra.mxu0 %v3494
        %5162 = vmatprep.subr.bf16.mxu0 %v3499
        %5163 = vmatpush1.bf16.msra.mxu0 %v3498
        %5164 = vmatprep.subr.bf16.mxu0 %v3503
        %5165 = vmatpush1.bf16.msra.mxu0 %v3502
        %5166 = vmatprep.subr.bf16.mxu0 %v3507
        %5167 = vmatpush1.bf16.msra.mxu0 %v3506
        %5168 = vmatprep.subr.bf16.mxu0 %v3511
        %5169 = vmatpush1.bf16.msra.mxu0 %v3510
        %5170 = vmatprep.subr.bf16.mxu0 %v3515
        %5171 = vmatpush1.bf16.msra.mxu0 %v3514
        %5172 = vmatprep.subr.bf16.mxu0 %v3519
        %5173 = vmatpush1.bf16.msra.mxu0 %v3518
        %5174 = vmatprep.subr.bf16.mxu0 %v3523
        %5175 = vmatpush1.bf16.msra.mxu0 %v3522
        %5176 = vmatprep.subr.bf16.mxu0 %v3527
        %5177 = vmatpush1.bf16.msra.mxu0 %v3526
        %5178 = vmatprep.subr.bf16.mxu0 %v3531
        %5179 = vmatpush1.bf16.msra.mxu0 %v3530
        %5180 = vmatprep.mubr.bf16.mxu0 %v1070
        %5181 = vmatmul.mubr.bf16.gmra.mrb[0].mxu0 %v1068
        %v5182 = vpop.f32.mrb[0].mxu0
        %v5183 = vadd.f32 %v5142, %v5182
        %v5184 = vpop.f32.mrb[0].mxu0
        %v5185 = vadd.f32 %v5144, %v5184
        %v5186 = vpop.f32.mrb[0].mxu0
        %v5187 = vpop.f32.mrb[0].mxu0
        %5188 = vdwg.mxu0
        %5189 = vmatprep.subr.bf16.mxu0 %v3535
        %5190 = vmatpush1.bf16.msra.mxu0 %v3534
        %5191 = vmatprep.subr.bf16.mxu0 %v3539
        %5192 = vmatpush1.bf16.msra.mxu0 %v3538
        %5193 = vmatprep.subr.bf16.mxu0 %v3543
        %5194 = vmatpush1.bf16.msra.mxu0 %v3542
        %5195 = vmatprep.subr.bf16.mxu0 %v3547
        %5196 = vmatpush1.bf16.msra.mxu0 %v3546
        %5197 = vmatprep.subr.bf16.mxu0 %v3551
        %5198 = vmatpush1.bf16.msra.mxu0 %v3550
        %5199 = vmatprep.subr.bf16.mxu0 %v3555
        %5200 = vmatpush1.bf16.msra.mxu0 %v3554
        %5201 = vmatprep.subr.bf16.mxu0 %v3559
        %5202 = vmatpush1.bf16.msra.mxu0 %v3558
        %5203 = vmatprep.subr.bf16.mxu0 %v3563
        %5204 = vmatpush1.bf16.msra.mxu0 %v3562
        %5205 = vmatprep.subr.bf16.mxu0 %v3567
        %5206 = vmatpush1.bf16.msra.mxu0 %v3566
        %5207 = vmatprep.subr.bf16.mxu0 %v3571
        %5208 = vmatpush1.bf16.msra.mxu0 %v3570
        %5209 = vmatprep.subr.bf16.mxu0 %v3575
        %5210 = vmatpush1.bf16.msra.mxu0 %v3574
        %5211 = vmatprep.subr.bf16.mxu0 %v3579
        %5212 = vmatpush1.bf16.msra.mxu0 %v3578
        %5213 = vmatprep.subr.bf16.mxu0 %v3583
        %5214 = vmatpush1.bf16.msra.mxu0 %v3582
        %5215 = vmatprep.subr.bf16.mxu0 %v3587
        %5216 = vmatpush1.bf16.msra.mxu0 %v3586
        %5217 = vmatprep.subr.bf16.mxu0 %v3591
        %5218 = vmatpush1.bf16.msra.mxu0 %v3590
        %5219 = vmatprep.subr.bf16.mxu0 %v3595
        %5220 = vmatpush1.bf16.msra.mxu0 %v3594
        %5221 = vmatprep.mubr.bf16.mxu0 %v1067
        %5222 = vmatmul.mubr.bf16.gmra.mrb[0].mxu0 %v1053
        %v5223 = vpop.f32.mrb[0].mxu0
        %v5224 = vadd.f32 %v5183, %v5223
        %v5225 = vpop.f32.mrb[0].mxu0
        %v5226 = vadd.f32 %v5185, %v5225
        %v5227 = vpop.f32.mrb[0].mxu0
        %v5228 = vpop.f32.mrb[0].mxu0
        %5229 = vdwg.mxu0
        %5230 = vmatprep.subr.bf16.mxu0 %v3599
        %5231 = vmatpush1.bf16.msra.mxu0 %v3598
        %5232 = vmatprep.subr.bf16.mxu0 %v3603
        %5233 = vmatpush1.bf16.msra.mxu0 %v3602
        %5234 = vmatprep.subr.bf16.mxu0 %v3607
        %5235 = vmatpush1.bf16.msra.mxu0 %v3606
        %5236 = vmatprep.subr.bf16.mxu0 %v3611
        %5237 = vmatpush1.bf16.msra.mxu0 %v3610
        %5238 = vmatprep.subr.bf16.mxu0 %v3615
        %5239 = vmatpush1.bf16.msra.mxu0 %v3614
        %5240 = vmatprep.subr.bf16.mxu0 %v3619
        %5241 = vmatpush1.bf16.msra.mxu0 %v3618
        %5242 = vmatprep.subr.bf16.mxu0 %v3623
        %5243 = vmatpush1.bf16.msra.mxu0 %v3622
        %5244 = vmatprep.subr.bf16.mxu0 %v3627
        %5245 = vmatpush1.bf16.msra.mxu0 %v3626
        %5246 = vmatprep.subr.bf16.mxu0 %v3631
        %5247 = vmatpush1.bf16.msra.mxu0 %v3630
        %5248 = vmatprep.subr.bf16.mxu0 %v3635
        %5249 = vmatpush1.bf16.msra.mxu0 %v3634
        %5250 = vmatprep.subr.bf16.mxu0 %v3639
        %5251 = vmatpush1.bf16.msra.mxu0 %v3638
        %5252 = vmatprep.subr.bf16.mxu0 %v3643
        %5253 = vmatpush1.bf16.msra.mxu0 %v3642
        %5254 = vmatprep.subr.bf16.mxu0 %v3647
        %5255 = vmatpush1.bf16.msra.mxu0 %v3646
        %5256 = vmatprep.subr.bf16.mxu0 %v3651
        %5257 = vmatpush1.bf16.msra.mxu0 %v3650
        %5258 = vmatprep.subr.bf16.mxu0 %v3655
        %5259 = vmatpush1.bf16.msra.mxu0 %v3654
        %5260 = vmatprep.subr.bf16.mxu0 %v3659
        %5261 = vmatpush1.bf16.msra.mxu0 %v3658
        %5262 = vmatprep.mubr.bf16.mxu0 %v1071
        %5263 = vmatmul.mubr.bf16.gmra.mrb[0].mxu0 %v1069
        %v5264 = vpop.f32.mrb[0].mxu0
        %v5265 = vadd.f32 %v5224, %v5264
        %v5266 = vpop.f32.mrb[0].mxu0
        %v5267 = vadd.f32 %v5226, %v5266
        %v5268 = vpop.f32.mrb[0].mxu0
        %v5269 = vpop.f32.mrb[0].mxu0
        %5270 = vdwg.mxu0
        %5271 = vmatprep.subr.bf16.mxu0 %v3663
        %5272 = vmatpush1.bf16.msra.mxu0 %v3662
        %5273 = vmatprep.subr.bf16.mxu0 %v3667
        %5274 = vmatpush1.bf16.msra.mxu0 %v3666
        %5275 = vmatprep.subr.bf16.mxu0 %v3671
        %5276 = vmatpush1.bf16.msra.mxu0 %v3670
        %5277 = vmatprep.subr.bf16.mxu0 %v3675
        %5278 = vmatpush1.bf16.msra.mxu0 %v3674
        %5279 = vmatprep.subr.bf16.mxu0 %v3679
        %5280 = vmatpush1.bf16.msra.mxu0 %v3678
        %5281 = vmatprep.subr.bf16.mxu0 %v3683
        %5282 = vmatpush1.bf16.msra.mxu0 %v3682
        %5283 = vmatprep.subr.bf16.mxu0 %v3687
        %5284 = vmatpush1.bf16.msra.mxu0 %v3686
        %5285 = vmatprep.subr.bf16.mxu0 %v3691
        %5286 = vmatpush1.bf16.msra.mxu0 %v3690
        %5287 = vmatprep.subr.bf16.mxu0 %v3695
        %5288 = vmatpush1.bf16.msra.mxu0 %v3694
        %5289 = vmatprep.subr.bf16.mxu0 %v3699
        %5290 = vmatpush1.bf16.msra.mxu0 %v3698
        %5291 = vmatprep.subr.bf16.mxu0 %v3703
        %5292 = vmatpush1.bf16.msra.mxu0 %v3702
        %5293 = vmatprep.subr.bf16.mxu0 %v3707
        %5294 = vmatpush1.bf16.msra.mxu0 %v3706
        %5295 = vmatprep.subr.bf16.mxu0 %v3711
        %5296 = vmatpush1.bf16.msra.mxu0 %v3710
        %5297 = vmatprep.subr.bf16.mxu0 %v3715
        %5298 = vmatpush1.bf16.msra.mxu0 %v3714
        %5299 = vmatprep.subr.bf16.mxu0 %v3719
        %5300 = vmatpush1.bf16.msra.mxu0 %v3718
        %5301 = vmatprep.subr.bf16.mxu0 %v3723
        %5302 = vmatpush1.bf16.msra.mxu0 %v3722
        %5303 = vmatprep.mubr.bf16.mxu0 %v1108
        %5304 = vmatmul.mubr.bf16.gmra.mrb[0].mxu0 %v1094
        %v5305 = vpop.f32.mrb[0].mxu0
        %v5306 = vadd.f32 %v5265, %v5305
        %v5307 = vpop.f32.mrb[0].mxu0
        %v5308 = vadd.f32 %v5267, %v5307
        %v5309 = vpop.f32.mrb[0].mxu0
        %v5310 = vpop.f32.mrb[0].mxu0
        %5311 = vdwg.mxu0
        %5312 = vmatprep.subr.bf16.mxu0 %v3727
        %5313 = vmatpush1.bf16.msra.mxu0 %v3726
        %5314 = vmatprep.subr.bf16.mxu0 %v3731
        %5315 = vmatpush1.bf16.msra.mxu0 %v3730
        %5316 = vmatprep.subr.bf16.mxu0 %v3735
        %5317 = vmatpush1.bf16.msra.mxu0 %v3734
        %5318 = vmatprep.subr.bf16.mxu0 %v3739
        %5319 = vmatpush1.bf16.msra.mxu0 %v3738
        %5320 = vmatprep.subr.bf16.mxu0 %v3743
        %5321 = vmatpush1.bf16.msra.mxu0 %v3742
        %5322 = vmatprep.subr.bf16.mxu0 %v3747
        %5323 = vmatpush1.bf16.msra.mxu0 %v3746
        %5324 = vmatprep.subr.bf16.mxu0 %v3751
        %5325 = vmatpush1.bf16.msra.mxu0 %v3750
        %5326 = vmatprep.subr.bf16.mxu0 %v3755
        %5327 = vmatpush1.bf16.msra.mxu0 %v3754
        %5328 = vmatprep.subr.bf16.mxu0 %v3759
        %5329 = vmatpush1.bf16.msra.mxu0 %v3758
        %5330 = vmatprep.subr.bf16.mxu0 %v3763
        %5331 = vmatpush1.bf16.msra.mxu0 %v3762
        %5332 = vmatprep.subr.bf16.mxu0 %v3767
        %5333 = vmatpush1.bf16.msra.mxu0 %v3766
        %5334 = vmatprep.subr.bf16.mxu0 %v3771
        %5335 = vmatpush1.bf16.msra.mxu0 %v3770
        %5336 = vmatprep.subr.bf16.mxu0 %v3775
        %5337 = vmatpush1.bf16.msra.mxu0 %v3774
        %5338 = vmatprep.subr.bf16.mxu0 %v3779
        %5339 = vmatpush1.bf16.msra.mxu0 %v3778
        %5340 = vmatprep.subr.bf16.mxu0 %v3783
        %5341 = vmatpush1.bf16.msra.mxu0 %v3782
        %5342 = vmatprep.subr.bf16.mxu0 %v3787
        %5343 = vmatpush1.bf16.msra.mxu0 %v3786
        %5344 = vmatprep.mubr.bf16.mxu0 %v1110
        %5345 = vmatmul.mubr.bf16.gmra.mrb[0].mxu0 %v1109
        %v5346 = vpop.f32.mrb[0].mxu0
        %v5347 = vadd.f32 %v5306, %v5346
        %v5348 = vpop.f32.mrb[0].mxu0
        %v5349 = vadd.f32 %v5308, %v5348
        %v5350 = vpop.f32.mrb[0].mxu0
        %v5351 = vpop.f32.mrb[0].mxu0
        %5352 = vdwg.mxu0
        %5353 = vmatprep.subr.bf16.mxu0 %v3791
        %5354 = vmatpush1.bf16.msra.mxu0 %v3790
        %5355 = vmatprep.subr.bf16.mxu0 %v3795
        %5356 = vmatpush1.bf16.msra.mxu0 %v3794
        %5357 = vmatprep.subr.bf16.mxu0 %v3799
        %5358 = vmatpush1.bf16.msra.mxu0 %v3798
        %5359 = vmatprep.subr.bf16.mxu0 %v3803
        %5360 = vmatpush1.bf16.msra.mxu0 %v3802
        %5361 = vmatprep.subr.bf16.mxu0 %v3807
        %5362 = vmatpush1.bf16.msra.mxu0 %v3806
        %5363 = vmatprep.subr.bf16.mxu0 %v3811
        %5364 = vmatpush1.bf16.msra.mxu0 %v3810
        %5365 = vmatprep.subr.bf16.mxu0 %v3815
        %5366 = vmatpush1.bf16.msra.mxu0 %v3814
        %5367 = vmatprep.subr.bf16.mxu0 %v3819
        %5368 = vmatpush1.bf16.msra.mxu0 %v3818
        %5369 = vmatprep.subr.bf16.mxu0 0
        %5370 = vmatpush1.bf16.msra.mxu0 0
        %5371 = vmatprep.subr.bf16.mxu0 0
        %5372 = vmatpush1.bf16.msra.mxu0 0
        %5373 = vmatprep.subr.bf16.mxu0 0
        %5374 = vmatpush1.bf16.msra.mxu0 0
        %5375 = vmatprep.subr.bf16.mxu0 0
        %5376 = vmatpush1.bf16.msra.mxu0 0
        %5377 = vmatprep.subr.bf16.mxu0 0
        %5378 = vmatpush1.bf16.msra.mxu0 0
        %5379 = vmatprep.subr.bf16.mxu0 0
        %5380 = vmatpush1.bf16.msra.mxu0 0
        %5381 = vmatprep.subr.bf16.mxu0 0
        %5382 = vmatpush1.bf16.msra.mxu0 0
        %5383 = vmatprep.subr.bf16.mxu0 0
        %5384 = vmatpush1.bf16.msra.mxu0 0
        %5385 = vmatprep.mubr.bf16.mxu0 0
        %5386 = vmatmul.mubr.bf16.gmra.mrb[0].mxu0 %v1101
        %v5387 = vpop.f32.mrb[0].mxu0
        %v5388 = vadd.f32 %v5347, %v5387
        %v5389 = vpop.f32.mrb[0].mxu0
        %v5390 = vadd.f32 %v5349, %v5389
        %v5391 = vpop.f32.mrb[0].mxu0
        %v5392 = vpop.f32.mrb[0].mxu0
        %5393 = vdwg.mxu0
        %v5398 = vcombine.low %v4937, %v4939
        %v5399 = vcombine.low %v5388, %v5390
        %v5401 = vunpack.c.l.s4 1983009808
        %v5402 = vunpack.c.0.s8 %v5401
        %v5403 = vlaneseq
        %v5404 = vshrl.u32 %v5403, 7
        %v5405 = vsub.s32 %v5402, %v5404
        %v5406 = vrot.slane %v5398, %v5405
        %v5408 = vunpack.c.l.s4 1983009808
        %v5409 = vunpack.c.0.s8 %v5408
        %v5410 = vlaneseq
        %v5411 = vshrl.u32 %v5410, 7
        %v5412 = vsub.s32 %v5409, %v5411
        %v5413 = vrot.slane %v5399, %v5412
        %v5414 = vcombine.low %v5406, %v5413
        %v5416 = vadd.f32 %v295, %v5414
        %5417 = vst [vmem:[#allocation2] sm:$0xff] %v5416
        %p5418 = scmp.eq.s32.totalorder %s19, 1
        // Predicated region
        $region53: #{forward.5} parent=47 // pred_check
          %p5419 = pneg %p5418
        $region54: #{forward.5} parent=47 // pred_check_branch
          %5421 = sbr.rel (%p5419) target = $region56
        $region55: #{forward.5} parent=47 // pred_region
          %v5422 = vld [vmem:[#allocation2] sm:$0xff]
          %v5423 = vld [vmem:[%s2] sm:$0xf]
          %v5425 = vlaneseq
          %v5426 = vshrl.u32 %v5425, 7
          %v5427 = vsub.s32 0, %v5426
          %v5428 = vrot.slane %v5423, %v5427
          %v5429 = vlaneseq
          %v5430 = vshrl.u32 %v5429, 7
          %v5431 = vsub.s32 1, %v5430
          %v5432 = vrot.slane %v5423, %v5431
          %v5433 = vlaneseq
          %v5434 = vshrl.u32 %v5433, 7
          %v5435 = vsub.s32 2, %v5434
          %v5436 = vrot.slane %v5423, %v5435
          %v5437 = vlaneseq
          %v5438 = vshrl.u32 %v5437, 7
          %v5439 = vsub.s32 3, %v5438
          %v5440 = vrot.slane %v5423, %v5439
          %v5441 = vcombine.low %v5428, %v5432
          %v5442 = vcombine.low %v5436, %v5440
          %v5444 = vunpack.c.l.s4 1983009808
          %v5445 = vunpack.c.0.s8 %v5444
          %v5446 = vlaneseq
          %v5447 = vshrl.u32 %v5446, 7
          %v5448 = vsub.s32 %v5445, %v5447
          %v5449 = vrot.slane %v5441, %v5448
          %v5451 = vunpack.c.l.s4 1983009808
          %v5452 = vunpack.c.0.s8 %v5451
          %v5453 = vlaneseq
          %v5454 = vshrl.u32 %v5453, 7
          %v5455 = vsub.s32 %v5452, %v5454
          %v5456 = vrot.slane %v5442, %v5455
          %v5457 = vcombine.low %v5449, %v5456
          %v5459 = vadd.f32 %v5422, %v5457
          %v5460 = vmax.f32 %v5459, 0.0
          %v5462 = vcombine.high %v5460, %v5460
          %v5464 = vunpack.c.l.s4 1983009808
          %v5465 = vunpack.c.0.s8 %v5464
          %v5466 = vlaneseq
          %v5467 = vshrl.u32 %v5466, 7
          %v5468 = vsub.s32 %v5465, %v5467
          %v5469 = vrot.slane %v5460, %v5468
          %v5471 = vunpack.c.l.s4 1983009808
          %v5472 = vunpack.c.0.s8 %v5471
          %v5473 = vlaneseq
          %v5474 = vshrl.u32 %v5473, 7
          %v5475 = vsub.s32 %v5472, %v5474
          %v5476 = vrot.slane %v5462, %v5475
          %v5477 = vcombine.high %v5469, %v5469
          %v5478 = vcombine.high %v5476, %v5476
          %v5483 = vpack.c.bf16 %v5469, %v5469
          %v5484 = vpack.c.bf16 %v5477, %v5477
          %v5485 = vpack.c.bf16 %v5476, %v5476
          %v5486 = vpack.c.bf16 %v5478, %v5478
          %v5487 = vld [vmem:[%s3] sm:$0xf]
          %v5488 = vld [vmem:[%s3 + $0x4] sm:$0xf]
          %v5489 = vld [vmem:[%s3 + $0x8] sm:$0xf]
          %v5490 = vld [vmem:[%s3 + $0xc] sm:$0xf]
          %v5491 = vld [vmem:[%s3 + $0x10] sm:$0xf]
          %v5492 = vld [vmem:[%s3 + $0x14] sm:$0xf]
          %v5493 = vld [vmem:[%s3 + $0x18] sm:$0xf]
          %v5494 = vld [vmem:[%s3 + $0x1c] sm:$0xf]
          %v5495 = vld [vmem:[%s3 + $0x20] sm:$0xf]
          %v5496 = vld [vmem:[%s3 + $0x24] sm:$0xf]
          %v5497 = vld [vmem:[%s3 + $0x28] sm:$0xf]
          %v5498 = vld [vmem:[%s3 + $0x2c] sm:$0xf]
          %v5499 = vld [vmem:[%s3 + $0x30] sm:$0xf]
          %v5500 = vld [vmem:[%s3 + $0x34] sm:$0xf]
          %v5501 = vld [vmem:[%s3 + $0x38] sm:$0xf]
          %v5502 = vld [vmem:[%s3 + $0x3c] sm:$0xf]
          %v5503 = vld [vmem:[%s3 + $0x40] sm:$0xf]
          %v5504 = vld [vmem:[%s3 + $0x44] sm:$0xf]
          %v5505 = vld [vmem:[%s3 + $0x48] sm:$0xf]
          %v5506 = vld [vmem:[%s3 + $0x4c] sm:$0xf]
          %v5507 = vld [vmem:[%s3 + $0x50] sm:$0xf]
          %v5508 = vld [vmem:[%s3 + $0x54] sm:$0xf]
          %v5509 = vld [vmem:[%s3 + $0x58] sm:$0xf]
          %v5510 = vld [vmem:[%s3 + $0x5c] sm:$0xf]
          %v5511 = vld [vmem:[%s3 + $0x60] sm:$0xf]
          %v5512 = vld [vmem:[%s3 + $0x64] sm:$0xf]
          %v5513 = vld [vmem:[%s3 + $0x68] sm:$0xf]
          %v5514 = vld [vmem:[%s3 + $0x6c] sm:$0xf]
          %v5515 = vld [vmem:[%s3 + $0x70] sm:$0xf]
          %v5516 = vld [vmem:[%s3 + $0x74] sm:$0xf]
          %v5517 = vld [vmem:[%s3 + $0x78] sm:$0xf]
          %v5518 = vld [vmem:[%s3 + $0x7c] sm:$0xf]
          %v5519 = vld [vmem:[%s3 + $0x80] sm:$0xf]
          %v5520 = vld [vmem:[%s3 + $0x84] sm:$0xf]
          %v5521 = vld [vmem:[%s3 + $0x88] sm:$0xf]
          %v5522 = vld [vmem:[%s3 + $0x8c] sm:$0xf]
          %v5523 = vld [vmem:[%s3 + $0x90] sm:$0xf]
          %v5524 = vld [vmem:[%s3 + $0x94] sm:$0xf]
          %v5525 = vld [vmem:[%s3 + $0x98] sm:$0xf]
          %v5526 = vld [vmem:[%s3 + $0x9c] sm:$0xf]
          %v5527 = vld [vmem:[%s3 + $0xa0] sm:$0xf]
          %v5528 = vld [vmem:[%s3 + $0xa4] sm:$0xf]
          %v5529 = vld [vmem:[%s3 + $0xa8] sm:$0xf]
          %v5530 = vld [vmem:[%s3 + $0xac] sm:$0xf]
          %v5531 = vld [vmem:[%s3 + $0xb0] sm:$0xf]
          %v5532 = vld [vmem:[%s3 + $0xb4] sm:$0xf]
          %v5533 = vld [vmem:[%s3 + $0xb8] sm:$0xf]
          %v5534 = vld [vmem:[%s3 + $0xbc] sm:$0xf]
          %v5535 = vld [vmem:[%s3 + $0xc0] sm:$0xf]
          %v5536 = vld [vmem:[%s3 + $0xc4] sm:$0xf]
          %v5537 = vld [vmem:[%s3 + $0xc8] sm:$0xf]
          %v5538 = vld [vmem:[%s3 + $0xcc] sm:$0xf]
          %v5539 = vld [vmem:[%s3 + $0xd0] sm:$0xf]
          %v5540 = vld [vmem:[%s3 + $0xd4] sm:$0xf]
          %v5541 = vld [vmem:[%s3 + $0xd8] sm:$0xf]
          %v5542 = vld [vmem:[%s3 + $0xdc] sm:$0xf]
          %v5543 = vld [vmem:[%s3 + $0xe0] sm:$0xf]
          %v5544 = vld [vmem:[%s3 + $0xe4] sm:$0xf]
          %v5545 = vld [vmem:[%s3 + $0xe8] sm:$0xf]
          %v5546 = vld [vmem:[%s3 + $0xec] sm:$0xf]
          %v5547 = vld [vmem:[%s3 + $0xf0] sm:$0xf]
          %v5548 = vld [vmem:[%s3 + $0xf4] sm:$0xf]
          %v5549 = vld [vmem:[%s3 + $0xf8] sm:$0xf]
          %v5550 = vld [vmem:[%s3 + $0xfc] sm:$0xf]
          %v5551 = vld [vmem:[%s4] sm:$0x1]
          %v5553 = vlaneseq
          %v5554 = vshrl.u32 %v5553, 7
          %v5555 = vsub.s32 0, %v5554
          %v5556 = vrot.slane %v5551, %v5555
          %v5622 = vunpack.c.l.b16 %v5487
          %v5623 = vunpack.c.l.b16 %v5488
          %v5624 = vunpack.c.l.b16 %v5489
          %v5625 = vunpack.c.l.b16 %v5490
          %v5626 = vunpack.c.l.b16 %v5491
          %v5627 = vunpack.c.l.b16 %v5492
          %v5628 = vunpack.c.l.b16 %v5493
          %v5629 = vunpack.c.l.b16 %v5494
          %v5630 = vunpack.c.l.b16 %v5495
          %v5631 = vunpack.c.l.b16 %v5496
          %v5632 = vunpack.c.l.b16 %v5497
          %v5633 = vunpack.c.l.b16 %v5498
          %v5634 = vunpack.c.l.b16 %v5499
          %v5635 = vunpack.c.l.b16 %v5500
          %v5636 = vunpack.c.l.b16 %v5501
          %v5637 = vunpack.c.l.b16 %v5502
          %v5638 = vunpack.c.l.b16 %v5503
          %v5639 = vunpack.c.l.b16 %v5504
          %v5640 = vunpack.c.l.b16 %v5505
          %v5641 = vunpack.c.l.b16 %v5506
          %v5642 = vunpack.c.l.b16 %v5507
          %v5643 = vunpack.c.l.b16 %v5508
          %v5644 = vunpack.c.l.b16 %v5509
          %v5645 = vunpack.c.l.b16 %v5510
          %v5646 = vunpack.c.l.b16 %v5511
          %v5647 = vunpack.c.l.b16 %v5512
          %v5648 = vunpack.c.l.b16 %v5513
          %v5649 = vunpack.c.l.b16 %v5514
          %v5650 = vunpack.c.l.b16 %v5515
          %v5651 = vunpack.c.l.b16 %v5516
          %v5652 = vunpack.c.l.b16 %v5517
          %v5653 = vunpack.c.l.b16 %v5518
          %v5654 = vunpack.c.l.b16 %v5519
          %v5655 = vunpack.c.l.b16 %v5520
          %v5656 = vunpack.c.l.b16 %v5521
          %v5657 = vunpack.c.l.b16 %v5522
          %v5658 = vunpack.c.l.b16 %v5523
          %v5659 = vunpack.c.l.b16 %v5524
          %v5660 = vunpack.c.l.b16 %v5525
          %v5661 = vunpack.c.l.b16 %v5526
          %v5662 = vunpack.c.l.b16 %v5527
          %v5663 = vunpack.c.l.b16 %v5528
          %v5664 = vunpack.c.l.b16 %v5529
          %v5665 = vunpack.c.l.b16 %v5530
          %v5666 = vunpack.c.l.b16 %v5531
          %v5667 = vunpack.c.l.b16 %v5532
          %v5668 = vunpack.c.l.b16 %v5533
          %v5669 = vunpack.c.l.b16 %v5534
          %v5670 = vunpack.c.l.b16 %v5535
          %v5671 = vunpack.c.l.b16 %v5536
          %v5672 = vunpack.c.l.b16 %v5537
          %v5673 = vunpack.c.l.b16 %v5538
          %v5674 = vunpack.c.l.b16 %v5539
          %v5675 = vunpack.c.l.b16 %v5540
          %v5676 = vunpack.c.l.b16 %v5541
          %v5677 = vunpack.c.l.b16 %v5542
          %v5678 = vunpack.c.l.b16 %v5543
          %v5679 = vunpack.c.l.b16 %v5544
          %v5680 = vunpack.c.l.b16 %v5545
          %v5681 = vunpack.c.l.b16 %v5546
          %v5682 = vunpack.c.l.b16 %v5547
          %v5683 = vunpack.c.l.b16 %v5548
          %v5684 = vunpack.c.l.b16 %v5549
          %v5685 = vunpack.c.l.b16 %v5550
          %v5686 = vpack.c.b16 %v5623, %v5622
          %v5687 = vpack.c.b16 %v5625, %v5624
          %v5688 = vpack.c.b16 %v5627, %v5626
          %v5689 = vpack.c.b16 %v5629, %v5628
          %v5690 = vpack.c.b16 %v5631, %v5630
          %v5691 = vpack.c.b16 %v5633, %v5632
          %v5692 = vpack.c.b16 %v5635, %v5634
          %v5693 = vpack.c.b16 %v5637, %v5636
          %v5694 = vpack.c.b16 %v5639, %v5638
          %v5695 = vpack.c.b16 %v5641, %v5640
          %v5696 = vpack.c.b16 %v5643, %v5642
          %v5697 = vpack.c.b16 %v5645, %v5644
          %v5698 = vpack.c.b16 %v5647, %v5646
          %v5699 = vpack.c.b16 %v5649, %v5648
          %v5700 = vpack.c.b16 %v5651, %v5650
          %v5701 = vpack.c.b16 %v5653, %v5652
          %v5702 = vpack.c.b16 %v5655, %v5654
          %v5703 = vpack.c.b16 %v5657, %v5656
          %v5704 = vpack.c.b16 %v5659, %v5658
          %v5705 = vpack.c.b16 %v5661, %v5660
          %v5706 = vpack.c.b16 %v5663, %v5662
          %v5707 = vpack.c.b16 %v5665, %v5664
          %v5708 = vpack.c.b16 %v5667, %v5666
          %v5709 = vpack.c.b16 %v5669, %v5668
          %v5710 = vpack.c.b16 %v5671, %v5670
          %v5711 = vpack.c.b16 %v5673, %v5672
          %v5712 = vpack.c.b16 %v5675, %v5674
          %v5713 = vpack.c.b16 %v5677, %v5676
          %v5714 = vpack.c.b16 %v5679, %v5678
          %v5715 = vpack.c.b16 %v5681, %v5680
          %v5716 = vpack.c.b16 %v5683, %v5682
          %v5717 = vpack.c.b16 %v5685, %v5684
          %5750 = vmatprep.subr.bf16.mxu0 0
          %5751 = vmatpush1.bf16.msra.mxu0 %v5686
          %5752 = vmatprep.subr.bf16.mxu0 0
          %5753 = vmatpush1.bf16.msra.mxu0 %v5687
          %5754 = vmatprep.subr.bf16.mxu0 0
          %5755 = vmatpush1.bf16.msra.mxu0 %v5688
          %5756 = vmatprep.subr.bf16.mxu0 0
          %5757 = vmatpush1.bf16.msra.mxu0 %v5689
          %5758 = vmatprep.subr.bf16.mxu0 0
          %5759 = vmatpush1.bf16.msra.mxu0 %v5690
          %5760 = vmatprep.subr.bf16.mxu0 0
          %5761 = vmatpush1.bf16.msra.mxu0 %v5691
          %5762 = vmatprep.subr.bf16.mxu0 0
          %5763 = vmatpush1.bf16.msra.mxu0 %v5692
          %5764 = vmatprep.subr.bf16.mxu0 0
          %5765 = vmatpush1.bf16.msra.mxu0 %v5693
          %5766 = vmatprep.subr.bf16.mxu0 0
          %5767 = vmatpush1.bf16.msra.mxu0 %v5694
          %5768 = vmatprep.subr.bf16.mxu0 0
          %5769 = vmatpush1.bf16.msra.mxu0 %v5695
          %5770 = vmatprep.subr.bf16.mxu0 0
          %5771 = vmatpush1.bf16.msra.mxu0 %v5696
          %5772 = vmatprep.subr.bf16.mxu0 0
          %5773 = vmatpush1.bf16.msra.mxu0 %v5697
          %5774 = vmatprep.subr.bf16.mxu0 0
          %5775 = vmatpush1.bf16.msra.mxu0 %v5698
          %5776 = vmatprep.subr.bf16.mxu0 0
          %5777 = vmatpush1.bf16.msra.mxu0 %v5699
          %5778 = vmatprep.subr.bf16.mxu0 0
          %5779 = vmatpush1.bf16.msra.mxu0 %v5700
          %5780 = vmatprep.subr.bf16.mxu0 0
          %5781 = vmatpush1.bf16.msra.mxu0 %v5701
          %5782 = vmatprep.mubr.bf16.mxu0 %v5484
          %5783 = vmatmul.mubr.bf16.gmra.mrb[0].mxu0 %v5483
          %v5784 = vpop.f32.mrb[0].mxu0
          %v5785 = vadd.f32 %v5556, %v5784
          %v5786 = vpop.f32.mrb[0].mxu0
          %v5787 = vpop.f32.mrb[0].mxu0
          %v5788 = vpop.f32.mrb[0].mxu0
          %5789 = vdwg.mxu0
          %5790 = vmatprep.subr.bf16.mxu0 0
          %5791 = vmatpush1.bf16.msra.mxu0 %v5702
          %5792 = vmatprep.subr.bf16.mxu0 0
          %5793 = vmatpush1.bf16.msra.mxu0 %v5703
          %5794 = vmatprep.subr.bf16.mxu0 0
          %5795 = vmatpush1.bf16.msra.mxu0 %v5704
          %5796 = vmatprep.subr.bf16.mxu0 0
          %5797 = vmatpush1.bf16.msra.mxu0 %v5705
          %5798 = vmatprep.subr.bf16.mxu0 0
          %5799 = vmatpush1.bf16.msra.mxu0 %v5706
          %5800 = vmatprep.subr.bf16.mxu0 0
          %5801 = vmatpush1.bf16.msra.mxu0 %v5707
          %5802 = vmatprep.subr.bf16.mxu0 0
          %5803 = vmatpush1.bf16.msra.mxu0 %v5708
          %5804 = vmatprep.subr.bf16.mxu0 0
          %5805 = vmatpush1.bf16.msra.mxu0 %v5709
          %5806 = vmatprep.subr.bf16.mxu0 0
          %5807 = vmatpush1.bf16.msra.mxu0 %v5710
          %5808 = vmatprep.subr.bf16.mxu0 0
          %5809 = vmatpush1.bf16.msra.mxu0 %v5711
          %5810 = vmatprep.subr.bf16.mxu0 0
          %5811 = vmatpush1.bf16.msra.mxu0 %v5712
          %5812 = vmatprep.subr.bf16.mxu0 0
          %5813 = vmatpush1.bf16.msra.mxu0 %v5713
          %5814 = vmatprep.subr.bf16.mxu0 0
          %5815 = vmatpush1.bf16.msra.mxu0 %v5714
          %5816 = vmatprep.subr.bf16.mxu0 0
          %5817 = vmatpush1.bf16.msra.mxu0 %v5715
          %5818 = vmatprep.subr.bf16.mxu0 0
          %5819 = vmatpush1.bf16.msra.mxu0 %v5716
          %5820 = vmatprep.subr.bf16.mxu0 0
          %5821 = vmatpush1.bf16.msra.mxu0 %v5717
          %5822 = vmatprep.mubr.bf16.mxu0 %v5486
          %5823 = vmatmul.mubr.bf16.gmra.mrb[0].mxu0 %v5485
          %v5824 = vpop.f32.mrb[0].mxu0
          %v5825 = vadd.f32 %v5785, %v5824
          %v5826 = vpop.f32.mrb[0].mxu0
          %v5827 = vpop.f32.mrb[0].mxu0
          %v5828 = vpop.f32.mrb[0].mxu0
          %5829 = vdwg.mxu0
          %v5830 = vmax.f32 %v5825, 0.0
          %v5831 = vpack.c.bf16 %v5830, %v5830
          %v5832 = vld [vmem:[%s5] sm:$0xf]
          %v5833 = vld [vmem:[%s5 + $0x4] sm:$0xf]
          %v5834 = vld [vmem:[%s5 + $0x8] sm:$0xf]
          %v5835 = vld [vmem:[%s5 + $0xc] sm:$0xf]
          %v5836 = vld [vmem:[%s5 + $0x10] sm:$0xf]
          %v5837 = vld [vmem:[%s5 + $0x14] sm:$0xf]
          %v5838 = vld [vmem:[%s5 + $0x18] sm:$0xf]
          %v5839 = vld [vmem:[%s5 + $0x1c] sm:$0xf]
          %v5840 = vld [vmem:[%s5 + $0x20] sm:$0xf]
          %v5841 = vld [vmem:[%s5 + $0x24] sm:$0xf]
          %v5842 = vld [vmem:[%s5 + $0x28] sm:$0xf]
          %v5843 = vld [vmem:[%s5 + $0x2c] sm:$0xf]
          %v5844 = vld [vmem:[%s5 + $0x30] sm:$0xf]
          %v5845 = vld [vmem:[%s5 + $0x34] sm:$0xf]
          %v5846 = vld [vmem:[%s5 + $0x38] sm:$0xf]
          %v5847 = vld [vmem:[%s5 + $0x3c] sm:$0xf]
          %v5848 = vld [vmem:[%s6] sm:$0x1]
          %v5850 = vlaneseq
          %v5851 = vshrl.u32 %v5850, 7
          %v5852 = vsub.s32 0, %v5851
          %v5853 = vrot.slane %v5848, %v5852
          %v5871 = vunpack.c.l.b16 %v5832
          %v5872 = vunpack.c.l.b16 %v5833
          %v5873 = vunpack.c.l.b16 %v5834
          %v5874 = vunpack.c.l.b16 %v5835
          %v5875 = vunpack.c.l.b16 %v5836
          %v5876 = vunpack.c.l.b16 %v5837
          %v5877 = vunpack.c.l.b16 %v5838
          %v5878 = vunpack.c.l.b16 %v5839
          %v5879 = vunpack.c.l.b16 %v5840
          %v5880 = vunpack.c.l.b16 %v5841
          %v5881 = vunpack.c.l.b16 %v5842
          %v5882 = vunpack.c.l.b16 %v5843
          %v5883 = vunpack.c.l.b16 %v5844
          %v5884 = vunpack.c.l.b16 %v5845
          %v5885 = vunpack.c.l.b16 %v5846
          %v5886 = vunpack.c.l.b16 %v5847
          %v5887 = vpack.c.b16 %v5872, %v5871
          %v5888 = vpack.c.b16 %v5874, %v5873
          %v5889 = vpack.c.b16 %v5876, %v5875
          %v5890 = vpack.c.b16 %v5878, %v5877
          %v5891 = vpack.c.b16 %v5880, %v5879
          %v5892 = vpack.c.b16 %v5882, %v5881
          %v5893 = vpack.c.b16 %v5884, %v5883
          %v5894 = vpack.c.b16 %v5886, %v5885
          %5903 = vmatprep.subr.bf16.mxu0 0
          %5904 = vmatpush1.bf16.msra.mxu0 %v5887
          %5905 = vmatprep.subr.bf16.mxu0 0
          %5906 = vmatpush1.bf16.msra.mxu0 %v5888
          %5907 = vmatprep.subr.bf16.mxu0 0
          %5908 = vmatpush1.bf16.msra.mxu0 %v5889
          %5909 = vmatprep.subr.bf16.mxu0 0
          %5910 = vmatpush1.bf16.msra.mxu0 %v5890
          %5911 = vmatprep.subr.bf16.mxu0 0
          %5912 = vmatpush1.bf16.msra.mxu0 %v5891
          %5913 = vmatprep.subr.bf16.mxu0 0
          %5914 = vmatpush1.bf16.msra.mxu0 %v5892
          %5915 = vmatprep.subr.bf16.mxu0 0
          %5916 = vmatpush1.bf16.msra.mxu0 %v5893
          %5917 = vmatprep.subr.bf16.mxu0 0
          %5918 = vmatpush1.bf16.msra.mxu0 %v5894
          %5919 = vmatprep.subr.bf16.mxu0 0
          %5920 = vmatpush1.bf16.msra.mxu0 0
          %5921 = vmatprep.subr.bf16.mxu0 0
          %5922 = vmatpush1.bf16.msra.mxu0 0
          %5923 = vmatprep.subr.bf16.mxu0 0
          %5924 = vmatpush1.bf16.msra.mxu0 0
          %5925 = vmatprep.subr.bf16.mxu0 0
          %5926 = vmatpush1.bf16.msra.mxu0 0
          %5927 = vmatprep.subr.bf16.mxu0 0
          %5928 = vmatpush1.bf16.msra.mxu0 0
          %5929 = vmatprep.subr.bf16.mxu0 0
          %5930 = vmatpush1.bf16.msra.mxu0 0
          %5931 = vmatprep.subr.bf16.mxu0 0
          %5932 = vmatpush1.bf16.msra.mxu0 0
          %5933 = vmatprep.subr.bf16.mxu0 0
          %5934 = vmatpush1.bf16.msra.mxu0 0
          %5935 = vmatprep.mubr.bf16.mxu0 0
          %5936 = vmatmul.mubr.bf16.gmra.mrb[0].mxu0 %v5831
          %v5937 = vpop.f32.mrb[0].mxu0
          %v5938 = vadd.f32 %v5853, %v5937
          %v5939 = vpop.f32.mrb[0].mxu0
          %v5940 = vpop.f32.mrb[0].mxu0
          %v5941 = vpop.f32.mrb[0].mxu0
          %5942 = vdwg.mxu0
          %5943 = vst [vmem:[#allocation3] sm:$0x3] %v5938
        $region56: #{forward.5} parent=47 // pred_fallthru
          _
        // Predicated region
        $region57: #{forward.5} parent=47 // pred_check
          %p5944 = pneg %p189
        $region58: #{forward.5} parent=47 // pred_check_branch
          %5946 = sbr.rel (%p5944) target = $region60
        $region59: #{forward.5} parent=47 // pred_region
          %s5948 = ssub.s32 32, 32
          %5949 = vsyncadd [#allocation4], %s5948
          %s5951 = sshll.u32 [#allocation3], 4
          %s5952 = int_to_ptr.vmem [resolvable:$true] %s5951
          %5954 = dma.vmem_to_hbm [thread:$0]  %s5952, 32, %s7, [#allocation4]
        $region60: #{forward.5} parent=47 // pred_fallthru
          _
        // Predicated region
        $region61: #{forward.5} parent=47 // pred_check
          %p5955 = pneg %p189
        $region62: #{forward.5} parent=47 // pred_check_branch
          %5957 = sbr.rel (%p5955) target = $region64
        $region63: #{forward.5} parent=47 // pred_region
          %5958 = dma.done [#allocation4], 32
        $region64: #{forward.5} parent=47 // pred_fallthru
          _
      $region48: #{forward.5} parent=5 // pred_fallthru
        _
      %p5959 = scmp.le.s32.totalorder 2, %s14
      // Predicated region
      $region65: #{forward.5} parent=5 // pred_check
        %p5960 = pneg %p5959
      $region66: #{forward.5} parent=5 // pred_check_branch
        %5962 = sbr.rel (%p5960) target = $region68
      $region67: #{forward.5} parent=5 // pred_region
        %s5963 = ssub.s32 %s14, 2
      $region68: #{forward.5} parent=5 // pred_fallthru
        _
    $region6: #{forward.5} parent=1 // loop_footer
      %s18 = sadd.s32 1, %s14
    $region7: #{forward.5} parent=1 // loop_footer_branch
      %13 = sbr.rel target = $region3
    $region8: #{forward.5} parent=1 // loop_exit
      _
    %5964 = vsyncpa [#allocation4], 1
    %s5965 = scalar_lea.sflag [#allocation4], 1
    %5966 = vsyncpa %s5965, 1

</llo_original>
